<compile_context>
chip_gen: v7x
topology: tpu7x:2x2x1
jax: 0.10.0
libtpu: 0.0.40
codegen_flags: <defaults>
</compile_context>

<pallas_src>
import functools

import jax
import jax.numpy as jnp
import numpy as np
from jax import lax
from jax.experimental import pallas as pl
from jax.experimental.pallas import tpu as pltpu


def _round_up(x, m):
    return ((x + m - 1) // m) * m


def _pick_tile_rows(H, W, target_pixels=256):
    """Largest divisor of H whose row-tile (rows * W pixels) stays near the
    vreg-friendly target M of ~256 output pixels."""
    best = 1
    for d in range(1, H + 1):
        if H % d == 0 and d * W <= target_pixels:
            best = d
    return best


def basic_block_kernel(x_ref, w1_ref, w2_ref, sb_ref, out_ref,
                       xpad, midpad, slab, *, tile_rows):
    """One image of the batch per grid step.

    x_ref:   (1, H, W, C)      bf16 input (channel-padded, no spatial pad)
    w1_ref:  (3, 3C, C)        conv1 weights, kw folded into K, bf16
    w2_ref:  (3, 3C, C)        conv2 weights, kw folded into K, bf16
    sb_ref:  (4, C)            rows: [scale1, bias1, scale2, bias2], f32
    out_ref: (1, H, W, C)      f32 output (channel-padded; sliced outside)
    xpad:    (H+2, W+2, C)     bf16 scratch, zero-haloed staged input
    midpad:  (H+2, W+2, C)     bf16 scratch, zero-haloed conv1 output
    slab:    (tile_rows,W,3C)  bf16 scratch, per-kh im2col slab (K = 3C)
    """
    H = out_ref.shape[1]
    W = out_ref.shape[2]
    C = out_ref.shape[3]
    n_tiles = H // tile_rows
    bf16 = jnp.bfloat16

    # ---- stage the spatially padded bf16 input in VMEM --------------------
    # Only the 1-pixel halo is zeroed; the interior is fully overwritten.
    # Zeroed every grid step (not gated on program_id) so it stays correct
    # when the "parallel" batch axis is split across TensorCores.
    zrow = jnp.zeros((1, W + 2, C), bf16)
    zcol = jnp.zeros((H, 1, C), bf16)
    xpad[0:1, :, :] = zrow
    xpad[H + 1:H + 2, :, :] = zrow
    xpad[1:H + 1, 0:1, :] = zcol
    xpad[1:H + 1, W + 1:W + 2, :] = zcol
    xpad[1:H + 1, 1:W + 1, :] = x_ref[0]

    midpad[0:1, :, :] = zrow
    midpad[H + 1:H + 2, :, :] = zrow
    midpad[1:H + 1, 0:1, :] = zcol
    midpad[1:H + 1, W + 1:W + 2, :] = zcol

    # Folded-BN scale/bias rows, hoisted out of the tile loops.
    s1 = sb_ref[0:1, :]
    b1 = sb_ref[1:2, :]
    s2 = sb_ref[2:3, :]
    b2 = sb_ref[3:4, :]

    def conv_tile(src_pad, w_ref, r0):
        """3x3 conv for output rows [r0, r0+tile_rows); kw folded into K=3C.
        3 MXU matmuls (one per kh) with bf16 operands / f32 accumulation."""
        def tap(kh):
            # Build the (tile_rows, W, 3C) slab: the three kw-shifted windows
            # side by side along lanes (each copy is lane-aligned, 128 wide).
            for kw in range(3):
                slab[:, :, kw * C:(kw + 1) * C] = (
                    src_pad[pl.ds(r0 + kh, tile_rows), pl.ds(kw, W), :])
            return jnp.dot(slab[...].reshape(tile_rows * W, 3 * C),
                           w_ref[kh], preferred_element_type=jnp.float32)

        acc = tap(0)          # f32 (tile_rows*W, C), compiler/vreg managed
        acc += tap(1)
        acc += tap(2)
        return acc

    # ---- conv1 + BN1 + ReLU -> midpad interior (bf16) ---------------------
    def c1_body(t, carry):
        r0 = pl.multiple_of(t * tile_rows, tile_rows)
        out1 = jnp.maximum(conv_tile(xpad, w1_ref, r0) * s1 + b1, 0.0)
        midpad[pl.ds(r0 + 1, tile_rows), pl.ds(1, W), :] = (
            out1.astype(bf16).reshape(tile_rows, W, C))
        return carry

    lax.fori_loop(0, n_tiles, c1_body, 0, unroll=True)

    # ---- conv2 + BN2 + identity + ReLU -> out ------------------------------
    def c2_body(t, carry):
        r0 = pl.multiple_of(t * tile_rows, tile_rows)
        res = (conv_tile(midpad, w2_ref, r0) * s2 + b2).reshape(
            tile_rows, W, C)
        # Residual add in the output (H,W,C) layout straight from the
        # un-haloed input block (no strided-slice copy).
        res = res + x_ref[0, pl.ds(r0, tile_rows), :, :].astype(jnp.float32)
        out_ref[0, pl.ds(r0, tile_rows), :, :] = jnp.maximum(res, 0.0)
        return carry

    lax.fori_loop(0, n_tiles, c2_body, 0, unroll=True)


@jax.jit
def basic_block(x, w1, scale1, bias1, w2, scale2, bias2):
    """x: (N, H, W, Cin) f32; weights HWIO f32; folded BN scale/bias (P,).

    Returns (N, H, W, P) f32.
    """
    N, H, W, Cin = x.shape
    P = w1.shape[-1]
    assert w1.shape == (3, 3, Cin, P) and w2.shape == (3, 3, P, P)
    # Residual add requires matching shapes (stride=1, downsample=None).
    assert Cin == P, "BasicBlock residual path needs inplanes == planes here"

    LANE = 128
    C = _round_up(max(Cin, P), LANE)   # lane-dense channel count

    # Channel-pad to a lane-dense width and cast activations to bf16 once.
    # No spatial pad here: the 1-pixel halo is staged in VMEM in the kernel.
    x_bf = jnp.pad(x.astype(jnp.bfloat16),
                   ((0, 0), (0, 0), (0, 0), (0, C - Cin)))

    # Weights: channel-pad with zeros (padded out-channels produce exact 0),
    # cast bf16, and fold kw into the matmul K dim: (3,3,Ci,Co) -> (3, 3C, C).
    w1r = jnp.pad(w1, ((0, 0), (0, 0), (0, C - Cin), (0, C - P))
                  ).astype(jnp.bfloat16).reshape(3, 3 * C, C)
    w2r = jnp.pad(w2, ((0, 0), (0, 0), (0, C - P), (0, C - P))
                  ).astype(jnp.bfloat16).reshape(3, 3 * C, C)

    # Pack folded BN params into one (4, C) f32 array: [s1, b1, s2, b2].
    pad = (0, C - P)
    sb = jnp.stack([
        jnp.pad(scale1, pad, constant_values=1.0),
        jnp.pad(bias1, pad),
        jnp.pad(scale2, pad, constant_values=1.0),
        jnp.pad(bias2, pad),
    ], axis=0).astype(jnp.float32)

    tile_rows = _pick_tile_rows(H, W)

    # Explicit VMEM budget from the actual footprint (double-buffered blocks,
    # scratch, plus margin for matmul operands / f32 accumulator temporaries).
    est = ((H * W * C * 2) * 2            # x blocks, bf16, 2 buffers
           + (H * W * C * 4) * 2          # out blocks, f32, 2 buffers
           + (3 * 3 * C * C * 2) * 2 * 2  # w1 + w2, bf16, 2 buffers each
           + (4 * C * 4) * 2              # sb
           + 2 * (H + 2) * (W + 2) * C * 2  # xpad + midpad scratch, bf16
           + tile_rows * W * 3 * C * 2      # slab scratch, bf16
           + 6 * tile_rows * W * C * 4)     # lhs/accumulator temporaries
    vmem_limit = min(max(32 << 20, int(est * 1.5)), 100 << 20)

    grid_spec = pltpu.PrefetchScalarGridSpec(
        num_scalar_prefetch=0,
        grid=(N,),
        in_specs=[
            pl.BlockSpec((1, H, W, C), lambda n: (n, 0, 0, 0)),
            pl.BlockSpec((3, 3 * C, C), lambda n: (0, 0, 0)),
            pl.BlockSpec((3, 3 * C, C), lambda n: (0, 0, 0)),
            pl.BlockSpec((4, C), lambda n: (0, 0)),
        ],
        out_specs=pl.BlockSpec((1, H, W, C), lambda n: (n, 0, 0, 0)),
        scratch_shapes=[
            pltpu.VMEM((H + 2, W + 2, C), jnp.bfloat16),          # xpad
            pltpu.VMEM((H + 2, W + 2, C), jnp.bfloat16),          # midpad
            pltpu.VMEM((tile_rows, W, 3 * C), jnp.bfloat16),      # slab
        ],
    )

    out = pl.pallas_call(
        functools.partial(basic_block_kernel, tile_rows=tile_rows),
        out_shape=jax.ShapeDtypeStruct((N, H, W, C), jnp.float32),
        grid_spec=grid_spec,
        compiler_params=pltpu.CompilerParams(
            dimension_semantics=("parallel",),
            vmem_limit_bytes=vmem_limit),
    )(x_bf, w1r, w2r, sb)

    # Drop padded channels.  (A chained block could instead keep the padded
    # lane-dense layout, and take bf16, to skip this extra HBM round trip.)
    return out[..., :P]


def reference(x, w1, scale1, bias1, w2, scale2, bias2):
    """Pure-JAX f32 reference (NHWC / HWIO)."""
    dn = jax.lax.conv_dimension_numbers(x.shape, w1.shape,
                                        ('NHWC', 'HWIO', 'NHWC'))
    out = jax.lax.conv_general_dilated(x, w1, (1, 1), 'SAME',
                                       dimension_numbers=dn)
    out = out * scale1 + bias1
    out = jnp.maximum(out, 0.0)
    out = jax.lax.conv_general_dilated(out, w2, (1, 1), 'SAME',
                                       dimension_numbers=dn)
    out = out * scale2 + bias2
    out = jnp.maximum(out + x, 0.0)
    return out


if __name__ == "__main__":
    # Small shapes: batch=2, inplanes=planes=8, spatial=16x16, stride=1,
    # downsample=None, net_type='residual'.
    N, H, W, C = 2, 16, 16, 8
    P = C  # planes == inplanes so the residual add is well-defined
    eps = 1e-4

    key = jax.random.PRNGKey(0)
    k = jax.random.split(key, 10)

    x = jax.random.normal(k[0], (N, H, W, C), jnp.float32)

    # conv weights, HWIO layout (PyTorch conv3x3 has no bias)
    w1 = jax.random.normal(k[1], (3, 3, C, P), jnp.float32) * 0.1
    w2 = jax.random.normal(k[2], (3, 3, P, P), jnp.float32) * 0.1

    # BatchNorm2d parameters + running stats (deterministic), eval mode
    gamma1 = 1.0 + 0.1 * jax.random.normal(k[3], (P,), jnp.float32)
    beta1 = 0.1 * jax.random.normal(k[4], (P,), jnp.float32)
    mean1 = 0.1 * jax.random.normal(k[5], (P,), jnp.float32)
    var1 = 1.0 + 0.1 * jax.random.uniform(k[6], (P,), jnp.float32)

    gamma2 = 1.0 + 0.1 * jax.random.normal(k[7], (P,), jnp.float32)
    beta2 = 0.1 * jax.random.normal(k[8], (P,), jnp.float32)
    mean2 = 0.1 * jax.random.normal(k[9], (P,), jnp.float32)
    var2 = 1.0 + 0.05

    # Fold BN into per-channel scale / bias: y = x*scale + bias
    scale1 = gamma1 / jnp.sqrt(var1 + eps)
    bias1 = beta1 - mean1 * scale1
    scale2 = gamma2 / jnp.sqrt(var2 + eps)
    bias2 = beta2 - mean2 * scale2

    out = basic_block(x, w1, scale1, bias1, w2, scale2, bias2)
    out = jax.block_until_ready(out)

    ref = reference(x, w1, scale1, bias1, w2, scale2, bias2)
    # bf16 matmul operands + bf16-staged intermediate/identity (f32
    # accumulation) => slightly looser tolerance than pure f32.
    np.testing.assert_allclose(np.asarray(out), np.asarray(ref),
                               rtol=2e-2, atol=3e-2)

    print("KERNEL_OK")
</pallas_src>

<mosaic_0001>
module attributes {stable_mosaic.version = 11 : i64} {
  func.func @basic_block_kernel(%arg0: i32, %arg1: memref<1x16x16x128xbf16, #tpu.memory_space<vmem>>, %arg2: memref<3x384x128xbf16, #tpu.memory_space<vmem>>, %arg3: memref<3x384x128xbf16, #tpu.memory_space<vmem>>, %arg4: memref<4x128xf32, #tpu.memory_space<vmem>>, %arg5: memref<1x16x16x128xf32, #tpu.memory_space<vmem>>, %arg6: memref<18x18x128xbf16, #tpu.memory_space<vmem>>, %arg7: memref<18x18x128xbf16, #tpu.memory_space<vmem>>, %arg8: memref<16x16x384xbf16, #tpu.memory_space<vmem>>) attributes {dimension_semantics = [#tpu.dimension_semantics<parallel>], iteration_bounds = array<i64: 2>, scalar_prefetch = 0 : i64, scratch_operands = 3 : i64, tpu.core_type = #tpu.core_type<tc>, window_params = [{transform_indices = @transform_0, window_bounds = array<i64: 1, 16, 16, 128>}, {pipeline_mode = #tpu.pipeline_mode<synchronous>, transform_indices = @transform_1, window_bounds = array<i64: 3, 384, 128>}, {pipeline_mode = #tpu.pipeline_mode<synchronous>, transform_indices = @transform_2, window_bounds = array<i64: 3, 384, 128>}, {pipeline_mode = #tpu.pipeline_mode<synchronous>, transform_indices = @transform_3, window_bounds = array<i64: 4, 128>}, {transform_indices = @transform_4, window_bounds = array<i64: 1, 16, 16, 128>}]} {
    %cst = arith.constant 0.000000e+00 : bf16
    %0 = vector.broadcast %cst : bf16 to vector<1x18x128xbf16>
    %cst_0 = arith.constant 0.000000e+00 : bf16
    %1 = vector.broadcast %cst_0 : bf16 to vector<16x1x128xbf16>
    %c0 = arith.constant 0 : index
    %c0_1 = arith.constant 0 : index
    %c0_2 = arith.constant 0 : index
    %2 = vector.load %arg6[%c0, %c0_1, %c0_2] : memref<18x18x128xbf16, #tpu.memory_space<vmem>>, vector<1x18x128xbf16>
    tpu.vector_store %arg6[%c0, %c0_1, %c0_2], %0 {strides = array<i32>} : memref<18x18x128xbf16, #tpu.memory_space<vmem>>, vector<1x18x128xbf16>,
    %c17 = arith.constant 17 : index
    %c0_3 = arith.constant 0 : index
    %c0_4 = arith.constant 0 : index
    %3 = vector.load %arg6[%c17, %c0_3, %c0_4] : memref<18x18x128xbf16, #tpu.memory_space<vmem>>, vector<1x18x128xbf16>
    tpu.vector_store %arg6[%c17, %c0_3, %c0_4], %0 {strides = array<i32>} : memref<18x18x128xbf16, #tpu.memory_space<vmem>>, vector<1x18x128xbf16>,
    %c1 = arith.constant 1 : index
    %c0_5 = arith.constant 0 : index
    %c0_6 = arith.constant 0 : index
    %4 = vector.load %arg6[%c1, %c0_5, %c0_6] : memref<18x18x128xbf16, #tpu.memory_space<vmem>>, vector<16x1x128xbf16>
    tpu.vector_store %arg6[%c1, %c0_5, %c0_6], %1 {strides = array<i32>} : memref<18x18x128xbf16, #tpu.memory_space<vmem>>, vector<16x1x128xbf16>,
    %c1_7 = arith.constant 1 : index
    %c17_8 = arith.constant 17 : index
    %c0_9 = arith.constant 0 : index
    %5 = vector.load %arg6[%c1_7, %c17_8, %c0_9] : memref<18x18x128xbf16, #tpu.memory_space<vmem>>, vector<16x1x128xbf16>
    tpu.vector_store %arg6[%c1_7, %c17_8, %c0_9], %1 {strides = array<i32>} : memref<18x18x128xbf16, #tpu.memory_space<vmem>>, vector<16x1x128xbf16>,
    %c0_10 = arith.constant 0 : index
    %c0_11 = arith.constant 0 : index
    %c0_12 = arith.constant 0 : index
    %c0_13 = arith.constant 0 : index
    %6 = vector.load %arg1[%c0_10, %c0_11, %c0_12, %c0_13] : memref<1x16x16x128xbf16, #tpu.memory_space<vmem>>, vector<1x16x16x128xbf16>
    %7 = vector.shape_cast %6 : vector<1x16x16x128xbf16> to vector<16x16x128xbf16>
    %c1_14 = arith.constant 1 : index
    %c1_15 = arith.constant 1 : index
    %c0_16 = arith.constant 0 : index
    %8 = vector.load %arg6[%c1_14, %c1_15, %c0_16] : memref<18x18x128xbf16, #tpu.memory_space<vmem>>, vector<16x16x128xbf16>
    tpu.vector_store %arg6[%c1_14, %c1_15, %c0_16], %7 {strides = array<i32>} : memref<18x18x128xbf16, #tpu.memory_space<vmem>>, vector<16x16x128xbf16>,
    %c0_17 = arith.constant 0 : index
    %c0_18 = arith.constant 0 : index
    %c0_19 = arith.constant 0 : index
    %9 = vector.load %arg7[%c0_17, %c0_18, %c0_19] : memref<18x18x128xbf16, #tpu.memory_space<vmem>>, vector<1x18x128xbf16>
    tpu.vector_store %arg7[%c0_17, %c0_18, %c0_19], %0 {strides = array<i32>} : memref<18x18x128xbf16, #tpu.memory_space<vmem>>, vector<1x18x128xbf16>,
    %c17_20 = arith.constant 17 : index
    %c0_21 = arith.constant 0 : index
    %c0_22 = arith.constant 0 : index
    %10 = vector.load %arg7[%c17_20, %c0_21, %c0_22] : memref<18x18x128xbf16, #tpu.memory_space<vmem>>, vector<1x18x128xbf16>
    tpu.vector_store %arg7[%c17_20, %c0_21, %c0_22], %0 {strides = array<i32>} : memref<18x18x128xbf16, #tpu.memory_space<vmem>>, vector<1x18x128xbf16>,
    %c1_23 = arith.constant 1 : index
    %c0_24 = arith.constant 0 : index
    %c0_25 = arith.constant 0 : index
    %11 = vector.load %arg7[%c1_23, %c0_24, %c0_25] : memref<18x18x128xbf16, #tpu.memory_space<vmem>>, vector<16x1x128xbf16>
    tpu.vector_store %arg7[%c1_23, %c0_24, %c0_25], %1 {strides = array<i32>} : memref<18x18x128xbf16, #tpu.memory_space<vmem>>, vector<16x1x128xbf16>,
    %c1_26 = arith.constant 1 : index
    %c17_27 = arith.constant 17 : index
    %c0_28 = arith.constant 0 : index
    %12 = vector.load %arg7[%c1_26, %c17_27, %c0_28] : memref<18x18x128xbf16, #tpu.memory_space<vmem>>, vector<16x1x128xbf16>
    tpu.vector_store %arg7[%c1_26, %c17_27, %c0_28], %1 {strides = array<i32>} : memref<18x18x128xbf16, #tpu.memory_space<vmem>>, vector<16x1x128xbf16>,
    %c0_29 = arith.constant 0 : index
    %c0_30 = arith.constant 0 : index
    %13 = vector.load %arg4[%c0_29, %c0_30] : memref<4x128xf32, #tpu.memory_space<vmem>>, vector<1x128xf32>
    %c1_31 = arith.constant 1 : index
    %c0_32 = arith.constant 0 : index
    %14 = vector.load %arg4[%c1_31, %c0_32] : memref<4x128xf32, #tpu.memory_space<vmem>>, vector<1x128xf32>
    %c2 = arith.constant 2 : index
    %c0_33 = arith.constant 0 : index
    %15 = vector.load %arg4[%c2, %c0_33] : memref<4x128xf32, #tpu.memory_space<vmem>>, vector<1x128xf32>
    %c3 = arith.constant 3 : index
    %c0_34 = arith.constant 0 : index
    %16 = vector.load %arg4[%c3, %c0_34] : memref<4x128xf32, #tpu.memory_space<vmem>>, vector<1x128xf32>
    %c0_i32 = arith.constant 0 : i32
    %c16_i32 = arith.constant 16 : i32
    %17 = arith.muli %c0_i32, %c16_i32 : i32
    %18 = tpu.assume_multiple %17, 16 : i32
    %c0_i32_35 = arith.constant 0 : i32
    %19 = arith.addi %18, %c0_i32_35 : i32
    %20 = arith.index_cast %19 : i32 to index
    %c0_36 = arith.constant 0 : index
    %c0_37 = arith.constant 0 : index
    %21 = vector.load %arg6[%20, %c0_36, %c0_37] : memref<18x18x128xbf16, #tpu.memory_space<vmem>>, vector<16x16x128xbf16>
    %c0_38 = arith.constant 0 : index
    %c0_39 = arith.constant 0 : index
    %c0_40 = arith.constant 0 : index
    %22 = vector.load %arg8[%c0_38, %c0_39, %c0_40] : memref<16x16x384xbf16, #tpu.memory_space<vmem>>, vector<16x16x128xbf16>
    tpu.vector_store %arg8[%c0_38, %c0_39, %c0_40], %21 {strides = array<i32>} : memref<16x16x384xbf16, #tpu.memory_space<vmem>>, vector<16x16x128xbf16>,
    %c0_i32_41 = arith.constant 0 : i32
    %23 = arith.addi %18, %c0_i32_41 : i32
    %24 = arith.index_cast %23 : i32 to index
    %c1_42 = arith.constant 1 : index
    %c0_43 = arith.constant 0 : index
    %25 = vector.load %arg6[%24, %c1_42, %c0_43] : memref<18x18x128xbf16, #tpu.memory_space<vmem>>, vector<16x16x128xbf16>
    %c0_44 = arith.constant 0 : index
    %c0_45 = arith.constant 0 : index
    %c128 = arith.constant 128 : index
    %26 = vector.load %arg8[%c0_44, %c0_45, %c128] : memref<16x16x384xbf16, #tpu.memory_space<vmem>>, vector<16x16x128xbf16>
    tpu.vector_store %arg8[%c0_44, %c0_45, %c128], %25 {strides = array<i32>} : memref<16x16x384xbf16, #tpu.memory_space<vmem>>, vector<16x16x128xbf16>,
    %c0_i32_46 = arith.constant 0 : i32
    %27 = arith.addi %18, %c0_i32_46 : i32
    %28 = arith.index_cast %27 : i32 to index
    %c2_47 = arith.constant 2 : index
    %c0_48 = arith.constant 0 : index
    %29 = vector.load %arg6[%28, %c2_47, %c0_48] : memref<18x18x128xbf16, #tpu.memory_space<vmem>>, vector<16x16x128xbf16>
    %c0_49 = arith.constant 0 : index
    %c0_50 = arith.constant 0 : index
    %c256 = arith.constant 256 : index
    %30 = vector.load %arg8[%c0_49, %c0_50, %c256] : memref<16x16x384xbf16, #tpu.memory_space<vmem>>, vector<16x16x128xbf16>
    tpu.vector_store %arg8[%c0_49, %c0_50, %c256], %29 {strides = array<i32>} : memref<16x16x384xbf16, #tpu.memory_space<vmem>>, vector<16x16x128xbf16>,
    %c0_51 = arith.constant 0 : index
    %c0_52 = arith.constant 0 : index
    %c0_53 = arith.constant 0 : index
    %31 = vector.load %arg8[%c0_51, %c0_52, %c0_53] : memref<16x16x384xbf16, #tpu.memory_space<vmem>>, vector<16x16x384xbf16>
    %32 = vector.shape_cast %31 : vector<16x16x384xbf16> to vector<256x384xbf16>
    %c0_54 = arith.constant 0 : index
    %c0_55 = arith.constant 0 : index
    %c0_56 = arith.constant 0 : index
    %33 = vector.load %arg2[%c0_54, %c0_55, %c0_56] : memref<3x384x128xbf16, #tpu.memory_space<vmem>>, vector<1x384x128xbf16>
    %34 = vector.shape_cast %33 : vector<1x384x128xbf16> to vector<384x128xbf16>
    %cst_57 = arith.constant dense<0.000000e+00> : vector<256x128xf32>
    %35 = tpu.matmul %32, %34, %cst_57 {dimension_numbers = #tpu.dot_dimension_numbers<[1], [0], [0], [1], [0, 0, 1, 1], [], []>} : vector<256x384xbf16>, vector<384x128xbf16>, vector<256x128xf32> -> vector<256x128xf32>
    %c1_i32 = arith.constant 1 : i32
    %36 = arith.addi %18, %c1_i32 : i32
    %37 = arith.index_cast %36 : i32 to index
    %c0_58 = arith.constant 0 : index
    %c0_59 = arith.constant 0 : index
    %38 = vector.load %arg6[%37, %c0_58, %c0_59] : memref<18x18x128xbf16, #tpu.memory_space<vmem>>, vector<16x16x128xbf16>
    %c0_60 = arith.constant 0 : index
    %c0_61 = arith.constant 0 : index
    %c0_62 = arith.constant 0 : index
    %39 = vector.load %arg8[%c0_60, %c0_61, %c0_62] : memref<16x16x384xbf16, #tpu.memory_space<vmem>>, vector<16x16x128xbf16>
    tpu.vector_store %arg8[%c0_60, %c0_61, %c0_62], %38 {strides = array<i32>} : memref<16x16x384xbf16, #tpu.memory_space<vmem>>, vector<16x16x128xbf16>,
    %c1_i32_63 = arith.constant 1 : i32
    %40 = arith.addi %18, %c1_i32_63 : i32
    %41 = arith.index_cast %40 : i32 to index
    %c1_64 = arith.constant 1 : index
    %c0_65 = arith.constant 0 : index
    %42 = vector.load %arg6[%41, %c1_64, %c0_65] : memref<18x18x128xbf16, #tpu.memory_space<vmem>>, vector<16x16x128xbf16>
    %c0_66 = arith.constant 0 : index
    %c0_67 = arith.constant 0 : index
    %c128_68 = arith.constant 128 : index
    %43 = vector.load %arg8[%c0_66, %c0_67, %c128_68] : memref<16x16x384xbf16, #tpu.memory_space<vmem>>, vector<16x16x128xbf16>
    tpu.vector_store %arg8[%c0_66, %c0_67, %c128_68], %42 {strides = array<i32>} : memref<16x16x384xbf16, #tpu.memory_space<vmem>>, vector<16x16x128xbf16>,
    %c1_i32_69 = arith.constant 1 : i32
    %44 = arith.addi %18, %c1_i32_69 : i32
    %45 = arith.index_cast %44 : i32 to index
    %c2_70 = arith.constant 2 : index
    %c0_71 = arith.constant 0 : index
    %46 = vector.load %arg6[%45, %c2_70, %c0_71] : memref<18x18x128xbf16, #tpu.memory_space<vmem>>, vector<16x16x128xbf16>
    %c0_72 = arith.constant 0 : index
    %c0_73 = arith.constant 0 : index
    %c256_74 = arith.constant 256 : index
    %47 = vector.load %arg8[%c0_72, %c0_73, %c256_74] : memref<16x16x384xbf16, #tpu.memory_space<vmem>>, vector<16x16x128xbf16>
    tpu.vector_store %arg8[%c0_72, %c0_73, %c256_74], %46 {strides = array<i32>} : memref<16x16x384xbf16, #tpu.memory_space<vmem>>, vector<16x16x128xbf16>,
    %c0_75 = arith.constant 0 : index
    %c0_76 = arith.constant 0 : index
    %c0_77 = arith.constant 0 : index
    %48 = vector.load %arg8[%c0_75, %c0_76, %c0_77] : memref<16x16x384xbf16, #tpu.memory_space<vmem>>, vector<16x16x384xbf16>
    %49 = vector.shape_cast %48 : vector<16x16x384xbf16> to vector<256x384xbf16>
    %c1_78 = arith.constant 1 : index
    %c0_79 = arith.constant 0 : index
    %c0_80 = arith.constant 0 : index
    %50 = vector.load %arg2[%c1_78, %c0_79, %c0_80] : memref<3x384x128xbf16, #tpu.memory_space<vmem>>, vector<1x384x128xbf16>
    %51 = vector.shape_cast %50 : vector<1x384x128xbf16> to vector<384x128xbf16>
    %cst_81 = arith.constant dense<0.000000e+00> : vector<256x128xf32>
    %52 = tpu.matmul %49, %51, %cst_81 {dimension_numbers = #tpu.dot_dimension_numbers<[1], [0], [0], [1], [0, 0, 1, 1], [], []>} : vector<256x384xbf16>, vector<384x128xbf16>, vector<256x128xf32> -> vector<256x128xf32>
    %53 = arith.addf %35, %52 : vector<256x128xf32>
    %c2_i32 = arith.constant 2 : i32
    %54 = arith.addi %18, %c2_i32 : i32
    %55 = arith.index_cast %54 : i32 to index
    %c0_82 = arith.constant 0 : index
    %c0_83 = arith.constant 0 : index
    %56 = vector.load %arg6[%55, %c0_82, %c0_83] : memref<18x18x128xbf16, #tpu.memory_space<vmem>>, vector<16x16x128xbf16>
    %c0_84 = arith.constant 0 : index
    %c0_85 = arith.constant 0 : index
    %c0_86 = arith.constant 0 : index
    %57 = vector.load %arg8[%c0_84, %c0_85, %c0_86] : memref<16x16x384xbf16, #tpu.memory_space<vmem>>, vector<16x16x128xbf16>
    tpu.vector_store %arg8[%c0_84, %c0_85, %c0_86], %56 {strides = array<i32>} : memref<16x16x384xbf16, #tpu.memory_space<vmem>>, vector<16x16x128xbf16>,
    %c2_i32_87 = arith.constant 2 : i32
    %58 = arith.addi %18, %c2_i32_87 : i32
    %59 = arith.index_cast %58 : i32 to index
    %c1_88 = arith.constant 1 : index
    %c0_89 = arith.constant 0 : index
    %60 = vector.load %arg6[%59, %c1_88, %c0_89] : memref<18x18x128xbf16, #tpu.memory_space<vmem>>, vector<16x16x128xbf16>
    %c0_90 = arith.constant 0 : index
    %c0_91 = arith.constant 0 : index
    %c128_92 = arith.constant 128 : index
    %61 = vector.load %arg8[%c0_90, %c0_91, %c128_92] : memref<16x16x384xbf16, #tpu.memory_space<vmem>>, vector<16x16x128xbf16>
    tpu.vector_store %arg8[%c0_90, %c0_91, %c128_92], %60 {strides = array<i32>} : memref<16x16x384xbf16, #tpu.memory_space<vmem>>, vector<16x16x128xbf16>,
    %c2_i32_93 = arith.constant 2 : i32
    %62 = arith.addi %18, %c2_i32_93 : i32
    %63 = arith.index_cast %62 : i32 to index
    %c2_94 = arith.constant 2 : index
    %c0_95 = arith.constant 0 : index
    %64 = vector.load %arg6[%63, %c2_94, %c0_95] : memref<18x18x128xbf16, #tpu.memory_space<vmem>>, vector<16x16x128xbf16>
    %c0_96 = arith.constant 0 : index
    %c0_97 = arith.constant 0 : index
    %c256_98 = arith.constant 256 : index
    %65 = vector.load %arg8[%c0_96, %c0_97, %c256_98] : memref<16x16x384xbf16, #tpu.memory_space<vmem>>, vector<16x16x128xbf16>
    tpu.vector_store %arg8[%c0_96, %c0_97, %c256_98], %64 {strides = array<i32>} : memref<16x16x384xbf16, #tpu.memory_space<vmem>>, vector<16x16x128xbf16>,
    %c0_99 = arith.constant 0 : index
    %c0_100 = arith.constant 0 : index
    %c0_101 = arith.constant 0 : index
    %66 = vector.load %arg8[%c0_99, %c0_100, %c0_101] : memref<16x16x384xbf16, #tpu.memory_space<vmem>>, vector<16x16x384xbf16>
    %67 = vector.shape_cast %66 : vector<16x16x384xbf16> to vector<256x384xbf16>
    %c2_102 = arith.constant 2 : index
    %c0_103 = arith.constant 0 : index
    %c0_104 = arith.constant 0 : index
    %68 = vector.load %arg2[%c2_102, %c0_103, %c0_104] : memref<3x384x128xbf16, #tpu.memory_space<vmem>>, vector<1x384x128xbf16>
    %69 = vector.shape_cast %68 : vector<1x384x128xbf16> to vector<384x128xbf16>
    %cst_105 = arith.constant dense<0.000000e+00> : vector<256x128xf32>
    %70 = tpu.matmul %67, %69, %cst_105 {dimension_numbers = #tpu.dot_dimension_numbers<[1], [0], [0], [1], [0, 0, 1, 1], [], []>} : vector<256x384xbf16>, vector<384x128xbf16>, vector<256x128xf32> -> vector<256x128xf32>
    %71 = arith.addf %53, %70 : vector<256x128xf32>
    %72 = vector.broadcast %13 : vector<1x128xf32> to vector<256x128xf32>
    %73 = arith.mulf %71, %72 : vector<256x128xf32>
    %74 = vector.broadcast %14 : vector<1x128xf32> to vector<256x128xf32>
    %75 = arith.addf %73, %74 : vector<256x128xf32>
    %cst_106 = arith.constant 0.000000e+00 : f32
    %76 = vector.broadcast %cst_106 : f32 to vector<256x128xf32>
    %77 = arith.maximumf %75, %76 : vector<256x128xf32>
    %78 = arith.truncf %77 : vector<256x128xf32> to vector<256x128xbf16>
    %79 = vector.shape_cast %78 : vector<256x128xbf16> to vector<16x16x128xbf16>
    %c1_i32_107 = arith.constant 1 : i32
    %80 = arith.addi %18, %c1_i32_107 : i32
    %81 = arith.index_cast %80 : i32 to index
    %c1_108 = arith.constant 1 : index
    %c0_109 = arith.constant 0 : index
    %82 = vector.load %arg7[%81, %c1_108, %c0_109] : memref<18x18x128xbf16, #tpu.memory_space<vmem>>, vector<16x16x128xbf16>
    tpu.vector_store %arg7[%81, %c1_108, %c0_109], %79 {strides = array<i32>} : memref<18x18x128xbf16, #tpu.memory_space<vmem>>, vector<16x16x128xbf16>,
    %c1_i32_110 = arith.constant 1 : i32
    %c0_i32_111 = arith.constant 0 : i32
    %c16_i32_112 = arith.constant 16 : i32
    %83 = arith.muli %c0_i32_111, %c16_i32_112 : i32
    %84 = tpu.assume_multiple %83, 16 : i32
    %c0_i32_113 = arith.constant 0 : i32
    %85 = arith.addi %84, %c0_i32_113 : i32
    %86 = arith.index_cast %85 : i32 to index
    %c0_114 = arith.constant 0 : index
    %c0_115 = arith.constant 0 : index
    %87 = vector.load %arg7[%86, %c0_114, %c0_115] : memref<18x18x128xbf16, #tpu.memory_space<vmem>>, vector<16x16x128xbf16>
    %c0_116 = arith.constant 0 : index
    %c0_117 = arith.constant 0 : index
    %c0_118 = arith.constant 0 : index
    %88 = vector.load %arg8[%c0_116, %c0_117, %c0_118] : memref<16x16x384xbf16, #tpu.memory_space<vmem>>, vector<16x16x128xbf16>
    tpu.vector_store %arg8[%c0_116, %c0_117, %c0_118], %87 {strides = array<i32>} : memref<16x16x384xbf16, #tpu.memory_space<vmem>>, vector<16x16x128xbf16>,
    %c0_i32_119 = arith.constant 0 : i32
    %89 = arith.addi %84, %c0_i32_119 : i32
    %90 = arith.index_cast %89 : i32 to index
    %c1_120 = arith.constant 1 : index
    %c0_121 = arith.constant 0 : index
    %91 = vector.load %arg7[%90, %c1_120, %c0_121] : memref<18x18x128xbf16, #tpu.memory_space<vmem>>, vector<16x16x128xbf16>
    %c0_122 = arith.constant 0 : index
    %c0_123 = arith.constant 0 : index
    %c128_124 = arith.constant 128 : index
    %92 = vector.load %arg8[%c0_122, %c0_123, %c128_124] : memref<16x16x384xbf16, #tpu.memory_space<vmem>>, vector<16x16x128xbf16>
    tpu.vector_store %arg8[%c0_122, %c0_123, %c128_124], %91 {strides = array<i32>} : memref<16x16x384xbf16, #tpu.memory_space<vmem>>, vector<16x16x128xbf16>,
    %c0_i32_125 = arith.constant 0 : i32
    %93 = arith.addi %84, %c0_i32_125 : i32
    %94 = arith.index_cast %93 : i32 to index
    %c2_126 = arith.constant 2 : index
    %c0_127 = arith.constant 0 : index
    %95 = vector.load %arg7[%94, %c2_126, %c0_127] : memref<18x18x128xbf16, #tpu.memory_space<vmem>>, vector<16x16x128xbf16>
    %c0_128 = arith.constant 0 : index
    %c0_129 = arith.constant 0 : index
    %c256_130 = arith.constant 256 : index
    %96 = vector.load %arg8[%c0_128, %c0_129, %c256_130] : memref<16x16x384xbf16, #tpu.memory_space<vmem>>, vector<16x16x128xbf16>
    tpu.vector_store %arg8[%c0_128, %c0_129, %c256_130], %95 {strides = array<i32>} : memref<16x16x384xbf16, #tpu.memory_space<vmem>>, vector<16x16x128xbf16>,
    %c0_131 = arith.constant 0 : index
    %c0_132 = arith.constant 0 : index
    %c0_133 = arith.constant 0 : index
    %97 = vector.load %arg8[%c0_131, %c0_132, %c0_133] : memref<16x16x384xbf16, #tpu.memory_space<vmem>>, vector<16x16x384xbf16>
    %98 = vector.shape_cast %97 : vector<16x16x384xbf16> to vector<256x384xbf16>
    %c0_134 = arith.constant 0 : index
    %c0_135 = arith.constant 0 : index
    %c0_136 = arith.constant 0 : index
    %99 = vector.load %arg3[%c0_134, %c0_135, %c0_136] : memref<3x384x128xbf16, #tpu.memory_space<vmem>>, vector<1x384x128xbf16>
    %100 = vector.shape_cast %99 : vector<1x384x128xbf16> to vector<384x128xbf16>
    %cst_137 = arith.constant dense<0.000000e+00> : vector<256x128xf32>
    %101 = tpu.matmul %98, %100, %cst_137 {dimension_numbers = #tpu.dot_dimension_numbers<[1], [0], [0], [1], [0, 0, 1, 1], [], []>} : vector<256x384xbf16>, vector<384x128xbf16>, vector<256x128xf32> -> vector<256x128xf32>
    %c1_i32_138 = arith.constant 1 : i32
    %102 = arith.addi %84, %c1_i32_138 : i32
    %103 = arith.index_cast %102 : i32 to index
    %c0_139 = arith.constant 0 : index
    %c0_140 = arith.constant 0 : index
    %104 = vector.load %arg7[%103, %c0_139, %c0_140] : memref<18x18x128xbf16, #tpu.memory_space<vmem>>, vector<16x16x128xbf16>
    %c0_141 = arith.constant 0 : index
    %c0_142 = arith.constant 0 : index
    %c0_143 = arith.constant 0 : index
    %105 = vector.load %arg8[%c0_141, %c0_142, %c0_143] : memref<16x16x384xbf16, #tpu.memory_space<vmem>>, vector<16x16x128xbf16>
    tpu.vector_store %arg8[%c0_141, %c0_142, %c0_143], %104 {strides = array<i32>} : memref<16x16x384xbf16, #tpu.memory_space<vmem>>, vector<16x16x128xbf16>,
    %c1_i32_144 = arith.constant 1 : i32
    %106 = arith.addi %84, %c1_i32_144 : i32
    %107 = arith.index_cast %106 : i32 to index
    %c1_145 = arith.constant 1 : index
    %c0_146 = arith.constant 0 : index
    %108 = vector.load %arg7[%107, %c1_145, %c0_146] : memref<18x18x128xbf16, #tpu.memory_space<vmem>>, vector<16x16x128xbf16>
    %c0_147 = arith.constant 0 : index
    %c0_148 = arith.constant 0 : index
    %c128_149 = arith.constant 128 : index
    %109 = vector.load %arg8[%c0_147, %c0_148, %c128_149] : memref<16x16x384xbf16, #tpu.memory_space<vmem>>, vector<16x16x128xbf16>
    tpu.vector_store %arg8[%c0_147, %c0_148, %c128_149], %108 {strides = array<i32>} : memref<16x16x384xbf16, #tpu.memory_space<vmem>>, vector<16x16x128xbf16>,
    %c1_i32_150 = arith.constant 1 : i32
    %110 = arith.addi %84, %c1_i32_150 : i32
    %111 = arith.index_cast %110 : i32 to index
    %c2_151 = arith.constant 2 : index
    %c0_152 = arith.constant 0 : index
    %112 = vector.load %arg7[%111, %c2_151, %c0_152] : memref<18x18x128xbf16, #tpu.memory_space<vmem>>, vector<16x16x128xbf16>
    %c0_153 = arith.constant 0 : index
    %c0_154 = arith.constant 0 : index
    %c256_155 = arith.constant 256 : index
    %113 = vector.load %arg8[%c0_153, %c0_154, %c256_155] : memref<16x16x384xbf16, #tpu.memory_space<vmem>>, vector<16x16x128xbf16>
    tpu.vector_store %arg8[%c0_153, %c0_154, %c256_155], %112 {strides = array<i32>} : memref<16x16x384xbf16, #tpu.memory_space<vmem>>, vector<16x16x128xbf16>,
    %c0_156 = arith.constant 0 : index
    %c0_157 = arith.constant 0 : index
    %c0_158 = arith.constant 0 : index
    %114 = vector.load %arg8[%c0_156, %c0_157, %c0_158] : memref<16x16x384xbf16, #tpu.memory_space<vmem>>, vector<16x16x384xbf16>
    %115 = vector.shape_cast %114 : vector<16x16x384xbf16> to vector<256x384xbf16>
    %c1_159 = arith.constant 1 : index
    %c0_160 = arith.constant 0 : index
    %c0_161 = arith.constant 0 : index
    %116 = vector.load %arg3[%c1_159, %c0_160, %c0_161] : memref<3x384x128xbf16, #tpu.memory_space<vmem>>, vector<1x384x128xbf16>
    %117 = vector.shape_cast %116 : vector<1x384x128xbf16> to vector<384x128xbf16>
    %cst_162 = arith.constant dense<0.000000e+00> : vector<256x128xf32>
    %118 = tpu.matmul %115, %117, %cst_162 {dimension_numbers = #tpu.dot_dimension_numbers<[1], [0], [0], [1], [0, 0, 1, 1], [], []>} : vector<256x384xbf16>, vector<384x128xbf16>, vector<256x128xf32> -> vector<256x128xf32>
    %119 = arith.addf %101, %118 : vector<256x128xf32>
    %c2_i32_163 = arith.constant 2 : i32
    %120 = arith.addi %84, %c2_i32_163 : i32
    %121 = arith.index_cast %120 : i32 to index
    %c0_164 = arith.constant 0 : index
    %c0_165 = arith.constant 0 : index
    %122 = vector.load %arg7[%121, %c0_164, %c0_165] : memref<18x18x128xbf16, #tpu.memory_space<vmem>>, vector<16x16x128xbf16>
    %c0_166 = arith.constant 0 : index
    %c0_167 = arith.constant 0 : index
    %c0_168 = arith.constant 0 : index
    %123 = vector.load %arg8[%c0_166, %c0_167, %c0_168] : memref<16x16x384xbf16, #tpu.memory_space<vmem>>, vector<16x16x128xbf16>
    tpu.vector_store %arg8[%c0_166, %c0_167, %c0_168], %122 {strides = array<i32>} : memref<16x16x384xbf16, #tpu.memory_space<vmem>>, vector<16x16x128xbf16>,
    %c2_i32_169 = arith.constant 2 : i32
    %124 = arith.addi %84, %c2_i32_169 : i32
    %125 = arith.index_cast %124 : i32 to index
    %c1_170 = arith.constant 1 : index
    %c0_171 = arith.constant 0 : index
    %126 = vector.load %arg7[%125, %c1_170, %c0_171] : memref<18x18x128xbf16, #tpu.memory_space<vmem>>, vector<16x16x128xbf16>
    %c0_172 = arith.constant 0 : index
    %c0_173 = arith.constant 0 : index
    %c128_174 = arith.constant 128 : index
    %127 = vector.load %arg8[%c0_172, %c0_173, %c128_174] : memref<16x16x384xbf16, #tpu.memory_space<vmem>>, vector<16x16x128xbf16>
    tpu.vector_store %arg8[%c0_172, %c0_173, %c128_174], %126 {strides = array<i32>} : memref<16x16x384xbf16, #tpu.memory_space<vmem>>, vector<16x16x128xbf16>,
    %c2_i32_175 = arith.constant 2 : i32
    %128 = arith.addi %84, %c2_i32_175 : i32
    %129 = arith.index_cast %128 : i32 to index
    %c2_176 = arith.constant 2 : index
    %c0_177 = arith.constant 0 : index
    %130 = vector.load %arg7[%129, %c2_176, %c0_177] : memref<18x18x128xbf16, #tpu.memory_space<vmem>>, vector<16x16x128xbf16>
    %c0_178 = arith.constant 0 : index
    %c0_179 = arith.constant 0 : index
    %c256_180 = arith.constant 256 : index
    %131 = vector.load %arg8[%c0_178, %c0_179, %c256_180] : memref<16x16x384xbf16, #tpu.memory_space<vmem>>, vector<16x16x128xbf16>
    tpu.vector_store %arg8[%c0_178, %c0_179, %c256_180], %130 {strides = array<i32>} : memref<16x16x384xbf16, #tpu.memory_space<vmem>>, vector<16x16x128xbf16>,
    %c0_181 = arith.constant 0 : index
    %c0_182 = arith.constant 0 : index
    %c0_183 = arith.constant 0 : index
    %132 = vector.load %arg8[%c0_181, %c0_182, %c0_183] : memref<16x16x384xbf16, #tpu.memory_space<vmem>>, vector<16x16x384xbf16>
    %133 = vector.shape_cast %132 : vector<16x16x384xbf16> to vector<256x384xbf16>
    %c2_184 = arith.constant 2 : index
    %c0_185 = arith.constant 0 : index
    %c0_186 = arith.constant 0 : index
    %134 = vector.load %arg3[%c2_184, %c0_185, %c0_186] : memref<3x384x128xbf16, #tpu.memory_space<vmem>>, vector<1x384x128xbf16>
    %135 = vector.shape_cast %134 : vector<1x384x128xbf16> to vector<384x128xbf16>
    %cst_187 = arith.constant dense<0.000000e+00> : vector<256x128xf32>
    %136 = tpu.matmul %133, %135, %cst_187 {dimension_numbers = #tpu.dot_dimension_numbers<[1], [0], [0], [1], [0, 0, 1, 1], [], []>} : vector<256x384xbf16>, vector<384x128xbf16>, vector<256x128xf32> -> vector<256x128xf32>
    %137 = arith.addf %119, %136 : vector<256x128xf32>
    %138 = vector.broadcast %15 : vector<1x128xf32> to vector<256x128xf32>
    %139 = arith.mulf %137, %138 : vector<256x128xf32>
    %140 = vector.broadcast %16 : vector<1x128xf32> to vector<256x128xf32>
    %141 = arith.addf %139, %140 : vector<256x128xf32>
    %142 = vector.shape_cast %141 : vector<256x128xf32> to vector<16x16x128xf32>
    %c0_188 = arith.constant 0 : index
    %143 = arith.index_cast %84 : i32 to index
    %c0_189 = arith.constant 0 : index
    %c0_190 = arith.constant 0 : index
    %144 = vector.load %arg1[%c0_188, %143, %c0_189, %c0_190] : memref<1x16x16x128xbf16, #tpu.memory_space<vmem>>, vector<1x16x16x128xbf16>
    %145 = vector.shape_cast %144 : vector<1x16x16x128xbf16> to vector<16x16x128xbf16>
    %146 = arith.extf %145 : vector<16x16x128xbf16> to vector<16x16x128xf32>
    %147 = arith.addf %142, %146 : vector<16x16x128xf32>
    %cst_191 = arith.constant 0.000000e+00 : f32
    %148 = vector.broadcast %cst_191 : f32 to vector<16x16x128xf32>
    %149 = arith.maximumf %147, %148 : vector<16x16x128xf32>
    %c0_192 = arith.constant 0 : index
    %150 = arith.index_cast %84 : i32 to index
    %c0_193 = arith.constant 0 : index
    %c0_194 = arith.constant 0 : index
    %151 = vector.load %arg5[%c0_192, %150, %c0_193, %c0_194] : memref<1x16x16x128xf32, #tpu.memory_space<vmem>>, vector<1x16x16x128xf32>
    %152 = vector.shape_cast %151 : vector<1x16x16x128xf32> to vector<16x16x128xf32>
    %153 = vector.shape_cast %149 : vector<16x16x128xf32> to vector<1x16x16x128xf32>
    tpu.vector_store %arg5[%c0_192, %150, %c0_193, %c0_194], %153 {strides = array<i32>} : memref<1x16x16x128xf32, #tpu.memory_space<vmem>>, vector<1x16x16x128xf32>,
    %c1_i32_195 = arith.constant 1 : i32
    return
  }
  func.func @transform_0(%arg0: i32) -> (i32, i32, i32, i32) {
    %c0_i32 = arith.constant 0 : i32
    %c0_i32_0 = arith.constant 0 : i32
    %c0_i32_1 = arith.constant 0 : i32
    %c0_i32_2 = arith.constant 0 : i32
    return %arg0, %c0_i32, %c0_i32_0, %c0_i32_1 : i32, i32, i32, i32
  }
  func.func @transform_1(%arg0: i32) -> (i32, i32, i32) {
    %c0_i32 = arith.constant 0 : i32
    %c0_i32_0 = arith.constant 0 : i32
    %c0_i32_1 = arith.constant 0 : i32
    %c0_i32_2 = arith.constant 0 : i32
    return %c0_i32, %c0_i32_0, %c0_i32_1 : i32, i32, i32
  }
  func.func @transform_2(%arg0: i32) -> (i32, i32, i32) {
    %c0_i32 = arith.constant 0 : i32
    %c0_i32_0 = arith.constant 0 : i32
    %c0_i32_1 = arith.constant 0 : i32
    %c0_i32_2 = arith.constant 0 : i32
    return %c0_i32, %c0_i32_0, %c0_i32_1 : i32, i32, i32
  }
  func.func @transform_3(%arg0: i32) -> (i32, i32) {
    %c0_i32 = arith.constant 0 : i32
    %c0_i32_0 = arith.constant 0 : i32
    %c0_i32_1 = arith.constant 0 : i32
    return %c0_i32, %c0_i32_0 : i32, i32
  }
  func.func @transform_4(%arg0: i32) -> (i32, i32, i32, i32) {
    %c0_i32 = arith.constant 0 : i32
    %c0_i32_0 = arith.constant 0 : i32
    %c0_i32_1 = arith.constant 0 : i32
    %c0_i32_2 = arith.constant 0 : i32
    return %arg0, %c0_i32, %c0_i32_0, %c0_i32_1 : i32, i32, i32, i32
  }
}

</mosaic_0001>

<llo_original>
// kernel: basic_block.1
$region0: #{basic_block.1}
  #allocation0 [shape = 'u32[]', space=smem, size = 0x4, offset = 0x4, fixed_abs, tag = 'smem constant byte address 0x4 - core index']
  #allocation1 [shape = 'u32[144,128]{1,0:T(1,128)}', space=vmem, size = 0x12000, scoped, tag = 'internal scratch']
  #allocation2 [shape = 'bf16[18,18,128]{2,1,0:T(8,128)(2,1)}', space=vmem, size = 0x1b000, scoped, tag = 'scratch operand']
  #allocation3 [shape = 'bf16[18,18,128]{2,1,0:T(8,128)(2,1)}', space=vmem, size = 0x1b000, scoped, tag = 'scratch operand']
  #allocation4 [shape = 'bf16[16,16,384]{2,1,0:T(16,128)(2,1)}', space=vmem, size = 0x30000, scoped, tag = 'scratch operand']
  %s0 = inlined_call_operand.vmem [shape: bf16[2,16,16,128], index: 0, kind: input, shape index: {}]
  %s1 = inlined_call_operand.vmem [shape: bf16[3,384,128], index: 1, kind: input, shape index: {}]
  %s2 = inlined_call_operand.vmem [shape: bf16[3,384,128], index: 2, kind: input, shape index: {}]
  %s3 = inlined_call_operand.vmem [shape: f32[4,128], index: 3, kind: input, shape index: {}]
  %s4 = inlined_call_operand.vmem [shape: f32[2,16,16,128], index: 4, kind: output, shape index: {}]
  %s5 = sld [smem:[#allocation0]]
  $region49: #{basic_block.1} parent=0
    _
  %s7 = ssub.s32 1, %s5
  %s8 = scalar_select 0, %s7, %s5
  loop: start=0, step=1, limit=4
  $region2: #{basic_block.1} parent=0 // loop_pre_header
    _
  $region3: #{basic_block.1} parent=0 // loop_header
    %s10 = sphi 0, %s14
    %p11 = scmp.ge.s32.totalorder %s10, 4
    %s20 = sphi 0, %s22
    %s23 = sphi 0, %s20
    %s24 = sphi 0, %s23
    %s40 = sphi 0, %s24
    %s44 = sphi 0, %s44
    %s46 = sphi 0, %s44
    %s47 = sphi 0, %s46
    %s61 = sphi 0, %s47
    %s65 = sphi 0, %s65
    %s67 = sphi 0, %s65
    %s68 = sphi 0, %s67
    %s82 = sphi 0, %s68
    %s86 = sphi 0, %s86
    %s88 = sphi 0, %s86
    %s89 = sphi 0, %s88
    %s103 = sphi 0, %s89
    %s109 = sphi 0, %s111
    %s112 = sphi 0, %s109
    %s113 = sphi 0, %s112
    %s129 = sphi 0, %s113
  $region4: #{basic_block.1} parent=0 // loop_header_branch
    %13 = sbr.rel (%p11) target = $region8
  $region5: #{basic_block.1} parent=0 // loop_body
    %s15 = ssub.s32 %s10, 1
    %s16 = ssub.s32 %s10, 2
    %s17 = sadd.s32 %s10, 1
    %s18 = ssub.s32 %s10, %s17
    %p19 = scmp.eq.s32.totalorder %s18, 0
    %s21 = sadd.s32 %s20, 1
    %s22 = scalar_select %p19, %s20, %s21
    %p25 = pneg %p19
    %p26 = scmp.eq.s32.totalorder %s10, 1
    %p27 = por %p25, %p26
    %p28 = scmp.ne.s32.totalorder %s20, %s23
    %p29 = scmp.eq.s32.totalorder %s10, 0
    %p30 = por %p28, %p29
    %p31 = scmp.ne.s32.totalorder %s20, %s23
    %p32 = scmp.eq.s32.totalorder %s15, 1
    %p33 = por %p31, %p32
    %p34 = scmp.ne.s32.totalorder %s23, %s24
    %p35 = scmp.eq.s32.totalorder %s15, 0
    %p36 = por %p34, %p35
    %p37 = scmp.ne.s32.totalorder %s23, %s24
    %p38 = scmp.eq.s32.totalorder %s16, 1
    %p39 = por %p37, %p38
    %p41 = scmp.ne.s32.totalorder %s24, %s40
    %p42 = scmp.eq.s32.totalorder %s16, 0
    %p43 = por %p41, %p42
    %s45 = sadd.s32 %s44, 1
    %p48 = scmp.eq.s32.totalorder %s10, 1
    %p49 = scmp.ne.s32.totalorder %s44, %s46
    %p50 = scmp.eq.s32.totalorder %s10, 0
    %p51 = por %p49, %p50
    %p52 = scmp.ne.s32.totalorder %s44, %s46
    %p53 = scmp.eq.s32.totalorder %s15, 1
    %p54 = por %p52, %p53
    %p55 = scmp.ne.s32.totalorder %s46, %s47
    %p56 = scmp.eq.s32.totalorder %s15, 0
    %p57 = por %p55, %p56
    %p58 = scmp.ne.s32.totalorder %s46, %s47
    %p59 = scmp.eq.s32.totalorder %s16, 1
    %p60 = por %p58, %p59
    %p62 = scmp.ne.s32.totalorder %s47, %s61
    %p63 = scmp.eq.s32.totalorder %s16, 0
    %p64 = por %p62, %p63
    %s66 = sadd.s32 %s65, 1
    %p69 = scmp.eq.s32.totalorder %s10, 1
    %p70 = scmp.ne.s32.totalorder %s65, %s67
    %p71 = scmp.eq.s32.totalorder %s10, 0
    %p72 = por %p70, %p71
    %p73 = scmp.ne.s32.totalorder %s65, %s67
    %p74 = scmp.eq.s32.totalorder %s15, 1
    %p75 = por %p73, %p74
    %p76 = scmp.ne.s32.totalorder %s67, %s68
    %p77 = scmp.eq.s32.totalorder %s15, 0
    %p78 = por %p76, %p77
    %p79 = scmp.ne.s32.totalorder %s67, %s68
    %p80 = scmp.eq.s32.totalorder %s16, 1
    %p81 = por %p79, %p80
    %p83 = scmp.ne.s32.totalorder %s68, %s82
    %p84 = scmp.eq.s32.totalorder %s16, 0
    %p85 = por %p83, %p84
    %s87 = sadd.s32 %s86, 1
    %p90 = scmp.eq.s32.totalorder %s10, 1
    %p91 = scmp.ne.s32.totalorder %s86, %s88
    %p92 = scmp.eq.s32.totalorder %s10, 0
    %p93 = por %p91, %p92
    %p94 = scmp.ne.s32.totalorder %s86, %s88
    %p95 = scmp.eq.s32.totalorder %s15, 1
    %p96 = por %p94, %p95
    %p97 = scmp.ne.s32.totalorder %s88, %s89
    %p98 = scmp.eq.s32.totalorder %s15, 0
    %p99 = por %p97, %p98
    %p100 = scmp.ne.s32.totalorder %s88, %s89
    %p101 = scmp.eq.s32.totalorder %s16, 1
    %p102 = por %p100, %p101
    %p104 = scmp.ne.s32.totalorder %s89, %s103
    %p105 = scmp.eq.s32.totalorder %s16, 0
    %p106 = por %p104, %p105
    %s107 = ssub.s32 %s10, %s17
    %p108 = scmp.eq.s32.totalorder %s107, 0
    %s110 = sadd.s32 %s109, 1
    %s111 = scalar_select %p108, %s109, %s110
    %p114 = pneg %p108
    %p115 = scmp.eq.s32.totalorder %s10, 1
    %p116 = por %p114, %p115
    %p117 = scmp.ne.s32.totalorder %s109, %s112
    %p118 = scmp.eq.s32.totalorder %s10, 0
    %p119 = por %p117, %p118
    %p120 = scmp.ne.s32.totalorder %s109, %s112
    %p121 = scmp.eq.s32.totalorder %s15, 1
    %p122 = por %p120, %p121
    %p123 = scmp.ne.s32.totalorder %s112, %s113
    %p124 = scmp.eq.s32.totalorder %s15, 0
    %p125 = por %p123, %p124
    %p126 = scmp.ne.s32.totalorder %s112, %s113
    %p127 = scmp.eq.s32.totalorder %s16, 1
    %p128 = por %p126, %p127
    %p130 = scmp.ne.s32.totalorder %s113, %s129
    %p131 = scmp.eq.s32.totalorder %s16, 0
    %p132 = por %p130, %p131
    %p133 = scmp.le.s32.totalorder 1, %s10
    %p134 = scmp.lt.s32.totalorder %s10, 3
    %p135 = pnand %p133, %p134
    %p136 = pneg %p135
    // Predicated region
    $region9: #{basic_block.1} parent=5 // pred_check
      _
    $region10: #{basic_block.1} parent=5 // pred_check_branch
      %138 = sbr.rel (%p135) target = $region12
    $region11: #{basic_block.1} parent=5 // pred_region
      %s139 = ssub.s32 %s10, 1
      // Predicated region
      $region13: #{basic_block.1} parent=11 // pred_check
        %p140 = pneg %p57
      $region14: #{basic_block.1} parent=11 // pred_check_branch
        %142 = sbr.rel (%p140) target = $region16
      $region15: #{basic_block.1} parent=11 // pred_region
        _
      $region16: #{basic_block.1} parent=11 // pred_fallthru
        _
      // Predicated region
      $region17: #{basic_block.1} parent=11 // pred_check
        %p143 = pneg %p78
      $region18: #{basic_block.1} parent=11 // pred_check_branch
        %145 = sbr.rel (%p143) target = $region20
      $region19: #{basic_block.1} parent=11 // pred_region
        _
      $region20: #{basic_block.1} parent=11 // pred_fallthru
        _
      // Predicated region
      $region21: #{basic_block.1} parent=11 // pred_check
        %p146 = pneg %p99
      $region22: #{basic_block.1} parent=11 // pred_check_branch
        %148 = sbr.rel (%p146) target = $region24
      $region23: #{basic_block.1} parent=11 // pred_region
        _
      $region24: #{basic_block.1} parent=11 // pred_fallthru
        _
    $region12: #{basic_block.1} parent=5 // pred_fallthru
      _
    %p149 = scmp.lt.s32.totalorder %s10, 2
    // Predicated region
    $region25: #{basic_block.1} parent=5 // pred_check
      %p150 = pneg %p149
    $region26: #{basic_block.1} parent=5 // pred_check_branch
      %152 = sbr.rel (%p150) target = $region28
    $region27: #{basic_block.1} parent=5 // pred_region
      // Predicated region
      $region29: #{basic_block.1} parent=27 // pred_check
        %p153 = pneg %p30
      $region30: #{basic_block.1} parent=27 // pred_check_branch
        %155 = sbr.rel (%p153) target = $region32
      $region31: #{basic_block.1} parent=27 // pred_region
        %p156 = scmp.lt.s32.totalorder %s10, 1
        %s157 = scalar_select %p156, %s10, 1
        %s158 = smul.addr %s157, 32
        %s159 = smul.addr %s158, 4
        %s160 = scalar_lea.vmem %s0, %s159
      $region32: #{basic_block.1} parent=27 // pred_fallthru
        _
    $region28: #{basic_block.1} parent=5 // pred_fallthru
      _
    %p161 = scmp.le.s32.totalorder 1, %s10
    %p162 = scmp.lt.s32.totalorder %s10, 3
    %p163 = pnand %p161, %p162
    %p164 = pneg %p163
    // Predicated region
    $region33: #{basic_block.1} parent=5 // pred_check
      _
    $region34: #{basic_block.1} parent=5 // pred_check_branch
      %166 = sbr.rel (%p163) target = $region36
    $region35: #{basic_block.1} parent=5 // pred_region
      %s167 = ssub.s32 %s10, 1
      %p168 = scmp.lt.s32.totalorder %s15, 1
      %s169 = scalar_select %p168, %s15, 1
      %s170 = smul.addr %s169, 32
      %s171 = smul.addr %s170, 4
      %s172 = scalar_lea.vmem %s0, %s171
      %p173 = pneg %p36
      %p174 = pneg %p33
      %p175 = pneg %p57
      %p176 = pneg %p54
      %p177 = pneg %p78
      %p178 = pneg %p75
      %p179 = pneg %p99
      %p180 = pneg %p96
      %p181 = pneg %p125
      %p182 = pneg %p122
      %p183 = scmp.lt.s32.totalorder %s15, 1
      %s184 = scalar_select %p183, %s15, 1
      %s185 = smul.addr %s184, 32
      %s186 = smul.addr %s185, 8
      %s187 = scalar_lea.vmem %s4, %s186
      %p188 = scmp.lt.s32.totalorder %s15, 1
      %s189 = scalar_select %p188, %s15, 1
      %s190 = smul.addr %s189, 32
      %s191 = smul.addr %s190, 4
      %s192 = scalar_lea.vmem %s0, %s191
      %p193 = scmp.lt.s32.totalorder %s15, 1
      %s194 = scalar_select %p193, %s15, 1
      %s195 = smul.addr %s194, 32
      %s196 = smul.addr %s195, 8
      %s197 = scalar_lea.vmem %s4, %s196
      %199 = vst [vmem:[#allocation2] sm:$0xf] 0
      %200 = vst [vmem:[#allocation2 + $0x4] sm:$0xf] 0
      %201 = vst [vmem:[#allocation2 + $0x8] sm:$0x1] 0
      %s202 = scalar_lea.vmem [#allocation2], 204
      %203 = vst [vmem:[%s202] sm:$0xf] 0
      %204 = vst [vmem:[%s202 + $0x4] sm:$0xf] 0
      %205 = vst [vmem:[%s202 + $0x8] sm:$0x1] 0
      %s206 = scalar_lea.vmem [#allocation2], 12
      %vm207 = vcmask 1040384
      %vm208 = vsmask.f32 256
      %vm209 = vmand %vm207, %vm208
      %v210 = vld [vmem:[%s206] sm:$0x1]
      %v211 = vsel %vm209, 0, %v210
      %212 = vst [vmem:[%s206] sm:$0x1] %v211
      %v213 = vld [vmem:[%s206 + $0xc] sm:$0x1]
      %v214 = vsel %vm209, 0, %v213
      %215 = vst [vmem:[%s206 + $0xc] sm:$0x1] %v214
      %v216 = vld [vmem:[%s206 + $0x18] sm:$0x1]
      %v217 = vsel %vm209, 0, %v216
      %218 = vst [vmem:[%s206 + $0x18] sm:$0x1] %v217
      %v219 = vld [vmem:[%s206 + $0x24] sm:$0x1]
      %v220 = vsel %vm209, 0, %v219
      %221 = vst [vmem:[%s206 + $0x24] sm:$0x1] %v220
      %v222 = vld [vmem:[%s206 + $0x30] sm:$0x1]
      %v223 = vsel %vm209, 0, %v222
      %224 = vst [vmem:[%s206 + $0x30] sm:$0x1] %v223
      %v225 = vld [vmem:[%s206 + $0x3c] sm:$0x1]
      %v226 = vsel %vm209, 0, %v225
      %227 = vst [vmem:[%s206 + $0x3c] sm:$0x1] %v226
      %v228 = vld [vmem:[%s206 + $0x48] sm:$0x1]
      %v229 = vsel %vm209, 0, %v228
      %230 = vst [vmem:[%s206 + $0x48] sm:$0x1] %v229
      %v231 = vld [vmem:[%s206 + $0x54] sm:$0x1]
      %v232 = vsel %vm209, 0, %v231
      %233 = vst [vmem:[%s206 + $0x54] sm:$0x1] %v232
      %v234 = vld [vmem:[%s206 + $0x60] sm:$0x1]
      %v235 = vsel %vm209, 0, %v234
      %236 = vst [vmem:[%s206 + $0x60] sm:$0x1] %v235
      %v237 = vld [vmem:[%s206 + $0x6c] sm:$0x1]
      %v238 = vsel %vm209, 0, %v237
      %239 = vst [vmem:[%s206 + $0x6c] sm:$0x1] %v238
      %v240 = vld [vmem:[%s206 + $0x78] sm:$0x1]
      %v241 = vsel %vm209, 0, %v240
      %242 = vst [vmem:[%s206 + $0x78] sm:$0x1] %v241
      %v243 = vld [vmem:[%s206 + $0x84] sm:$0x1]
      %v244 = vsel %vm209, 0, %v243
      %245 = vst [vmem:[%s206 + $0x84] sm:$0x1] %v244
      %v246 = vld [vmem:[%s206 + $0x90] sm:$0x1]
      %v247 = vsel %vm209, 0, %v246
      %248 = vst [vmem:[%s206 + $0x90] sm:$0x1] %v247
      %v249 = vld [vmem:[%s206 + $0x9c] sm:$0x1]
      %v250 = vsel %vm209, 0, %v249
      %251 = vst [vmem:[%s206 + $0x9c] sm:$0x1] %v250
      %v252 = vld [vmem:[%s206 + $0xa8] sm:$0x1]
      %v253 = vsel %vm209, 0, %v252
      %254 = vst [vmem:[%s206 + $0xa8] sm:$0x1] %v253
      %v255 = vld [vmem:[%s206 + $0xb4] sm:$0x1]
      %v256 = vsel %vm209, 0, %v255
      %257 = vst [vmem:[%s206 + $0xb4] sm:$0x1] %v256
      %vm258 = vsmask.f32 7938
      %vm259 = vmand %vm207, %vm258
      %v260 = vld [vmem:[%s206 + $0x8] sm:$0x1]
      %v261 = vsel %vm259, 0, %v260
      %262 = vst [vmem:[%s206 + $0x8] sm:$0x1] %v261
      %v263 = vld [vmem:[%s206 + $0x14] sm:$0x1]
      %v264 = vsel %vm259, 0, %v263
      %265 = vst [vmem:[%s206 + $0x14] sm:$0x1] %v264
      %v266 = vld [vmem:[%s206 + $0x20] sm:$0x1]
      %v267 = vsel %vm259, 0, %v266
      %268 = vst [vmem:[%s206 + $0x20] sm:$0x1] %v267
      %v269 = vld [vmem:[%s206 + $0x2c] sm:$0x1]
      %v270 = vsel %vm259, 0, %v269
      %271 = vst [vmem:[%s206 + $0x2c] sm:$0x1] %v270
      %v272 = vld [vmem:[%s206 + $0x38] sm:$0x1]
      %v273 = vsel %vm259, 0, %v272
      %274 = vst [vmem:[%s206 + $0x38] sm:$0x1] %v273
      %v275 = vld [vmem:[%s206 + $0x44] sm:$0x1]
      %v276 = vsel %vm259, 0, %v275
      %277 = vst [vmem:[%s206 + $0x44] sm:$0x1] %v276
      %v278 = vld [vmem:[%s206 + $0x50] sm:$0x1]
      %v279 = vsel %vm259, 0, %v278
      %280 = vst [vmem:[%s206 + $0x50] sm:$0x1] %v279
      %v281 = vld [vmem:[%s206 + $0x5c] sm:$0x1]
      %v282 = vsel %vm259, 0, %v281
      %283 = vst [vmem:[%s206 + $0x5c] sm:$0x1] %v282
      %v284 = vld [vmem:[%s206 + $0x68] sm:$0x1]
      %v285 = vsel %vm259, 0, %v284
      %286 = vst [vmem:[%s206 + $0x68] sm:$0x1] %v285
      %v287 = vld [vmem:[%s206 + $0x74] sm:$0x1]
      %v288 = vsel %vm259, 0, %v287
      %289 = vst [vmem:[%s206 + $0x74] sm:$0x1] %v288
      %v290 = vld [vmem:[%s206 + $0x80] sm:$0x1]
      %v291 = vsel %vm259, 0, %v290
      %292 = vst [vmem:[%s206 + $0x80] sm:$0x1] %v291
      %v293 = vld [vmem:[%s206 + $0x8c] sm:$0x1]
      %v294 = vsel %vm259, 0, %v293
      %295 = vst [vmem:[%s206 + $0x8c] sm:$0x1] %v294
      %v296 = vld [vmem:[%s206 + $0x98] sm:$0x1]
      %v297 = vsel %vm259, 0, %v296
      %298 = vst [vmem:[%s206 + $0x98] sm:$0x1] %v297
      %v299 = vld [vmem:[%s206 + $0xa4] sm:$0x1]
      %v300 = vsel %vm259, 0, %v299
      %301 = vst [vmem:[%s206 + $0xa4] sm:$0x1] %v300
      %v302 = vld [vmem:[%s206 + $0xb0] sm:$0x1]
      %v303 = vsel %vm259, 0, %v302
      %304 = vst [vmem:[%s206 + $0xb0] sm:$0x1] %v303
      %v305 = vld [vmem:[%s206 + $0xbc] sm:$0x1]
      %v306 = vsel %vm259, 0, %v305
      %307 = vst [vmem:[%s206 + $0xbc] sm:$0x1] %v306
      %v308 = vld [vmem:[%s192] sm:$0xf]
      %v309 = vld [vmem:[%s192 + $0x4] sm:$0xf]
      %v310 = vld [vmem:[%s192 + $0x8] sm:$0xf]
      %v311 = vld [vmem:[%s192 + $0xc] sm:$0xf]
      %v312 = vld [vmem:[%s192 + $0x10] sm:$0xf]
      %v313 = vld [vmem:[%s192 + $0x14] sm:$0xf]
      %v314 = vld [vmem:[%s192 + $0x18] sm:$0xf]
      %v315 = vld [vmem:[%s192 + $0x1c] sm:$0xf]
      %v316 = vld [vmem:[%s192 + $0x20] sm:$0xf]
      %v317 = vld [vmem:[%s192 + $0x24] sm:$0xf]
      %v318 = vld [vmem:[%s192 + $0x28] sm:$0xf]
      %v319 = vld [vmem:[%s192 + $0x2c] sm:$0xf]
      %v320 = vld [vmem:[%s192 + $0x30] sm:$0xf]
      %v321 = vld [vmem:[%s192 + $0x34] sm:$0xf]
      %v322 = vld [vmem:[%s192 + $0x38] sm:$0xf]
      %v323 = vld [vmem:[%s192 + $0x3c] sm:$0xf]
      %v324 = vld [vmem:[%s192 + $0x40] sm:$0xf]
      %v325 = vld [vmem:[%s192 + $0x44] sm:$0xf]
      %v326 = vld [vmem:[%s192 + $0x48] sm:$0xf]
      %v327 = vld [vmem:[%s192 + $0x4c] sm:$0xf]
      %v328 = vld [vmem:[%s192 + $0x50] sm:$0xf]
      %v329 = vld [vmem:[%s192 + $0x54] sm:$0xf]
      %v330 = vld [vmem:[%s192 + $0x58] sm:$0xf]
      %v331 = vld [vmem:[%s192 + $0x5c] sm:$0xf]
      %v332 = vld [vmem:[%s192 + $0x60] sm:$0xf]
      %v333 = vld [vmem:[%s192 + $0x64] sm:$0xf]
      %v334 = vld [vmem:[%s192 + $0x68] sm:$0xf]
      %v335 = vld [vmem:[%s192 + $0x6c] sm:$0xf]
      %v336 = vld [vmem:[%s192 + $0x70] sm:$0xf]
      %v337 = vld [vmem:[%s192 + $0x74] sm:$0xf]
      %v338 = vld [vmem:[%s192 + $0x78] sm:$0xf]
      %v339 = vld [vmem:[%s192 + $0x7c] sm:$0xf]
      %vm340 = vsmask.f32 4368
      %vm341 = vmor %vm208, %vm340
      %v343 = vshrl.u32 %v308, 16
      %v345 = vrot.slane %v343, 7
      %v346 = vshll.u32 %v308, 16
      %v348 = vor.u32 %v345, %v346
      %v349 = vrot.slane %v345, 4
      %v351 = vshrl.u32 %v309, 16
      %v353 = vrot.slane %v351, 7
      %v354 = vshll.u32 %v309, 16
      %v356 = vor.u32 %v353, %v354
      %v357 = vsel %vm341, %v349, %v356
      %v358 = vrot.slane %v353, 4
      %v360 = vshrl.u32 %v310, 16
      %v362 = vrot.slane %v360, 7
      %v363 = vshll.u32 %v310, 16
      %v365 = vor.u32 %v362, %v363
      %v366 = vrot.slane %v362, 4
      %v368 = vshrl.u32 %v311, 16
      %v370 = vrot.slane %v368, 7
      %v371 = vshll.u32 %v311, 16
      %v373 = vor.u32 %v370, %v371
      %v374 = vsel %vm341, %v366, %v373
      %v375 = vrot.slane %v370, 4
      %v377 = vshrl.u32 %v312, 16
      %v379 = vrot.slane %v377, 7
      %v380 = vshll.u32 %v312, 16
      %v382 = vor.u32 %v379, %v380
      %v383 = vrot.slane %v379, 4
      %v385 = vshrl.u32 %v313, 16
      %v387 = vrot.slane %v385, 7
      %v388 = vshll.u32 %v313, 16
      %v390 = vor.u32 %v387, %v388
      %v391 = vsel %vm341, %v383, %v390
      %v392 = vrot.slane %v387, 4
      %v394 = vshrl.u32 %v314, 16
      %v396 = vrot.slane %v394, 7
      %v397 = vshll.u32 %v314, 16
      %v399 = vor.u32 %v396, %v397
      %v400 = vrot.slane %v396, 4
      %v402 = vshrl.u32 %v315, 16
      %v404 = vrot.slane %v402, 7
      %v405 = vshll.u32 %v315, 16
      %v407 = vor.u32 %v404, %v405
      %v408 = vsel %vm341, %v400, %v407
      %v409 = vrot.slane %v404, 4
      %v411 = vshrl.u32 %v316, 16
      %v413 = vrot.slane %v411, 7
      %v414 = vshll.u32 %v316, 16
      %v416 = vor.u32 %v413, %v414
      %v417 = vrot.slane %v413, 4
      %v419 = vshrl.u32 %v317, 16
      %v421 = vrot.slane %v419, 7
      %v422 = vshll.u32 %v317, 16
      %v424 = vor.u32 %v421, %v422
      %v425 = vsel %vm341, %v417, %v424
      %v426 = vrot.slane %v421, 4
      %v428 = vshrl.u32 %v318, 16
      %v430 = vrot.slane %v428, 7
      %v431 = vshll.u32 %v318, 16
      %v433 = vor.u32 %v430, %v431
      %v434 = vrot.slane %v430, 4
      %v436 = vshrl.u32 %v319, 16
      %v438 = vrot.slane %v436, 7
      %v439 = vshll.u32 %v319, 16
      %v441 = vor.u32 %v438, %v439
      %v442 = vsel %vm341, %v434, %v441
      %v443 = vrot.slane %v438, 4
      %v445 = vshrl.u32 %v320, 16
      %v447 = vrot.slane %v445, 7
      %v448 = vshll.u32 %v320, 16
      %v450 = vor.u32 %v447, %v448
      %v451 = vrot.slane %v447, 4
      %v453 = vshrl.u32 %v321, 16
      %v455 = vrot.slane %v453, 7
      %v456 = vshll.u32 %v321, 16
      %v458 = vor.u32 %v455, %v456
      %v459 = vsel %vm341, %v451, %v458
      %v460 = vrot.slane %v455, 4
      %v462 = vshrl.u32 %v322, 16
      %v464 = vrot.slane %v462, 7
      %v465 = vshll.u32 %v322, 16
      %v467 = vor.u32 %v464, %v465
      %v468 = vrot.slane %v464, 4
      %v470 = vshrl.u32 %v323, 16
      %v472 = vrot.slane %v470, 7
      %v473 = vshll.u32 %v323, 16
      %v475 = vor.u32 %v472, %v473
      %v476 = vsel %vm341, %v468, %v475
      %v477 = vrot.slane %v472, 4
      %v479 = vshrl.u32 %v324, 16
      %v481 = vrot.slane %v479, 7
      %v482 = vshll.u32 %v324, 16
      %v484 = vor.u32 %v481, %v482
      %v485 = vrot.slane %v481, 4
      %v487 = vshrl.u32 %v325, 16
      %v489 = vrot.slane %v487, 7
      %v490 = vshll.u32 %v325, 16
      %v492 = vor.u32 %v489, %v490
      %v493 = vsel %vm341, %v485, %v492
      %v494 = vrot.slane %v489, 4
      %v496 = vshrl.u32 %v326, 16
      %v498 = vrot.slane %v496, 7
      %v499 = vshll.u32 %v326, 16
      %v501 = vor.u32 %v498, %v499
      %v502 = vrot.slane %v498, 4
      %v504 = vshrl.u32 %v327, 16
      %v506 = vrot.slane %v504, 7
      %v507 = vshll.u32 %v327, 16
      %v509 = vor.u32 %v506, %v507
      %v510 = vsel %vm341, %v502, %v509
      %v511 = vrot.slane %v506, 4
      %v513 = vshrl.u32 %v328, 16
      %v515 = vrot.slane %v513, 7
      %v516 = vshll.u32 %v328, 16
      %v518 = vor.u32 %v515, %v516
      %v519 = vrot.slane %v515, 4
      %v521 = vshrl.u32 %v329, 16
      %v523 = vrot.slane %v521, 7
      %v524 = vshll.u32 %v329, 16
      %v526 = vor.u32 %v523, %v524
      %v527 = vsel %vm341, %v519, %v526
      %v528 = vrot.slane %v523, 4
      %v530 = vshrl.u32 %v330, 16
      %v532 = vrot.slane %v530, 7
      %v533 = vshll.u32 %v330, 16
      %v535 = vor.u32 %v532, %v533
      %v536 = vrot.slane %v532, 4
      %v538 = vshrl.u32 %v331, 16
      %v540 = vrot.slane %v538, 7
      %v541 = vshll.u32 %v331, 16
      %v543 = vor.u32 %v540, %v541
      %v544 = vsel %vm341, %v536, %v543
      %v545 = vrot.slane %v540, 4
      %v547 = vshrl.u32 %v332, 16
      %v549 = vrot.slane %v547, 7
      %v550 = vshll.u32 %v332, 16
      %v552 = vor.u32 %v549, %v550
      %v553 = vrot.slane %v549, 4
      %v555 = vshrl.u32 %v333, 16
      %v557 = vrot.slane %v555, 7
      %v558 = vshll.u32 %v333, 16
      %v560 = vor.u32 %v557, %v558
      %v561 = vsel %vm341, %v553, %v560
      %v562 = vrot.slane %v557, 4
      %v564 = vshrl.u32 %v334, 16
      %v566 = vrot.slane %v564, 7
      %v567 = vshll.u32 %v334, 16
      %v569 = vor.u32 %v566, %v567
      %v570 = vrot.slane %v566, 4
      %v572 = vshrl.u32 %v335, 16
      %v574 = vrot.slane %v572, 7
      %v575 = vshll.u32 %v335, 16
      %v577 = vor.u32 %v574, %v575
      %v578 = vsel %vm341, %v570, %v577
      %v579 = vrot.slane %v574, 4
      %v581 = vshrl.u32 %v336, 16
      %v583 = vrot.slane %v581, 7
      %v584 = vshll.u32 %v336, 16
      %v586 = vor.u32 %v583, %v584
      %v587 = vrot.slane %v583, 4
      %v589 = vshrl.u32 %v337, 16
      %v591 = vrot.slane %v589, 7
      %v592 = vshll.u32 %v337, 16
      %v594 = vor.u32 %v591, %v592
      %v595 = vsel %vm341, %v587, %v594
      %v596 = vrot.slane %v591, 4
      %v598 = vshrl.u32 %v338, 16
      %v600 = vrot.slane %v598, 7
      %v601 = vshll.u32 %v338, 16
      %v603 = vor.u32 %v600, %v601
      %v604 = vrot.slane %v600, 4
      %v606 = vshrl.u32 %v339, 16
      %v608 = vrot.slane %v606, 7
      %v609 = vshll.u32 %v339, 16
      %v611 = vor.u32 %v608, %v609
      %v612 = vsel %vm341, %v604, %v611
      %v613 = vrot.slane %v608, 4
      %vm662 = vcmask 1043456
      %vm663 = vmand %vm662, %vm258
      %v664 = vld [vmem:[%s206] sm:$0xf]
      %v665 = vsel %vm663, %v348, %v664
      %666 = vst [vmem:[%s206] sm:$0xf] %v665
      %667 = vst [vmem:[%s206 + $0x4] sm:$0xf] %v357
      %v668 = vld [vmem:[%s206 + $0x8] sm:$0x1]
      %v669 = vsel %vm209, %v358, %v668
      %670 = vst [vmem:[%s206 + $0x8] sm:$0x1] %v669
      %v671 = vld [vmem:[%s206 + $0xc] sm:$0xf]
      %v672 = vsel %vm663, %v365, %v671
      %673 = vst [vmem:[%s206 + $0xc] sm:$0xf] %v672
      %674 = vst [vmem:[%s206 + $0x10] sm:$0xf] %v374
      %v675 = vld [vmem:[%s206 + $0x14] sm:$0x1]
      %v676 = vsel %vm209, %v375, %v675
      %677 = vst [vmem:[%s206 + $0x14] sm:$0x1] %v676
      %v678 = vld [vmem:[%s206 + $0x18] sm:$0xf]
      %v679 = vsel %vm663, %v382, %v678
      %680 = vst [vmem:[%s206 + $0x18] sm:$0xf] %v679
      %681 = vst [vmem:[%s206 + $0x1c] sm:$0xf] %v391
      %v682 = vld [vmem:[%s206 + $0x20] sm:$0x1]
      %v683 = vsel %vm209, %v392, %v682
      %684 = vst [vmem:[%s206 + $0x20] sm:$0x1] %v683
      %v685 = vld [vmem:[%s206 + $0x24] sm:$0xf]
      %v686 = vsel %vm663, %v399, %v685
      %687 = vst [vmem:[%s206 + $0x24] sm:$0xf] %v686
      %688 = vst [vmem:[%s206 + $0x28] sm:$0xf] %v408
      %v689 = vld [vmem:[%s206 + $0x2c] sm:$0x1]
      %v690 = vsel %vm209, %v409, %v689
      %691 = vst [vmem:[%s206 + $0x2c] sm:$0x1] %v690
      %v692 = vld [vmem:[%s206 + $0x30] sm:$0xf]
      %v693 = vsel %vm663, %v416, %v692
      %694 = vst [vmem:[%s206 + $0x30] sm:$0xf] %v693
      %695 = vst [vmem:[%s206 + $0x34] sm:$0xf] %v425
      %v696 = vld [vmem:[%s206 + $0x38] sm:$0x1]
      %v697 = vsel %vm209, %v426, %v696
      %698 = vst [vmem:[%s206 + $0x38] sm:$0x1] %v697
      %v699 = vld [vmem:[%s206 + $0x3c] sm:$0xf]
      %v700 = vsel %vm663, %v433, %v699
      %701 = vst [vmem:[%s206 + $0x3c] sm:$0xf] %v700
      %702 = vst [vmem:[%s206 + $0x40] sm:$0xf] %v442
      %v703 = vld [vmem:[%s206 + $0x44] sm:$0x1]
      %v704 = vsel %vm209, %v443, %v703
      %705 = vst [vmem:[%s206 + $0x44] sm:$0x1] %v704
      %v706 = vld [vmem:[%s206 + $0x48] sm:$0xf]
      %v707 = vsel %vm663, %v450, %v706
      %708 = vst [vmem:[%s206 + $0x48] sm:$0xf] %v707
      %709 = vst [vmem:[%s206 + $0x4c] sm:$0xf] %v459
      %v710 = vld [vmem:[%s206 + $0x50] sm:$0x1]
      %v711 = vsel %vm209, %v460, %v710
      %712 = vst [vmem:[%s206 + $0x50] sm:$0x1] %v711
      %v713 = vld [vmem:[%s206 + $0x54] sm:$0xf]
      %v714 = vsel %vm663, %v467, %v713
      %715 = vst [vmem:[%s206 + $0x54] sm:$0xf] %v714
      %716 = vst [vmem:[%s206 + $0x58] sm:$0xf] %v476
      %v717 = vld [vmem:[%s206 + $0x5c] sm:$0x1]
      %v718 = vsel %vm209, %v477, %v717
      %719 = vst [vmem:[%s206 + $0x5c] sm:$0x1] %v718
      %v720 = vld [vmem:[%s206 + $0x60] sm:$0xf]
      %v721 = vsel %vm663, %v484, %v720
      %722 = vst [vmem:[%s206 + $0x60] sm:$0xf] %v721
      %723 = vst [vmem:[%s206 + $0x64] sm:$0xf] %v493
      %v724 = vld [vmem:[%s206 + $0x68] sm:$0x1]
      %v725 = vsel %vm209, %v494, %v724
      %726 = vst [vmem:[%s206 + $0x68] sm:$0x1] %v725
      %v727 = vld [vmem:[%s206 + $0x6c] sm:$0xf]
      %v728 = vsel %vm663, %v501, %v727
      %729 = vst [vmem:[%s206 + $0x6c] sm:$0xf] %v728
      %730 = vst [vmem:[%s206 + $0x70] sm:$0xf] %v510
      %v731 = vld [vmem:[%s206 + $0x74] sm:$0x1]
      %v732 = vsel %vm209, %v511, %v731
      %733 = vst [vmem:[%s206 + $0x74] sm:$0x1] %v732
      %v734 = vld [vmem:[%s206 + $0x78] sm:$0xf]
      %v735 = vsel %vm663, %v518, %v734
      %736 = vst [vmem:[%s206 + $0x78] sm:$0xf] %v735
      %737 = vst [vmem:[%s206 + $0x7c] sm:$0xf] %v527
      %v738 = vld [vmem:[%s206 + $0x80] sm:$0x1]
      %v739 = vsel %vm209, %v528, %v738
      %740 = vst [vmem:[%s206 + $0x80] sm:$0x1] %v739
      %v741 = vld [vmem:[%s206 + $0x84] sm:$0xf]
      %v742 = vsel %vm663, %v535, %v741
      %743 = vst [vmem:[%s206 + $0x84] sm:$0xf] %v742
      %744 = vst [vmem:[%s206 + $0x88] sm:$0xf] %v544
      %v745 = vld [vmem:[%s206 + $0x8c] sm:$0x1]
      %v746 = vsel %vm209, %v545, %v745
      %747 = vst [vmem:[%s206 + $0x8c] sm:$0x1] %v746
      %v748 = vld [vmem:[%s206 + $0x90] sm:$0xf]
      %v749 = vsel %vm663, %v552, %v748
      %750 = vst [vmem:[%s206 + $0x90] sm:$0xf] %v749
      %751 = vst [vmem:[%s206 + $0x94] sm:$0xf] %v561
      %v752 = vld [vmem:[%s206 + $0x98] sm:$0x1]
      %v753 = vsel %vm209, %v562, %v752
      %754 = vst [vmem:[%s206 + $0x98] sm:$0x1] %v753
      %v755 = vld [vmem:[%s206 + $0x9c] sm:$0xf]
      %v756 = vsel %vm663, %v569, %v755
      %757 = vst [vmem:[%s206 + $0x9c] sm:$0xf] %v756
      %758 = vst [vmem:[%s206 + $0xa0] sm:$0xf] %v578
      %v759 = vld [vmem:[%s206 + $0xa4] sm:$0x1]
      %v760 = vsel %vm209, %v579, %v759
      %761 = vst [vmem:[%s206 + $0xa4] sm:$0x1] %v760
      %v762 = vld [vmem:[%s206 + $0xa8] sm:$0xf]
      %v763 = vsel %vm663, %v586, %v762
      %764 = vst [vmem:[%s206 + $0xa8] sm:$0xf] %v763
      %765 = vst [vmem:[%s206 + $0xac] sm:$0xf] %v595
      %v766 = vld [vmem:[%s206 + $0xb0] sm:$0x1]
      %v767 = vsel %vm209, %v596, %v766
      %768 = vst [vmem:[%s206 + $0xb0] sm:$0x1] %v767
      %v769 = vld [vmem:[%s206 + $0xb4] sm:$0xf]
      %v770 = vsel %vm663, %v603, %v769
      %771 = vst [vmem:[%s206 + $0xb4] sm:$0xf] %v770
      %772 = vst [vmem:[%s206 + $0xb8] sm:$0xf] %v612
      %v773 = vld [vmem:[%s206 + $0xbc] sm:$0x1]
      %v774 = vsel %vm209, %v613, %v773
      %775 = vst [vmem:[%s206 + $0xbc] sm:$0x1] %v774
      %776 = vst [vmem:[#allocation3] sm:$0xf] 0
      %777 = vst [vmem:[#allocation3 + $0x4] sm:$0xf] 0
      %778 = vst [vmem:[#allocation3 + $0x8] sm:$0x1] 0
      %s779 = scalar_lea.vmem [#allocation3], 204
      %780 = vst [vmem:[%s779] sm:$0xf] 0
      %781 = vst [vmem:[%s779 + $0x4] sm:$0xf] 0
      %782 = vst [vmem:[%s779 + $0x8] sm:$0x1] 0
      %s783 = scalar_lea.vmem [#allocation3], 12
      %v784 = vld [vmem:[%s783] sm:$0x1]
      %v785 = vsel %vm209, 0, %v784
      %786 = vst [vmem:[%s783] sm:$0x1] %v785
      %v787 = vld [vmem:[%s783 + $0xc] sm:$0x1]
      %v788 = vsel %vm209, 0, %v787
      %789 = vst [vmem:[%s783 + $0xc] sm:$0x1] %v788
      %v790 = vld [vmem:[%s783 + $0x18] sm:$0x1]
      %v791 = vsel %vm209, 0, %v790
      %792 = vst [vmem:[%s783 + $0x18] sm:$0x1] %v791
      %v793 = vld [vmem:[%s783 + $0x24] sm:$0x1]
      %v794 = vsel %vm209, 0, %v793
      %795 = vst [vmem:[%s783 + $0x24] sm:$0x1] %v794
      %v796 = vld [vmem:[%s783 + $0x30] sm:$0x1]
      %v797 = vsel %vm209, 0, %v796
      %798 = vst [vmem:[%s783 + $0x30] sm:$0x1] %v797
      %v799 = vld [vmem:[%s783 + $0x3c] sm:$0x1]
      %v800 = vsel %vm209, 0, %v799
      %801 = vst [vmem:[%s783 + $0x3c] sm:$0x1] %v800
      %v802 = vld [vmem:[%s783 + $0x48] sm:$0x1]
      %v803 = vsel %vm209, 0, %v802
      %804 = vst [vmem:[%s783 + $0x48] sm:$0x1] %v803
      %v805 = vld [vmem:[%s783 + $0x54] sm:$0x1]
      %v806 = vsel %vm209, 0, %v805
      %807 = vst [vmem:[%s783 + $0x54] sm:$0x1] %v806
      %v808 = vld [vmem:[%s783 + $0x60] sm:$0x1]
      %v809 = vsel %vm209, 0, %v808
      %810 = vst [vmem:[%s783 + $0x60] sm:$0x1] %v809
      %v811 = vld [vmem:[%s783 + $0x6c] sm:$0x1]
      %v812 = vsel %vm209, 0, %v811
      %813 = vst [vmem:[%s783 + $0x6c] sm:$0x1] %v812
      %v814 = vld [vmem:[%s783 + $0x78] sm:$0x1]
      %v815 = vsel %vm209, 0, %v814
      %816 = vst [vmem:[%s783 + $0x78] sm:$0x1] %v815
      %v817 = vld [vmem:[%s783 + $0x84] sm:$0x1]
      %v818 = vsel %vm209, 0, %v817
      %819 = vst [vmem:[%s783 + $0x84] sm:$0x1] %v818
      %v820 = vld [vmem:[%s783 + $0x90] sm:$0x1]
      %v821 = vsel %vm209, 0, %v820
      %822 = vst [vmem:[%s783 + $0x90] sm:$0x1] %v821
      %v823 = vld [vmem:[%s783 + $0x9c] sm:$0x1]
      %v824 = vsel %vm209, 0, %v823
      %825 = vst [vmem:[%s783 + $0x9c] sm:$0x1] %v824
      %v826 = vld [vmem:[%s783 + $0xa8] sm:$0x1]
      %v827 = vsel %vm209, 0, %v826
      %828 = vst [vmem:[%s783 + $0xa8] sm:$0x1] %v827
      %v829 = vld [vmem:[%s783 + $0xb4] sm:$0x1]
      %v830 = vsel %vm209, 0, %v829
      %831 = vst [vmem:[%s783 + $0xb4] sm:$0x1] %v830
      %v832 = vld [vmem:[%s783 + $0x8] sm:$0x1]
      %v833 = vsel %vm259, 0, %v832
      %834 = vst [vmem:[%s783 + $0x8] sm:$0x1] %v833
      %v835 = vld [vmem:[%s783 + $0x14] sm:$0x1]
      %v836 = vsel %vm259, 0, %v835
      %837 = vst [vmem:[%s783 + $0x14] sm:$0x1] %v836
      %v838 = vld [vmem:[%s783 + $0x20] sm:$0x1]
      %v839 = vsel %vm259, 0, %v838
      %840 = vst [vmem:[%s783 + $0x20] sm:$0x1] %v839
      %v841 = vld [vmem:[%s783 + $0x2c] sm:$0x1]
      %v842 = vsel %vm259, 0, %v841
      %843 = vst [vmem:[%s783 + $0x2c] sm:$0x1] %v842
      %v844 = vld [vmem:[%s783 + $0x38] sm:$0x1]
      %v845 = vsel %vm259, 0, %v844
      %846 = vst [vmem:[%s783 + $0x38] sm:$0x1] %v845
      %v847 = vld [vmem:[%s783 + $0x44] sm:$0x1]
      %v848 = vsel %vm259, 0, %v847
      %849 = vst [vmem:[%s783 + $0x44] sm:$0x1] %v848
      %v850 = vld [vmem:[%s783 + $0x50] sm:$0x1]
      %v851 = vsel %vm259, 0, %v850
      %852 = vst [vmem:[%s783 + $0x50] sm:$0x1] %v851
      %v853 = vld [vmem:[%s783 + $0x5c] sm:$0x1]
      %v854 = vsel %vm259, 0, %v853
      %855 = vst [vmem:[%s783 + $0x5c] sm:$0x1] %v854
      %v856 = vld [vmem:[%s783 + $0x68] sm:$0x1]
      %v857 = vsel %vm259, 0, %v856
      %858 = vst [vmem:[%s783 + $0x68] sm:$0x1] %v857
      %v859 = vld [vmem:[%s783 + $0x74] sm:$0x1]
      %v860 = vsel %vm259, 0, %v859
      %861 = vst [vmem:[%s783 + $0x74] sm:$0x1] %v860
      %v862 = vld [vmem:[%s783 + $0x80] sm:$0x1]
      %v863 = vsel %vm259, 0, %v862
      %864 = vst [vmem:[%s783 + $0x80] sm:$0x1] %v863
      %v865 = vld [vmem:[%s783 + $0x8c] sm:$0x1]
      %v866 = vsel %vm259, 0, %v865
      %867 = vst [vmem:[%s783 + $0x8c] sm:$0x1] %v866
      %v868 = vld [vmem:[%s783 + $0x98] sm:$0x1]
      %v869 = vsel %vm259, 0, %v868
      %870 = vst [vmem:[%s783 + $0x98] sm:$0x1] %v869
      %v871 = vld [vmem:[%s783 + $0xa4] sm:$0x1]
      %v872 = vsel %vm259, 0, %v871
      %873 = vst [vmem:[%s783 + $0xa4] sm:$0x1] %v872
      %v874 = vld [vmem:[%s783 + $0xb0] sm:$0x1]
      %v875 = vsel %vm259, 0, %v874
      %876 = vst [vmem:[%s783 + $0xb0] sm:$0x1] %v875
      %v877 = vld [vmem:[%s783 + $0xbc] sm:$0x1]
      %v878 = vsel %vm259, 0, %v877
      %879 = vst [vmem:[%s783 + $0xbc] sm:$0x1] %v878
      %v880 = vld [vmem:[%s3] sm:$0x1]
      %v881 = vld [vmem:[%s3 + $0x1] sm:$0x1]
      %v882 = vld [vmem:[%s3 + $0x2] sm:$0x1]
      %v883 = vld [vmem:[%s3 + $0x3] sm:$0x1]
      %s884 = smul.u32 0, 3
      %s885 = smul.addr %s884, 4
      %s886 = scalar_lea.vmem [#allocation2], %s885
      %v887 = vld [vmem:[%s886] sm:$0xf]
      %v888 = vld [vmem:[%s886 + $0x4] sm:$0xf]
      %v889 = vld [vmem:[%s886 + $0xc] sm:$0xf]
      %v890 = vld [vmem:[%s886 + $0x10] sm:$0xf]
      %v891 = vld [vmem:[%s886 + $0x18] sm:$0xf]
      %v892 = vld [vmem:[%s886 + $0x1c] sm:$0xf]
      %v893 = vld [vmem:[%s886 + $0x24] sm:$0xf]
      %v894 = vld [vmem:[%s886 + $0x28] sm:$0xf]
      %v895 = vld [vmem:[%s886 + $0x30] sm:$0xf]
      %v896 = vld [vmem:[%s886 + $0x34] sm:$0xf]
      %v897 = vld [vmem:[%s886 + $0x3c] sm:$0xf]
      %v898 = vld [vmem:[%s886 + $0x40] sm:$0xf]
      %v899 = vld [vmem:[%s886 + $0x48] sm:$0xf]
      %v900 = vld [vmem:[%s886 + $0x4c] sm:$0xf]
      %v901 = vld [vmem:[%s886 + $0x54] sm:$0xf]
      %v902 = vld [vmem:[%s886 + $0x58] sm:$0xf]
      %v903 = vld [vmem:[%s886 + $0x60] sm:$0xf]
      %v904 = vld [vmem:[%s886 + $0x64] sm:$0xf]
      %v905 = vld [vmem:[%s886 + $0x6c] sm:$0xf]
      %v906 = vld [vmem:[%s886 + $0x70] sm:$0xf]
      %v907 = vld [vmem:[%s886 + $0x78] sm:$0xf]
      %v908 = vld [vmem:[%s886 + $0x7c] sm:$0xf]
      %v909 = vld [vmem:[%s886 + $0x84] sm:$0xf]
      %v910 = vld [vmem:[%s886 + $0x88] sm:$0xf]
      %v911 = vld [vmem:[%s886 + $0x90] sm:$0xf]
      %v912 = vld [vmem:[%s886 + $0x94] sm:$0xf]
      %v913 = vld [vmem:[%s886 + $0x9c] sm:$0xf]
      %v914 = vld [vmem:[%s886 + $0xa0] sm:$0xf]
      %v915 = vld [vmem:[%s886 + $0xa8] sm:$0xf]
      %v916 = vld [vmem:[%s886 + $0xac] sm:$0xf]
      %v917 = vld [vmem:[%s886 + $0xb4] sm:$0xf]
      %v918 = vld [vmem:[%s886 + $0xb8] sm:$0xf]
      %v951 = vunpack.c.l.b16 %v887
      %v952 = vunpack.c.l.b16 %v888
      %v953 = vunpack.c.l.b16 %v889
      %v954 = vunpack.c.l.b16 %v890
      %v955 = vunpack.c.l.b16 %v891
      %v956 = vunpack.c.l.b16 %v892
      %v957 = vunpack.c.l.b16 %v893
      %v958 = vunpack.c.l.b16 %v894
      %v959 = vunpack.c.l.b16 %v895
      %v960 = vunpack.c.l.b16 %v896
      %v961 = vunpack.c.l.b16 %v897
      %v962 = vunpack.c.l.b16 %v898
      %v963 = vunpack.c.l.b16 %v899
      %v964 = vunpack.c.l.b16 %v900
      %v965 = vunpack.c.l.b16 %v901
      %v966 = vunpack.c.l.b16 %v902
      %v967 = vunpack.c.l.b16 %v903
      %v968 = vunpack.c.l.b16 %v904
      %v969 = vunpack.c.l.b16 %v905
      %v970 = vunpack.c.l.b16 %v906
      %v971 = vunpack.c.l.b16 %v907
      %v972 = vunpack.c.l.b16 %v908
      %v973 = vunpack.c.l.b16 %v909
      %v974 = vunpack.c.l.b16 %v910
      %v975 = vunpack.c.l.b16 %v911
      %v976 = vunpack.c.l.b16 %v912
      %v977 = vunpack.c.l.b16 %v913
      %v978 = vunpack.c.l.b16 %v914
      %v979 = vunpack.c.l.b16 %v915
      %v980 = vunpack.c.l.b16 %v916
      %v981 = vunpack.c.l.b16 %v917
      %v982 = vunpack.c.l.b16 %v918
      %v983 = vpack.c.b16 %v952, %v951
      %v984 = vpack.c.b16 %v954, %v953
      %v985 = vpack.c.b16 %v956, %v955
      %v986 = vpack.c.b16 %v958, %v957
      %v987 = vpack.c.b16 %v960, %v959
      %v988 = vpack.c.b16 %v962, %v961
      %v989 = vpack.c.b16 %v964, %v963
      %v990 = vpack.c.b16 %v966, %v965
      %v991 = vpack.c.b16 %v968, %v967
      %v992 = vpack.c.b16 %v970, %v969
      %v993 = vpack.c.b16 %v972, %v971
      %v994 = vpack.c.b16 %v974, %v973
      %v995 = vpack.c.b16 %v976, %v975
      %v996 = vpack.c.b16 %v978, %v977
      %v997 = vpack.c.b16 %v980, %v979
      %v998 = vpack.c.b16 %v982, %v981
      %1015 = vst [vmem:[#allocation4] sm:$0xff] %v983
      %1016 = vst [vmem:[#allocation4 + $0x18] sm:$0xff] %v984
      %1017 = vst [vmem:[#allocation4 + $0x30] sm:$0xff] %v985
      %1018 = vst [vmem:[#allocation4 + $0x48] sm:$0xff] %v986
      %1019 = vst [vmem:[#allocation4 + $0x60] sm:$0xff] %v987
      %1020 = vst [vmem:[#allocation4 + $0x78] sm:$0xff] %v988
      %1021 = vst [vmem:[#allocation4 + $0x90] sm:$0xff] %v989
      %1022 = vst [vmem:[#allocation4 + $0xa8] sm:$0xff] %v990
      %1023 = vst [vmem:[#allocation4 + $0xc0] sm:$0xff] %v991
      %1024 = vst [vmem:[#allocation4 + $0xd8] sm:$0xff] %v992
      %1025 = vst [vmem:[#allocation4 + $0xf0] sm:$0xff] %v993
      %1026 = vst [vmem:[#allocation4 + $0x108] sm:$0xff] %v994
      %1027 = vst [vmem:[#allocation4 + $0x120] sm:$0xff] %v995
      %1028 = vst [vmem:[#allocation4 + $0x138] sm:$0xff] %v996
      %1029 = vst [vmem:[#allocation4 + $0x150] sm:$0xff] %v997
      %1030 = vst [vmem:[#allocation4 + $0x168] sm:$0xff] %v998
      %v1031 = vld [vmem:[%s886] sm:$0xf]
      %v1032 = vld [vmem:[%s886 + $0x4] sm:$0xf]
      %v1033 = vld [vmem:[%s886 + $0x8] sm:$0x1]
      %v1034 = vld [vmem:[%s886 + $0xc] sm:$0xf]
      %v1035 = vld [vmem:[%s886 + $0x10] sm:$0xf]
      %v1036 = vld [vmem:[%s886 + $0x14] sm:$0x1]
      %v1037 = vld [vmem:[%s886 + $0x18] sm:$0xf]
      %v1038 = vld [vmem:[%s886 + $0x1c] sm:$0xf]
      %v1039 = vld [vmem:[%s886 + $0x20] sm:$0x1]
      %v1040 = vld [vmem:[%s886 + $0x24] sm:$0xf]
      %v1041 = vld [vmem:[%s886 + $0x28] sm:$0xf]
      %v1042 = vld [vmem:[%s886 + $0x2c] sm:$0x1]
      %v1043 = vld [vmem:[%s886 + $0x30] sm:$0xf]
      %v1044 = vld [vmem:[%s886 + $0x34] sm:$0xf]
      %v1045 = vld [vmem:[%s886 + $0x38] sm:$0x1]
      %v1046 = vld [vmem:[%s886 + $0x3c] sm:$0xf]
      %v1047 = vld [vmem:[%s886 + $0x40] sm:$0xf]
      %v1048 = vld [vmem:[%s886 + $0x44] sm:$0x1]
      %v1049 = vld [vmem:[%s886 + $0x48] sm:$0xf]
      %v1050 = vld [vmem:[%s886 + $0x4c] sm:$0xf]
      %v1051 = vld [vmem:[%s886 + $0x50] sm:$0x1]
      %v1052 = vld [vmem:[%s886 + $0x54] sm:$0xf]
      %v1053 = vld [vmem:[%s886 + $0x58] sm:$0xf]
      %v1054 = vld [vmem:[%s886 + $0x5c] sm:$0x1]
      %v1055 = vld [vmem:[%s886 + $0x60] sm:$0xf]
      %v1056 = vld [vmem:[%s886 + $0x64] sm:$0xf]
      %v1057 = vld [vmem:[%s886 + $0x68] sm:$0x1]
      %v1058 = vld [vmem:[%s886 + $0x6c] sm:$0xf]
      %v1059 = vld [vmem:[%s886 + $0x70] sm:$0xf]
      %v1060 = vld [vmem:[%s886 + $0x74] sm:$0x1]
      %v1061 = vld [vmem:[%s886 + $0x78] sm:$0xf]
      %v1062 = vld [vmem:[%s886 + $0x7c] sm:$0xf]
      %v1063 = vld [vmem:[%s886 + $0x80] sm:$0x1]
      %v1064 = vld [vmem:[%s886 + $0x84] sm:$0xf]
      %v1065 = vld [vmem:[%s886 + $0x88] sm:$0xf]
      %v1066 = vld [vmem:[%s886 + $0x8c] sm:$0x1]
      %v1067 = vld [vmem:[%s886 + $0x90] sm:$0xf]
      %v1068 = vld [vmem:[%s886 + $0x94] sm:$0xf]
      %v1069 = vld [vmem:[%s886 + $0x98] sm:$0x1]
      %v1070 = vld [vmem:[%s886 + $0x9c] sm:$0xf]
      %v1071 = vld [vmem:[%s886 + $0xa0] sm:$0xf]
      %v1072 = vld [vmem:[%s886 + $0xa4] sm:$0x1]
      %v1073 = vld [vmem:[%s886 + $0xa8] sm:$0xf]
      %v1074 = vld [vmem:[%s886 + $0xac] sm:$0xf]
      %v1075 = vld [vmem:[%s886 + $0xb0] sm:$0x1]
      %v1076 = vld [vmem:[%s886 + $0xb4] sm:$0xf]
      %v1077 = vld [vmem:[%s886 + $0xb8] sm:$0xf]
      %v1078 = vld [vmem:[%s886 + $0xbc] sm:$0x1]
      %v1127 = vunpack.c.l.b16 %v1031
      %v1128 = vunpack.c.l.b16 %v1032
      %v1129 = vunpack.c.l.b16 %v1033
      %v1130 = vunpack.c.l.b16 %v1034
      %v1131 = vunpack.c.l.b16 %v1035
      %v1132 = vunpack.c.l.b16 %v1036
      %v1133 = vunpack.c.l.b16 %v1037
      %v1134 = vunpack.c.l.b16 %v1038
      %v1135 = vunpack.c.l.b16 %v1039
      %v1136 = vunpack.c.l.b16 %v1040
      %v1137 = vunpack.c.l.b16 %v1041
      %v1138 = vunpack.c.l.b16 %v1042
      %v1139 = vunpack.c.l.b16 %v1043
      %v1140 = vunpack.c.l.b16 %v1044
      %v1141 = vunpack.c.l.b16 %v1045
      %v1142 = vunpack.c.l.b16 %v1046
      %v1143 = vunpack.c.l.b16 %v1047
      %v1144 = vunpack.c.l.b16 %v1048
      %v1145 = vunpack.c.l.b16 %v1049
      %v1146 = vunpack.c.l.b16 %v1050
      %v1147 = vunpack.c.l.b16 %v1051
      %v1148 = vunpack.c.l.b16 %v1052
      %v1149 = vunpack.c.l.b16 %v1053
      %v1150 = vunpack.c.l.b16 %v1054
      %v1151 = vunpack.c.l.b16 %v1055
      %v1152 = vunpack.c.l.b16 %v1056
      %v1153 = vunpack.c.l.b16 %v1057
      %v1154 = vunpack.c.l.b16 %v1058
      %v1155 = vunpack.c.l.b16 %v1059
      %v1156 = vunpack.c.l.b16 %v1060
      %v1157 = vunpack.c.l.b16 %v1061
      %v1158 = vunpack.c.l.b16 %v1062
      %v1159 = vunpack.c.l.b16 %v1063
      %v1160 = vunpack.c.l.b16 %v1064
      %v1161 = vunpack.c.l.b16 %v1065
      %v1162 = vunpack.c.l.b16 %v1066
      %v1163 = vunpack.c.l.b16 %v1067
      %v1164 = vunpack.c.l.b16 %v1068
      %v1165 = vunpack.c.l.b16 %v1069
      %v1166 = vunpack.c.l.b16 %v1070
      %v1167 = vunpack.c.l.b16 %v1071
      %v1168 = vunpack.c.l.b16 %v1072
      %v1169 = vunpack.c.l.b16 %v1073
      %v1170 = vunpack.c.l.b16 %v1074
      %v1171 = vunpack.c.l.b16 %v1075
      %v1172 = vunpack.c.l.b16 %v1076
      %v1173 = vunpack.c.l.b16 %v1077
      %v1174 = vunpack.c.l.b16 %v1078
      %v1175 = vpack.c.b16 %v1128, %v1127
      %v1176 = vpack.c.b16 %v1129, %v1129
      %v1177 = vpack.c.b16 %v1131, %v1130
      %v1178 = vpack.c.b16 %v1132, %v1132
      %v1179 = vpack.c.b16 %v1134, %v1133
      %v1180 = vpack.c.b16 %v1135, %v1135
      %v1181 = vpack.c.b16 %v1137, %v1136
      %v1182 = vpack.c.b16 %v1138, %v1138
      %v1183 = vpack.c.b16 %v1140, %v1139
      %v1184 = vpack.c.b16 %v1141, %v1141
      %v1185 = vpack.c.b16 %v1143, %v1142
      %v1186 = vpack.c.b16 %v1144, %v1144
      %v1187 = vpack.c.b16 %v1146, %v1145
      %v1188 = vpack.c.b16 %v1147, %v1147
      %v1189 = vpack.c.b16 %v1149, %v1148
      %v1190 = vpack.c.b16 %v1150, %v1150
      %v1191 = vpack.c.b16 %v1152, %v1151
      %v1192 = vpack.c.b16 %v1153, %v1153
      %v1193 = vpack.c.b16 %v1155, %v1154
      %v1194 = vpack.c.b16 %v1156, %v1156
      %v1195 = vpack.c.b16 %v1158, %v1157
      %v1196 = vpack.c.b16 %v1159, %v1159
      %v1197 = vpack.c.b16 %v1161, %v1160
      %v1198 = vpack.c.b16 %v1162, %v1162
      %v1199 = vpack.c.b16 %v1164, %v1163
      %v1200 = vpack.c.b16 %v1165, %v1165
      %v1201 = vpack.c.b16 %v1167, %v1166
      %v1202 = vpack.c.b16 %v1168, %v1168
      %v1203 = vpack.c.b16 %v1170, %v1169
      %v1204 = vpack.c.b16 %v1171, %v1171
      %v1205 = vpack.c.b16 %v1173, %v1172
      %v1206 = vpack.c.b16 %v1174, %v1174
      %vm1207 = vsmask.f32 7424
      %v1209 = vshrl.u32 %v1175, 16
      %v1211 = vshll.u32 %v1175, 16
      %v1213 = vrot.slane %v1211, 1
      %v1214 = vor.u32 %v1209, %v1213
      %v1216 = vshll.u32 %v1176, 16
      %v1218 = vrot.slane %v1216, 1
      %v1219 = vsel %vm1207, %v1214, %v1218
      %v1221 = vshrl.u32 %v1177, 16
      %v1223 = vshll.u32 %v1177, 16
      %v1225 = vrot.slane %v1223, 1
      %v1226 = vor.u32 %v1221, %v1225
      %v1228 = vshll.u32 %v1178, 16
      %v1230 = vrot.slane %v1228, 1
      %v1231 = vsel %vm1207, %v1226, %v1230
      %v1233 = vshrl.u32 %v1179, 16
      %v1235 = vshll.u32 %v1179, 16
      %v1237 = vrot.slane %v1235, 1
      %v1238 = vor.u32 %v1233, %v1237
      %v1240 = vshll.u32 %v1180, 16
      %v1242 = vrot.slane %v1240, 1
      %v1243 = vsel %vm1207, %v1238, %v1242
      %v1245 = vshrl.u32 %v1181, 16
      %v1247 = vshll.u32 %v1181, 16
      %v1249 = vrot.slane %v1247, 1
      %v1250 = vor.u32 %v1245, %v1249
      %v1252 = vshll.u32 %v1182, 16
      %v1254 = vrot.slane %v1252, 1
      %v1255 = vsel %vm1207, %v1250, %v1254
      %v1257 = vshrl.u32 %v1183, 16
      %v1259 = vshll.u32 %v1183, 16
      %v1261 = vrot.slane %v1259, 1
      %v1262 = vor.u32 %v1257, %v1261
      %v1264 = vshll.u32 %v1184, 16
      %v1266 = vrot.slane %v1264, 1
      %v1267 = vsel %vm1207, %v1262, %v1266
      %v1269 = vshrl.u32 %v1185, 16
      %v1271 = vshll.u32 %v1185, 16
      %v1273 = vrot.slane %v1271, 1
      %v1274 = vor.u32 %v1269, %v1273
      %v1276 = vshll.u32 %v1186, 16
      %v1278 = vrot.slane %v1276, 1
      %v1279 = vsel %vm1207, %v1274, %v1278
      %v1281 = vshrl.u32 %v1187, 16
      %v1283 = vshll.u32 %v1187, 16
      %v1285 = vrot.slane %v1283, 1
      %v1286 = vor.u32 %v1281, %v1285
      %v1288 = vshll.u32 %v1188, 16
      %v1290 = vrot.slane %v1288, 1
      %v1291 = vsel %vm1207, %v1286, %v1290
      %v1293 = vshrl.u32 %v1189, 16
      %v1295 = vshll.u32 %v1189, 16
      %v1297 = vrot.slane %v1295, 1
      %v1298 = vor.u32 %v1293, %v1297
      %v1300 = vshll.u32 %v1190, 16
      %v1302 = vrot.slane %v1300, 1
      %v1303 = vsel %vm1207, %v1298, %v1302
      %v1305 = vshrl.u32 %v1191, 16
      %v1307 = vshll.u32 %v1191, 16
      %v1309 = vrot.slane %v1307, 1
      %v1310 = vor.u32 %v1305, %v1309
      %v1312 = vshll.u32 %v1192, 16
      %v1314 = vrot.slane %v1312, 1
      %v1315 = vsel %vm1207, %v1310, %v1314
      %v1317 = vshrl.u32 %v1193, 16
      %v1319 = vshll.u32 %v1193, 16
      %v1321 = vrot.slane %v1319, 1
      %v1322 = vor.u32 %v1317, %v1321
      %v1324 = vshll.u32 %v1194, 16
      %v1326 = vrot.slane %v1324, 1
      %v1327 = vsel %vm1207, %v1322, %v1326
      %v1329 = vshrl.u32 %v1195, 16
      %v1331 = vshll.u32 %v1195, 16
      %v1333 = vrot.slane %v1331, 1
      %v1334 = vor.u32 %v1329, %v1333
      %v1336 = vshll.u32 %v1196, 16
      %v1338 = vrot.slane %v1336, 1
      %v1339 = vsel %vm1207, %v1334, %v1338
      %v1341 = vshrl.u32 %v1197, 16
      %v1343 = vshll.u32 %v1197, 16
      %v1345 = vrot.slane %v1343, 1
      %v1346 = vor.u32 %v1341, %v1345
      %v1348 = vshll.u32 %v1198, 16
      %v1350 = vrot.slane %v1348, 1
      %v1351 = vsel %vm1207, %v1346, %v1350
      %v1353 = vshrl.u32 %v1199, 16
      %v1355 = vshll.u32 %v1199, 16
      %v1357 = vrot.slane %v1355, 1
      %v1358 = vor.u32 %v1353, %v1357
      %v1360 = vshll.u32 %v1200, 16
      %v1362 = vrot.slane %v1360, 1
      %v1363 = vsel %vm1207, %v1358, %v1362
      %v1365 = vshrl.u32 %v1201, 16
      %v1367 = vshll.u32 %v1201, 16
      %v1369 = vrot.slane %v1367, 1
      %v1370 = vor.u32 %v1365, %v1369
      %v1372 = vshll.u32 %v1202, 16
      %v1374 = vrot.slane %v1372, 1
      %v1375 = vsel %vm1207, %v1370, %v1374
      %v1377 = vshrl.u32 %v1203, 16
      %v1379 = vshll.u32 %v1203, 16
      %v1381 = vrot.slane %v1379, 1
      %v1382 = vor.u32 %v1377, %v1381
      %v1384 = vshll.u32 %v1204, 16
      %v1386 = vrot.slane %v1384, 1
      %v1387 = vsel %vm1207, %v1382, %v1386
      %v1389 = vshrl.u32 %v1205, 16
      %v1391 = vshll.u32 %v1205, 16
      %v1393 = vrot.slane %v1391, 1
      %v1394 = vor.u32 %v1389, %v1393
      %v1396 = vshll.u32 %v1206, 16
      %v1398 = vrot.slane %v1396, 1
      %v1399 = vsel %vm1207, %v1394, %v1398
      %1416 = vst [vmem:[#allocation4 + $0x8] sm:$0xff] %v1219
      %1417 = vst [vmem:[#allocation4 + $0x20] sm:$0xff] %v1231
      %1418 = vst [vmem:[#allocation4 + $0x38] sm:$0xff] %v1243
      %1419 = vst [vmem:[#allocation4 + $0x50] sm:$0xff] %v1255
      %1420 = vst [vmem:[#allocation4 + $0x68] sm:$0xff] %v1267
      %1421 = vst [vmem:[#allocation4 + $0x80] sm:$0xff] %v1279
      %1422 = vst [vmem:[#allocation4 + $0x98] sm:$0xff] %v1291
      %1423 = vst [vmem:[#allocation4 + $0xb0] sm:$0xff] %v1303
      %1424 = vst [vmem:[#allocation4 + $0xc8] sm:$0xff] %v1315
      %1425 = vst [vmem:[#allocation4 + $0xe0] sm:$0xff] %v1327
      %1426 = vst [vmem:[#allocation4 + $0xf8] sm:$0xff] %v1339
      %1427 = vst [vmem:[#allocation4 + $0x110] sm:$0xff] %v1351
      %1428 = vst [vmem:[#allocation4 + $0x128] sm:$0xff] %v1363
      %1429 = vst [vmem:[#allocation4 + $0x140] sm:$0xff] %v1375
      %1430 = vst [vmem:[#allocation4 + $0x158] sm:$0xff] %v1387
      %1431 = vst [vmem:[#allocation4 + $0x170] sm:$0xff] %v1399
      %v1432 = vld [vmem:[%s886] sm:$0xe]
      %v1433 = vld [vmem:[%s886 + $0x4] sm:$0xf]
      %v1434 = vld [vmem:[%s886 + $0x8] sm:$0x1]
      %v1435 = vld [vmem:[%s886 + $0xc] sm:$0xe]
      %v1436 = vld [vmem:[%s886 + $0x10] sm:$0xf]
      %v1437 = vld [vmem:[%s886 + $0x14] sm:$0x1]
      %v1438 = vld [vmem:[%s886 + $0x18] sm:$0xe]
      %v1439 = vld [vmem:[%s886 + $0x1c] sm:$0xf]
      %v1440 = vld [vmem:[%s886 + $0x20] sm:$0x1]
      %v1441 = vld [vmem:[%s886 + $0x24] sm:$0xe]
      %v1442 = vld [vmem:[%s886 + $0x28] sm:$0xf]
      %v1443 = vld [vmem:[%s886 + $0x2c] sm:$0x1]
      %v1444 = vld [vmem:[%s886 + $0x30] sm:$0xe]
      %v1445 = vld [vmem:[%s886 + $0x34] sm:$0xf]
      %v1446 = vld [vmem:[%s886 + $0x38] sm:$0x1]
      %v1447 = vld [vmem:[%s886 + $0x3c] sm:$0xe]
      %v1448 = vld [vmem:[%s886 + $0x40] sm:$0xf]
      %v1449 = vld [vmem:[%s886 + $0x44] sm:$0x1]
      %v1450 = vld [vmem:[%s886 + $0x48] sm:$0xe]
      %v1451 = vld [vmem:[%s886 + $0x4c] sm:$0xf]
      %v1452 = vld [vmem:[%s886 + $0x50] sm:$0x1]
      %v1453 = vld [vmem:[%s886 + $0x54] sm:$0xe]
      %v1454 = vld [vmem:[%s886 + $0x58] sm:$0xf]
      %v1455 = vld [vmem:[%s886 + $0x5c] sm:$0x1]
      %v1456 = vld [vmem:[%s886 + $0x60] sm:$0xe]
      %v1457 = vld [vmem:[%s886 + $0x64] sm:$0xf]
      %v1458 = vld [vmem:[%s886 + $0x68] sm:$0x1]
      %v1459 = vld [vmem:[%s886 + $0x6c] sm:$0xe]
      %v1460 = vld [vmem:[%s886 + $0x70] sm:$0xf]
      %v1461 = vld [vmem:[%s886 + $0x74] sm:$0x1]
      %v1462 = vld [vmem:[%s886 + $0x78] sm:$0xe]
      %v1463 = vld [vmem:[%s886 + $0x7c] sm:$0xf]
      %v1464 = vld [vmem:[%s886 + $0x80] sm:$0x1]
      %v1465 = vld [vmem:[%s886 + $0x84] sm:$0xe]
      %v1466 = vld [vmem:[%s886 + $0x88] sm:$0xf]
      %v1467 = vld [vmem:[%s886 + $0x8c] sm:$0x1]
      %v1468 = vld [vmem:[%s886 + $0x90] sm:$0xe]
      %v1469 = vld [vmem:[%s886 + $0x94] sm:$0xf]
      %v1470 = vld [vmem:[%s886 + $0x98] sm:$0x1]
      %v1471 = vld [vmem:[%s886 + $0x9c] sm:$0xe]
      %v1472 = vld [vmem:[%s886 + $0xa0] sm:$0xf]
      %v1473 = vld [vmem:[%s886 + $0xa4] sm:$0x1]
      %v1474 = vld [vmem:[%s886 + $0xa8] sm:$0xe]
      %v1475 = vld [vmem:[%s886 + $0xac] sm:$0xf]
      %v1476 = vld [vmem:[%s886 + $0xb0] sm:$0x1]
      %v1477 = vld [vmem:[%s886 + $0xb4] sm:$0xe]
      %v1478 = vld [vmem:[%s886 + $0xb8] sm:$0xf]
      %v1479 = vld [vmem:[%s886 + $0xbc] sm:$0x1]
      %v1528 = vunpack.c.l.b16 %v1432
      %v1529 = vunpack.c.l.b16 %v1433
      %v1530 = vunpack.c.l.b16 %v1434
      %v1531 = vunpack.c.l.b16 %v1435
      %v1532 = vunpack.c.l.b16 %v1436
      %v1533 = vunpack.c.l.b16 %v1437
      %v1534 = vunpack.c.l.b16 %v1438
      %v1535 = vunpack.c.l.b16 %v1439
      %v1536 = vunpack.c.l.b16 %v1440
      %v1537 = vunpack.c.l.b16 %v1441
      %v1538 = vunpack.c.l.b16 %v1442
      %v1539 = vunpack.c.l.b16 %v1443
      %v1540 = vunpack.c.l.b16 %v1444
      %v1541 = vunpack.c.l.b16 %v1445
      %v1542 = vunpack.c.l.b16 %v1446
      %v1543 = vunpack.c.l.b16 %v1447
      %v1544 = vunpack.c.l.b16 %v1448
      %v1545 = vunpack.c.l.b16 %v1449
      %v1546 = vunpack.c.l.b16 %v1450
      %v1547 = vunpack.c.l.b16 %v1451
      %v1548 = vunpack.c.l.b16 %v1452
      %v1549 = vunpack.c.l.b16 %v1453
      %v1550 = vunpack.c.l.b16 %v1454
      %v1551 = vunpack.c.l.b16 %v1455
      %v1552 = vunpack.c.l.b16 %v1456
      %v1553 = vunpack.c.l.b16 %v1457
      %v1554 = vunpack.c.l.b16 %v1458
      %v1555 = vunpack.c.l.b16 %v1459
      %v1556 = vunpack.c.l.b16 %v1460
      %v1557 = vunpack.c.l.b16 %v1461
      %v1558 = vunpack.c.l.b16 %v1462
      %v1559 = vunpack.c.l.b16 %v1463
      %v1560 = vunpack.c.l.b16 %v1464
      %v1561 = vunpack.c.l.b16 %v1465
      %v1562 = vunpack.c.l.b16 %v1466
      %v1563 = vunpack.c.l.b16 %v1467
      %v1564 = vunpack.c.l.b16 %v1468
      %v1565 = vunpack.c.l.b16 %v1469
      %v1566 = vunpack.c.l.b16 %v1470
      %v1567 = vunpack.c.l.b16 %v1471
      %v1568 = vunpack.c.l.b16 %v1472
      %v1569 = vunpack.c.l.b16 %v1473
      %v1570 = vunpack.c.l.b16 %v1474
      %v1571 = vunpack.c.l.b16 %v1475
      %v1572 = vunpack.c.l.b16 %v1476
      %v1573 = vunpack.c.l.b16 %v1477
      %v1574 = vunpack.c.l.b16 %v1478
      %v1575 = vunpack.c.l.b16 %v1479
      %v1576 = vpack.c.b16 %v1529, %v1528
      %v1577 = vpack.c.b16 %v1530, %v1530
      %v1578 = vpack.c.b16 %v1532, %v1531
      %v1579 = vpack.c.b16 %v1533, %v1533
      %v1580 = vpack.c.b16 %v1535, %v1534
      %v1581 = vpack.c.b16 %v1536, %v1536
      %v1582 = vpack.c.b16 %v1538, %v1537
      %v1583 = vpack.c.b16 %v1539, %v1539
      %v1584 = vpack.c.b16 %v1541, %v1540
      %v1585 = vpack.c.b16 %v1542, %v1542
      %v1586 = vpack.c.b16 %v1544, %v1543
      %v1587 = vpack.c.b16 %v1545, %v1545
      %v1588 = vpack.c.b16 %v1547, %v1546
      %v1589 = vpack.c.b16 %v1548, %v1548
      %v1590 = vpack.c.b16 %v1550, %v1549
      %v1591 = vpack.c.b16 %v1551, %v1551
      %v1592 = vpack.c.b16 %v1553, %v1552
      %v1593 = vpack.c.b16 %v1554, %v1554
      %v1594 = vpack.c.b16 %v1556, %v1555
      %v1595 = vpack.c.b16 %v1557, %v1557
      %v1596 = vpack.c.b16 %v1559, %v1558
      %v1597 = vpack.c.b16 %v1560, %v1560
      %v1598 = vpack.c.b16 %v1562, %v1561
      %v1599 = vpack.c.b16 %v1563, %v1563
      %v1600 = vpack.c.b16 %v1565, %v1564
      %v1601 = vpack.c.b16 %v1566, %v1566
      %v1602 = vpack.c.b16 %v1568, %v1567
      %v1603 = vpack.c.b16 %v1569, %v1569
      %v1604 = vpack.c.b16 %v1571, %v1570
      %v1605 = vpack.c.b16 %v1572, %v1572
      %v1606 = vpack.c.b16 %v1574, %v1573
      %v1607 = vpack.c.b16 %v1575, %v1575
      %vm1608 = vcmask 1046528
      %v1609 = vrot.slane %v1576, 1
      %v1610 = vrot.slane %v1577, 1
      %v1611 = vsel %vm1608, %v1609, %v1610
      %v1612 = vrot.slane %v1578, 1
      %v1613 = vrot.slane %v1579, 1
      %v1614 = vsel %vm1608, %v1612, %v1613
      %v1615 = vrot.slane %v1580, 1
      %v1616 = vrot.slane %v1581, 1
      %v1617 = vsel %vm1608, %v1615, %v1616
      %v1618 = vrot.slane %v1582, 1
      %v1619 = vrot.slane %v1583, 1
      %v1620 = vsel %vm1608, %v1618, %v1619
      %v1621 = vrot.slane %v1584, 1
      %v1622 = vrot.slane %v1585, 1
      %v1623 = vsel %vm1608, %v1621, %v1622
      %v1624 = vrot.slane %v1586, 1
      %v1625 = vrot.slane %v1587, 1
      %v1626 = vsel %vm1608, %v1624, %v1625
      %v1627 = vrot.slane %v1588, 1
      %v1628 = vrot.slane %v1589, 1
      %v1629 = vsel %vm1608, %v1627, %v1628
      %v1630 = vrot.slane %v1590, 1
      %v1631 = vrot.slane %v1591, 1
      %v1632 = vsel %vm1608, %v1630, %v1631
      %v1633 = vrot.slane %v1592, 1
      %v1634 = vrot.slane %v1593, 1
      %v1635 = vsel %vm1608, %v1633, %v1634
      %v1636 = vrot.slane %v1594, 1
      %v1637 = vrot.slane %v1595, 1
      %v1638 = vsel %vm1608, %v1636, %v1637
      %v1639 = vrot.slane %v1596, 1
      %v1640 = vrot.slane %v1597, 1
      %v1641 = vsel %vm1608, %v1639, %v1640
      %v1642 = vrot.slane %v1598, 1
      %v1643 = vrot.slane %v1599, 1
      %v1644 = vsel %vm1608, %v1642, %v1643
      %v1645 = vrot.slane %v1600, 1
      %v1646 = vrot.slane %v1601, 1
      %v1647 = vsel %vm1608, %v1645, %v1646
      %v1648 = vrot.slane %v1602, 1
      %v1649 = vrot.slane %v1603, 1
      %v1650 = vsel %vm1608, %v1648, %v1649
      %v1651 = vrot.slane %v1604, 1
      %v1652 = vrot.slane %v1605, 1
      %v1653 = vsel %vm1608, %v1651, %v1652
      %v1654 = vrot.slane %v1606, 1
      %v1655 = vrot.slane %v1607, 1
      %v1656 = vsel %vm1608, %v1654, %v1655
      %1673 = vst [vmem:[#allocation4 + $0x10] sm:$0xff] %v1611
      %1674 = vst [vmem:[#allocation4 + $0x28] sm:$0xff] %v1614
      %1675 = vst [vmem:[#allocation4 + $0x40] sm:$0xff] %v1617
      %1676 = vst [vmem:[#allocation4 + $0x58] sm:$0xff] %v1620
      %1677 = vst [vmem:[#allocation4 + $0x70] sm:$0xff] %v1623
      %1678 = vst [vmem:[#allocation4 + $0x88] sm:$0xff] %v1626
      %1679 = vst [vmem:[#allocation4 + $0xa0] sm:$0xff] %v1629
      %1680 = vst [vmem:[#allocation4 + $0xb8] sm:$0xff] %v1632
      %1681 = vst [vmem:[#allocation4 + $0xd0] sm:$0xff] %v1635
      %1682 = vst [vmem:[#allocation4 + $0xe8] sm:$0xff] %v1638
      %1683 = vst [vmem:[#allocation4 + $0x100] sm:$0xff] %v1641
      %1684 = vst [vmem:[#allocation4 + $0x118] sm:$0xff] %v1644
      %1685 = vst [vmem:[#allocation4 + $0x130] sm:$0xff] %v1647
      %1686 = vst [vmem:[#allocation4 + $0x148] sm:$0xff] %v1650
      %1687 = vst [vmem:[#allocation4 + $0x160] sm:$0xff] %v1653
      %1688 = vst [vmem:[#allocation4 + $0x178] sm:$0xff] %v1656
      %v1689 = vld [vmem:[#allocation4] sm:$0xff]
      %v1690 = vld [vmem:[#allocation4 + $0x8] sm:$0xff]
      %v1691 = vld [vmem:[#allocation4 + $0x10] sm:$0xff]
      %v1692 = vld [vmem:[#allocation4 + $0x18] sm:$0xff]
      %v1693 = vld [vmem:[#allocation4 + $0x20] sm:$0xff]
      %v1694 = vld [vmem:[#allocation4 + $0x28] sm:$0xff]
      %v1695 = vld [vmem:[#allocation4 + $0x30] sm:$0xff]
      %v1696 = vld [vmem:[#allocation4 + $0x38] sm:$0xff]
      %v1697 = vld [vmem:[#allocation4 + $0x40] sm:$0xff]
      %v1698 = vld [vmem:[#allocation4 + $0x48] sm:$0xff]
      %v1699 = vld [vmem:[#allocation4 + $0x50] sm:$0xff]
      %v1700 = vld [vmem:[#allocation4 + $0x58] sm:$0xff]
      %v1701 = vld [vmem:[#allocation4 + $0x60] sm:$0xff]
      %v1702 = vld [vmem:[#allocation4 + $0x68] sm:$0xff]
      %v1703 = vld [vmem:[#allocation4 + $0x70] sm:$0xff]
      %v1704 = vld [vmem:[#allocation4 + $0x78] sm:$0xff]
      %v1705 = vld [vmem:[#allocation4 + $0x80] sm:$0xff]
      %v1706 = vld [vmem:[#allocation4 + $0x88] sm:$0xff]
      %v1707 = vld [vmem:[#allocation4 + $0x90] sm:$0xff]
      %v1708 = vld [vmem:[#allocation4 + $0x98] sm:$0xff]
      %v1709 = vld [vmem:[#allocation4 + $0xa0] sm:$0xff]
      %v1710 = vld [vmem:[#allocation4 + $0xa8] sm:$0xff]
      %v1711 = vld [vmem:[#allocation4 + $0xb0] sm:$0xff]
      %v1712 = vld [vmem:[#allocation4 + $0xb8] sm:$0xff]
      %v1713 = vld [vmem:[#allocation4 + $0xc0] sm:$0xff]
      %v1714 = vld [vmem:[#allocation4 + $0xc8] sm:$0xff]
      %v1715 = vld [vmem:[#allocation4 + $0xd0] sm:$0xff]
      %v1716 = vld [vmem:[#allocation4 + $0xd8] sm:$0xff]
      %v1717 = vld [vmem:[#allocation4 + $0xe0] sm:$0xff]
      %v1718 = vld [vmem:[#allocation4 + $0xe8] sm:$0xff]
      %v1719 = vld [vmem:[#allocation4 + $0xf0] sm:$0xff]
      %v1720 = vld [vmem:[#allocation4 + $0xf8] sm:$0xff]
      %v1721 = vld [vmem:[#allocation4 + $0x100] sm:$0xff]
      %v1722 = vld [vmem:[#allocation4 + $0x108] sm:$0xff]
      %v1723 = vld [vmem:[#allocation4 + $0x110] sm:$0xff]
      %v1724 = vld [vmem:[#allocation4 + $0x118] sm:$0xff]
      %v1725 = vld [vmem:[#allocation4 + $0x120] sm:$0xff]
      %v1726 = vld [vmem:[#allocation4 + $0x128] sm:$0xff]
      %v1727 = vld [vmem:[#allocation4 + $0x130] sm:$0xff]
      %v1728 = vld [vmem:[#allocation4 + $0x138] sm:$0xff]
      %v1729 = vld [vmem:[#allocation4 + $0x140] sm:$0xff]
      %v1730 = vld [vmem:[#allocation4 + $0x148] sm:$0xff]
      %v1731 = vld [vmem:[#allocation4 + $0x150] sm:$0xff]
      %v1732 = vld [vmem:[#allocation4 + $0x158] sm:$0xff]
      %v1733 = vld [vmem:[#allocation4 + $0x160] sm:$0xff]
      %v1734 = vld [vmem:[#allocation4 + $0x168] sm:$0xff]
      %v1735 = vld [vmem:[#allocation4 + $0x170] sm:$0xff]
      %v1736 = vld [vmem:[#allocation4 + $0x178] sm:$0xff]
      %v1737 = vld [vmem:[%s1] sm:$0xf]
      %v1738 = vld [vmem:[%s1 + $0x4] sm:$0xf]
      %v1739 = vld [vmem:[%s1 + $0x8] sm:$0xf]
      %v1740 = vld [vmem:[%s1 + $0xc] sm:$0xf]
      %v1741 = vld [vmem:[%s1 + $0x10] sm:$0xf]
      %v1742 = vld [vmem:[%s1 + $0x14] sm:$0xf]
      %v1743 = vld [vmem:[%s1 + $0x18] sm:$0xf]
      %v1744 = vld [vmem:[%s1 + $0x1c] sm:$0xf]
      %v1745 = vld [vmem:[%s1 + $0x20] sm:$0xf]
      %v1746 = vld [vmem:[%s1 + $0x24] sm:$0xf]
      %v1747 = vld [vmem:[%s1 + $0x28] sm:$0xf]
      %v1748 = vld [vmem:[%s1 + $0x2c] sm:$0xf]
      %v1749 = vld [vmem:[%s1 + $0x30] sm:$0xf]
      %v1750 = vld [vmem:[%s1 + $0x34] sm:$0xf]
      %v1751 = vld [vmem:[%s1 + $0x38] sm:$0xf]
      %v1752 = vld [vmem:[%s1 + $0x3c] sm:$0xf]
      %v1753 = vld [vmem:[%s1 + $0x40] sm:$0xf]
      %v1754 = vld [vmem:[%s1 + $0x44] sm:$0xf]
      %v1755 = vld [vmem:[%s1 + $0x48] sm:$0xf]
      %v1756 = vld [vmem:[%s1 + $0x4c] sm:$0xf]
      %v1757 = vld [vmem:[%s1 + $0x50] sm:$0xf]
      %v1758 = vld [vmem:[%s1 + $0x54] sm:$0xf]
      %v1759 = vld [vmem:[%s1 + $0x58] sm:$0xf]
      %v1760 = vld [vmem:[%s1 + $0x5c] sm:$0xf]
      %v1761 = vld [vmem:[%s1 + $0x60] sm:$0xf]
      %v1762 = vld [vmem:[%s1 + $0x64] sm:$0xf]
      %v1763 = vld [vmem:[%s1 + $0x68] sm:$0xf]
      %v1764 = vld [vmem:[%s1 + $0x6c] sm:$0xf]
      %v1765 = vld [vmem:[%s1 + $0x70] sm:$0xf]
      %v1766 = vld [vmem:[%s1 + $0x74] sm:$0xf]
      %v1767 = vld [vmem:[%s1 + $0x78] sm:$0xf]
      %v1768 = vld [vmem:[%s1 + $0x7c] sm:$0xf]
      %v1769 = vld [vmem:[%s1 + $0x80] sm:$0xf]
      %v1770 = vld [vmem:[%s1 + $0x84] sm:$0xf]
      %v1771 = vld [vmem:[%s1 + $0x88] sm:$0xf]
      %v1772 = vld [vmem:[%s1 + $0x8c] sm:$0xf]
      %v1773 = vld [vmem:[%s1 + $0x90] sm:$0xf]
      %v1774 = vld [vmem:[%s1 + $0x94] sm:$0xf]
      %v1775 = vld [vmem:[%s1 + $0x98] sm:$0xf]
      %v1776 = vld [vmem:[%s1 + $0x9c] sm:$0xf]
      %v1777 = vld [vmem:[%s1 + $0xa0] sm:$0xf]
      %v1778 = vld [vmem:[%s1 + $0xa4] sm:$0xf]
      %v1779 = vld [vmem:[%s1 + $0xa8] sm:$0xf]
      %v1780 = vld [vmem:[%s1 + $0xac] sm:$0xf]
      %v1781 = vld [vmem:[%s1 + $0xb0] sm:$0xf]
      %v1782 = vld [vmem:[%s1 + $0xb4] sm:$0xf]
      %v1783 = vld [vmem:[%s1 + $0xb8] sm:$0xf]
      %v1784 = vld [vmem:[%s1 + $0xbc] sm:$0xf]
      %s1785 = sadd.s32 0, 1
      %s1786 = smul.u32 %s1785, 3
      %s1787 = smul.addr %s1786, 4
      %s1788 = scalar_lea.vmem [#allocation2], %s1787
      %v1789 = vld [vmem:[%s1788] sm:$0xf]
      %v1790 = vld [vmem:[%s1788 + $0x4] sm:$0xf]
      %v1791 = vld [vmem:[%s1788 + $0xc] sm:$0xf]
      %v1792 = vld [vmem:[%s1788 + $0x10] sm:$0xf]
      %v1793 = vld [vmem:[%s1788 + $0x18] sm:$0xf]
      %v1794 = vld [vmem:[%s1788 + $0x1c] sm:$0xf]
      %v1795 = vld [vmem:[%s1788 + $0x24] sm:$0xf]
      %v1796 = vld [vmem:[%s1788 + $0x28] sm:$0xf]
      %v1797 = vld [vmem:[%s1788 + $0x30] sm:$0xf]
      %v1798 = vld [vmem:[%s1788 + $0x34] sm:$0xf]
      %v1799 = vld [vmem:[%s1788 + $0x3c] sm:$0xf]
      %v1800 = vld [vmem:[%s1788 + $0x40] sm:$0xf]
      %v1801 = vld [vmem:[%s1788 + $0x48] sm:$0xf]
      %v1802 = vld [vmem:[%s1788 + $0x4c] sm:$0xf]
      %v1803 = vld [vmem:[%s1788 + $0x54] sm:$0xf]
      %v1804 = vld [vmem:[%s1788 + $0x58] sm:$0xf]
      %v1805 = vld [vmem:[%s1788 + $0x60] sm:$0xf]
      %v1806 = vld [vmem:[%s1788 + $0x64] sm:$0xf]
      %v1807 = vld [vmem:[%s1788 + $0x6c] sm:$0xf]
      %v1808 = vld [vmem:[%s1788 + $0x70] sm:$0xf]
      %v1809 = vld [vmem:[%s1788 + $0x78] sm:$0xf]
      %v1810 = vld [vmem:[%s1788 + $0x7c] sm:$0xf]
      %v1811 = vld [vmem:[%s1788 + $0x84] sm:$0xf]
      %v1812 = vld [vmem:[%s1788 + $0x88] sm:$0xf]
      %v1813 = vld [vmem:[%s1788 + $0x90] sm:$0xf]
      %v1814 = vld [vmem:[%s1788 + $0x94] sm:$0xf]
      %v1815 = vld [vmem:[%s1788 + $0x9c] sm:$0xf]
      %v1816 = vld [vmem:[%s1788 + $0xa0] sm:$0xf]
      %v1817 = vld [vmem:[%s1788 + $0xa8] sm:$0xf]
      %v1818 = vld [vmem:[%s1788 + $0xac] sm:$0xf]
      %v1819 = vld [vmem:[%s1788 + $0xb4] sm:$0xf]
      %v1820 = vld [vmem:[%s1788 + $0xb8] sm:$0xf]
      %v1853 = vunpack.c.l.b16 %v1789
      %v1854 = vunpack.c.l.b16 %v1790
      %v1855 = vunpack.c.l.b16 %v1791
      %v1856 = vunpack.c.l.b16 %v1792
      %v1857 = vunpack.c.l.b16 %v1793
      %v1858 = vunpack.c.l.b16 %v1794
      %v1859 = vunpack.c.l.b16 %v1795
      %v1860 = vunpack.c.l.b16 %v1796
      %v1861 = vunpack.c.l.b16 %v1797
      %v1862 = vunpack.c.l.b16 %v1798
      %v1863 = vunpack.c.l.b16 %v1799
      %v1864 = vunpack.c.l.b16 %v1800
      %v1865 = vunpack.c.l.b16 %v1801
      %v1866 = vunpack.c.l.b16 %v1802
      %v1867 = vunpack.c.l.b16 %v1803
      %v1868 = vunpack.c.l.b16 %v1804
      %v1869 = vunpack.c.l.b16 %v1805
      %v1870 = vunpack.c.l.b16 %v1806
      %v1871 = vunpack.c.l.b16 %v1807
      %v1872 = vunpack.c.l.b16 %v1808
      %v1873 = vunpack.c.l.b16 %v1809
      %v1874 = vunpack.c.l.b16 %v1810
      %v1875 = vunpack.c.l.b16 %v1811
      %v1876 = vunpack.c.l.b16 %v1812
      %v1877 = vunpack.c.l.b16 %v1813
      %v1878 = vunpack.c.l.b16 %v1814
      %v1879 = vunpack.c.l.b16 %v1815
      %v1880 = vunpack.c.l.b16 %v1816
      %v1881 = vunpack.c.l.b16 %v1817
      %v1882 = vunpack.c.l.b16 %v1818
      %v1883 = vunpack.c.l.b16 %v1819
      %v1884 = vunpack.c.l.b16 %v1820
      %v1885 = vpack.c.b16 %v1854, %v1853
      %v1886 = vpack.c.b16 %v1856, %v1855
      %v1887 = vpack.c.b16 %v1858, %v1857
      %v1888 = vpack.c.b16 %v1860, %v1859
      %v1889 = vpack.c.b16 %v1862, %v1861
      %v1890 = vpack.c.b16 %v1864, %v1863
      %v1891 = vpack.c.b16 %v1866, %v1865
      %v1892 = vpack.c.b16 %v1868, %v1867
      %v1893 = vpack.c.b16 %v1870, %v1869
      %v1894 = vpack.c.b16 %v1872, %v1871
      %v1895 = vpack.c.b16 %v1874, %v1873
      %v1896 = vpack.c.b16 %v1876, %v1875
      %v1897 = vpack.c.b16 %v1878, %v1877
      %v1898 = vpack.c.b16 %v1880, %v1879
      %v1899 = vpack.c.b16 %v1882, %v1881
      %v1900 = vpack.c.b16 %v1884, %v1883
      %1917 = vst [vmem:[#allocation4] sm:$0xff] %v1885
      %1918 = vst [vmem:[#allocation4 + $0x18] sm:$0xff] %v1886
      %1919 = vst [vmem:[#allocation4 + $0x30] sm:$0xff] %v1887
      %1920 = vst [vmem:[#allocation4 + $0x48] sm:$0xff] %v1888
      %1921 = vst [vmem:[#allocation4 + $0x60] sm:$0xff] %v1889
      %1922 = vst [vmem:[#allocation4 + $0x78] sm:$0xff] %v1890
      %1923 = vst [vmem:[#allocation4 + $0x90] sm:$0xff] %v1891
      %1924 = vst [vmem:[#allocation4 + $0xa8] sm:$0xff] %v1892
      %1925 = vst [vmem:[#allocation4 + $0xc0] sm:$0xff] %v1893
      %1926 = vst [vmem:[#allocation4 + $0xd8] sm:$0xff] %v1894
      %1927 = vst [vmem:[#allocation4 + $0xf0] sm:$0xff] %v1895
      %1928 = vst [vmem:[#allocation4 + $0x108] sm:$0xff] %v1896
      %1929 = vst [vmem:[#allocation4 + $0x120] sm:$0xff] %v1897
      %1930 = vst [vmem:[#allocation4 + $0x138] sm:$0xff] %v1898
      %1931 = vst [vmem:[#allocation4 + $0x150] sm:$0xff] %v1899
      %1932 = vst [vmem:[#allocation4 + $0x168] sm:$0xff] %v1900
      %v1933 = vld [vmem:[%s1788] sm:$0xf]
      %v1934 = vld [vmem:[%s1788 + $0x4] sm:$0xf]
      %v1935 = vld [vmem:[%s1788 + $0x8] sm:$0x1]
      %v1936 = vld [vmem:[%s1788 + $0xc] sm:$0xf]
      %v1937 = vld [vmem:[%s1788 + $0x10] sm:$0xf]
      %v1938 = vld [vmem:[%s1788 + $0x14] sm:$0x1]
      %v1939 = vld [vmem:[%s1788 + $0x18] sm:$0xf]
      %v1940 = vld [vmem:[%s1788 + $0x1c] sm:$0xf]
      %v1941 = vld [vmem:[%s1788 + $0x20] sm:$0x1]
      %v1942 = vld [vmem:[%s1788 + $0x24] sm:$0xf]
      %v1943 = vld [vmem:[%s1788 + $0x28] sm:$0xf]
      %v1944 = vld [vmem:[%s1788 + $0x2c] sm:$0x1]
      %v1945 = vld [vmem:[%s1788 + $0x30] sm:$0xf]
      %v1946 = vld [vmem:[%s1788 + $0x34] sm:$0xf]
      %v1947 = vld [vmem:[%s1788 + $0x38] sm:$0x1]
      %v1948 = vld [vmem:[%s1788 + $0x3c] sm:$0xf]
      %v1949 = vld [vmem:[%s1788 + $0x40] sm:$0xf]
      %v1950 = vld [vmem:[%s1788 + $0x44] sm:$0x1]
      %v1951 = vld [vmem:[%s1788 + $0x48] sm:$0xf]
      %v1952 = vld [vmem:[%s1788 + $0x4c] sm:$0xf]
      %v1953 = vld [vmem:[%s1788 + $0x50] sm:$0x1]
      %v1954 = vld [vmem:[%s1788 + $0x54] sm:$0xf]
      %v1955 = vld [vmem:[%s1788 + $0x58] sm:$0xf]
      %v1956 = vld [vmem:[%s1788 + $0x5c] sm:$0x1]
      %v1957 = vld [vmem:[%s1788 + $0x60] sm:$0xf]
      %v1958 = vld [vmem:[%s1788 + $0x64] sm:$0xf]
      %v1959 = vld [vmem:[%s1788 + $0x68] sm:$0x1]
      %v1960 = vld [vmem:[%s1788 + $0x6c] sm:$0xf]
      %v1961 = vld [vmem:[%s1788 + $0x70] sm:$0xf]
      %v1962 = vld [vmem:[%s1788 + $0x74] sm:$0x1]
      %v1963 = vld [vmem:[%s1788 + $0x78] sm:$0xf]
      %v1964 = vld [vmem:[%s1788 + $0x7c] sm:$0xf]
      %v1965 = vld [vmem:[%s1788 + $0x80] sm:$0x1]
      %v1966 = vld [vmem:[%s1788 + $0x84] sm:$0xf]
      %v1967 = vld [vmem:[%s1788 + $0x88] sm:$0xf]
      %v1968 = vld [vmem:[%s1788 + $0x8c] sm:$0x1]
      %v1969 = vld [vmem:[%s1788 + $0x90] sm:$0xf]
      %v1970 = vld [vmem:[%s1788 + $0x94] sm:$0xf]
      %v1971 = vld [vmem:[%s1788 + $0x98] sm:$0x1]
      %v1972 = vld [vmem:[%s1788 + $0x9c] sm:$0xf]
      %v1973 = vld [vmem:[%s1788 + $0xa0] sm:$0xf]
      %v1974 = vld [vmem:[%s1788 + $0xa4] sm:$0x1]
      %v1975 = vld [vmem:[%s1788 + $0xa8] sm:$0xf]
      %v1976 = vld [vmem:[%s1788 + $0xac] sm:$0xf]
      %v1977 = vld [vmem:[%s1788 + $0xb0] sm:$0x1]
      %v1978 = vld [vmem:[%s1788 + $0xb4] sm:$0xf]
      %v1979 = vld [vmem:[%s1788 + $0xb8] sm:$0xf]
      %v1980 = vld [vmem:[%s1788 + $0xbc] sm:$0x1]
      %v2029 = vunpack.c.l.b16 %v1933
      %v2030 = vunpack.c.l.b16 %v1934
      %v2031 = vunpack.c.l.b16 %v1935
      %v2032 = vunpack.c.l.b16 %v1936
      %v2033 = vunpack.c.l.b16 %v1937
      %v2034 = vunpack.c.l.b16 %v1938
      %v2035 = vunpack.c.l.b16 %v1939
      %v2036 = vunpack.c.l.b16 %v1940
      %v2037 = vunpack.c.l.b16 %v1941
      %v2038 = vunpack.c.l.b16 %v1942
      %v2039 = vunpack.c.l.b16 %v1943
      %v2040 = vunpack.c.l.b16 %v1944
      %v2041 = vunpack.c.l.b16 %v1945
      %v2042 = vunpack.c.l.b16 %v1946
      %v2043 = vunpack.c.l.b16 %v1947
      %v2044 = vunpack.c.l.b16 %v1948
      %v2045 = vunpack.c.l.b16 %v1949
      %v2046 = vunpack.c.l.b16 %v1950
      %v2047 = vunpack.c.l.b16 %v1951
      %v2048 = vunpack.c.l.b16 %v1952
      %v2049 = vunpack.c.l.b16 %v1953
      %v2050 = vunpack.c.l.b16 %v1954
      %v2051 = vunpack.c.l.b16 %v1955
      %v2052 = vunpack.c.l.b16 %v1956
      %v2053 = vunpack.c.l.b16 %v1957
      %v2054 = vunpack.c.l.b16 %v1958
      %v2055 = vunpack.c.l.b16 %v1959
      %v2056 = vunpack.c.l.b16 %v1960
      %v2057 = vunpack.c.l.b16 %v1961
      %v2058 = vunpack.c.l.b16 %v1962
      %v2059 = vunpack.c.l.b16 %v1963
      %v2060 = vunpack.c.l.b16 %v1964
      %v2061 = vunpack.c.l.b16 %v1965
      %v2062 = vunpack.c.l.b16 %v1966
      %v2063 = vunpack.c.l.b16 %v1967
      %v2064 = vunpack.c.l.b16 %v1968
      %v2065 = vunpack.c.l.b16 %v1969
      %v2066 = vunpack.c.l.b16 %v1970
      %v2067 = vunpack.c.l.b16 %v1971
      %v2068 = vunpack.c.l.b16 %v1972
      %v2069 = vunpack.c.l.b16 %v1973
      %v2070 = vunpack.c.l.b16 %v1974
      %v2071 = vunpack.c.l.b16 %v1975
      %v2072 = vunpack.c.l.b16 %v1976
      %v2073 = vunpack.c.l.b16 %v1977
      %v2074 = vunpack.c.l.b16 %v1978
      %v2075 = vunpack.c.l.b16 %v1979
      %v2076 = vunpack.c.l.b16 %v1980
      %v2077 = vpack.c.b16 %v2030, %v2029
      %v2078 = vpack.c.b16 %v2031, %v2031
      %v2079 = vpack.c.b16 %v2033, %v2032
      %v2080 = vpack.c.b16 %v2034, %v2034
      %v2081 = vpack.c.b16 %v2036, %v2035
      %v2082 = vpack.c.b16 %v2037, %v2037
      %v2083 = vpack.c.b16 %v2039, %v2038
      %v2084 = vpack.c.b16 %v2040, %v2040
      %v2085 = vpack.c.b16 %v2042, %v2041
      %v2086 = vpack.c.b16 %v2043, %v2043
      %v2087 = vpack.c.b16 %v2045, %v2044
      %v2088 = vpack.c.b16 %v2046, %v2046
      %v2089 = vpack.c.b16 %v2048, %v2047
      %v2090 = vpack.c.b16 %v2049, %v2049
      %v2091 = vpack.c.b16 %v2051, %v2050
      %v2092 = vpack.c.b16 %v2052, %v2052
      %v2093 = vpack.c.b16 %v2054, %v2053
      %v2094 = vpack.c.b16 %v2055, %v2055
      %v2095 = vpack.c.b16 %v2057, %v2056
      %v2096 = vpack.c.b16 %v2058, %v2058
      %v2097 = vpack.c.b16 %v2060, %v2059
      %v2098 = vpack.c.b16 %v2061, %v2061
      %v2099 = vpack.c.b16 %v2063, %v2062
      %v2100 = vpack.c.b16 %v2064, %v2064
      %v2101 = vpack.c.b16 %v2066, %v2065
      %v2102 = vpack.c.b16 %v2067, %v2067
      %v2103 = vpack.c.b16 %v2069, %v2068
      %v2104 = vpack.c.b16 %v2070, %v2070
      %v2105 = vpack.c.b16 %v2072, %v2071
      %v2106 = vpack.c.b16 %v2073, %v2073
      %v2107 = vpack.c.b16 %v2075, %v2074
      %v2108 = vpack.c.b16 %v2076, %v2076
      %v2110 = vshrl.u32 %v2077, 16
      %v2112 = vshll.u32 %v2077, 16
      %v2114 = vrot.slane %v2112, 1
      %v2115 = vor.u32 %v2110, %v2114
      %v2117 = vshll.u32 %v2078, 16
      %v2119 = vrot.slane %v2117, 1
      %v2120 = vsel %vm1207, %v2115, %v2119
      %v2122 = vshrl.u32 %v2079, 16
      %v2124 = vshll.u32 %v2079, 16
      %v2126 = vrot.slane %v2124, 1
      %v2127 = vor.u32 %v2122, %v2126
      %v2129 = vshll.u32 %v2080, 16
      %v2131 = vrot.slane %v2129, 1
      %v2132 = vsel %vm1207, %v2127, %v2131
      %v2134 = vshrl.u32 %v2081, 16
      %v2136 = vshll.u32 %v2081, 16
      %v2138 = vrot.slane %v2136, 1
      %v2139 = vor.u32 %v2134, %v2138
      %v2141 = vshll.u32 %v2082, 16
      %v2143 = vrot.slane %v2141, 1
      %v2144 = vsel %vm1207, %v2139, %v2143
      %v2146 = vshrl.u32 %v2083, 16
      %v2148 = vshll.u32 %v2083, 16
      %v2150 = vrot.slane %v2148, 1
      %v2151 = vor.u32 %v2146, %v2150
      %v2153 = vshll.u32 %v2084, 16
      %v2155 = vrot.slane %v2153, 1
      %v2156 = vsel %vm1207, %v2151, %v2155
      %v2158 = vshrl.u32 %v2085, 16
      %v2160 = vshll.u32 %v2085, 16
      %v2162 = vrot.slane %v2160, 1
      %v2163 = vor.u32 %v2158, %v2162
      %v2165 = vshll.u32 %v2086, 16
      %v2167 = vrot.slane %v2165, 1
      %v2168 = vsel %vm1207, %v2163, %v2167
      %v2170 = vshrl.u32 %v2087, 16
      %v2172 = vshll.u32 %v2087, 16
      %v2174 = vrot.slane %v2172, 1
      %v2175 = vor.u32 %v2170, %v2174
      %v2177 = vshll.u32 %v2088, 16
      %v2179 = vrot.slane %v2177, 1
      %v2180 = vsel %vm1207, %v2175, %v2179
      %v2182 = vshrl.u32 %v2089, 16
      %v2184 = vshll.u32 %v2089, 16
      %v2186 = vrot.slane %v2184, 1
      %v2187 = vor.u32 %v2182, %v2186
      %v2189 = vshll.u32 %v2090, 16
      %v2191 = vrot.slane %v2189, 1
      %v2192 = vsel %vm1207, %v2187, %v2191
      %v2194 = vshrl.u32 %v2091, 16
      %v2196 = vshll.u32 %v2091, 16
      %v2198 = vrot.slane %v2196, 1
      %v2199 = vor.u32 %v2194, %v2198
      %v2201 = vshll.u32 %v2092, 16
      %v2203 = vrot.slane %v2201, 1
      %v2204 = vsel %vm1207, %v2199, %v2203
      %v2206 = vshrl.u32 %v2093, 16
      %v2208 = vshll.u32 %v2093, 16
      %v2210 = vrot.slane %v2208, 1
      %v2211 = vor.u32 %v2206, %v2210
      %v2213 = vshll.u32 %v2094, 16
      %v2215 = vrot.slane %v2213, 1
      %v2216 = vsel %vm1207, %v2211, %v2215
      %v2218 = vshrl.u32 %v2095, 16
      %v2220 = vshll.u32 %v2095, 16
      %v2222 = vrot.slane %v2220, 1
      %v2223 = vor.u32 %v2218, %v2222
      %v2225 = vshll.u32 %v2096, 16
      %v2227 = vrot.slane %v2225, 1
      %v2228 = vsel %vm1207, %v2223, %v2227
      %v2230 = vshrl.u32 %v2097, 16
      %v2232 = vshll.u32 %v2097, 16
      %v2234 = vrot.slane %v2232, 1
      %v2235 = vor.u32 %v2230, %v2234
      %v2237 = vshll.u32 %v2098, 16
      %v2239 = vrot.slane %v2237, 1
      %v2240 = vsel %vm1207, %v2235, %v2239
      %v2242 = vshrl.u32 %v2099, 16
      %v2244 = vshll.u32 %v2099, 16
      %v2246 = vrot.slane %v2244, 1
      %v2247 = vor.u32 %v2242, %v2246
      %v2249 = vshll.u32 %v2100, 16
      %v2251 = vrot.slane %v2249, 1
      %v2252 = vsel %vm1207, %v2247, %v2251
      %v2254 = vshrl.u32 %v2101, 16
      %v2256 = vshll.u32 %v2101, 16
      %v2258 = vrot.slane %v2256, 1
      %v2259 = vor.u32 %v2254, %v2258
      %v2261 = vshll.u32 %v2102, 16
      %v2263 = vrot.slane %v2261, 1
      %v2264 = vsel %vm1207, %v2259, %v2263
      %v2266 = vshrl.u32 %v2103, 16
      %v2268 = vshll.u32 %v2103, 16
      %v2270 = vrot.slane %v2268, 1
      %v2271 = vor.u32 %v2266, %v2270
      %v2273 = vshll.u32 %v2104, 16
      %v2275 = vrot.slane %v2273, 1
      %v2276 = vsel %vm1207, %v2271, %v2275
      %v2278 = vshrl.u32 %v2105, 16
      %v2280 = vshll.u32 %v2105, 16
      %v2282 = vrot.slane %v2280, 1
      %v2283 = vor.u32 %v2278, %v2282
      %v2285 = vshll.u32 %v2106, 16
      %v2287 = vrot.slane %v2285, 1
      %v2288 = vsel %vm1207, %v2283, %v2287
      %v2290 = vshrl.u32 %v2107, 16
      %v2292 = vshll.u32 %v2107, 16
      %v2294 = vrot.slane %v2292, 1
      %v2295 = vor.u32 %v2290, %v2294
      %v2297 = vshll.u32 %v2108, 16
      %v2299 = vrot.slane %v2297, 1
      %v2300 = vsel %vm1207, %v2295, %v2299
      %2317 = vst [vmem:[#allocation4 + $0x8] sm:$0xff] %v2120
      %2318 = vst [vmem:[#allocation4 + $0x20] sm:$0xff] %v2132
      %2319 = vst [vmem:[#allocation4 + $0x38] sm:$0xff] %v2144
      %2320 = vst [vmem:[#allocation4 + $0x50] sm:$0xff] %v2156
      %2321 = vst [vmem:[#allocation4 + $0x68] sm:$0xff] %v2168
      %2322 = vst [vmem:[#allocation4 + $0x80] sm:$0xff] %v2180
      %2323 = vst [vmem:[#allocation4 + $0x98] sm:$0xff] %v2192
      %2324 = vst [vmem:[#allocation4 + $0xb0] sm:$0xff] %v2204
      %2325 = vst [vmem:[#allocation4 + $0xc8] sm:$0xff] %v2216
      %2326 = vst [vmem:[#allocation4 + $0xe0] sm:$0xff] %v2228
      %2327 = vst [vmem:[#allocation4 + $0xf8] sm:$0xff] %v2240
      %2328 = vst [vmem:[#allocation4 + $0x110] sm:$0xff] %v2252
      %2329 = vst [vmem:[#allocation4 + $0x128] sm:$0xff] %v2264
      %2330 = vst [vmem:[#allocation4 + $0x140] sm:$0xff] %v2276
      %2331 = vst [vmem:[#allocation4 + $0x158] sm:$0xff] %v2288
      %2332 = vst [vmem:[#allocation4 + $0x170] sm:$0xff] %v2300
      %v2333 = vld [vmem:[%s1788] sm:$0xe]
      %v2334 = vld [vmem:[%s1788 + $0x4] sm:$0xf]
      %v2335 = vld [vmem:[%s1788 + $0x8] sm:$0x1]
      %v2336 = vld [vmem:[%s1788 + $0xc] sm:$0xe]
      %v2337 = vld [vmem:[%s1788 + $0x10] sm:$0xf]
      %v2338 = vld [vmem:[%s1788 + $0x14] sm:$0x1]
      %v2339 = vld [vmem:[%s1788 + $0x18] sm:$0xe]
      %v2340 = vld [vmem:[%s1788 + $0x1c] sm:$0xf]
      %v2341 = vld [vmem:[%s1788 + $0x20] sm:$0x1]
      %v2342 = vld [vmem:[%s1788 + $0x24] sm:$0xe]
      %v2343 = vld [vmem:[%s1788 + $0x28] sm:$0xf]
      %v2344 = vld [vmem:[%s1788 + $0x2c] sm:$0x1]
      %v2345 = vld [vmem:[%s1788 + $0x30] sm:$0xe]
      %v2346 = vld [vmem:[%s1788 + $0x34] sm:$0xf]
      %v2347 = vld [vmem:[%s1788 + $0x38] sm:$0x1]
      %v2348 = vld [vmem:[%s1788 + $0x3c] sm:$0xe]
      %v2349 = vld [vmem:[%s1788 + $0x40] sm:$0xf]
      %v2350 = vld [vmem:[%s1788 + $0x44] sm:$0x1]
      %v2351 = vld [vmem:[%s1788 + $0x48] sm:$0xe]
      %v2352 = vld [vmem:[%s1788 + $0x4c] sm:$0xf]
      %v2353 = vld [vmem:[%s1788 + $0x50] sm:$0x1]
      %v2354 = vld [vmem:[%s1788 + $0x54] sm:$0xe]
      %v2355 = vld [vmem:[%s1788 + $0x58] sm:$0xf]
      %v2356 = vld [vmem:[%s1788 + $0x5c] sm:$0x1]
      %v2357 = vld [vmem:[%s1788 + $0x60] sm:$0xe]
      %v2358 = vld [vmem:[%s1788 + $0x64] sm:$0xf]
      %v2359 = vld [vmem:[%s1788 + $0x68] sm:$0x1]
      %v2360 = vld [vmem:[%s1788 + $0x6c] sm:$0xe]
      %v2361 = vld [vmem:[%s1788 + $0x70] sm:$0xf]
      %v2362 = vld [vmem:[%s1788 + $0x74] sm:$0x1]
      %v2363 = vld [vmem:[%s1788 + $0x78] sm:$0xe]
      %v2364 = vld [vmem:[%s1788 + $0x7c] sm:$0xf]
      %v2365 = vld [vmem:[%s1788 + $0x80] sm:$0x1]
      %v2366 = vld [vmem:[%s1788 + $0x84] sm:$0xe]
      %v2367 = vld [vmem:[%s1788 + $0x88] sm:$0xf]
      %v2368 = vld [vmem:[%s1788 + $0x8c] sm:$0x1]
      %v2369 = vld [vmem:[%s1788 + $0x90] sm:$0xe]
      %v2370 = vld [vmem:[%s1788 + $0x94] sm:$0xf]
      %v2371 = vld [vmem:[%s1788 + $0x98] sm:$0x1]
      %v2372 = vld [vmem:[%s1788 + $0x9c] sm:$0xe]
      %v2373 = vld [vmem:[%s1788 + $0xa0] sm:$0xf]
      %v2374 = vld [vmem:[%s1788 + $0xa4] sm:$0x1]
      %v2375 = vld [vmem:[%s1788 + $0xa8] sm:$0xe]
      %v2376 = vld [vmem:[%s1788 + $0xac] sm:$0xf]
      %v2377 = vld [vmem:[%s1788 + $0xb0] sm:$0x1]
      %v2378 = vld [vmem:[%s1788 + $0xb4] sm:$0xe]
      %v2379 = vld [vmem:[%s1788 + $0xb8] sm:$0xf]
      %v2380 = vld [vmem:[%s1788 + $0xbc] sm:$0x1]
      %v2429 = vunpack.c.l.b16 %v2333
      %v2430 = vunpack.c.l.b16 %v2334
      %v2431 = vunpack.c.l.b16 %v2335
      %v2432 = vunpack.c.l.b16 %v2336
      %v2433 = vunpack.c.l.b16 %v2337
      %v2434 = vunpack.c.l.b16 %v2338
      %v2435 = vunpack.c.l.b16 %v2339
      %v2436 = vunpack.c.l.b16 %v2340
      %v2437 = vunpack.c.l.b16 %v2341
      %v2438 = vunpack.c.l.b16 %v2342
      %v2439 = vunpack.c.l.b16 %v2343
      %v2440 = vunpack.c.l.b16 %v2344
      %v2441 = vunpack.c.l.b16 %v2345
      %v2442 = vunpack.c.l.b16 %v2346
      %v2443 = vunpack.c.l.b16 %v2347
      %v2444 = vunpack.c.l.b16 %v2348
      %v2445 = vunpack.c.l.b16 %v2349
      %v2446 = vunpack.c.l.b16 %v2350
      %v2447 = vunpack.c.l.b16 %v2351
      %v2448 = vunpack.c.l.b16 %v2352
      %v2449 = vunpack.c.l.b16 %v2353
      %v2450 = vunpack.c.l.b16 %v2354
      %v2451 = vunpack.c.l.b16 %v2355
      %v2452 = vunpack.c.l.b16 %v2356
      %v2453 = vunpack.c.l.b16 %v2357
      %v2454 = vunpack.c.l.b16 %v2358
      %v2455 = vunpack.c.l.b16 %v2359
      %v2456 = vunpack.c.l.b16 %v2360
      %v2457 = vunpack.c.l.b16 %v2361
      %v2458 = vunpack.c.l.b16 %v2362
      %v2459 = vunpack.c.l.b16 %v2363
      %v2460 = vunpack.c.l.b16 %v2364
      %v2461 = vunpack.c.l.b16 %v2365
      %v2462 = vunpack.c.l.b16 %v2366
      %v2463 = vunpack.c.l.b16 %v2367
      %v2464 = vunpack.c.l.b16 %v2368
      %v2465 = vunpack.c.l.b16 %v2369
      %v2466 = vunpack.c.l.b16 %v2370
      %v2467 = vunpack.c.l.b16 %v2371
      %v2468 = vunpack.c.l.b16 %v2372
      %v2469 = vunpack.c.l.b16 %v2373
      %v2470 = vunpack.c.l.b16 %v2374
      %v2471 = vunpack.c.l.b16 %v2375
      %v2472 = vunpack.c.l.b16 %v2376
      %v2473 = vunpack.c.l.b16 %v2377
      %v2474 = vunpack.c.l.b16 %v2378
      %v2475 = vunpack.c.l.b16 %v2379
      %v2476 = vunpack.c.l.b16 %v2380
      %v2477 = vpack.c.b16 %v2430, %v2429
      %v2478 = vpack.c.b16 %v2431, %v2431
      %v2479 = vpack.c.b16 %v2433, %v2432
      %v2480 = vpack.c.b16 %v2434, %v2434
      %v2481 = vpack.c.b16 %v2436, %v2435
      %v2482 = vpack.c.b16 %v2437, %v2437
      %v2483 = vpack.c.b16 %v2439, %v2438
      %v2484 = vpack.c.b16 %v2440, %v2440
      %v2485 = vpack.c.b16 %v2442, %v2441
      %v2486 = vpack.c.b16 %v2443, %v2443
      %v2487 = vpack.c.b16 %v2445, %v2444
      %v2488 = vpack.c.b16 %v2446, %v2446
      %v2489 = vpack.c.b16 %v2448, %v2447
      %v2490 = vpack.c.b16 %v2449, %v2449
      %v2491 = vpack.c.b16 %v2451, %v2450
      %v2492 = vpack.c.b16 %v2452, %v2452
      %v2493 = vpack.c.b16 %v2454, %v2453
      %v2494 = vpack.c.b16 %v2455, %v2455
      %v2495 = vpack.c.b16 %v2457, %v2456
      %v2496 = vpack.c.b16 %v2458, %v2458
      %v2497 = vpack.c.b16 %v2460, %v2459
      %v2498 = vpack.c.b16 %v2461, %v2461
      %v2499 = vpack.c.b16 %v2463, %v2462
      %v2500 = vpack.c.b16 %v2464, %v2464
      %v2501 = vpack.c.b16 %v2466, %v2465
      %v2502 = vpack.c.b16 %v2467, %v2467
      %v2503 = vpack.c.b16 %v2469, %v2468
      %v2504 = vpack.c.b16 %v2470, %v2470
      %v2505 = vpack.c.b16 %v2472, %v2471
      %v2506 = vpack.c.b16 %v2473, %v2473
      %v2507 = vpack.c.b16 %v2475, %v2474
      %v2508 = vpack.c.b16 %v2476, %v2476
      %v2509 = vrot.slane %v2477, 1
      %v2510 = vrot.slane %v2478, 1
      %v2511 = vsel %vm1608, %v2509, %v2510
      %v2512 = vrot.slane %v2479, 1
      %v2513 = vrot.slane %v2480, 1
      %v2514 = vsel %vm1608, %v2512, %v2513
      %v2515 = vrot.slane %v2481, 1
      %v2516 = vrot.slane %v2482, 1
      %v2517 = vsel %vm1608, %v2515, %v2516
      %v2518 = vrot.slane %v2483, 1
      %v2519 = vrot.slane %v2484, 1
      %v2520 = vsel %vm1608, %v2518, %v2519
      %v2521 = vrot.slane %v2485, 1
      %v2522 = vrot.slane %v2486, 1
      %v2523 = vsel %vm1608, %v2521, %v2522
      %v2524 = vrot.slane %v2487, 1
      %v2525 = vrot.slane %v2488, 1
      %v2526 = vsel %vm1608, %v2524, %v2525
      %v2527 = vrot.slane %v2489, 1
      %v2528 = vrot.slane %v2490, 1
      %v2529 = vsel %vm1608, %v2527, %v2528
      %v2530 = vrot.slane %v2491, 1
      %v2531 = vrot.slane %v2492, 1
      %v2532 = vsel %vm1608, %v2530, %v2531
      %v2533 = vrot.slane %v2493, 1
      %v2534 = vrot.slane %v2494, 1
      %v2535 = vsel %vm1608, %v2533, %v2534
      %v2536 = vrot.slane %v2495, 1
      %v2537 = vrot.slane %v2496, 1
      %v2538 = vsel %vm1608, %v2536, %v2537
      %v2539 = vrot.slane %v2497, 1
      %v2540 = vrot.slane %v2498, 1
      %v2541 = vsel %vm1608, %v2539, %v2540
      %v2542 = vrot.slane %v2499, 1
      %v2543 = vrot.slane %v2500, 1
      %v2544 = vsel %vm1608, %v2542, %v2543
      %v2545 = vrot.slane %v2501, 1
      %v2546 = vrot.slane %v2502, 1
      %v2547 = vsel %vm1608, %v2545, %v2546
      %v2548 = vrot.slane %v2503, 1
      %v2549 = vrot.slane %v2504, 1
      %v2550 = vsel %vm1608, %v2548, %v2549
      %v2551 = vrot.slane %v2505, 1
      %v2552 = vrot.slane %v2506, 1
      %v2553 = vsel %vm1608, %v2551, %v2552
      %v2554 = vrot.slane %v2507, 1
      %v2555 = vrot.slane %v2508, 1
      %v2556 = vsel %vm1608, %v2554, %v2555
      %2573 = vst [vmem:[#allocation4 + $0x10] sm:$0xff] %v2511
      %2574 = vst [vmem:[#allocation4 + $0x28] sm:$0xff] %v2514
      %2575 = vst [vmem:[#allocation4 + $0x40] sm:$0xff] %v2517
      %2576 = vst [vmem:[#allocation4 + $0x58] sm:$0xff] %v2520
      %2577 = vst [vmem:[#allocation4 + $0x70] sm:$0xff] %v2523
      %2578 = vst [vmem:[#allocation4 + $0x88] sm:$0xff] %v2526
      %2579 = vst [vmem:[#allocation4 + $0xa0] sm:$0xff] %v2529
      %2580 = vst [vmem:[#allocation4 + $0xb8] sm:$0xff] %v2532
      %2581 = vst [vmem:[#allocation4 + $0xd0] sm:$0xff] %v2535
      %2582 = vst [vmem:[#allocation4 + $0xe8] sm:$0xff] %v2538
      %2583 = vst [vmem:[#allocation4 + $0x100] sm:$0xff] %v2541
      %2584 = vst [vmem:[#allocation4 + $0x118] sm:$0xff] %v2544
      %2585 = vst [vmem:[#allocation4 + $0x130] sm:$0xff] %v2547
      %2586 = vst [vmem:[#allocation4 + $0x148] sm:$0xff] %v2550
      %2587 = vst [vmem:[#allocation4 + $0x160] sm:$0xff] %v2553
      %2588 = vst [vmem:[#allocation4 + $0x178] sm:$0xff] %v2556
      %v2589 = vld [vmem:[#allocation4] sm:$0xff]
      %v2590 = vld [vmem:[#allocation4 + $0x8] sm:$0xff]
      %v2591 = vld [vmem:[#allocation4 + $0x10] sm:$0xff]
      %v2592 = vld [vmem:[#allocation4 + $0x18] sm:$0xff]
      %v2593 = vld [vmem:[#allocation4 + $0x20] sm:$0xff]
      %v2594 = vld [vmem:[#allocation4 + $0x28] sm:$0xff]
      %v2595 = vld [vmem:[#allocation4 + $0x30] sm:$0xff]
      %v2596 = vld [vmem:[#allocation4 + $0x38] sm:$0xff]
      %v2597 = vld [vmem:[#allocation4 + $0x40] sm:$0xff]
      %v2598 = vld [vmem:[#allocation4 + $0x48] sm:$0xff]
      %v2599 = vld [vmem:[#allocation4 + $0x50] sm:$0xff]
      %v2600 = vld [vmem:[#allocation4 + $0x58] sm:$0xff]
      %v2601 = vld [vmem:[#allocation4 + $0x60] sm:$0xff]
      %v2602 = vld [vmem:[#allocation4 + $0x68] sm:$0xff]
      %v2603 = vld [vmem:[#allocation4 + $0x70] sm:$0xff]
      %v2604 = vld [vmem:[#allocation4 + $0x78] sm:$0xff]
      %v2605 = vld [vmem:[#allocation4 + $0x80] sm:$0xff]
      %v2606 = vld [vmem:[#allocation4 + $0x88] sm:$0xff]
      %v2607 = vld [vmem:[#allocation4 + $0x90] sm:$0xff]
      %v2608 = vld [vmem:[#allocation4 + $0x98] sm:$0xff]
      %v2609 = vld [vmem:[#allocation4 + $0xa0] sm:$0xff]
      %v2610 = vld [vmem:[#allocation4 + $0xa8] sm:$0xff]
      %v2611 = vld [vmem:[#allocation4 + $0xb0] sm:$0xff]
      %v2612 = vld [vmem:[#allocation4 + $0xb8] sm:$0xff]
      %v2613 = vld [vmem:[#allocation4 + $0xc0] sm:$0xff]
      %v2614 = vld [vmem:[#allocation4 + $0xc8] sm:$0xff]
      %v2615 = vld [vmem:[#allocation4 + $0xd0] sm:$0xff]
      %v2616 = vld [vmem:[#allocation4 + $0xd8] sm:$0xff]
      %v2617 = vld [vmem:[#allocation4 + $0xe0] sm:$0xff]
      %v2618 = vld [vmem:[#allocation4 + $0xe8] sm:$0xff]
      %v2619 = vld [vmem:[#allocation4 + $0xf0] sm:$0xff]
      %v2620 = vld [vmem:[#allocation4 + $0xf8] sm:$0xff]
      %v2621 = vld [vmem:[#allocation4 + $0x100] sm:$0xff]
      %v2622 = vld [vmem:[#allocation4 + $0x108] sm:$0xff]
      %v2623 = vld [vmem:[#allocation4 + $0x110] sm:$0xff]
      %v2624 = vld [vmem:[#allocation4 + $0x118] sm:$0xff]
      %v2625 = vld [vmem:[#allocation4 + $0x120] sm:$0xff]
      %v2626 = vld [vmem:[#allocation4 + $0x128] sm:$0xff]
      %v2627 = vld [vmem:[#allocation4 + $0x130] sm:$0xff]
      %v2628 = vld [vmem:[#allocation4 + $0x138] sm:$0xff]
      %v2629 = vld [vmem:[#allocation4 + $0x140] sm:$0xff]
      %v2630 = vld [vmem:[#allocation4 + $0x148] sm:$0xff]
      %v2631 = vld [vmem:[#allocation4 + $0x150] sm:$0xff]
      %v2632 = vld [vmem:[#allocation4 + $0x158] sm:$0xff]
      %v2633 = vld [vmem:[#allocation4 + $0x160] sm:$0xff]
      %v2634 = vld [vmem:[#allocation4 + $0x168] sm:$0xff]
      %v2635 = vld [vmem:[#allocation4 + $0x170] sm:$0xff]
      %v2636 = vld [vmem:[#allocation4 + $0x178] sm:$0xff]
      %s2637 = scalar_lea.vmem %s1, 192
      %v2638 = vld [vmem:[%s2637] sm:$0xf]
      %v2639 = vld [vmem:[%s2637 + $0x4] sm:$0xf]
      %v2640 = vld [vmem:[%s2637 + $0x8] sm:$0xf]
      %v2641 = vld [vmem:[%s2637 + $0xc] sm:$0xf]
      %v2642 = vld [vmem:[%s2637 + $0x10] sm:$0xf]
      %v2643 = vld [vmem:[%s2637 + $0x14] sm:$0xf]
      %v2644 = vld [vmem:[%s2637 + $0x18] sm:$0xf]
      %v2645 = vld [vmem:[%s2637 + $0x1c] sm:$0xf]
      %v2646 = vld [vmem:[%s2637 + $0x20] sm:$0xf]
      %v2647 = vld [vmem:[%s2637 + $0x24] sm:$0xf]
      %v2648 = vld [vmem:[%s2637 + $0x28] sm:$0xf]
      %v2649 = vld [vmem:[%s2637 + $0x2c] sm:$0xf]
      %v2650 = vld [vmem:[%s2637 + $0x30] sm:$0xf]
      %v2651 = vld [vmem:[%s2637 + $0x34] sm:$0xf]
      %v2652 = vld [vmem:[%s2637 + $0x38] sm:$0xf]
      %v2653 = vld [vmem:[%s2637 + $0x3c] sm:$0xf]
      %v2654 = vld [vmem:[%s2637 + $0x40] sm:$0xf]
      %v2655 = vld [vmem:[%s2637 + $0x44] sm:$0xf]
      %v2656 = vld [vmem:[%s2637 + $0x48] sm:$0xf]
      %v2657 = vld [vmem:[%s2637 + $0x4c] sm:$0xf]
      %v2658 = vld [vmem:[%s2637 + $0x50] sm:$0xf]
      %v2659 = vld [vmem:[%s2637 + $0x54] sm:$0xf]
      %v2660 = vld [vmem:[%s2637 + $0x58] sm:$0xf]
      %v2661 = vld [vmem:[%s2637 + $0x5c] sm:$0xf]
      %v2662 = vld [vmem:[%s2637 + $0x60] sm:$0xf]
      %v2663 = vld [vmem:[%s2637 + $0x64] sm:$0xf]
      %v2664 = vld [vmem:[%s2637 + $0x68] sm:$0xf]
      %v2665 = vld [vmem:[%s2637 + $0x6c] sm:$0xf]
      %v2666 = vld [vmem:[%s2637 + $0x70] sm:$0xf]
      %v2667 = vld [vmem:[%s2637 + $0x74] sm:$0xf]
      %v2668 = vld [vmem:[%s2637 + $0x78] sm:$0xf]
      %v2669 = vld [vmem:[%s2637 + $0x7c] sm:$0xf]
      %v2670 = vld [vmem:[%s2637 + $0x80] sm:$0xf]
      %v2671 = vld [vmem:[%s2637 + $0x84] sm:$0xf]
      %v2672 = vld [vmem:[%s2637 + $0x88] sm:$0xf]
      %v2673 = vld [vmem:[%s2637 + $0x8c] sm:$0xf]
      %v2674 = vld [vmem:[%s2637 + $0x90] sm:$0xf]
      %v2675 = vld [vmem:[%s2637 + $0x94] sm:$0xf]
      %v2676 = vld [vmem:[%s2637 + $0x98] sm:$0xf]
      %v2677 = vld [vmem:[%s2637 + $0x9c] sm:$0xf]
      %v2678 = vld [vmem:[%s2637 + $0xa0] sm:$0xf]
      %v2679 = vld [vmem:[%s2637 + $0xa4] sm:$0xf]
      %v2680 = vld [vmem:[%s2637 + $0xa8] sm:$0xf]
      %v2681 = vld [vmem:[%s2637 + $0xac] sm:$0xf]
      %v2682 = vld [vmem:[%s2637 + $0xb0] sm:$0xf]
      %v2683 = vld [vmem:[%s2637 + $0xb4] sm:$0xf]
      %v2684 = vld [vmem:[%s2637 + $0xb8] sm:$0xf]
      %v2685 = vld [vmem:[%s2637 + $0xbc] sm:$0xf]
      %v2734 = vunpack.c.l.b16 %v2638
      %v2735 = vunpack.c.l.b16 %v2639
      %v2736 = vunpack.c.l.b16 %v2640
      %v2737 = vunpack.c.l.b16 %v2641
      %v2738 = vunpack.c.l.b16 %v2642
      %v2739 = vunpack.c.l.b16 %v2643
      %v2740 = vunpack.c.l.b16 %v2644
      %v2741 = vunpack.c.l.b16 %v2645
      %v2742 = vunpack.c.l.b16 %v2646
      %v2743 = vunpack.c.l.b16 %v2647
      %v2744 = vunpack.c.l.b16 %v2648
      %v2745 = vunpack.c.l.b16 %v2649
      %v2746 = vunpack.c.l.b16 %v2650
      %v2747 = vunpack.c.l.b16 %v2651
      %v2748 = vunpack.c.l.b16 %v2652
      %v2749 = vunpack.c.l.b16 %v2653
      %v2750 = vunpack.c.l.b16 %v2654
      %v2751 = vunpack.c.l.b16 %v2655
      %v2752 = vunpack.c.l.b16 %v2656
      %v2753 = vunpack.c.l.b16 %v2657
      %v2754 = vunpack.c.l.b16 %v2658
      %v2755 = vunpack.c.l.b16 %v2659
      %v2756 = vunpack.c.l.b16 %v2660
      %v2757 = vunpack.c.l.b16 %v2661
      %v2758 = vunpack.c.l.b16 %v2662
      %v2759 = vunpack.c.l.b16 %v2663
      %v2760 = vunpack.c.l.b16 %v2664
      %v2761 = vunpack.c.l.b16 %v2665
      %v2762 = vunpack.c.l.b16 %v2666
      %v2763 = vunpack.c.l.b16 %v2667
      %v2764 = vunpack.c.l.b16 %v2668
      %v2765 = vunpack.c.l.b16 %v2669
      %v2766 = vunpack.c.l.b16 %v2670
      %v2767 = vunpack.c.l.b16 %v2671
      %v2768 = vunpack.c.l.b16 %v2672
      %v2769 = vunpack.c.l.b16 %v2673
      %v2770 = vunpack.c.l.b16 %v2674
      %v2771 = vunpack.c.l.b16 %v2675
      %v2772 = vunpack.c.l.b16 %v2676
      %v2773 = vunpack.c.l.b16 %v2677
      %v2774 = vunpack.c.l.b16 %v2678
      %v2775 = vunpack.c.l.b16 %v2679
      %v2776 = vunpack.c.l.b16 %v2680
      %v2777 = vunpack.c.l.b16 %v2681
      %v2778 = vunpack.c.l.b16 %v2682
      %v2779 = vunpack.c.l.b16 %v2683
      %v2780 = vunpack.c.l.b16 %v2684
      %v2781 = vunpack.c.l.b16 %v2685
      %v2782 = vpack.c.b16 %v2735, %v2734
      %v2783 = vpack.c.b16 %v2737, %v2736
      %v2784 = vpack.c.b16 %v2739, %v2738
      %v2785 = vpack.c.b16 %v2741, %v2740
      %v2786 = vpack.c.b16 %v2743, %v2742
      %v2787 = vpack.c.b16 %v2745, %v2744
      %v2788 = vpack.c.b16 %v2747, %v2746
      %v2789 = vpack.c.b16 %v2749, %v2748
      %v2790 = vpack.c.b16 %v2751, %v2750
      %v2791 = vpack.c.b16 %v2753, %v2752
      %v2792 = vpack.c.b16 %v2755, %v2754
      %v2793 = vpack.c.b16 %v2757, %v2756
      %v2794 = vpack.c.b16 %v2759, %v2758
      %v2795 = vpack.c.b16 %v2761, %v2760
      %v2796 = vpack.c.b16 %v2763, %v2762
      %v2797 = vpack.c.b16 %v2765, %v2764
      %v2798 = vpack.c.b16 %v2767, %v2766
      %v2799 = vpack.c.b16 %v2769, %v2768
      %v2800 = vpack.c.b16 %v2771, %v2770
      %v2801 = vpack.c.b16 %v2773, %v2772
      %v2802 = vpack.c.b16 %v2775, %v2774
      %v2803 = vpack.c.b16 %v2777, %v2776
      %v2804 = vpack.c.b16 %v2779, %v2778
      %v2805 = vpack.c.b16 %v2781, %v2780
      %2830 = vmatprep.subr.bf16.mxu0 0
      %2831 = vmatpush1.bf16.msra.mxu0 %v2782
      %2832 = vmatprep.subr.bf16.mxu0 0
      %2833 = vmatpush1.bf16.msra.mxu0 %v2783
      %2834 = vmatprep.subr.bf16.mxu0 0
      %2835 = vmatpush1.bf16.msra.mxu0 %v2784
      %2836 = vmatprep.subr.bf16.mxu0 0
      %2837 = vmatpush1.bf16.msra.mxu0 %v2785
      %2838 = vmatprep.subr.bf16.mxu0 0
      %2839 = vmatpush1.bf16.msra.mxu0 %v2786
      %2840 = vmatprep.subr.bf16.mxu0 0
      %2841 = vmatpush1.bf16.msra.mxu0 %v2787
      %2842 = vmatprep.subr.bf16.mxu0 0
      %2843 = vmatpush1.bf16.msra.mxu0 %v2788
      %2844 = vmatprep.subr.bf16.mxu0 0
      %2845 = vmatpush1.bf16.msra.mxu0 %v2789
      %2846 = vmatprep.subr.bf16.mxu0 0
      %2847 = vmatpush1.bf16.msra.mxu0 %v2790
      %2848 = vmatprep.subr.bf16.mxu0 0
      %2849 = vmatpush1.bf16.msra.mxu0 %v2791
      %2850 = vmatprep.subr.bf16.mxu0 0
      %2851 = vmatpush1.bf16.msra.mxu0 %v2792
      %2852 = vmatprep.subr.bf16.mxu0 0
      %2853 = vmatpush1.bf16.msra.mxu0 %v2793
      %2854 = vmatprep.subr.bf16.mxu0 0
      %2855 = vmatpush1.bf16.msra.mxu0 %v2794
      %2856 = vmatprep.subr.bf16.mxu0 0
      %2857 = vmatpush1.bf16.msra.mxu0 %v2795
      %2858 = vmatprep.subr.bf16.mxu0 0
      %2859 = vmatpush1.bf16.msra.mxu0 %v2796
      %2860 = vmatprep.subr.bf16.mxu0 0
      %2861 = vmatpush1.bf16.msra.mxu0 %v2797
      %2862 = vmatprep.mubr.bf16.mxu0 %v2590
      %2863 = vmatmul.mubr.bf16.gmra.mrb[0].mxu0 %v2589
      %v2864 = vpop.f32.mrb[0].mxu0
      %v2865 = vadd.f32 0.0, %v2864
      %v2866 = vpop.f32.mrb[0].mxu0
      %v2867 = vpop.f32.mrb[0].mxu0
      %v2868 = vadd.f32 0.0, %v2867
      %v2869 = vpop.f32.mrb[0].mxu0
      %2870 = vmatprep.mubr.bf16.mxu0 %v2593
      %2871 = vmatmul.mubr.bf16.gmra.mrb[0].mxu0 %v2592
      %v2872 = vpop.f32.mrb[0].mxu0
      %v2873 = vadd.f32 0.0, %v2872
      %v2874 = vpop.f32.mrb[0].mxu0
      %v2875 = vpop.f32.mrb[0].mxu0
      %v2876 = vadd.f32 0.0, %v2875
      %v2877 = vpop.f32.mrb[0].mxu0
      %2878 = vmatprep.mubr.bf16.mxu0 %v2596
      %2879 = vmatmul.mubr.bf16.gmra.mrb[0].mxu0 %v2595
      %v2880 = vpop.f32.mrb[0].mxu0
      %v2881 = vadd.f32 0.0, %v2880
      %v2882 = vpop.f32.mrb[0].mxu0
      %v2883 = vpop.f32.mrb[0].mxu0
      %v2884 = vadd.f32 0.0, %v2883
      %v2885 = vpop.f32.mrb[0].mxu0
      %2886 = vmatprep.mubr.bf16.mxu0 %v2599
      %2887 = vmatmul.mubr.bf16.gmra.mrb[0].mxu0 %v2598
      %v2888 = vpop.f32.mrb[0].mxu0
      %v2889 = vadd.f32 0.0, %v2888
      %v2890 = vpop.f32.mrb[0].mxu0
      %v2891 = vpop.f32.mrb[0].mxu0
      %v2892 = vadd.f32 0.0, %v2891
      %v2893 = vpop.f32.mrb[0].mxu0
      %2894 = vmatprep.mubr.bf16.mxu0 %v2602
      %2895 = vmatmul.mubr.bf16.gmra.mrb[0].mxu0 %v2601
      %v2896 = vpop.f32.mrb[0].mxu0
      %v2897 = vadd.f32 0.0, %v2896
      %v2898 = vpop.f32.mrb[0].mxu0
      %v2899 = vpop.f32.mrb[0].mxu0
      %v2900 = vadd.f32 0.0, %v2899
      %v2901 = vpop.f32.mrb[0].mxu0
      %2902 = vmatprep.mubr.bf16.mxu0 %v2605
      %2903 = vmatmul.mubr.bf16.gmra.mrb[0].mxu0 %v2604
      %v2904 = vpop.f32.mrb[0].mxu0
      %v2905 = vadd.f32 0.0, %v2904
      %v2906 = vpop.f32.mrb[0].mxu0
      %v2907 = vpop.f32.mrb[0].mxu0
      %v2908 = vadd.f32 0.0, %v2907
      %v2909 = vpop.f32.mrb[0].mxu0
      %2910 = vmatprep.mubr.bf16.mxu0 %v2608
      %2911 = vmatmul.mubr.bf16.gmra.mrb[0].mxu0 %v2607
      %v2912 = vpop.f32.mrb[0].mxu0
      %v2913 = vadd.f32 0.0, %v2912
      %v2914 = vpop.f32.mrb[0].mxu0
      %v2915 = vpop.f32.mrb[0].mxu0
      %v2916 = vadd.f32 0.0, %v2915
      %v2917 = vpop.f32.mrb[0].mxu0
      %2918 = vmatprep.mubr.bf16.mxu0 %v2611
      %2919 = vmatmul.mubr.bf16.gmra.mrb[0].mxu0 %v2610
      %v2920 = vpop.f32.mrb[0].mxu0
      %v2921 = vadd.f32 0.0, %v2920
      %v2922 = vpop.f32.mrb[0].mxu0
      %v2923 = vpop.f32.mrb[0].mxu0
      %v2924 = vadd.f32 0.0, %v2923
      %v2925 = vpop.f32.mrb[0].mxu0
      %2926 = vmatprep.mubr.bf16.mxu0 %v2614
      %2927 = vmatmul.mubr.bf16.gmra.mrb[0].mxu0 %v2613
      %v2928 = vpop.f32.mrb[0].mxu0
      %v2929 = vadd.f32 0.0, %v2928
      %v2930 = vpop.f32.mrb[0].mxu0
      %v2931 = vpop.f32.mrb[0].mxu0
      %v2932 = vadd.f32 0.0, %v2931
      %v2933 = vpop.f32.mrb[0].mxu0
      %2934 = vmatprep.mubr.bf16.mxu0 %v2617
      %2935 = vmatmul.mubr.bf16.gmra.mrb[0].mxu0 %v2616
      %v2936 = vpop.f32.mrb[0].mxu0
      %v2937 = vadd.f32 0.0, %v2936
      %v2938 = vpop.f32.mrb[0].mxu0
      %v2939 = vpop.f32.mrb[0].mxu0
      %v2940 = vadd.f32 0.0, %v2939
      %v2941 = vpop.f32.mrb[0].mxu0
      %2942 = vmatprep.mubr.bf16.mxu0 %v2620
      %2943 = vmatmul.mubr.bf16.gmra.mrb[0].mxu0 %v2619
      %v2944 = vpop.f32.mrb[0].mxu0
      %v2945 = vadd.f32 0.0, %v2944
      %v2946 = vpop.f32.mrb[0].mxu0
      %v2947 = vpop.f32.mrb[0].mxu0
      %v2948 = vadd.f32 0.0, %v2947
      %v2949 = vpop.f32.mrb[0].mxu0
      %2950 = vmatprep.mubr.bf16.mxu0 %v2623
      %2951 = vmatmul.mubr.bf16.gmra.mrb[0].mxu0 %v2622
      %v2952 = vpop.f32.mrb[0].mxu0
      %v2953 = vadd.f32 0.0, %v2952
      %v2954 = vpop.f32.mrb[0].mxu0
      %v2955 = vpop.f32.mrb[0].mxu0
      %v2956 = vadd.f32 0.0, %v2955
      %v2957 = vpop.f32.mrb[0].mxu0
      %2958 = vmatprep.mubr.bf16.mxu0 %v2626
      %2959 = vmatmul.mubr.bf16.gmra.mrb[0].mxu0 %v2625
      %v2960 = vpop.f32.mrb[0].mxu0
      %v2961 = vadd.f32 0.0, %v2960
      %v2962 = vpop.f32.mrb[0].mxu0
      %v2963 = vpop.f32.mrb[0].mxu0
      %v2964 = vadd.f32 0.0, %v2963
      %v2965 = vpop.f32.mrb[0].mxu0
      %2966 = vmatprep.mubr.bf16.mxu0 %v2629
      %2967 = vmatmul.mubr.bf16.gmra.mrb[0].mxu0 %v2628
      %v2968 = vpop.f32.mrb[0].mxu0
      %v2969 = vadd.f32 0.0, %v2968
      %v2970 = vpop.f32.mrb[0].mxu0
      %v2971 = vpop.f32.mrb[0].mxu0
      %v2972 = vadd.f32 0.0, %v2971
      %v2973 = vpop.f32.mrb[0].mxu0
      %2974 = vmatprep.mubr.bf16.mxu0 %v2632
      %2975 = vmatmul.mubr.bf16.gmra.mrb[0].mxu0 %v2631
      %v2976 = vpop.f32.mrb[0].mxu0
      %v2977 = vadd.f32 0.0, %v2976
      %v2978 = vpop.f32.mrb[0].mxu0
      %v2979 = vpop.f32.mrb[0].mxu0
      %v2980 = vadd.f32 0.0, %v2979
      %v2981 = vpop.f32.mrb[0].mxu0
      %2982 = vmatprep.mubr.bf16.mxu0 %v2635
      %2983 = vmatmul.mubr.bf16.gmra.mrb[0].mxu0 %v2634
      %v2984 = vpop.f32.mrb[0].mxu0
      %v2985 = vadd.f32 0.0, %v2984
      %v2986 = vpop.f32.mrb[0].mxu0
      %v2987 = vpop.f32.mrb[0].mxu0
      %v2988 = vadd.f32 0.0, %v2987
      %v2989 = vpop.f32.mrb[0].mxu0
      %2990 = vdwg.mxu0
      %2991 = vmatprep.subr.bf16.mxu0 0
      %2992 = vmatpush1.bf16.msra.mxu0 %v2798
      %2993 = vmatprep.subr.bf16.mxu0 0
      %2994 = vmatpush1.bf16.msra.mxu0 %v2799
      %2995 = vmatprep.subr.bf16.mxu0 0
      %2996 = vmatpush1.bf16.msra.mxu0 %v2800
      %2997 = vmatprep.subr.bf16.mxu0 0
      %2998 = vmatpush1.bf16.msra.mxu0 %v2801
      %2999 = vmatprep.subr.bf16.mxu0 0
      %3000 = vmatpush1.bf16.msra.mxu0 %v2802
      %3001 = vmatprep.subr.bf16.mxu0 0
      %3002 = vmatpush1.bf16.msra.mxu0 %v2803
      %3003 = vmatprep.subr.bf16.mxu0 0
      %3004 = vmatpush1.bf16.msra.mxu0 %v2804
      %3005 = vmatprep.subr.bf16.mxu0 0
      %3006 = vmatpush1.bf16.msra.mxu0 %v2805
      %3007 = vmatprep.subr.bf16.mxu0 0
      %3008 = vmatpush1.bf16.msra.mxu0 0
      %3009 = vmatprep.subr.bf16.mxu0 0
      %3010 = vmatpush1.bf16.msra.mxu0 0
      %3011 = vmatprep.subr.bf16.mxu0 0
      %3012 = vmatpush1.bf16.msra.mxu0 0
      %3013 = vmatprep.subr.bf16.mxu0 0
      %3014 = vmatpush1.bf16.msra.mxu0 0
      %3015 = vmatprep.subr.bf16.mxu0 0
      %3016 = vmatpush1.bf16.msra.mxu0 0
      %3017 = vmatprep.subr.bf16.mxu0 0
      %3018 = vmatpush1.bf16.msra.mxu0 0
      %3019 = vmatprep.subr.bf16.mxu0 0
      %3020 = vmatpush1.bf16.msra.mxu0 0
      %3021 = vmatprep.subr.bf16.mxu0 0
      %3022 = vmatpush1.bf16.msra.mxu0 0
      %3023 = vmatprep.mubr.bf16.mxu0 0
      %3024 = vmatmul.mubr.bf16.gmra.mrb[0].mxu0 %v2591
      %v3025 = vpop.f32.mrb[0].mxu0
      %v3026 = vadd.f32 %v2865, %v3025
      %v3027 = vpop.f32.mrb[0].mxu0
      %v3028 = vpop.f32.mrb[0].mxu0
      %v3029 = vadd.f32 %v2868, %v3028
      %v3030 = vpop.f32.mrb[0].mxu0
      %3031 = vmatprep.mubr.bf16.mxu0 0
      %3032 = vmatmul.mubr.bf16.gmra.mrb[0].mxu0 %v2594
      %v3033 = vpop.f32.mrb[0].mxu0
      %v3034 = vadd.f32 %v2873, %v3033
      %v3035 = vpop.f32.mrb[0].mxu0
      %v3036 = vpop.f32.mrb[0].mxu0
      %v3037 = vadd.f32 %v2876, %v3036
      %v3038 = vpop.f32.mrb[0].mxu0
      %3039 = vmatprep.mubr.bf16.mxu0 0
      %3040 = vmatmul.mubr.bf16.gmra.mrb[0].mxu0 %v2597
      %v3041 = vpop.f32.mrb[0].mxu0
      %v3042 = vadd.f32 %v2881, %v3041
      %v3043 = vpop.f32.mrb[0].mxu0
      %v3044 = vpop.f32.mrb[0].mxu0
      %v3045 = vadd.f32 %v2884, %v3044
      %v3046 = vpop.f32.mrb[0].mxu0
      %3047 = vmatprep.mubr.bf16.mxu0 0
      %3048 = vmatmul.mubr.bf16.gmra.mrb[0].mxu0 %v2600
      %v3049 = vpop.f32.mrb[0].mxu0
      %v3050 = vadd.f32 %v2889, %v3049
      %v3051 = vpop.f32.mrb[0].mxu0
      %v3052 = vpop.f32.mrb[0].mxu0
      %v3053 = vadd.f32 %v2892, %v3052
      %v3054 = vpop.f32.mrb[0].mxu0
      %3055 = vmatprep.mubr.bf16.mxu0 0
      %3056 = vmatmul.mubr.bf16.gmra.mrb[0].mxu0 %v2603
      %v3057 = vpop.f32.mrb[0].mxu0
      %v3058 = vadd.f32 %v2897, %v3057
      %v3059 = vpop.f32.mrb[0].mxu0
      %v3060 = vpop.f32.mrb[0].mxu0
      %v3061 = vadd.f32 %v2900, %v3060
      %v3062 = vpop.f32.mrb[0].mxu0
      %3063 = vmatprep.mubr.bf16.mxu0 0
      %3064 = vmatmul.mubr.bf16.gmra.mrb[0].mxu0 %v2606
      %v3065 = vpop.f32.mrb[0].mxu0
      %v3066 = vadd.f32 %v2905, %v3065
      %v3067 = vpop.f32.mrb[0].mxu0
      %v3068 = vpop.f32.mrb[0].mxu0
      %v3069 = vadd.f32 %v2908, %v3068
      %v3070 = vpop.f32.mrb[0].mxu0
      %3071 = vmatprep.mubr.bf16.mxu0 0
      %3072 = vmatmul.mubr.bf16.gmra.mrb[0].mxu0 %v2609
      %v3073 = vpop.f32.mrb[0].mxu0
      %v3074 = vadd.f32 %v2913, %v3073
      %v3075 = vpop.f32.mrb[0].mxu0
      %v3076 = vpop.f32.mrb[0].mxu0
      %v3077 = vadd.f32 %v2916, %v3076
      %v3078 = vpop.f32.mrb[0].mxu0
      %3079 = vmatprep.mubr.bf16.mxu0 0
      %3080 = vmatmul.mubr.bf16.gmra.mrb[0].mxu0 %v2612
      %v3081 = vpop.f32.mrb[0].mxu0
      %v3082 = vadd.f32 %v2921, %v3081
      %v3083 = vpop.f32.mrb[0].mxu0
      %v3084 = vpop.f32.mrb[0].mxu0
      %v3085 = vadd.f32 %v2924, %v3084
      %v3086 = vpop.f32.mrb[0].mxu0
      %3087 = vmatprep.mubr.bf16.mxu0 0
      %3088 = vmatmul.mubr.bf16.gmra.mrb[0].mxu0 %v2615
      %v3089 = vpop.f32.mrb[0].mxu0
      %v3090 = vadd.f32 %v2929, %v3089
      %v3091 = vpop.f32.mrb[0].mxu0
      %v3092 = vpop.f32.mrb[0].mxu0
      %v3093 = vadd.f32 %v2932, %v3092
      %v3094 = vpop.f32.mrb[0].mxu0
      %3095 = vmatprep.mubr.bf16.mxu0 0
      %3096 = vmatmul.mubr.bf16.gmra.mrb[0].mxu0 %v2618
      %v3097 = vpop.f32.mrb[0].mxu0
      %v3098 = vadd.f32 %v2937, %v3097
      %v3099 = vpop.f32.mrb[0].mxu0
      %v3100 = vpop.f32.mrb[0].mxu0
      %v3101 = vadd.f32 %v2940, %v3100
      %v3102 = vpop.f32.mrb[0].mxu0
      %3103 = vmatprep.mubr.bf16.mxu0 0
      %3104 = vmatmul.mubr.bf16.gmra.mrb[0].mxu0 %v2621
      %v3105 = vpop.f32.mrb[0].mxu0
      %v3106 = vadd.f32 %v2945, %v3105
      %v3107 = vpop.f32.mrb[0].mxu0
      %v3108 = vpop.f32.mrb[0].mxu0
      %v3109 = vadd.f32 %v2948, %v3108
      %v3110 = vpop.f32.mrb[0].mxu0
      %3111 = vmatprep.mubr.bf16.mxu0 0
      %3112 = vmatmul.mubr.bf16.gmra.mrb[0].mxu0 %v2624
      %v3113 = vpop.f32.mrb[0].mxu0
      %v3114 = vadd.f32 %v2953, %v3113
      %v3115 = vpop.f32.mrb[0].mxu0
      %v3116 = vpop.f32.mrb[0].mxu0
      %v3117 = vadd.f32 %v2956, %v3116
      %v3118 = vpop.f32.mrb[0].mxu0
      %3119 = vmatprep.mubr.bf16.mxu0 0
      %3120 = vmatmul.mubr.bf16.gmra.mrb[0].mxu0 %v2627
      %v3121 = vpop.f32.mrb[0].mxu0
      %v3122 = vadd.f32 %v2961, %v3121
      %v3123 = vpop.f32.mrb[0].mxu0
      %v3124 = vpop.f32.mrb[0].mxu0
      %v3125 = vadd.f32 %v2964, %v3124
      %v3126 = vpop.f32.mrb[0].mxu0
      %3127 = vmatprep.mubr.bf16.mxu0 0
      %3128 = vmatmul.mubr.bf16.gmra.mrb[0].mxu0 %v2630
      %v3129 = vpop.f32.mrb[0].mxu0
      %v3130 = vadd.f32 %v2969, %v3129
      %v3131 = vpop.f32.mrb[0].mxu0
      %v3132 = vpop.f32.mrb[0].mxu0
      %v3133 = vadd.f32 %v2972, %v3132
      %v3134 = vpop.f32.mrb[0].mxu0
      %3135 = vmatprep.mubr.bf16.mxu0 0
      %3136 = vmatmul.mubr.bf16.gmra.mrb[0].mxu0 %v2633
      %v3137 = vpop.f32.mrb[0].mxu0
      %v3138 = vadd.f32 %v2977, %v3137
      %v3139 = vpop.f32.mrb[0].mxu0
      %v3140 = vpop.f32.mrb[0].mxu0
      %v3141 = vadd.f32 %v2980, %v3140
      %v3142 = vpop.f32.mrb[0].mxu0
      %3143 = vmatprep.mubr.bf16.mxu0 0
      %3144 = vmatmul.mubr.bf16.gmra.mrb[0].mxu0 %v2636
      %v3145 = vpop.f32.mrb[0].mxu0
      %v3146 = vadd.f32 %v2985, %v3145
      %v3147 = vpop.f32.mrb[0].mxu0
      %v3148 = vpop.f32.mrb[0].mxu0
      %v3149 = vadd.f32 %v2988, %v3148
      %v3150 = vpop.f32.mrb[0].mxu0
      %3151 = vdwg.mxu0
      %v3200 = vunpack.c.l.b16 %v1737
      %v3201 = vunpack.c.l.b16 %v1738
      %v3202 = vunpack.c.l.b16 %v1739
      %v3203 = vunpack.c.l.b16 %v1740
      %v3204 = vunpack.c.l.b16 %v1741
      %v3205 = vunpack.c.l.b16 %v1742
      %v3206 = vunpack.c.l.b16 %v1743
      %v3207 = vunpack.c.l.b16 %v1744
      %v3208 = vunpack.c.l.b16 %v1745
      %v3209 = vunpack.c.l.b16 %v1746
      %v3210 = vunpack.c.l.b16 %v1747
      %v3211 = vunpack.c.l.b16 %v1748
      %v3212 = vunpack.c.l.b16 %v1749
      %v3213 = vunpack.c.l.b16 %v1750
      %v3214 = vunpack.c.l.b16 %v1751
      %v3215 = vunpack.c.l.b16 %v1752
      %v3216 = vunpack.c.l.b16 %v1753
      %v3217 = vunpack.c.l.b16 %v1754
      %v3218 = vunpack.c.l.b16 %v1755
      %v3219 = vunpack.c.l.b16 %v1756
      %v3220 = vunpack.c.l.b16 %v1757
      %v3221 = vunpack.c.l.b16 %v1758
      %v3222 = vunpack.c.l.b16 %v1759
      %v3223 = vunpack.c.l.b16 %v1760
      %v3224 = vunpack.c.l.b16 %v1761
      %v3225 = vunpack.c.l.b16 %v1762
      %v3226 = vunpack.c.l.b16 %v1763
      %v3227 = vunpack.c.l.b16 %v1764
      %v3228 = vunpack.c.l.b16 %v1765
      %v3229 = vunpack.c.l.b16 %v1766
      %v3230 = vunpack.c.l.b16 %v1767
      %v3231 = vunpack.c.l.b16 %v1768
      %v3232 = vunpack.c.l.b16 %v1769
      %v3233 = vunpack.c.l.b16 %v1770
      %v3234 = vunpack.c.l.b16 %v1771
      %v3235 = vunpack.c.l.b16 %v1772
      %v3236 = vunpack.c.l.b16 %v1773
      %v3237 = vunpack.c.l.b16 %v1774
      %v3238 = vunpack.c.l.b16 %v1775
      %v3239 = vunpack.c.l.b16 %v1776
      %v3240 = vunpack.c.l.b16 %v1777
      %v3241 = vunpack.c.l.b16 %v1778
      %v3242 = vunpack.c.l.b16 %v1779
      %v3243 = vunpack.c.l.b16 %v1780
      %v3244 = vunpack.c.l.b16 %v1781
      %v3245 = vunpack.c.l.b16 %v1782
      %v3246 = vunpack.c.l.b16 %v1783
      %v3247 = vunpack.c.l.b16 %v1784
      %v3248 = vpack.c.b16 %v3201, %v3200
      %v3249 = vpack.c.b16 %v3203, %v3202
      %v3250 = vpack.c.b16 %v3205, %v3204
      %v3251 = vpack.c.b16 %v3207, %v3206
      %v3252 = vpack.c.b16 %v3209, %v3208
      %v3253 = vpack.c.b16 %v3211, %v3210
      %v3254 = vpack.c.b16 %v3213, %v3212
      %v3255 = vpack.c.b16 %v3215, %v3214
      %v3256 = vpack.c.b16 %v3217, %v3216
      %v3257 = vpack.c.b16 %v3219, %v3218
      %v3258 = vpack.c.b16 %v3221, %v3220
      %v3259 = vpack.c.b16 %v3223, %v3222
      %v3260 = vpack.c.b16 %v3225, %v3224
      %v3261 = vpack.c.b16 %v3227, %v3226
      %v3262 = vpack.c.b16 %v3229, %v3228
      %v3263 = vpack.c.b16 %v3231, %v3230
      %v3264 = vpack.c.b16 %v3233, %v3232
      %v3265 = vpack.c.b16 %v3235, %v3234
      %v3266 = vpack.c.b16 %v3237, %v3236
      %v3267 = vpack.c.b16 %v3239, %v3238
      %v3268 = vpack.c.b16 %v3241, %v3240
      %v3269 = vpack.c.b16 %v3243, %v3242
      %v3270 = vpack.c.b16 %v3245, %v3244
      %v3271 = vpack.c.b16 %v3247, %v3246
      %3296 = vmatprep.subr.bf16.mxu0 0
      %3297 = vmatpush1.bf16.msra.mxu0 %v3248
      %3298 = vmatprep.subr.bf16.mxu0 0
      %3299 = vmatpush1.bf16.msra.mxu0 %v3249
      %3300 = vmatprep.subr.bf16.mxu0 0
      %3301 = vmatpush1.bf16.msra.mxu0 %v3250
      %3302 = vmatprep.subr.bf16.mxu0 0
      %3303 = vmatpush1.bf16.msra.mxu0 %v3251
      %3304 = vmatprep.subr.bf16.mxu0 0
      %3305 = vmatpush1.bf16.msra.mxu0 %v3252
      %3306 = vmatprep.subr.bf16.mxu0 0
      %3307 = vmatpush1.bf16.msra.mxu0 %v3253
      %3308 = vmatprep.subr.bf16.mxu0 0
      %3309 = vmatpush1.bf16.msra.mxu0 %v3254
      %3310 = vmatprep.subr.bf16.mxu0 0
      %3311 = vmatpush1.bf16.msra.mxu0 %v3255
      %3312 = vmatprep.subr.bf16.mxu0 0
      %3313 = vmatpush1.bf16.msra.mxu0 %v3256
      %3314 = vmatprep.subr.bf16.mxu0 0
      %3315 = vmatpush1.bf16.msra.mxu0 %v3257
      %3316 = vmatprep.subr.bf16.mxu0 0
      %3317 = vmatpush1.bf16.msra.mxu0 %v3258
      %3318 = vmatprep.subr.bf16.mxu0 0
      %3319 = vmatpush1.bf16.msra.mxu0 %v3259
      %3320 = vmatprep.subr.bf16.mxu0 0
      %3321 = vmatpush1.bf16.msra.mxu0 %v3260
      %3322 = vmatprep.subr.bf16.mxu0 0
      %3323 = vmatpush1.bf16.msra.mxu0 %v3261
      %3324 = vmatprep.subr.bf16.mxu0 0
      %3325 = vmatpush1.bf16.msra.mxu0 %v3262
      %3326 = vmatprep.subr.bf16.mxu0 0
      %3327 = vmatpush1.bf16.msra.mxu0 %v3263
      %3328 = vmatprep.mubr.bf16.mxu0 %v1690
      %3329 = vmatmul.mubr.bf16.gmra.mrb[0].mxu0 %v1689
      %v3330 = vpop.f32.mrb[0].mxu0
      %v3331 = vadd.f32 %v3026, %v3330
      %v3332 = vpop.f32.mrb[0].mxu0
      %v3333 = vpop.f32.mrb[0].mxu0
      %v3334 = vadd.f32 %v3029, %v3333
      %v3335 = vpop.f32.mrb[0].mxu0
      %3336 = vmatprep.mubr.bf16.mxu0 %v1693
      %3337 = vmatmul.mubr.bf16.gmra.mrb[0].mxu0 %v1692
      %v3338 = vpop.f32.mrb[0].mxu0
      %v3339 = vadd.f32 %v3034, %v3338
      %v3340 = vpop.f32.mrb[0].mxu0
      %v3341 = vpop.f32.mrb[0].mxu0
      %v3342 = vadd.f32 %v3037, %v3341
      %v3343 = vpop.f32.mrb[0].mxu0
      %3344 = vmatprep.mubr.bf16.mxu0 %v1696
      %3345 = vmatmul.mubr.bf16.gmra.mrb[0].mxu0 %v1695
      %v3346 = vpop.f32.mrb[0].mxu0
      %v3347 = vadd.f32 %v3042, %v3346
      %v3348 = vpop.f32.mrb[0].mxu0
      %v3349 = vpop.f32.mrb[0].mxu0
      %v3350 = vadd.f32 %v3045, %v3349
      %v3351 = vpop.f32.mrb[0].mxu0
      %3352 = vmatprep.mubr.bf16.mxu0 %v1699
      %3353 = vmatmul.mubr.bf16.gmra.mrb[0].mxu0 %v1698
      %v3354 = vpop.f32.mrb[0].mxu0
      %v3355 = vadd.f32 %v3050, %v3354
      %v3356 = vpop.f32.mrb[0].mxu0
      %v3357 = vpop.f32.mrb[0].mxu0
      %v3358 = vadd.f32 %v3053, %v3357
      %v3359 = vpop.f32.mrb[0].mxu0
      %3360 = vmatprep.mubr.bf16.mxu0 %v1702
      %3361 = vmatmul.mubr.bf16.gmra.mrb[0].mxu0 %v1701
      %v3362 = vpop.f32.mrb[0].mxu0
      %v3363 = vadd.f32 %v3058, %v3362
      %v3364 = vpop.f32.mrb[0].mxu0
      %v3365 = vpop.f32.mrb[0].mxu0
      %v3366 = vadd.f32 %v3061, %v3365
      %v3367 = vpop.f32.mrb[0].mxu0
      %3368 = vmatprep.mubr.bf16.mxu0 %v1705
      %3369 = vmatmul.mubr.bf16.gmra.mrb[0].mxu0 %v1704
      %v3370 = vpop.f32.mrb[0].mxu0
      %v3371 = vadd.f32 %v3066, %v3370
      %v3372 = vpop.f32.mrb[0].mxu0
      %v3373 = vpop.f32.mrb[0].mxu0
      %v3374 = vadd.f32 %v3069, %v3373
      %v3375 = vpop.f32.mrb[0].mxu0
      %3376 = vmatprep.mubr.bf16.mxu0 %v1708
      %3377 = vmatmul.mubr.bf16.gmra.mrb[0].mxu0 %v1707
      %v3378 = vpop.f32.mrb[0].mxu0
      %v3379 = vadd.f32 %v3074, %v3378
      %v3380 = vpop.f32.mrb[0].mxu0
      %v3381 = vpop.f32.mrb[0].mxu0
      %v3382 = vadd.f32 %v3077, %v3381
      %v3383 = vpop.f32.mrb[0].mxu0
      %3384 = vmatprep.mubr.bf16.mxu0 %v1711
      %3385 = vmatmul.mubr.bf16.gmra.mrb[0].mxu0 %v1710
      %v3386 = vpop.f32.mrb[0].mxu0
      %v3387 = vadd.f32 %v3082, %v3386
      %v3388 = vpop.f32.mrb[0].mxu0
      %v3389 = vpop.f32.mrb[0].mxu0
      %v3390 = vadd.f32 %v3085, %v3389
      %v3391 = vpop.f32.mrb[0].mxu0
      %3392 = vmatprep.mubr.bf16.mxu0 %v1714
      %3393 = vmatmul.mubr.bf16.gmra.mrb[0].mxu0 %v1713
      %v3394 = vpop.f32.mrb[0].mxu0
      %v3395 = vadd.f32 %v3090, %v3394
      %v3396 = vpop.f32.mrb[0].mxu0
      %v3397 = vpop.f32.mrb[0].mxu0
      %v3398 = vadd.f32 %v3093, %v3397
      %v3399 = vpop.f32.mrb[0].mxu0
      %3400 = vmatprep.mubr.bf16.mxu0 %v1717
      %3401 = vmatmul.mubr.bf16.gmra.mrb[0].mxu0 %v1716
      %v3402 = vpop.f32.mrb[0].mxu0
      %v3403 = vadd.f32 %v3098, %v3402
      %v3404 = vpop.f32.mrb[0].mxu0
      %v3405 = vpop.f32.mrb[0].mxu0
      %v3406 = vadd.f32 %v3101, %v3405
      %v3407 = vpop.f32.mrb[0].mxu0
      %3408 = vmatprep.mubr.bf16.mxu0 %v1720
      %3409 = vmatmul.mubr.bf16.gmra.mrb[0].mxu0 %v1719
      %v3410 = vpop.f32.mrb[0].mxu0
      %v3411 = vadd.f32 %v3106, %v3410
      %v3412 = vpop.f32.mrb[0].mxu0
      %v3413 = vpop.f32.mrb[0].mxu0
      %v3414 = vadd.f32 %v3109, %v3413
      %v3415 = vpop.f32.mrb[0].mxu0
      %3416 = vmatprep.mubr.bf16.mxu0 %v1723
      %3417 = vmatmul.mubr.bf16.gmra.mrb[0].mxu0 %v1722
      %v3418 = vpop.f32.mrb[0].mxu0
      %v3419 = vadd.f32 %v3114, %v3418
      %v3420 = vpop.f32.mrb[0].mxu0
      %v3421 = vpop.f32.mrb[0].mxu0
      %v3422 = vadd.f32 %v3117, %v3421
      %v3423 = vpop.f32.mrb[0].mxu0
      %3424 = vmatprep.mubr.bf16.mxu0 %v1726
      %3425 = vmatmul.mubr.bf16.gmra.mrb[0].mxu0 %v1725
      %v3426 = vpop.f32.mrb[0].mxu0
      %v3427 = vadd.f32 %v3122, %v3426
      %v3428 = vpop.f32.mrb[0].mxu0
      %v3429 = vpop.f32.mrb[0].mxu0
      %v3430 = vadd.f32 %v3125, %v3429
      %v3431 = vpop.f32.mrb[0].mxu0
      %3432 = vmatprep.mubr.bf16.mxu0 %v1729
      %3433 = vmatmul.mubr.bf16.gmra.mrb[0].mxu0 %v1728
      %v3434 = vpop.f32.mrb[0].mxu0
      %v3435 = vadd.f32 %v3130, %v3434
      %v3436 = vpop.f32.mrb[0].mxu0
      %v3437 = vpop.f32.mrb[0].mxu0
      %v3438 = vadd.f32 %v3133, %v3437
      %v3439 = vpop.f32.mrb[0].mxu0
      %3440 = vmatprep.mubr.bf16.mxu0 %v1732
      %3441 = vmatmul.mubr.bf16.gmra.mrb[0].mxu0 %v1731
      %v3442 = vpop.f32.mrb[0].mxu0
      %v3443 = vadd.f32 %v3138, %v3442
      %v3444 = vpop.f32.mrb[0].mxu0
      %v3445 = vpop.f32.mrb[0].mxu0
      %v3446 = vadd.f32 %v3141, %v3445
      %v3447 = vpop.f32.mrb[0].mxu0
      %3448 = vmatprep.mubr.bf16.mxu0 %v1735
      %3449 = vmatmul.mubr.bf16.gmra.mrb[0].mxu0 %v1734
      %v3450 = vpop.f32.mrb[0].mxu0
      %v3451 = vadd.f32 %v3146, %v3450
      %v3452 = vpop.f32.mrb[0].mxu0
      %v3453 = vpop.f32.mrb[0].mxu0
      %v3454 = vadd.f32 %v3149, %v3453
      %v3455 = vpop.f32.mrb[0].mxu0
      %3456 = vdwg.mxu0
      %3457 = vmatprep.subr.bf16.mxu0 0
      %3458 = vmatpush1.bf16.msra.mxu0 %v3264
      %3459 = vmatprep.subr.bf16.mxu0 0
      %3460 = vmatpush1.bf16.msra.mxu0 %v3265
      %3461 = vmatprep.subr.bf16.mxu0 0
      %3462 = vmatpush1.bf16.msra.mxu0 %v3266
      %3463 = vmatprep.subr.bf16.mxu0 0
      %3464 = vmatpush1.bf16.msra.mxu0 %v3267
      %3465 = vmatprep.subr.bf16.mxu0 0
      %3466 = vmatpush1.bf16.msra.mxu0 %v3268
      %3467 = vmatprep.subr.bf16.mxu0 0
      %3468 = vmatpush1.bf16.msra.mxu0 %v3269
      %3469 = vmatprep.subr.bf16.mxu0 0
      %3470 = vmatpush1.bf16.msra.mxu0 %v3270
      %3471 = vmatprep.subr.bf16.mxu0 0
      %3472 = vmatpush1.bf16.msra.mxu0 %v3271
      %3473 = vmatprep.subr.bf16.mxu0 0
      %3474 = vmatpush1.bf16.msra.mxu0 0
      %3475 = vmatprep.subr.bf16.mxu0 0
      %3476 = vmatpush1.bf16.msra.mxu0 0
      %3477 = vmatprep.subr.bf16.mxu0 0
      %3478 = vmatpush1.bf16.msra.mxu0 0
      %3479 = vmatprep.subr.bf16.mxu0 0
      %3480 = vmatpush1.bf16.msra.mxu0 0
      %3481 = vmatprep.subr.bf16.mxu0 0
      %3482 = vmatpush1.bf16.msra.mxu0 0
      %3483 = vmatprep.subr.bf16.mxu0 0
      %3484 = vmatpush1.bf16.msra.mxu0 0
      %3485 = vmatprep.subr.bf16.mxu0 0
      %3486 = vmatpush1.bf16.msra.mxu0 0
      %3487 = vmatprep.subr.bf16.mxu0 0
      %3488 = vmatpush1.bf16.msra.mxu0 0
      %3489 = vmatprep.mubr.bf16.mxu0 0
      %3490 = vmatmul.mubr.bf16.gmra.mrb[0].mxu0 %v1691
      %v3491 = vpop.f32.mrb[0].mxu0
      %v3492 = vadd.f32 %v3331, %v3491
      %v3493 = vpop.f32.mrb[0].mxu0
      %v3494 = vpop.f32.mrb[0].mxu0
      %v3495 = vadd.f32 %v3334, %v3494
      %v3496 = vpop.f32.mrb[0].mxu0
      %3497 = vmatprep.mubr.bf16.mxu0 0
      %3498 = vmatmul.mubr.bf16.gmra.mrb[0].mxu0 %v1694
      %v3499 = vpop.f32.mrb[0].mxu0
      %v3500 = vadd.f32 %v3339, %v3499
      %v3501 = vpop.f32.mrb[0].mxu0
      %v3502 = vpop.f32.mrb[0].mxu0
      %v3503 = vadd.f32 %v3342, %v3502
      %v3504 = vpop.f32.mrb[0].mxu0
      %3505 = vmatprep.mubr.bf16.mxu0 0
      %3506 = vmatmul.mubr.bf16.gmra.mrb[0].mxu0 %v1697
      %v3507 = vpop.f32.mrb[0].mxu0
      %v3508 = vadd.f32 %v3347, %v3507
      %v3509 = vpop.f32.mrb[0].mxu0
      %v3510 = vpop.f32.mrb[0].mxu0
      %v3511 = vadd.f32 %v3350, %v3510
      %v3512 = vpop.f32.mrb[0].mxu0
      %3513 = vmatprep.mubr.bf16.mxu0 0
      %3514 = vmatmul.mubr.bf16.gmra.mrb[0].mxu0 %v1700
      %v3515 = vpop.f32.mrb[0].mxu0
      %v3516 = vadd.f32 %v3355, %v3515
      %v3517 = vpop.f32.mrb[0].mxu0
      %v3518 = vpop.f32.mrb[0].mxu0
      %v3519 = vadd.f32 %v3358, %v3518
      %v3520 = vpop.f32.mrb[0].mxu0
      %3521 = vmatprep.mubr.bf16.mxu0 0
      %3522 = vmatmul.mubr.bf16.gmra.mrb[0].mxu0 %v1703
      %v3523 = vpop.f32.mrb[0].mxu0
      %v3524 = vadd.f32 %v3363, %v3523
      %v3525 = vpop.f32.mrb[0].mxu0
      %v3526 = vpop.f32.mrb[0].mxu0
      %v3527 = vadd.f32 %v3366, %v3526
      %v3528 = vpop.f32.mrb[0].mxu0
      %3529 = vmatprep.mubr.bf16.mxu0 0
      %3530 = vmatmul.mubr.bf16.gmra.mrb[0].mxu0 %v1706
      %v3531 = vpop.f32.mrb[0].mxu0
      %v3532 = vadd.f32 %v3371, %v3531
      %v3533 = vpop.f32.mrb[0].mxu0
      %v3534 = vpop.f32.mrb[0].mxu0
      %v3535 = vadd.f32 %v3374, %v3534
      %v3536 = vpop.f32.mrb[0].mxu0
      %3537 = vmatprep.mubr.bf16.mxu0 0
      %3538 = vmatmul.mubr.bf16.gmra.mrb[0].mxu0 %v1709
      %v3539 = vpop.f32.mrb[0].mxu0
      %v3540 = vadd.f32 %v3379, %v3539
      %v3541 = vpop.f32.mrb[0].mxu0
      %v3542 = vpop.f32.mrb[0].mxu0
      %v3543 = vadd.f32 %v3382, %v3542
      %v3544 = vpop.f32.mrb[0].mxu0
      %3545 = vmatprep.mubr.bf16.mxu0 0
      %3546 = vmatmul.mubr.bf16.gmra.mrb[0].mxu0 %v1712
      %v3547 = vpop.f32.mrb[0].mxu0
      %v3548 = vadd.f32 %v3387, %v3547
      %v3549 = vpop.f32.mrb[0].mxu0
      %v3550 = vpop.f32.mrb[0].mxu0
      %v3551 = vadd.f32 %v3390, %v3550
      %v3552 = vpop.f32.mrb[0].mxu0
      %3553 = vmatprep.mubr.bf16.mxu0 0
      %3554 = vmatmul.mubr.bf16.gmra.mrb[0].mxu0 %v1715
      %v3555 = vpop.f32.mrb[0].mxu0
      %v3556 = vadd.f32 %v3395, %v3555
      %v3557 = vpop.f32.mrb[0].mxu0
      %v3558 = vpop.f32.mrb[0].mxu0
      %v3559 = vadd.f32 %v3398, %v3558
      %v3560 = vpop.f32.mrb[0].mxu0
      %3561 = vmatprep.mubr.bf16.mxu0 0
      %3562 = vmatmul.mubr.bf16.gmra.mrb[0].mxu0 %v1718
      %v3563 = vpop.f32.mrb[0].mxu0
      %v3564 = vadd.f32 %v3403, %v3563
      %v3565 = vpop.f32.mrb[0].mxu0
      %v3566 = vpop.f32.mrb[0].mxu0
      %v3567 = vadd.f32 %v3406, %v3566
      %v3568 = vpop.f32.mrb[0].mxu0
      %3569 = vmatprep.mubr.bf16.mxu0 0
      %3570 = vmatmul.mubr.bf16.gmra.mrb[0].mxu0 %v1721
      %v3571 = vpop.f32.mrb[0].mxu0
      %v3572 = vadd.f32 %v3411, %v3571
      %v3573 = vpop.f32.mrb[0].mxu0
      %v3574 = vpop.f32.mrb[0].mxu0
      %v3575 = vadd.f32 %v3414, %v3574
      %v3576 = vpop.f32.mrb[0].mxu0
      %3577 = vmatprep.mubr.bf16.mxu0 0
      %3578 = vmatmul.mubr.bf16.gmra.mrb[0].mxu0 %v1724
      %v3579 = vpop.f32.mrb[0].mxu0
      %v3580 = vadd.f32 %v3419, %v3579
      %v3581 = vpop.f32.mrb[0].mxu0
      %v3582 = vpop.f32.mrb[0].mxu0
      %v3583 = vadd.f32 %v3422, %v3582
      %v3584 = vpop.f32.mrb[0].mxu0
      %3585 = vmatprep.mubr.bf16.mxu0 0
      %3586 = vmatmul.mubr.bf16.gmra.mrb[0].mxu0 %v1727
      %v3587 = vpop.f32.mrb[0].mxu0
      %v3588 = vadd.f32 %v3427, %v3587
      %v3589 = vpop.f32.mrb[0].mxu0
      %v3590 = vpop.f32.mrb[0].mxu0
      %v3591 = vadd.f32 %v3430, %v3590
      %v3592 = vpop.f32.mrb[0].mxu0
      %3593 = vmatprep.mubr.bf16.mxu0 0
      %3594 = vmatmul.mubr.bf16.gmra.mrb[0].mxu0 %v1730
      %v3595 = vpop.f32.mrb[0].mxu0
      %v3596 = vadd.f32 %v3435, %v3595
      %v3597 = vpop.f32.mrb[0].mxu0
      %v3598 = vpop.f32.mrb[0].mxu0
      %v3599 = vadd.f32 %v3438, %v3598
      %v3600 = vpop.f32.mrb[0].mxu0
      %3601 = vmatprep.mubr.bf16.mxu0 0
      %3602 = vmatmul.mubr.bf16.gmra.mrb[0].mxu0 %v1733
      %v3603 = vpop.f32.mrb[0].mxu0
      %v3604 = vadd.f32 %v3443, %v3603
      %v3605 = vpop.f32.mrb[0].mxu0
      %v3606 = vpop.f32.mrb[0].mxu0
      %v3607 = vadd.f32 %v3446, %v3606
      %v3608 = vpop.f32.mrb[0].mxu0
      %3609 = vmatprep.mubr.bf16.mxu0 0
      %3610 = vmatmul.mubr.bf16.gmra.mrb[0].mxu0 %v1736
      %v3611 = vpop.f32.mrb[0].mxu0
      %v3612 = vadd.f32 %v3451, %v3611
      %v3613 = vpop.f32.mrb[0].mxu0
      %v3614 = vpop.f32.mrb[0].mxu0
      %v3615 = vadd.f32 %v3454, %v3614
      %v3616 = vpop.f32.mrb[0].mxu0
      %3617 = vdwg.mxu0
      %s3618 = sadd.s32 0, 2
      %s3619 = smul.u32 %s3618, 3
      %s3620 = smul.addr %s3619, 4
      %s3621 = scalar_lea.vmem [#allocation2], %s3620
      %v3622 = vld [vmem:[%s3621] sm:$0xf]
      %v3623 = vld [vmem:[%s3621 + $0x4] sm:$0xf]
      %v3624 = vld [vmem:[%s3621 + $0xc] sm:$0xf]
      %v3625 = vld [vmem:[%s3621 + $0x10] sm:$0xf]
      %v3626 = vld [vmem:[%s3621 + $0x18] sm:$0xf]
      %v3627 = vld [vmem:[%s3621 + $0x1c] sm:$0xf]
      %v3628 = vld [vmem:[%s3621 + $0x24] sm:$0xf]
      %v3629 = vld [vmem:[%s3621 + $0x28] sm:$0xf]
      %v3630 = vld [vmem:[%s3621 + $0x30] sm:$0xf]
      %v3631 = vld [vmem:[%s3621 + $0x34] sm:$0xf]
      %v3632 = vld [vmem:[%s3621 + $0x3c] sm:$0xf]
      %v3633 = vld [vmem:[%s3621 + $0x40] sm:$0xf]
      %v3634 = vld [vmem:[%s3621 + $0x48] sm:$0xf]
      %v3635 = vld [vmem:[%s3621 + $0x4c] sm:$0xf]
      %v3636 = vld [vmem:[%s3621 + $0x54] sm:$0xf]
      %v3637 = vld [vmem:[%s3621 + $0x58] sm:$0xf]
      %v3638 = vld [vmem:[%s3621 + $0x60] sm:$0xf]
      %v3639 = vld [vmem:[%s3621 + $0x64] sm:$0xf]
      %v3640 = vld [vmem:[%s3621 + $0x6c] sm:$0xf]
      %v3641 = vld [vmem:[%s3621 + $0x70] sm:$0xf]
      %v3642 = vld [vmem:[%s3621 + $0x78] sm:$0xf]
      %v3643 = vld [vmem:[%s3621 + $0x7c] sm:$0xf]
      %v3644 = vld [vmem:[%s3621 + $0x84] sm:$0xf]
      %v3645 = vld [vmem:[%s3621 + $0x88] sm:$0xf]
      %v3646 = vld [vmem:[%s3621 + $0x90] sm:$0xf]
      %v3647 = vld [vmem:[%s3621 + $0x94] sm:$0xf]
      %v3648 = vld [vmem:[%s3621 + $0x9c] sm:$0xf]
      %v3649 = vld [vmem:[%s3621 + $0xa0] sm:$0xf]
      %v3650 = vld [vmem:[%s3621 + $0xa8] sm:$0xf]
      %v3651 = vld [vmem:[%s3621 + $0xac] sm:$0xf]
      %v3652 = vld [vmem:[%s3621 + $0xb4] sm:$0xf]
      %v3653 = vld [vmem:[%s3621 + $0xb8] sm:$0xf]
      %v3686 = vunpack.c.l.b16 %v3622
      %v3687 = vunpack.c.l.b16 %v3623
      %v3688 = vunpack.c.l.b16 %v3624
      %v3689 = vunpack.c.l.b16 %v3625
      %v3690 = vunpack.c.l.b16 %v3626
      %v3691 = vunpack.c.l.b16 %v3627
      %v3692 = vunpack.c.l.b16 %v3628
      %v3693 = vunpack.c.l.b16 %v3629
      %v3694 = vunpack.c.l.b16 %v3630
      %v3695 = vunpack.c.l.b16 %v3631
      %v3696 = vunpack.c.l.b16 %v3632
      %v3697 = vunpack.c.l.b16 %v3633
      %v3698 = vunpack.c.l.b16 %v3634
      %v3699 = vunpack.c.l.b16 %v3635
      %v3700 = vunpack.c.l.b16 %v3636
      %v3701 = vunpack.c.l.b16 %v3637
      %v3702 = vunpack.c.l.b16 %v3638
      %v3703 = vunpack.c.l.b16 %v3639
      %v3704 = vunpack.c.l.b16 %v3640
      %v3705 = vunpack.c.l.b16 %v3641
      %v3706 = vunpack.c.l.b16 %v3642
      %v3707 = vunpack.c.l.b16 %v3643
      %v3708 = vunpack.c.l.b16 %v3644
      %v3709 = vunpack.c.l.b16 %v3645
      %v3710 = vunpack.c.l.b16 %v3646
      %v3711 = vunpack.c.l.b16 %v3647
      %v3712 = vunpack.c.l.b16 %v3648
      %v3713 = vunpack.c.l.b16 %v3649
      %v3714 = vunpack.c.l.b16 %v3650
      %v3715 = vunpack.c.l.b16 %v3651
      %v3716 = vunpack.c.l.b16 %v3652
      %v3717 = vunpack.c.l.b16 %v3653
      %v3718 = vpack.c.b16 %v3687, %v3686
      %v3719 = vpack.c.b16 %v3689, %v3688
      %v3720 = vpack.c.b16 %v3691, %v3690
      %v3721 = vpack.c.b16 %v3693, %v3692
      %v3722 = vpack.c.b16 %v3695, %v3694
      %v3723 = vpack.c.b16 %v3697, %v3696
      %v3724 = vpack.c.b16 %v3699, %v3698
      %v3725 = vpack.c.b16 %v3701, %v3700
      %v3726 = vpack.c.b16 %v3703, %v3702
      %v3727 = vpack.c.b16 %v3705, %v3704
      %v3728 = vpack.c.b16 %v3707, %v3706
      %v3729 = vpack.c.b16 %v3709, %v3708
      %v3730 = vpack.c.b16 %v3711, %v3710
      %v3731 = vpack.c.b16 %v3713, %v3712
      %v3732 = vpack.c.b16 %v3715, %v3714
      %v3733 = vpack.c.b16 %v3717, %v3716
      %3750 = vst [vmem:[#allocation4] sm:$0xff] %v3718
      %3751 = vst [vmem:[#allocation4 + $0x18] sm:$0xff] %v3719
      %3752 = vst [vmem:[#allocation4 + $0x30] sm:$0xff] %v3720
      %3753 = vst [vmem:[#allocation4 + $0x48] sm:$0xff] %v3721
      %3754 = vst [vmem:[#allocation4 + $0x60] sm:$0xff] %v3722
      %3755 = vst [vmem:[#allocation4 + $0x78] sm:$0xff] %v3723
      %3756 = vst [vmem:[#allocation4 + $0x90] sm:$0xff] %v3724
      %3757 = vst [vmem:[#allocation4 + $0xa8] sm:$0xff] %v3725
      %3758 = vst [vmem:[#allocation4 + $0xc0] sm:$0xff] %v3726
      %3759 = vst [vmem:[#allocation4 + $0xd8] sm:$0xff] %v3727
      %3760 = vst [vmem:[#allocation4 + $0xf0] sm:$0xff] %v3728
      %3761 = vst [vmem:[#allocation4 + $0x108] sm:$0xff] %v3729
      %3762 = vst [vmem:[#allocation4 + $0x120] sm:$0xff] %v3730
      %3763 = vst [vmem:[#allocation4 + $0x138] sm:$0xff] %v3731
      %3764 = vst [vmem:[#allocation4 + $0x150] sm:$0xff] %v3732
      %3765 = vst [vmem:[#allocation4 + $0x168] sm:$0xff] %v3733
      %v3766 = vld [vmem:[%s3621] sm:$0xf]
      %v3767 = vld [vmem:[%s3621 + $0x4] sm:$0xf]
      %v3768 = vld [vmem:[%s3621 + $0x8] sm:$0x1]
      %v3769 = vld [vmem:[%s3621 + $0xc] sm:$0xf]
      %v3770 = vld [vmem:[%s3621 + $0x10] sm:$0xf]
      %v3771 = vld [vmem:[%s3621 + $0x14] sm:$0x1]
      %v3772 = vld [vmem:[%s3621 + $0x18] sm:$0xf]
      %v3773 = vld [vmem:[%s3621 + $0x1c] sm:$0xf]
      %v3774 = vld [vmem:[%s3621 + $0x20] sm:$0x1]
      %v3775 = vld [vmem:[%s3621 + $0x24] sm:$0xf]
      %v3776 = vld [vmem:[%s3621 + $0x28] sm:$0xf]
      %v3777 = vld [vmem:[%s3621 + $0x2c] sm:$0x1]
      %v3778 = vld [vmem:[%s3621 + $0x30] sm:$0xf]
      %v3779 = vld [vmem:[%s3621 + $0x34] sm:$0xf]
      %v3780 = vld [vmem:[%s3621 + $0x38] sm:$0x1]
      %v3781 = vld [vmem:[%s3621 + $0x3c] sm:$0xf]
      %v3782 = vld [vmem:[%s3621 + $0x40] sm:$0xf]
      %v3783 = vld [vmem:[%s3621 + $0x44] sm:$0x1]
      %v3784 = vld [vmem:[%s3621 + $0x48] sm:$0xf]
      %v3785 = vld [vmem:[%s3621 + $0x4c] sm:$0xf]
      %v3786 = vld [vmem:[%s3621 + $0x50] sm:$0x1]
      %v3787 = vld [vmem:[%s3621 + $0x54] sm:$0xf]
      %v3788 = vld [vmem:[%s3621 + $0x58] sm:$0xf]
      %v3789 = vld [vmem:[%s3621 + $0x5c] sm:$0x1]
      %v3790 = vld [vmem:[%s3621 + $0x60] sm:$0xf]
      %v3791 = vld [vmem:[%s3621 + $0x64] sm:$0xf]
      %v3792 = vld [vmem:[%s3621 + $0x68] sm:$0x1]
      %v3793 = vld [vmem:[%s3621 + $0x6c] sm:$0xf]
      %v3794 = vld [vmem:[%s3621 + $0x70] sm:$0xf]
      %v3795 = vld [vmem:[%s3621 + $0x74] sm:$0x1]
      %v3796 = vld [vmem:[%s3621 + $0x78] sm:$0xf]
      %v3797 = vld [vmem:[%s3621 + $0x7c] sm:$0xf]
      %v3798 = vld [vmem:[%s3621 + $0x80] sm:$0x1]
      %v3799 = vld [vmem:[%s3621 + $0x84] sm:$0xf]
      %v3800 = vld [vmem:[%s3621 + $0x88] sm:$0xf]
      %v3801 = vld [vmem:[%s3621 + $0x8c] sm:$0x1]
      %v3802 = vld [vmem:[%s3621 + $0x90] sm:$0xf]
      %v3803 = vld [vmem:[%s3621 + $0x94] sm:$0xf]
      %v3804 = vld [vmem:[%s3621 + $0x98] sm:$0x1]
      %v3805 = vld [vmem:[%s3621 + $0x9c] sm:$0xf]
      %v3806 = vld [vmem:[%s3621 + $0xa0] sm:$0xf]
      %v3807 = vld [vmem:[%s3621 + $0xa4] sm:$0x1]
      %v3808 = vld [vmem:[%s3621 + $0xa8] sm:$0xf]
      %v3809 = vld [vmem:[%s3621 + $0xac] sm:$0xf]
      %v3810 = vld [vmem:[%s3621 + $0xb0] sm:$0x1]
      %v3811 = vld [vmem:[%s3621 + $0xb4] sm:$0xf]
      %v3812 = vld [vmem:[%s3621 + $0xb8] sm:$0xf]
      %v3813 = vld [vmem:[%s3621 + $0xbc] sm:$0x1]
      %v3862 = vunpack.c.l.b16 %v3766
      %v3863 = vunpack.c.l.b16 %v3767
      %v3864 = vunpack.c.l.b16 %v3768
      %v3865 = vunpack.c.l.b16 %v3769
      %v3866 = vunpack.c.l.b16 %v3770
      %v3867 = vunpack.c.l.b16 %v3771
      %v3868 = vunpack.c.l.b16 %v3772
      %v3869 = vunpack.c.l.b16 %v3773
      %v3870 = vunpack.c.l.b16 %v3774
      %v3871 = vunpack.c.l.b16 %v3775
      %v3872 = vunpack.c.l.b16 %v3776
      %v3873 = vunpack.c.l.b16 %v3777
      %v3874 = vunpack.c.l.b16 %v3778
      %v3875 = vunpack.c.l.b16 %v3779
      %v3876 = vunpack.c.l.b16 %v3780
      %v3877 = vunpack.c.l.b16 %v3781
      %v3878 = vunpack.c.l.b16 %v3782
      %v3879 = vunpack.c.l.b16 %v3783
      %v3880 = vunpack.c.l.b16 %v3784
      %v3881 = vunpack.c.l.b16 %v3785
      %v3882 = vunpack.c.l.b16 %v3786
      %v3883 = vunpack.c.l.b16 %v3787
      %v3884 = vunpack.c.l.b16 %v3788
      %v3885 = vunpack.c.l.b16 %v3789
      %v3886 = vunpack.c.l.b16 %v3790
      %v3887 = vunpack.c.l.b16 %v3791
      %v3888 = vunpack.c.l.b16 %v3792
      %v3889 = vunpack.c.l.b16 %v3793
      %v3890 = vunpack.c.l.b16 %v3794
      %v3891 = vunpack.c.l.b16 %v3795
      %v3892 = vunpack.c.l.b16 %v3796
      %v3893 = vunpack.c.l.b16 %v3797
      %v3894 = vunpack.c.l.b16 %v3798
      %v3895 = vunpack.c.l.b16 %v3799
      %v3896 = vunpack.c.l.b16 %v3800
      %v3897 = vunpack.c.l.b16 %v3801
      %v3898 = vunpack.c.l.b16 %v3802
      %v3899 = vunpack.c.l.b16 %v3803
      %v3900 = vunpack.c.l.b16 %v3804
      %v3901 = vunpack.c.l.b16 %v3805
      %v3902 = vunpack.c.l.b16 %v3806
      %v3903 = vunpack.c.l.b16 %v3807
      %v3904 = vunpack.c.l.b16 %v3808
      %v3905 = vunpack.c.l.b16 %v3809
      %v3906 = vunpack.c.l.b16 %v3810
      %v3907 = vunpack.c.l.b16 %v3811
      %v3908 = vunpack.c.l.b16 %v3812
      %v3909 = vunpack.c.l.b16 %v3813
      %v3910 = vpack.c.b16 %v3863, %v3862
      %v3911 = vpack.c.b16 %v3864, %v3864
      %v3912 = vpack.c.b16 %v3866, %v3865
      %v3913 = vpack.c.b16 %v3867, %v3867
      %v3914 = vpack.c.b16 %v3869, %v3868
      %v3915 = vpack.c.b16 %v3870, %v3870
      %v3916 = vpack.c.b16 %v3872, %v3871
      %v3917 = vpack.c.b16 %v3873, %v3873
      %v3918 = vpack.c.b16 %v3875, %v3874
      %v3919 = vpack.c.b16 %v3876, %v3876
      %v3920 = vpack.c.b16 %v3878, %v3877
      %v3921 = vpack.c.b16 %v3879, %v3879
      %v3922 = vpack.c.b16 %v3881, %v3880
      %v3923 = vpack.c.b16 %v3882, %v3882
      %v3924 = vpack.c.b16 %v3884, %v3883
      %v3925 = vpack.c.b16 %v3885, %v3885
      %v3926 = vpack.c.b16 %v3887, %v3886
      %v3927 = vpack.c.b16 %v3888, %v3888
      %v3928 = vpack.c.b16 %v3890, %v3889
      %v3929 = vpack.c.b16 %v3891, %v3891
      %v3930 = vpack.c.b16 %v3893, %v3892
      %v3931 = vpack.c.b16 %v3894, %v3894
      %v3932 = vpack.c.b16 %v3896, %v3895
      %v3933 = vpack.c.b16 %v3897, %v3897
      %v3934 = vpack.c.b16 %v3899, %v3898
      %v3935 = vpack.c.b16 %v3900, %v3900
      %v3936 = vpack.c.b16 %v3902, %v3901
      %v3937 = vpack.c.b16 %v3903, %v3903
      %v3938 = vpack.c.b16 %v3905, %v3904
      %v3939 = vpack.c.b16 %v3906, %v3906
      %v3940 = vpack.c.b16 %v3908, %v3907
      %v3941 = vpack.c.b16 %v3909, %v3909
      %v3943 = vshrl.u32 %v3910, 16
      %v3945 = vshll.u32 %v3910, 16
      %v3947 = vrot.slane %v3945, 1
      %v3948 = vor.u32 %v3943, %v3947
      %v3950 = vshll.u32 %v3911, 16
      %v3952 = vrot.slane %v3950, 1
      %v3953 = vsel %vm1207, %v3948, %v3952
      %v3955 = vshrl.u32 %v3912, 16
      %v3957 = vshll.u32 %v3912, 16
      %v3959 = vrot.slane %v3957, 1
      %v3960 = vor.u32 %v3955, %v3959
      %v3962 = vshll.u32 %v3913, 16
      %v3964 = vrot.slane %v3962, 1
      %v3965 = vsel %vm1207, %v3960, %v3964
      %v3967 = vshrl.u32 %v3914, 16
      %v3969 = vshll.u32 %v3914, 16
      %v3971 = vrot.slane %v3969, 1
      %v3972 = vor.u32 %v3967, %v3971
      %v3974 = vshll.u32 %v3915, 16
      %v3976 = vrot.slane %v3974, 1
      %v3977 = vsel %vm1207, %v3972, %v3976
      %v3979 = vshrl.u32 %v3916, 16
      %v3981 = vshll.u32 %v3916, 16
      %v3983 = vrot.slane %v3981, 1
      %v3984 = vor.u32 %v3979, %v3983
      %v3986 = vshll.u32 %v3917, 16
      %v3988 = vrot.slane %v3986, 1
      %v3989 = vsel %vm1207, %v3984, %v3988
      %v3991 = vshrl.u32 %v3918, 16
      %v3993 = vshll.u32 %v3918, 16
      %v3995 = vrot.slane %v3993, 1
      %v3996 = vor.u32 %v3991, %v3995
      %v3998 = vshll.u32 %v3919, 16
      %v4000 = vrot.slane %v3998, 1
      %v4001 = vsel %vm1207, %v3996, %v4000
      %v4003 = vshrl.u32 %v3920, 16
      %v4005 = vshll.u32 %v3920, 16
      %v4007 = vrot.slane %v4005, 1
      %v4008 = vor.u32 %v4003, %v4007
      %v4010 = vshll.u32 %v3921, 16
      %v4012 = vrot.slane %v4010, 1
      %v4013 = vsel %vm1207, %v4008, %v4012
      %v4015 = vshrl.u32 %v3922, 16
      %v4017 = vshll.u32 %v3922, 16
      %v4019 = vrot.slane %v4017, 1
      %v4020 = vor.u32 %v4015, %v4019
      %v4022 = vshll.u32 %v3923, 16
      %v4024 = vrot.slane %v4022, 1
      %v4025 = vsel %vm1207, %v4020, %v4024
      %v4027 = vshrl.u32 %v3924, 16
      %v4029 = vshll.u32 %v3924, 16
      %v4031 = vrot.slane %v4029, 1
      %v4032 = vor.u32 %v4027, %v4031
      %v4034 = vshll.u32 %v3925, 16
      %v4036 = vrot.slane %v4034, 1
      %v4037 = vsel %vm1207, %v4032, %v4036
      %v4039 = vshrl.u32 %v3926, 16
      %v4041 = vshll.u32 %v3926, 16
      %v4043 = vrot.slane %v4041, 1
      %v4044 = vor.u32 %v4039, %v4043
      %v4046 = vshll.u32 %v3927, 16
      %v4048 = vrot.slane %v4046, 1
      %v4049 = vsel %vm1207, %v4044, %v4048
      %v4051 = vshrl.u32 %v3928, 16
      %v4053 = vshll.u32 %v3928, 16
      %v4055 = vrot.slane %v4053, 1
      %v4056 = vor.u32 %v4051, %v4055
      %v4058 = vshll.u32 %v3929, 16
      %v4060 = vrot.slane %v4058, 1
      %v4061 = vsel %vm1207, %v4056, %v4060
      %v4063 = vshrl.u32 %v3930, 16
      %v4065 = vshll.u32 %v3930, 16
      %v4067 = vrot.slane %v4065, 1
      %v4068 = vor.u32 %v4063, %v4067
      %v4070 = vshll.u32 %v3931, 16
      %v4072 = vrot.slane %v4070, 1
      %v4073 = vsel %vm1207, %v4068, %v4072
      %v4075 = vshrl.u32 %v3932, 16
      %v4077 = vshll.u32 %v3932, 16
      %v4079 = vrot.slane %v4077, 1
      %v4080 = vor.u32 %v4075, %v4079
      %v4082 = vshll.u32 %v3933, 16
      %v4084 = vrot.slane %v4082, 1
      %v4085 = vsel %vm1207, %v4080, %v4084
      %v4087 = vshrl.u32 %v3934, 16
      %v4089 = vshll.u32 %v3934, 16
      %v4091 = vrot.slane %v4089, 1
      %v4092 = vor.u32 %v4087, %v4091
      %v4094 = vshll.u32 %v3935, 16
      %v4096 = vrot.slane %v4094, 1
      %v4097 = vsel %vm1207, %v4092, %v4096
      %v4099 = vshrl.u32 %v3936, 16
      %v4101 = vshll.u32 %v3936, 16
      %v4103 = vrot.slane %v4101, 1
      %v4104 = vor.u32 %v4099, %v4103
      %v4106 = vshll.u32 %v3937, 16
      %v4108 = vrot.slane %v4106, 1
      %v4109 = vsel %vm1207, %v4104, %v4108
      %v4111 = vshrl.u32 %v3938, 16
      %v4113 = vshll.u32 %v3938, 16
      %v4115 = vrot.slane %v4113, 1
      %v4116 = vor.u32 %v4111, %v4115
      %v4118 = vshll.u32 %v3939, 16
      %v4120 = vrot.slane %v4118, 1
      %v4121 = vsel %vm1207, %v4116, %v4120
      %v4123 = vshrl.u32 %v3940, 16
      %v4125 = vshll.u32 %v3940, 16
      %v4127 = vrot.slane %v4125, 1
      %v4128 = vor.u32 %v4123, %v4127
      %v4130 = vshll.u32 %v3941, 16
      %v4132 = vrot.slane %v4130, 1
      %v4133 = vsel %vm1207, %v4128, %v4132
      %4150 = vst [vmem:[#allocation4 + $0x8] sm:$0xff] %v3953
      %4151 = vst [vmem:[#allocation4 + $0x20] sm:$0xff] %v3965
      %4152 = vst [vmem:[#allocation4 + $0x38] sm:$0xff] %v3977
      %4153 = vst [vmem:[#allocation4 + $0x50] sm:$0xff] %v3989
      %4154 = vst [vmem:[#allocation4 + $0x68] sm:$0xff] %v4001
      %4155 = vst [vmem:[#allocation4 + $0x80] sm:$0xff] %v4013
      %4156 = vst [vmem:[#allocation4 + $0x98] sm:$0xff] %v4025
      %4157 = vst [vmem:[#allocation4 + $0xb0] sm:$0xff] %v4037
      %4158 = vst [vmem:[#allocation4 + $0xc8] sm:$0xff] %v4049
      %4159 = vst [vmem:[#allocation4 + $0xe0] sm:$0xff] %v4061
      %4160 = vst [vmem:[#allocation4 + $0xf8] sm:$0xff] %v4073
      %4161 = vst [vmem:[#allocation4 + $0x110] sm:$0xff] %v4085
      %4162 = vst [vmem:[#allocation4 + $0x128] sm:$0xff] %v4097
      %4163 = vst [vmem:[#allocation4 + $0x140] sm:$0xff] %v4109
      %4164 = vst [vmem:[#allocation4 + $0x158] sm:$0xff] %v4121
      %4165 = vst [vmem:[#allocation4 + $0x170] sm:$0xff] %v4133
      %v4166 = vld [vmem:[%s3621] sm:$0xe]
      %v4167 = vld [vmem:[%s3621 + $0x4] sm:$0xf]
      %v4168 = vld [vmem:[%s3621 + $0x8] sm:$0x1]
      %v4169 = vld [vmem:[%s3621 + $0xc] sm:$0xe]
      %v4170 = vld [vmem:[%s3621 + $0x10] sm:$0xf]
      %v4171 = vld [vmem:[%s3621 + $0x14] sm:$0x1]
      %v4172 = vld [vmem:[%s3621 + $0x18] sm:$0xe]
      %v4173 = vld [vmem:[%s3621 + $0x1c] sm:$0xf]
      %v4174 = vld [vmem:[%s3621 + $0x20] sm:$0x1]
      %v4175 = vld [vmem:[%s3621 + $0x24] sm:$0xe]
      %v4176 = vld [vmem:[%s3621 + $0x28] sm:$0xf]
      %v4177 = vld [vmem:[%s3621 + $0x2c] sm:$0x1]
      %v4178 = vld [vmem:[%s3621 + $0x30] sm:$0xe]
      %v4179 = vld [vmem:[%s3621 + $0x34] sm:$0xf]
      %v4180 = vld [vmem:[%s3621 + $0x38] sm:$0x1]
      %v4181 = vld [vmem:[%s3621 + $0x3c] sm:$0xe]
      %v4182 = vld [vmem:[%s3621 + $0x40] sm:$0xf]
      %v4183 = vld [vmem:[%s3621 + $0x44] sm:$0x1]
      %v4184 = vld [vmem:[%s3621 + $0x48] sm:$0xe]
      %v4185 = vld [vmem:[%s3621 + $0x4c] sm:$0xf]
      %v4186 = vld [vmem:[%s3621 + $0x50] sm:$0x1]
      %v4187 = vld [vmem:[%s3621 + $0x54] sm:$0xe]
      %v4188 = vld [vmem:[%s3621 + $0x58] sm:$0xf]
      %v4189 = vld [vmem:[%s3621 + $0x5c] sm:$0x1]
      %v4190 = vld [vmem:[%s3621 + $0x60] sm:$0xe]
      %v4191 = vld [vmem:[%s3621 + $0x64] sm:$0xf]
      %v4192 = vld [vmem:[%s3621 + $0x68] sm:$0x1]
      %v4193 = vld [vmem:[%s3621 + $0x6c] sm:$0xe]
      %v4194 = vld [vmem:[%s3621 + $0x70] sm:$0xf]
      %v4195 = vld [vmem:[%s3621 + $0x74] sm:$0x1]
      %v4196 = vld [vmem:[%s3621 + $0x78] sm:$0xe]
      %v4197 = vld [vmem:[%s3621 + $0x7c] sm:$0xf]
      %v4198 = vld [vmem:[%s3621 + $0x80] sm:$0x1]
      %v4199 = vld [vmem:[%s3621 + $0x84] sm:$0xe]
      %v4200 = vld [vmem:[%s3621 + $0x88] sm:$0xf]
      %v4201 = vld [vmem:[%s3621 + $0x8c] sm:$0x1]
      %v4202 = vld [vmem:[%s3621 + $0x90] sm:$0xe]
      %v4203 = vld [vmem:[%s3621 + $0x94] sm:$0xf]
      %v4204 = vld [vmem:[%s3621 + $0x98] sm:$0x1]
      %v4205 = vld [vmem:[%s3621 + $0x9c] sm:$0xe]
      %v4206 = vld [vmem:[%s3621 + $0xa0] sm:$0xf]
      %v4207 = vld [vmem:[%s3621 + $0xa4] sm:$0x1]
      %v4208 = vld [vmem:[%s3621 + $0xa8] sm:$0xe]
      %v4209 = vld [vmem:[%s3621 + $0xac] sm:$0xf]
      %v4210 = vld [vmem:[%s3621 + $0xb0] sm:$0x1]
      %v4211 = vld [vmem:[%s3621 + $0xb4] sm:$0xe]
      %v4212 = vld [vmem:[%s3621 + $0xb8] sm:$0xf]
      %v4213 = vld [vmem:[%s3621 + $0xbc] sm:$0x1]
      %v4262 = vunpack.c.l.b16 %v4166
      %v4263 = vunpack.c.l.b16 %v4167
      %v4264 = vunpack.c.l.b16 %v4168
      %v4265 = vunpack.c.l.b16 %v4169
      %v4266 = vunpack.c.l.b16 %v4170
      %v4267 = vunpack.c.l.b16 %v4171
      %v4268 = vunpack.c.l.b16 %v4172
      %v4269 = vunpack.c.l.b16 %v4173
      %v4270 = vunpack.c.l.b16 %v4174
      %v4271 = vunpack.c.l.b16 %v4175
      %v4272 = vunpack.c.l.b16 %v4176
      %v4273 = vunpack.c.l.b16 %v4177
      %v4274 = vunpack.c.l.b16 %v4178
      %v4275 = vunpack.c.l.b16 %v4179
      %v4276 = vunpack.c.l.b16 %v4180
      %v4277 = vunpack.c.l.b16 %v4181
      %v4278 = vunpack.c.l.b16 %v4182
      %v4279 = vunpack.c.l.b16 %v4183
      %v4280 = vunpack.c.l.b16 %v4184
      %v4281 = vunpack.c.l.b16 %v4185
      %v4282 = vunpack.c.l.b16 %v4186
      %v4283 = vunpack.c.l.b16 %v4187
      %v4284 = vunpack.c.l.b16 %v4188
      %v4285 = vunpack.c.l.b16 %v4189
      %v4286 = vunpack.c.l.b16 %v4190
      %v4287 = vunpack.c.l.b16 %v4191
      %v4288 = vunpack.c.l.b16 %v4192
      %v4289 = vunpack.c.l.b16 %v4193
      %v4290 = vunpack.c.l.b16 %v4194
      %v4291 = vunpack.c.l.b16 %v4195
      %v4292 = vunpack.c.l.b16 %v4196
      %v4293 = vunpack.c.l.b16 %v4197
      %v4294 = vunpack.c.l.b16 %v4198
      %v4295 = vunpack.c.l.b16 %v4199
      %v4296 = vunpack.c.l.b16 %v4200
      %v4297 = vunpack.c.l.b16 %v4201
      %v4298 = vunpack.c.l.b16 %v4202
      %v4299 = vunpack.c.l.b16 %v4203
      %v4300 = vunpack.c.l.b16 %v4204
      %v4301 = vunpack.c.l.b16 %v4205
      %v4302 = vunpack.c.l.b16 %v4206
      %v4303 = vunpack.c.l.b16 %v4207
      %v4304 = vunpack.c.l.b16 %v4208
      %v4305 = vunpack.c.l.b16 %v4209
      %v4306 = vunpack.c.l.b16 %v4210
      %v4307 = vunpack.c.l.b16 %v4211
      %v4308 = vunpack.c.l.b16 %v4212
      %v4309 = vunpack.c.l.b16 %v4213
      %v4310 = vpack.c.b16 %v4263, %v4262
      %v4311 = vpack.c.b16 %v4264, %v4264
      %v4312 = vpack.c.b16 %v4266, %v4265
      %v4313 = vpack.c.b16 %v4267, %v4267
      %v4314 = vpack.c.b16 %v4269, %v4268
      %v4315 = vpack.c.b16 %v4270, %v4270
      %v4316 = vpack.c.b16 %v4272, %v4271
      %v4317 = vpack.c.b16 %v4273, %v4273
      %v4318 = vpack.c.b16 %v4275, %v4274
      %v4319 = vpack.c.b16 %v4276, %v4276
      %v4320 = vpack.c.b16 %v4278, %v4277
      %v4321 = vpack.c.b16 %v4279, %v4279
      %v4322 = vpack.c.b16 %v4281, %v4280
      %v4323 = vpack.c.b16 %v4282, %v4282
      %v4324 = vpack.c.b16 %v4284, %v4283
      %v4325 = vpack.c.b16 %v4285, %v4285
      %v4326 = vpack.c.b16 %v4287, %v4286
      %v4327 = vpack.c.b16 %v4288, %v4288
      %v4328 = vpack.c.b16 %v4290, %v4289
      %v4329 = vpack.c.b16 %v4291, %v4291
      %v4330 = vpack.c.b16 %v4293, %v4292
      %v4331 = vpack.c.b16 %v4294, %v4294
      %v4332 = vpack.c.b16 %v4296, %v4295
      %v4333 = vpack.c.b16 %v4297, %v4297
      %v4334 = vpack.c.b16 %v4299, %v4298
      %v4335 = vpack.c.b16 %v4300, %v4300
      %v4336 = vpack.c.b16 %v4302, %v4301
      %v4337 = vpack.c.b16 %v4303, %v4303
      %v4338 = vpack.c.b16 %v4305, %v4304
      %v4339 = vpack.c.b16 %v4306, %v4306
      %v4340 = vpack.c.b16 %v4308, %v4307
      %v4341 = vpack.c.b16 %v4309, %v4309
      %v4342 = vrot.slane %v4310, 1
      %v4343 = vrot.slane %v4311, 1
      %v4344 = vsel %vm1608, %v4342, %v4343
      %v4345 = vrot.slane %v4312, 1
      %v4346 = vrot.slane %v4313, 1
      %v4347 = vsel %vm1608, %v4345, %v4346
      %v4348 = vrot.slane %v4314, 1
      %v4349 = vrot.slane %v4315, 1
      %v4350 = vsel %vm1608, %v4348, %v4349
      %v4351 = vrot.slane %v4316, 1
      %v4352 = vrot.slane %v4317, 1
      %v4353 = vsel %vm1608, %v4351, %v4352
      %v4354 = vrot.slane %v4318, 1
      %v4355 = vrot.slane %v4319, 1
      %v4356 = vsel %vm1608, %v4354, %v4355
      %v4357 = vrot.slane %v4320, 1
      %v4358 = vrot.slane %v4321, 1
      %v4359 = vsel %vm1608, %v4357, %v4358
      %v4360 = vrot.slane %v4322, 1
      %v4361 = vrot.slane %v4323, 1
      %v4362 = vsel %vm1608, %v4360, %v4361
      %v4363 = vrot.slane %v4324, 1
      %v4364 = vrot.slane %v4325, 1
      %v4365 = vsel %vm1608, %v4363, %v4364
      %v4366 = vrot.slane %v4326, 1
      %v4367 = vrot.slane %v4327, 1
      %v4368 = vsel %vm1608, %v4366, %v4367
      %v4369 = vrot.slane %v4328, 1
      %v4370 = vrot.slane %v4329, 1
      %v4371 = vsel %vm1608, %v4369, %v4370
      %v4372 = vrot.slane %v4330, 1
      %v4373 = vrot.slane %v4331, 1
      %v4374 = vsel %vm1608, %v4372, %v4373
      %v4375 = vrot.slane %v4332, 1
      %v4376 = vrot.slane %v4333, 1
      %v4377 = vsel %vm1608, %v4375, %v4376
      %v4378 = vrot.slane %v4334, 1
      %v4379 = vrot.slane %v4335, 1
      %v4380 = vsel %vm1608, %v4378, %v4379
      %v4381 = vrot.slane %v4336, 1
      %v4382 = vrot.slane %v4337, 1
      %v4383 = vsel %vm1608, %v4381, %v4382
      %v4384 = vrot.slane %v4338, 1
      %v4385 = vrot.slane %v4339, 1
      %v4386 = vsel %vm1608, %v4384, %v4385
      %v4387 = vrot.slane %v4340, 1
      %v4388 = vrot.slane %v4341, 1
      %v4389 = vsel %vm1608, %v4387, %v4388
      %4406 = vst [vmem:[#allocation4 + $0x10] sm:$0xff] %v4344
      %4407 = vst [vmem:[#allocation4 + $0x28] sm:$0xff] %v4347
      %4408 = vst [vmem:[#allocation4 + $0x40] sm:$0xff] %v4350
      %4409 = vst [vmem:[#allocation4 + $0x58] sm:$0xff] %v4353
      %4410 = vst [vmem:[#allocation4 + $0x70] sm:$0xff] %v4356
      %4411 = vst [vmem:[#allocation4 + $0x88] sm:$0xff] %v4359
      %4412 = vst [vmem:[#allocation4 + $0xa0] sm:$0xff] %v4362
      %4413 = vst [vmem:[#allocation4 + $0xb8] sm:$0xff] %v4365
      %4414 = vst [vmem:[#allocation4 + $0xd0] sm:$0xff] %v4368
      %4415 = vst [vmem:[#allocation4 + $0xe8] sm:$0xff] %v4371
      %4416 = vst [vmem:[#allocation4 + $0x100] sm:$0xff] %v4374
      %4417 = vst [vmem:[#allocation4 + $0x118] sm:$0xff] %v4377
      %4418 = vst [vmem:[#allocation4 + $0x130] sm:$0xff] %v4380
      %4419 = vst [vmem:[#allocation4 + $0x148] sm:$0xff] %v4383
      %4420 = vst [vmem:[#allocation4 + $0x160] sm:$0xff] %v4386
      %4421 = vst [vmem:[#allocation4 + $0x178] sm:$0xff] %v4389
      %v4422 = vld [vmem:[#allocation4] sm:$0xff]
      %v4423 = vld [vmem:[#allocation4 + $0x8] sm:$0xff]
      %v4424 = vld [vmem:[#allocation4 + $0x10] sm:$0xff]
      %v4425 = vld [vmem:[#allocation4 + $0x18] sm:$0xff]
      %v4426 = vld [vmem:[#allocation4 + $0x20] sm:$0xff]
      %v4427 = vld [vmem:[#allocation4 + $0x28] sm:$0xff]
      %v4428 = vld [vmem:[#allocation4 + $0x30] sm:$0xff]
      %v4429 = vld [vmem:[#allocation4 + $0x38] sm:$0xff]
      %v4430 = vld [vmem:[#allocation4 + $0x40] sm:$0xff]
      %v4431 = vld [vmem:[#allocation4 + $0x48] sm:$0xff]
      %v4432 = vld [vmem:[#allocation4 + $0x50] sm:$0xff]
      %v4433 = vld [vmem:[#allocation4 + $0x58] sm:$0xff]
      %v4434 = vld [vmem:[#allocation4 + $0x60] sm:$0xff]
      %v4435 = vld [vmem:[#allocation4 + $0x68] sm:$0xff]
      %v4436 = vld [vmem:[#allocation4 + $0x70] sm:$0xff]
      %v4437 = vld [vmem:[#allocation4 + $0x78] sm:$0xff]
      %v4438 = vld [vmem:[#allocation4 + $0x80] sm:$0xff]
      %v4439 = vld [vmem:[#allocation4 + $0x88] sm:$0xff]
      %v4440 = vld [vmem:[#allocation4 + $0x90] sm:$0xff]
      %v4441 = vld [vmem:[#allocation4 + $0x98] sm:$0xff]
      %v4442 = vld [vmem:[#allocation4 + $0xa0] sm:$0xff]
      %v4443 = vld [vmem:[#allocation4 + $0xa8] sm:$0xff]
      %v4444 = vld [vmem:[#allocation4 + $0xb0] sm:$0xff]
      %v4445 = vld [vmem:[#allocation4 + $0xb8] sm:$0xff]
      %v4446 = vld [vmem:[#allocation4 + $0xc0] sm:$0xff]
      %v4447 = vld [vmem:[#allocation4 + $0xc8] sm:$0xff]
      %v4448 = vld [vmem:[#allocation4 + $0xd0] sm:$0xff]
      %v4449 = vld [vmem:[#allocation4 + $0xd8] sm:$0xff]
      %v4450 = vld [vmem:[#allocation4 + $0xe0] sm:$0xff]
      %v4451 = vld [vmem:[#allocation4 + $0xe8] sm:$0xff]
      %v4452 = vld [vmem:[#allocation4 + $0xf0] sm:$0xff]
      %v4453 = vld [vmem:[#allocation4 + $0xf8] sm:$0xff]
      %v4454 = vld [vmem:[#allocation4 + $0x100] sm:$0xff]
      %v4455 = vld [vmem:[#allocation4 + $0x108] sm:$0xff]
      %v4456 = vld [vmem:[#allocation4 + $0x110] sm:$0xff]
      %v4457 = vld [vmem:[#allocation4 + $0x118] sm:$0xff]
      %v4458 = vld [vmem:[#allocation4 + $0x120] sm:$0xff]
      %v4459 = vld [vmem:[#allocation4 + $0x128] sm:$0xff]
      %v4460 = vld [vmem:[#allocation4 + $0x130] sm:$0xff]
      %v4461 = vld [vmem:[#allocation4 + $0x138] sm:$0xff]
      %v4462 = vld [vmem:[#allocation4 + $0x140] sm:$0xff]
      %v4463 = vld [vmem:[#allocation4 + $0x148] sm:$0xff]
      %v4464 = vld [vmem:[#allocation4 + $0x150] sm:$0xff]
      %v4465 = vld [vmem:[#allocation4 + $0x158] sm:$0xff]
      %v4466 = vld [vmem:[#allocation4 + $0x160] sm:$0xff]
      %v4467 = vld [vmem:[#allocation4 + $0x168] sm:$0xff]
      %v4468 = vld [vmem:[#allocation4 + $0x170] sm:$0xff]
      %v4469 = vld [vmem:[#allocation4 + $0x178] sm:$0xff]
      %s4470 = scalar_lea.vmem %s1, 384
      %v4471 = vld [vmem:[%s4470] sm:$0xf]
      %v4472 = vld [vmem:[%s4470 + $0x4] sm:$0xf]
      %v4473 = vld [vmem:[%s4470 + $0x8] sm:$0xf]
      %v4474 = vld [vmem:[%s4470 + $0xc] sm:$0xf]
      %v4475 = vld [vmem:[%s4470 + $0x10] sm:$0xf]
      %v4476 = vld [vmem:[%s4470 + $0x14] sm:$0xf]
      %v4477 = vld [vmem:[%s4470 + $0x18] sm:$0xf]
      %v4478 = vld [vmem:[%s4470 + $0x1c] sm:$0xf]
      %v4479 = vld [vmem:[%s4470 + $0x20] sm:$0xf]
      %v4480 = vld [vmem:[%s4470 + $0x24] sm:$0xf]
      %v4481 = vld [vmem:[%s4470 + $0x28] sm:$0xf]
      %v4482 = vld [vmem:[%s4470 + $0x2c] sm:$0xf]
      %v4483 = vld [vmem:[%s4470 + $0x30] sm:$0xf]
      %v4484 = vld [vmem:[%s4470 + $0x34] sm:$0xf]
      %v4485 = vld [vmem:[%s4470 + $0x38] sm:$0xf]
      %v4486 = vld [vmem:[%s4470 + $0x3c] sm:$0xf]
      %v4487 = vld [vmem:[%s4470 + $0x40] sm:$0xf]
      %v4488 = vld [vmem:[%s4470 + $0x44] sm:$0xf]
      %v4489 = vld [vmem:[%s4470 + $0x48] sm:$0xf]
      %v4490 = vld [vmem:[%s4470 + $0x4c] sm:$0xf]
      %v4491 = vld [vmem:[%s4470 + $0x50] sm:$0xf]
      %v4492 = vld [vmem:[%s4470 + $0x54] sm:$0xf]
      %v4493 = vld [vmem:[%s4470 + $0x58] sm:$0xf]
      %v4494 = vld [vmem:[%s4470 + $0x5c] sm:$0xf]
      %v4495 = vld [vmem:[%s4470 + $0x60] sm:$0xf]
      %v4496 = vld [vmem:[%s4470 + $0x64] sm:$0xf]
      %v4497 = vld [vmem:[%s4470 + $0x68] sm:$0xf]
      %v4498 = vld [vmem:[%s4470 + $0x6c] sm:$0xf]
      %v4499 = vld [vmem:[%s4470 + $0x70] sm:$0xf]
      %v4500 = vld [vmem:[%s4470 + $0x74] sm:$0xf]
      %v4501 = vld [vmem:[%s4470 + $0x78] sm:$0xf]
      %v4502 = vld [vmem:[%s4470 + $0x7c] sm:$0xf]
      %v4503 = vld [vmem:[%s4470 + $0x80] sm:$0xf]
      %v4504 = vld [vmem:[%s4470 + $0x84] sm:$0xf]
      %v4505 = vld [vmem:[%s4470 + $0x88] sm:$0xf]
      %v4506 = vld [vmem:[%s4470 + $0x8c] sm:$0xf]
      %v4507 = vld [vmem:[%s4470 + $0x90] sm:$0xf]
      %v4508 = vld [vmem:[%s4470 + $0x94] sm:$0xf]
      %v4509 = vld [vmem:[%s4470 + $0x98] sm:$0xf]
      %v4510 = vld [vmem:[%s4470 + $0x9c] sm:$0xf]
      %v4511 = vld [vmem:[%s4470 + $0xa0] sm:$0xf]
      %v4512 = vld [vmem:[%s4470 + $0xa4] sm:$0xf]
      %v4513 = vld [vmem:[%s4470 + $0xa8] sm:$0xf]
      %v4514 = vld [vmem:[%s4470 + $0xac] sm:$0xf]
      %v4515 = vld [vmem:[%s4470 + $0xb0] sm:$0xf]
      %v4516 = vld [vmem:[%s4470 + $0xb4] sm:$0xf]
      %v4517 = vld [vmem:[%s4470 + $0xb8] sm:$0xf]
      %v4518 = vld [vmem:[%s4470 + $0xbc] sm:$0xf]
      %v4567 = vunpack.c.l.b16 %v4471
      %v4568 = vunpack.c.l.b16 %v4472
      %v4569 = vunpack.c.l.b16 %v4473
      %v4570 = vunpack.c.l.b16 %v4474
      %v4571 = vunpack.c.l.b16 %v4475
      %v4572 = vunpack.c.l.b16 %v4476
      %v4573 = vunpack.c.l.b16 %v4477
      %v4574 = vunpack.c.l.b16 %v4478
      %v4575 = vunpack.c.l.b16 %v4479
      %v4576 = vunpack.c.l.b16 %v4480
      %v4577 = vunpack.c.l.b16 %v4481
      %v4578 = vunpack.c.l.b16 %v4482
      %v4579 = vunpack.c.l.b16 %v4483
      %v4580 = vunpack.c.l.b16 %v4484
      %v4581 = vunpack.c.l.b16 %v4485
      %v4582 = vunpack.c.l.b16 %v4486
      %v4583 = vunpack.c.l.b16 %v4487
      %v4584 = vunpack.c.l.b16 %v4488
      %v4585 = vunpack.c.l.b16 %v4489
      %v4586 = vunpack.c.l.b16 %v4490
      %v4587 = vunpack.c.l.b16 %v4491
      %v4588 = vunpack.c.l.b16 %v4492
      %v4589 = vunpack.c.l.b16 %v4493
      %v4590 = vunpack.c.l.b16 %v4494
      %v4591 = vunpack.c.l.b16 %v4495
      %v4592 = vunpack.c.l.b16 %v4496
      %v4593 = vunpack.c.l.b16 %v4497
      %v4594 = vunpack.c.l.b16 %v4498
      %v4595 = vunpack.c.l.b16 %v4499
      %v4596 = vunpack.c.l.b16 %v4500
      %v4597 = vunpack.c.l.b16 %v4501
      %v4598 = vunpack.c.l.b16 %v4502
      %v4599 = vunpack.c.l.b16 %v4503
      %v4600 = vunpack.c.l.b16 %v4504
      %v4601 = vunpack.c.l.b16 %v4505
      %v4602 = vunpack.c.l.b16 %v4506
      %v4603 = vunpack.c.l.b16 %v4507
      %v4604 = vunpack.c.l.b16 %v4508
      %v4605 = vunpack.c.l.b16 %v4509
      %v4606 = vunpack.c.l.b16 %v4510
      %v4607 = vunpack.c.l.b16 %v4511
      %v4608 = vunpack.c.l.b16 %v4512
      %v4609 = vunpack.c.l.b16 %v4513
      %v4610 = vunpack.c.l.b16 %v4514
      %v4611 = vunpack.c.l.b16 %v4515
      %v4612 = vunpack.c.l.b16 %v4516
      %v4613 = vunpack.c.l.b16 %v4517
      %v4614 = vunpack.c.l.b16 %v4518
      %v4615 = vpack.c.b16 %v4568, %v4567
      %v4616 = vpack.c.b16 %v4570, %v4569
      %v4617 = vpack.c.b16 %v4572, %v4571
      %v4618 = vpack.c.b16 %v4574, %v4573
      %v4619 = vpack.c.b16 %v4576, %v4575
      %v4620 = vpack.c.b16 %v4578, %v4577
      %v4621 = vpack.c.b16 %v4580, %v4579
      %v4622 = vpack.c.b16 %v4582, %v4581
      %v4623 = vpack.c.b16 %v4584, %v4583
      %v4624 = vpack.c.b16 %v4586, %v4585
      %v4625 = vpack.c.b16 %v4588, %v4587
      %v4626 = vpack.c.b16 %v4590, %v4589
      %v4627 = vpack.c.b16 %v4592, %v4591
      %v4628 = vpack.c.b16 %v4594, %v4593
      %v4629 = vpack.c.b16 %v4596, %v4595
      %v4630 = vpack.c.b16 %v4598, %v4597
      %v4631 = vpack.c.b16 %v4600, %v4599
      %v4632 = vpack.c.b16 %v4602, %v4601
      %v4633 = vpack.c.b16 %v4604, %v4603
      %v4634 = vpack.c.b16 %v4606, %v4605
      %v4635 = vpack.c.b16 %v4608, %v4607
      %v4636 = vpack.c.b16 %v4610, %v4609
      %v4637 = vpack.c.b16 %v4612, %v4611
      %v4638 = vpack.c.b16 %v4614, %v4613
      %4663 = vmatprep.subr.bf16.mxu0 0
      %4664 = vmatpush1.bf16.msra.mxu0 %v4615
      %4665 = vmatprep.subr.bf16.mxu0 0
      %4666 = vmatpush1.bf16.msra.mxu0 %v4616
      %4667 = vmatprep.subr.bf16.mxu0 0
      %4668 = vmatpush1.bf16.msra.mxu0 %v4617
      %4669 = vmatprep.subr.bf16.mxu0 0
      %4670 = vmatpush1.bf16.msra.mxu0 %v4618
      %4671 = vmatprep.subr.bf16.mxu0 0
      %4672 = vmatpush1.bf16.msra.mxu0 %v4619
      %4673 = vmatprep.subr.bf16.mxu0 0
      %4674 = vmatpush1.bf16.msra.mxu0 %v4620
      %4675 = vmatprep.subr.bf16.mxu0 0
      %4676 = vmatpush1.bf16.msra.mxu0 %v4621
      %4677 = vmatprep.subr.bf16.mxu0 0
      %4678 = vmatpush1.bf16.msra.mxu0 %v4622
      %4679 = vmatprep.subr.bf16.mxu0 0
      %4680 = vmatpush1.bf16.msra.mxu0 %v4623
      %4681 = vmatprep.subr.bf16.mxu0 0
      %4682 = vmatpush1.bf16.msra.mxu0 %v4624
      %4683 = vmatprep.subr.bf16.mxu0 0
      %4684 = vmatpush1.bf16.msra.mxu0 %v4625
      %4685 = vmatprep.subr.bf16.mxu0 0
      %4686 = vmatpush1.bf16.msra.mxu0 %v4626
      %4687 = vmatprep.subr.bf16.mxu0 0
      %4688 = vmatpush1.bf16.msra.mxu0 %v4627
      %4689 = vmatprep.subr.bf16.mxu0 0
      %4690 = vmatpush1.bf16.msra.mxu0 %v4628
      %4691 = vmatprep.subr.bf16.mxu0 0
      %4692 = vmatpush1.bf16.msra.mxu0 %v4629
      %4693 = vmatprep.subr.bf16.mxu0 0
      %4694 = vmatpush1.bf16.msra.mxu0 %v4630
      %4695 = vmatprep.mubr.bf16.mxu0 %v4423
      %4696 = vmatmul.mubr.bf16.gmra.mrb[0].mxu0 %v4422
      %v4697 = vpop.f32.mrb[0].mxu0
      %v4698 = vadd.f32 0.0, %v4697
      %v4699 = vpop.f32.mrb[0].mxu0
      %v4700 = vpop.f32.mrb[0].mxu0
      %v4701 = vadd.f32 0.0, %v4700
      %v4702 = vpop.f32.mrb[0].mxu0
      %4703 = vmatprep.mubr.bf16.mxu0 %v4426
      %4704 = vmatmul.mubr.bf16.gmra.mrb[0].mxu0 %v4425
      %v4705 = vpop.f32.mrb[0].mxu0
      %v4706 = vadd.f32 0.0, %v4705
      %v4707 = vpop.f32.mrb[0].mxu0
      %v4708 = vpop.f32.mrb[0].mxu0
      %v4709 = vadd.f32 0.0, %v4708
      %v4710 = vpop.f32.mrb[0].mxu0
      %4711 = vmatprep.mubr.bf16.mxu0 %v4429
      %4712 = vmatmul.mubr.bf16.gmra.mrb[0].mxu0 %v4428
      %v4713 = vpop.f32.mrb[0].mxu0
      %v4714 = vadd.f32 0.0, %v4713
      %v4715 = vpop.f32.mrb[0].mxu0
      %v4716 = vpop.f32.mrb[0].mxu0
      %v4717 = vadd.f32 0.0, %v4716
      %v4718 = vpop.f32.mrb[0].mxu0
      %4719 = vmatprep.mubr.bf16.mxu0 %v4432
      %4720 = vmatmul.mubr.bf16.gmra.mrb[0].mxu0 %v4431
      %v4721 = vpop.f32.mrb[0].mxu0
      %v4722 = vadd.f32 0.0, %v4721
      %v4723 = vpop.f32.mrb[0].mxu0
      %v4724 = vpop.f32.mrb[0].mxu0
      %v4725 = vadd.f32 0.0, %v4724
      %v4726 = vpop.f32.mrb[0].mxu0
      %4727 = vmatprep.mubr.bf16.mxu0 %v4435
      %4728 = vmatmul.mubr.bf16.gmra.mrb[0].mxu0 %v4434
      %v4729 = vpop.f32.mrb[0].mxu0
      %v4730 = vadd.f32 0.0, %v4729
      %v4731 = vpop.f32.mrb[0].mxu0
      %v4732 = vpop.f32.mrb[0].mxu0
      %v4733 = vadd.f32 0.0, %v4732
      %v4734 = vpop.f32.mrb[0].mxu0
      %4735 = vmatprep.mubr.bf16.mxu0 %v4438
      %4736 = vmatmul.mubr.bf16.gmra.mrb[0].mxu0 %v4437
      %v4737 = vpop.f32.mrb[0].mxu0
      %v4738 = vadd.f32 0.0, %v4737
      %v4739 = vpop.f32.mrb[0].mxu0
      %v4740 = vpop.f32.mrb[0].mxu0
      %v4741 = vadd.f32 0.0, %v4740
      %v4742 = vpop.f32.mrb[0].mxu0
      %4743 = vmatprep.mubr.bf16.mxu0 %v4441
      %4744 = vmatmul.mubr.bf16.gmra.mrb[0].mxu0 %v4440
      %v4745 = vpop.f32.mrb[0].mxu0
      %v4746 = vadd.f32 0.0, %v4745
      %v4747 = vpop.f32.mrb[0].mxu0
      %v4748 = vpop.f32.mrb[0].mxu0
      %v4749 = vadd.f32 0.0, %v4748
      %v4750 = vpop.f32.mrb[0].mxu0
      %4751 = vmatprep.mubr.bf16.mxu0 %v4444
      %4752 = vmatmul.mubr.bf16.gmra.mrb[0].mxu0 %v4443
      %v4753 = vpop.f32.mrb[0].mxu0
      %v4754 = vadd.f32 0.0, %v4753
      %v4755 = vpop.f32.mrb[0].mxu0
      %v4756 = vpop.f32.mrb[0].mxu0
      %v4757 = vadd.f32 0.0, %v4756
      %v4758 = vpop.f32.mrb[0].mxu0
      %4759 = vmatprep.mubr.bf16.mxu0 %v4447
      %4760 = vmatmul.mubr.bf16.gmra.mrb[0].mxu0 %v4446
      %v4761 = vpop.f32.mrb[0].mxu0
      %v4762 = vadd.f32 0.0, %v4761
      %v4763 = vpop.f32.mrb[0].mxu0
      %v4764 = vpop.f32.mrb[0].mxu0
      %v4765 = vadd.f32 0.0, %v4764
      %v4766 = vpop.f32.mrb[0].mxu0
      %4767 = vmatprep.mubr.bf16.mxu0 %v4450
      %4768 = vmatmul.mubr.bf16.gmra.mrb[0].mxu0 %v4449
      %v4769 = vpop.f32.mrb[0].mxu0
      %v4770 = vadd.f32 0.0, %v4769
      %v4771 = vpop.f32.mrb[0].mxu0
      %v4772 = vpop.f32.mrb[0].mxu0
      %v4773 = vadd.f32 0.0, %v4772
      %v4774 = vpop.f32.mrb[0].mxu0
      %4775 = vmatprep.mubr.bf16.mxu0 %v4453
      %4776 = vmatmul.mubr.bf16.gmra.mrb[0].mxu0 %v4452
      %v4777 = vpop.f32.mrb[0].mxu0
      %v4778 = vadd.f32 0.0, %v4777
      %v4779 = vpop.f32.mrb[0].mxu0
      %v4780 = vpop.f32.mrb[0].mxu0
      %v4781 = vadd.f32 0.0, %v4780
      %v4782 = vpop.f32.mrb[0].mxu0
      %4783 = vmatprep.mubr.bf16.mxu0 %v4456
      %4784 = vmatmul.mubr.bf16.gmra.mrb[0].mxu0 %v4455
      %v4785 = vpop.f32.mrb[0].mxu0
      %v4786 = vadd.f32 0.0, %v4785
      %v4787 = vpop.f32.mrb[0].mxu0
      %v4788 = vpop.f32.mrb[0].mxu0
      %v4789 = vadd.f32 0.0, %v4788
      %v4790 = vpop.f32.mrb[0].mxu0
      %4791 = vmatprep.mubr.bf16.mxu0 %v4459
      %4792 = vmatmul.mubr.bf16.gmra.mrb[0].mxu0 %v4458
      %v4793 = vpop.f32.mrb[0].mxu0
      %v4794 = vadd.f32 0.0, %v4793
      %v4795 = vpop.f32.mrb[0].mxu0
      %v4796 = vpop.f32.mrb[0].mxu0
      %v4797 = vadd.f32 0.0, %v4796
      %v4798 = vpop.f32.mrb[0].mxu0
      %4799 = vmatprep.mubr.bf16.mxu0 %v4462
      %4800 = vmatmul.mubr.bf16.gmra.mrb[0].mxu0 %v4461
      %v4801 = vpop.f32.mrb[0].mxu0
      %v4802 = vadd.f32 0.0, %v4801
      %v4803 = vpop.f32.mrb[0].mxu0
      %v4804 = vpop.f32.mrb[0].mxu0
      %v4805 = vadd.f32 0.0, %v4804
      %v4806 = vpop.f32.mrb[0].mxu0
      %4807 = vmatprep.mubr.bf16.mxu0 %v4465
      %4808 = vmatmul.mubr.bf16.gmra.mrb[0].mxu0 %v4464
      %v4809 = vpop.f32.mrb[0].mxu0
      %v4810 = vadd.f32 0.0, %v4809
      %v4811 = vpop.f32.mrb[0].mxu0
      %v4812 = vpop.f32.mrb[0].mxu0
      %v4813 = vadd.f32 0.0, %v4812
      %v4814 = vpop.f32.mrb[0].mxu0
      %4815 = vmatprep.mubr.bf16.mxu0 %v4468
      %4816 = vmatmul.mubr.bf16.gmra.mrb[0].mxu0 %v4467
      %v4817 = vpop.f32.mrb[0].mxu0
      %v4818 = vadd.f32 0.0, %v4817
      %v4819 = vpop.f32.mrb[0].mxu0
      %v4820 = vpop.f32.mrb[0].mxu0
      %v4821 = vadd.f32 0.0, %v4820
      %v4822 = vpop.f32.mrb[0].mxu0
      %4823 = vdwg.mxu0
      %4824 = vmatprep.subr.bf16.mxu0 0
      %4825 = vmatpush1.bf16.msra.mxu0 %v4631
      %4826 = vmatprep.subr.bf16.mxu0 0
      %4827 = vmatpush1.bf16.msra.mxu0 %v4632
      %4828 = vmatprep.subr.bf16.mxu0 0
      %4829 = vmatpush1.bf16.msra.mxu0 %v4633
      %4830 = vmatprep.subr.bf16.mxu0 0
      %4831 = vmatpush1.bf16.msra.mxu0 %v4634
      %4832 = vmatprep.subr.bf16.mxu0 0
      %4833 = vmatpush1.bf16.msra.mxu0 %v4635
      %4834 = vmatprep.subr.bf16.mxu0 0
      %4835 = vmatpush1.bf16.msra.mxu0 %v4636
      %4836 = vmatprep.subr.bf16.mxu0 0
      %4837 = vmatpush1.bf16.msra.mxu0 %v4637
      %4838 = vmatprep.subr.bf16.mxu0 0
      %4839 = vmatpush1.bf16.msra.mxu0 %v4638
      %4840 = vmatprep.subr.bf16.mxu0 0
      %4841 = vmatpush1.bf16.msra.mxu0 0
      %4842 = vmatprep.subr.bf16.mxu0 0
      %4843 = vmatpush1.bf16.msra.mxu0 0
      %4844 = vmatprep.subr.bf16.mxu0 0
      %4845 = vmatpush1.bf16.msra.mxu0 0
      %4846 = vmatprep.subr.bf16.mxu0 0
      %4847 = vmatpush1.bf16.msra.mxu0 0
      %4848 = vmatprep.subr.bf16.mxu0 0
      %4849 = vmatpush1.bf16.msra.mxu0 0
      %4850 = vmatprep.subr.bf16.mxu0 0
      %4851 = vmatpush1.bf16.msra.mxu0 0
      %4852 = vmatprep.subr.bf16.mxu0 0
      %4853 = vmatpush1.bf16.msra.mxu0 0
      %4854 = vmatprep.subr.bf16.mxu0 0
      %4855 = vmatpush1.bf16.msra.mxu0 0
      %4856 = vmatprep.mubr.bf16.mxu0 0
      %4857 = vmatmul.mubr.bf16.gmra.mrb[0].mxu0 %v4424
      %v4858 = vpop.f32.mrb[0].mxu0
      %v4859 = vadd.f32 %v4698, %v4858
      %v4860 = vpop.f32.mrb[0].mxu0
      %v4861 = vpop.f32.mrb[0].mxu0
      %v4862 = vadd.f32 %v4701, %v4861
      %v4863 = vpop.f32.mrb[0].mxu0
      %4864 = vmatprep.mubr.bf16.mxu0 0
      %4865 = vmatmul.mubr.bf16.gmra.mrb[0].mxu0 %v4427
      %v4866 = vpop.f32.mrb[0].mxu0
      %v4867 = vadd.f32 %v4706, %v4866
      %v4868 = vpop.f32.mrb[0].mxu0
      %v4869 = vpop.f32.mrb[0].mxu0
      %v4870 = vadd.f32 %v4709, %v4869
      %v4871 = vpop.f32.mrb[0].mxu0
      %4872 = vmatprep.mubr.bf16.mxu0 0
      %4873 = vmatmul.mubr.bf16.gmra.mrb[0].mxu0 %v4430
      %v4874 = vpop.f32.mrb[0].mxu0
      %v4875 = vadd.f32 %v4714, %v4874
      %v4876 = vpop.f32.mrb[0].mxu0
      %v4877 = vpop.f32.mrb[0].mxu0
      %v4878 = vadd.f32 %v4717, %v4877
      %v4879 = vpop.f32.mrb[0].mxu0
      %4880 = vmatprep.mubr.bf16.mxu0 0
      %4881 = vmatmul.mubr.bf16.gmra.mrb[0].mxu0 %v4433
      %v4882 = vpop.f32.mrb[0].mxu0
      %v4883 = vadd.f32 %v4722, %v4882
      %v4884 = vpop.f32.mrb[0].mxu0
      %v4885 = vpop.f32.mrb[0].mxu0
      %v4886 = vadd.f32 %v4725, %v4885
      %v4887 = vpop.f32.mrb[0].mxu0
      %4888 = vmatprep.mubr.bf16.mxu0 0
      %4889 = vmatmul.mubr.bf16.gmra.mrb[0].mxu0 %v4436
      %v4890 = vpop.f32.mrb[0].mxu0
      %v4891 = vadd.f32 %v4730, %v4890
      %v4892 = vpop.f32.mrb[0].mxu0
      %v4893 = vpop.f32.mrb[0].mxu0
      %v4894 = vadd.f32 %v4733, %v4893
      %v4895 = vpop.f32.mrb[0].mxu0
      %4896 = vmatprep.mubr.bf16.mxu0 0
      %4897 = vmatmul.mubr.bf16.gmra.mrb[0].mxu0 %v4439
      %v4898 = vpop.f32.mrb[0].mxu0
      %v4899 = vadd.f32 %v4738, %v4898
      %v4900 = vpop.f32.mrb[0].mxu0
      %v4901 = vpop.f32.mrb[0].mxu0
      %v4902 = vadd.f32 %v4741, %v4901
      %v4903 = vpop.f32.mrb[0].mxu0
      %4904 = vmatprep.mubr.bf16.mxu0 0
      %4905 = vmatmul.mubr.bf16.gmra.mrb[0].mxu0 %v4442
      %v4906 = vpop.f32.mrb[0].mxu0
      %v4907 = vadd.f32 %v4746, %v4906
      %v4908 = vpop.f32.mrb[0].mxu0
      %v4909 = vpop.f32.mrb[0].mxu0
      %v4910 = vadd.f32 %v4749, %v4909
      %v4911 = vpop.f32.mrb[0].mxu0
      %4912 = vmatprep.mubr.bf16.mxu0 0
      %4913 = vmatmul.mubr.bf16.gmra.mrb[0].mxu0 %v4445
      %v4914 = vpop.f32.mrb[0].mxu0
      %v4915 = vadd.f32 %v4754, %v4914
      %v4916 = vpop.f32.mrb[0].mxu0
      %v4917 = vpop.f32.mrb[0].mxu0
      %v4918 = vadd.f32 %v4757, %v4917
      %v4919 = vpop.f32.mrb[0].mxu0
      %4920 = vmatprep.mubr.bf16.mxu0 0
      %4921 = vmatmul.mubr.bf16.gmra.mrb[0].mxu0 %v4448
      %v4922 = vpop.f32.mrb[0].mxu0
      %v4923 = vadd.f32 %v4762, %v4922
      %v4924 = vpop.f32.mrb[0].mxu0
      %v4925 = vpop.f32.mrb[0].mxu0
      %v4926 = vadd.f32 %v4765, %v4925
      %v4927 = vpop.f32.mrb[0].mxu0
      %4928 = vmatprep.mubr.bf16.mxu0 0
      %4929 = vmatmul.mubr.bf16.gmra.mrb[0].mxu0 %v4451
      %v4930 = vpop.f32.mrb[0].mxu0
      %v4931 = vadd.f32 %v4770, %v4930
      %v4932 = vpop.f32.mrb[0].mxu0
      %v4933 = vpop.f32.mrb[0].mxu0
      %v4934 = vadd.f32 %v4773, %v4933
      %v4935 = vpop.f32.mrb[0].mxu0
      %4936 = vmatprep.mubr.bf16.mxu0 0
      %4937 = vmatmul.mubr.bf16.gmra.mrb[0].mxu0 %v4454
      %v4938 = vpop.f32.mrb[0].mxu0
      %v4939 = vadd.f32 %v4778, %v4938
      %v4940 = vpop.f32.mrb[0].mxu0
      %v4941 = vpop.f32.mrb[0].mxu0
      %v4942 = vadd.f32 %v4781, %v4941
      %v4943 = vpop.f32.mrb[0].mxu0
      %4944 = vmatprep.mubr.bf16.mxu0 0
      %4945 = vmatmul.mubr.bf16.gmra.mrb[0].mxu0 %v4457
      %v4946 = vpop.f32.mrb[0].mxu0
      %v4947 = vadd.f32 %v4786, %v4946
      %v4948 = vpop.f32.mrb[0].mxu0
      %v4949 = vpop.f32.mrb[0].mxu0
      %v4950 = vadd.f32 %v4789, %v4949
      %v4951 = vpop.f32.mrb[0].mxu0
      %4952 = vmatprep.mubr.bf16.mxu0 0
      %4953 = vmatmul.mubr.bf16.gmra.mrb[0].mxu0 %v4460
      %v4954 = vpop.f32.mrb[0].mxu0
      %v4955 = vadd.f32 %v4794, %v4954
      %v4956 = vpop.f32.mrb[0].mxu0
      %v4957 = vpop.f32.mrb[0].mxu0
      %v4958 = vadd.f32 %v4797, %v4957
      %v4959 = vpop.f32.mrb[0].mxu0
      %4960 = vmatprep.mubr.bf16.mxu0 0
      %4961 = vmatmul.mubr.bf16.gmra.mrb[0].mxu0 %v4463
      %v4962 = vpop.f32.mrb[0].mxu0
      %v4963 = vadd.f32 %v4802, %v4962
      %v4964 = vpop.f32.mrb[0].mxu0
      %v4965 = vpop.f32.mrb[0].mxu0
      %v4966 = vadd.f32 %v4805, %v4965
      %v4967 = vpop.f32.mrb[0].mxu0
      %4968 = vmatprep.mubr.bf16.mxu0 0
      %4969 = vmatmul.mubr.bf16.gmra.mrb[0].mxu0 %v4466
      %v4970 = vpop.f32.mrb[0].mxu0
      %v4971 = vadd.f32 %v4810, %v4970
      %v4972 = vpop.f32.mrb[0].mxu0
      %v4973 = vpop.f32.mrb[0].mxu0
      %v4974 = vadd.f32 %v4813, %v4973
      %v4975 = vpop.f32.mrb[0].mxu0
      %4976 = vmatprep.mubr.bf16.mxu0 0
      %4977 = vmatmul.mubr.bf16.gmra.mrb[0].mxu0 %v4469
      %v4978 = vpop.f32.mrb[0].mxu0
      %v4979 = vadd.f32 %v4818, %v4978
      %v4980 = vpop.f32.mrb[0].mxu0
      %v4981 = vpop.f32.mrb[0].mxu0
      %v4982 = vadd.f32 %v4821, %v4981
      %v4983 = vpop.f32.mrb[0].mxu0
      %4984 = vdwg.mxu0
      %v4985 = vadd.f32 %v3492, %v4859
      %v4986 = vadd.f32 %v3495, %v4862
      %v4987 = vadd.f32 %v3500, %v4867
      %v4988 = vadd.f32 %v3503, %v4870
      %v4989 = vadd.f32 %v3508, %v4875
      %v4990 = vadd.f32 %v3511, %v4878
      %v4991 = vadd.f32 %v3516, %v4883
      %v4992 = vadd.f32 %v3519, %v4886
      %v4993 = vadd.f32 %v3524, %v4891
      %v4994 = vadd.f32 %v3527, %v4894
      %v4995 = vadd.f32 %v3532, %v4899
      %v4996 = vadd.f32 %v3535, %v4902
      %v4997 = vadd.f32 %v3540, %v4907
      %v4998 = vadd.f32 %v3543, %v4910
      %v4999 = vadd.f32 %v3548, %v4915
      %v5000 = vadd.f32 %v3551, %v4918
      %v5001 = vadd.f32 %v3556, %v4923
      %v5002 = vadd.f32 %v3559, %v4926
      %v5003 = vadd.f32 %v3564, %v4931
      %v5004 = vadd.f32 %v3567, %v4934
      %v5005 = vadd.f32 %v3572, %v4939
      %v5006 = vadd.f32 %v3575, %v4942
      %v5007 = vadd.f32 %v3580, %v4947
      %v5008 = vadd.f32 %v3583, %v4950
      %v5009 = vadd.f32 %v3588, %v4955
      %v5010 = vadd.f32 %v3591, %v4958
      %v5011 = vadd.f32 %v3596, %v4963
      %v5012 = vadd.f32 %v3599, %v4966
      %v5013 = vadd.f32 %v3604, %v4971
      %v5014 = vadd.f32 %v3607, %v4974
      %v5015 = vadd.f32 %v3612, %v4979
      %v5016 = vadd.f32 %v3615, %v4982
      %v5017 = vlaneseq
      %v5018 = vshrl.u32 %v5017, 7
      %v5019 = vsub.s32 0, %v5018
      %v5020 = vrot.slane %v880, %v5019
      %v5021 = vmul.f32 %v4985, %v5020
      %v5022 = vmul.f32 %v4986, %v5020
      %v5023 = vmul.f32 %v4987, %v5020
      %v5024 = vmul.f32 %v4988, %v5020
      %v5025 = vmul.f32 %v4989, %v5020
      %v5026 = vmul.f32 %v4990, %v5020
      %v5027 = vmul.f32 %v4991, %v5020
      %v5028 = vmul.f32 %v4992, %v5020
      %v5029 = vmul.f32 %v4993, %v5020
      %v5030 = vmul.f32 %v4994, %v5020
      %v5031 = vmul.f32 %v4995, %v5020
      %v5032 = vmul.f32 %v4996, %v5020
      %v5033 = vmul.f32 %v4997, %v5020
      %v5034 = vmul.f32 %v4998, %v5020
      %v5035 = vmul.f32 %v4999, %v5020
      %v5036 = vmul.f32 %v5000, %v5020
      %v5037 = vmul.f32 %v5001, %v5020
      %v5038 = vmul.f32 %v5002, %v5020
      %v5039 = vmul.f32 %v5003, %v5020
      %v5040 = vmul.f32 %v5004, %v5020
      %v5041 = vmul.f32 %v5005, %v5020
      %v5042 = vmul.f32 %v5006, %v5020
      %v5043 = vmul.f32 %v5007, %v5020
      %v5044 = vmul.f32 %v5008, %v5020
      %v5045 = vmul.f32 %v5009, %v5020
      %v5046 = vmul.f32 %v5010, %v5020
      %v5047 = vmul.f32 %v5011, %v5020
      %v5048 = vmul.f32 %v5012, %v5020
      %v5049 = vmul.f32 %v5013, %v5020
      %v5050 = vmul.f32 %v5014, %v5020
      %v5051 = vmul.f32 %v5015, %v5020
      %v5052 = vmul.f32 %v5016, %v5020
      %v5053 = vlaneseq
      %v5054 = vshrl.u32 %v5053, 7
      %v5055 = vsub.s32 0, %v5054
      %v5056 = vrot.slane %v881, %v5055
      %v5057 = vadd.f32 %v5021, %v5056
      %v5058 = vadd.f32 %v5022, %v5056
      %v5059 = vadd.f32 %v5023, %v5056
      %v5060 = vadd.f32 %v5024, %v5056
      %v5061 = vadd.f32 %v5025, %v5056
      %v5062 = vadd.f32 %v5026, %v5056
      %v5063 = vadd.f32 %v5027, %v5056
      %v5064 = vadd.f32 %v5028, %v5056
      %v5065 = vadd.f32 %v5029, %v5056
      %v5066 = vadd.f32 %v5030, %v5056
      %v5067 = vadd.f32 %v5031, %v5056
      %v5068 = vadd.f32 %v5032, %v5056
      %v5069 = vadd.f32 %v5033, %v5056
      %v5070 = vadd.f32 %v5034, %v5056
      %v5071 = vadd.f32 %v5035, %v5056
      %v5072 = vadd.f32 %v5036, %v5056
      %v5073 = vadd.f32 %v5037, %v5056
      %v5074 = vadd.f32 %v5038, %v5056
      %v5075 = vadd.f32 %v5039, %v5056
      %v5076 = vadd.f32 %v5040, %v5056
      %v5077 = vadd.f32 %v5041, %v5056
      %v5078 = vadd.f32 %v5042, %v5056
      %v5079 = vadd.f32 %v5043, %v5056
      %v5080 = vadd.f32 %v5044, %v5056
      %v5081 = vadd.f32 %v5045, %v5056
      %v5082 = vadd.f32 %v5046, %v5056
      %v5083 = vadd.f32 %v5047, %v5056
      %v5084 = vadd.f32 %v5048, %v5056
      %v5085 = vadd.f32 %v5049, %v5056
      %v5086 = vadd.f32 %v5050, %v5056
      %v5087 = vadd.f32 %v5051, %v5056
      %v5088 = vadd.f32 %v5052, %v5056
      %v5089 = vmax.f32 %v5057, 0.0
      %v5090 = vmax.f32 %v5058, 0.0
      %v5091 = vmax.f32 %v5059, 0.0
      %v5092 = vmax.f32 %v5060, 0.0
      %v5093 = vmax.f32 %v5061, 0.0
      %v5094 = vmax.f32 %v5062, 0.0
      %v5095 = vmax.f32 %v5063, 0.0
      %v5096 = vmax.f32 %v5064, 0.0
      %v5097 = vmax.f32 %v5065, 0.0
      %v5098 = vmax.f32 %v5066, 0.0
      %v5099 = vmax.f32 %v5067, 0.0
      %v5100 = vmax.f32 %v5068, 0.0
      %v5101 = vmax.f32 %v5069, 0.0
      %v5102 = vmax.f32 %v5070, 0.0
      %v5103 = vmax.f32 %v5071, 0.0
      %v5104 = vmax.f32 %v5072, 0.0
      %v5105 = vmax.f32 %v5073, 0.0
      %v5106 = vmax.f32 %v5074, 0.0
      %v5107 = vmax.f32 %v5075, 0.0
      %v5108 = vmax.f32 %v5076, 0.0
      %v5109 = vmax.f32 %v5077, 0.0
      %v5110 = vmax.f32 %v5078, 0.0
      %v5111 = vmax.f32 %v5079, 0.0
      %v5112 = vmax.f32 %v5080, 0.0
      %v5113 = vmax.f32 %v5081, 0.0
      %v5114 = vmax.f32 %v5082, 0.0
      %v5115 = vmax.f32 %v5083, 0.0
      %v5116 = vmax.f32 %v5084, 0.0
      %v5117 = vmax.f32 %v5085, 0.0
      %v5118 = vmax.f32 %v5086, 0.0
      %v5119 = vmax.f32 %v5087, 0.0
      %v5120 = vmax.f32 %v5088, 0.0
      %v5121 = vpack.c.bf16 %v5090, %v5089
      %v5122 = vpack.c.bf16 %v5092, %v5091
      %v5123 = vpack.c.bf16 %v5094, %v5093
      %v5124 = vpack.c.bf16 %v5096, %v5095
      %v5125 = vpack.c.bf16 %v5098, %v5097
      %v5126 = vpack.c.bf16 %v5100, %v5099
      %v5127 = vpack.c.bf16 %v5102, %v5101
      %v5128 = vpack.c.bf16 %v5104, %v5103
      %v5129 = vpack.c.bf16 %v5106, %v5105
      %v5130 = vpack.c.bf16 %v5108, %v5107
      %v5131 = vpack.c.bf16 %v5110, %v5109
      %v5132 = vpack.c.bf16 %v5112, %v5111
      %v5133 = vpack.c.bf16 %v5114, %v5113
      %v5134 = vpack.c.bf16 %v5116, %v5115
      %v5135 = vpack.c.bf16 %v5118, %v5117
      %v5136 = vpack.c.bf16 %v5120, %v5119
      %v5153 = vunpack.c.l.b16 %v5121
      %v5154 = vunpack.c.h.b16 %v5121
      %v5155 = vunpack.c.l.b16 %v5122
      %v5156 = vunpack.c.h.b16 %v5122
      %v5157 = vunpack.c.l.b16 %v5123
      %v5158 = vunpack.c.h.b16 %v5123
      %v5159 = vunpack.c.l.b16 %v5124
      %v5160 = vunpack.c.h.b16 %v5124
      %v5161 = vunpack.c.l.b16 %v5125
      %v5162 = vunpack.c.h.b16 %v5125
      %v5163 = vunpack.c.l.b16 %v5126
      %v5164 = vunpack.c.h.b16 %v5126
      %v5165 = vunpack.c.l.b16 %v5127
      %v5166 = vunpack.c.h.b16 %v5127
      %v5167 = vunpack.c.l.b16 %v5128
      %v5168 = vunpack.c.h.b16 %v5128
      %v5169 = vunpack.c.l.b16 %v5129
      %v5170 = vunpack.c.h.b16 %v5129
      %v5171 = vunpack.c.l.b16 %v5130
      %v5172 = vunpack.c.h.b16 %v5130
      %v5173 = vunpack.c.l.b16 %v5131
      %v5174 = vunpack.c.h.b16 %v5131
      %v5175 = vunpack.c.l.b16 %v5132
      %v5176 = vunpack.c.h.b16 %v5132
      %v5177 = vunpack.c.l.b16 %v5133
      %v5178 = vunpack.c.h.b16 %v5133
      %v5179 = vunpack.c.l.b16 %v5134
      %v5180 = vunpack.c.h.b16 %v5134
      %v5181 = vunpack.c.l.b16 %v5135
      %v5182 = vunpack.c.h.b16 %v5135
      %v5183 = vunpack.c.l.b16 %v5136
      %v5184 = vunpack.c.h.b16 %v5136
      %v5185 = vpack.c.b16 %v5153, %v5153
      %v5186 = vpack.c.b16 %v5154, %v5154
      %v5187 = vpack.c.b16 %v5155, %v5155
      %v5188 = vpack.c.b16 %v5156, %v5156
      %v5189 = vpack.c.b16 %v5157, %v5157
      %v5190 = vpack.c.b16 %v5158, %v5158
      %v5191 = vpack.c.b16 %v5159, %v5159
      %v5192 = vpack.c.b16 %v5160, %v5160
      %v5193 = vpack.c.b16 %v5161, %v5161
      %v5194 = vpack.c.b16 %v5162, %v5162
      %v5195 = vpack.c.b16 %v5163, %v5163
      %v5196 = vpack.c.b16 %v5164, %v5164
      %v5197 = vpack.c.b16 %v5165, %v5165
      %v5198 = vpack.c.b16 %v5166, %v5166
      %v5199 = vpack.c.b16 %v5167, %v5167
      %v5200 = vpack.c.b16 %v5168, %v5168
      %v5201 = vpack.c.b16 %v5169, %v5169
      %v5202 = vpack.c.b16 %v5170, %v5170
      %v5203 = vpack.c.b16 %v5171, %v5171
      %v5204 = vpack.c.b16 %v5172, %v5172
      %v5205 = vpack.c.b16 %v5173, %v5173
      %v5206 = vpack.c.b16 %v5174, %v5174
      %v5207 = vpack.c.b16 %v5175, %v5175
      %v5208 = vpack.c.b16 %v5176, %v5176
      %v5209 = vpack.c.b16 %v5177, %v5177
      %v5210 = vpack.c.b16 %v5178, %v5178
      %v5211 = vpack.c.b16 %v5179, %v5179
      %v5212 = vpack.c.b16 %v5180, %v5180
      %v5213 = vpack.c.b16 %v5181, %v5181
      %v5214 = vpack.c.b16 %v5182, %v5182
      %v5215 = vpack.c.b16 %v5183, %v5183
      %v5216 = vpack.c.b16 %v5184, %v5184
      %v5218 = vshrl.u32 %v5185, 16
      %v5220 = vrot.slane %v5218, 7
      %v5221 = vshll.u32 %v5185, 16
      %v5223 = vor.u32 %v5220, %v5221
      %v5224 = vrot.slane %v5220, 4
      %v5226 = vshrl.u32 %v5186, 16
      %v5228 = vrot.slane %v5226, 7
      %v5229 = vshll.u32 %v5186, 16
      %v5231 = vor.u32 %v5228, %v5229
      %v5232 = vsel %vm341, %v5224, %v5231
      %v5233 = vrot.slane %v5228, 4
      %v5235 = vshrl.u32 %v5187, 16
      %v5237 = vrot.slane %v5235, 7
      %v5238 = vshll.u32 %v5187, 16
      %v5240 = vor.u32 %v5237, %v5238
      %v5241 = vrot.slane %v5237, 4
      %v5243 = vshrl.u32 %v5188, 16
      %v5245 = vrot.slane %v5243, 7
      %v5246 = vshll.u32 %v5188, 16
      %v5248 = vor.u32 %v5245, %v5246
      %v5249 = vsel %vm341, %v5241, %v5248
      %v5250 = vrot.slane %v5245, 4
      %v5252 = vshrl.u32 %v5189, 16
      %v5254 = vrot.slane %v5252, 7
      %v5255 = vshll.u32 %v5189, 16
      %v5257 = vor.u32 %v5254, %v5255
      %v5258 = vrot.slane %v5254, 4
      %v5260 = vshrl.u32 %v5190, 16
      %v5262 = vrot.slane %v5260, 7
      %v5263 = vshll.u32 %v5190, 16
      %v5265 = vor.u32 %v5262, %v5263
      %v5266 = vsel %vm341, %v5258, %v5265
      %v5267 = vrot.slane %v5262, 4
      %v5269 = vshrl.u32 %v5191, 16
      %v5271 = vrot.slane %v5269, 7
      %v5272 = vshll.u32 %v5191, 16
      %v5274 = vor.u32 %v5271, %v5272
      %v5275 = vrot.slane %v5271, 4
      %v5277 = vshrl.u32 %v5192, 16
      %v5279 = vrot.slane %v5277, 7
      %v5280 = vshll.u32 %v5192, 16
      %v5282 = vor.u32 %v5279, %v5280
      %v5283 = vsel %vm341, %v5275, %v5282
      %v5284 = vrot.slane %v5279, 4
      %v5286 = vshrl.u32 %v5193, 16
      %v5288 = vrot.slane %v5286, 7
      %v5289 = vshll.u32 %v5193, 16
      %v5291 = vor.u32 %v5288, %v5289
      %v5292 = vrot.slane %v5288, 4
      %v5294 = vshrl.u32 %v5194, 16
      %v5296 = vrot.slane %v5294, 7
      %v5297 = vshll.u32 %v5194, 16
      %v5299 = vor.u32 %v5296, %v5297
      %v5300 = vsel %vm341, %v5292, %v5299
      %v5301 = vrot.slane %v5296, 4
      %v5303 = vshrl.u32 %v5195, 16
      %v5305 = vrot.slane %v5303, 7
      %v5306 = vshll.u32 %v5195, 16
      %v5308 = vor.u32 %v5305, %v5306
      %v5309 = vrot.slane %v5305, 4
      %v5311 = vshrl.u32 %v5196, 16
      %v5313 = vrot.slane %v5311, 7
      %v5314 = vshll.u32 %v5196, 16
      %v5316 = vor.u32 %v5313, %v5314
      %v5317 = vsel %vm341, %v5309, %v5316
      %v5318 = vrot.slane %v5313, 4
      %v5320 = vshrl.u32 %v5197, 16
      %v5322 = vrot.slane %v5320, 7
      %v5323 = vshll.u32 %v5197, 16
      %v5325 = vor.u32 %v5322, %v5323
      %v5326 = vrot.slane %v5322, 4
      %v5328 = vshrl.u32 %v5198, 16
      %v5330 = vrot.slane %v5328, 7
      %v5331 = vshll.u32 %v5198, 16
      %v5333 = vor.u32 %v5330, %v5331
      %v5334 = vsel %vm341, %v5326, %v5333
      %v5335 = vrot.slane %v5330, 4
      %v5337 = vshrl.u32 %v5199, 16
      %v5339 = vrot.slane %v5337, 7
      %v5340 = vshll.u32 %v5199, 16
      %v5342 = vor.u32 %v5339, %v5340
      %v5343 = vrot.slane %v5339, 4
      %v5345 = vshrl.u32 %v5200, 16
      %v5347 = vrot.slane %v5345, 7
      %v5348 = vshll.u32 %v5200, 16
      %v5350 = vor.u32 %v5347, %v5348
      %v5351 = vsel %vm341, %v5343, %v5350
      %v5352 = vrot.slane %v5347, 4
      %v5354 = vshrl.u32 %v5201, 16
      %v5356 = vrot.slane %v5354, 7
      %v5357 = vshll.u32 %v5201, 16
      %v5359 = vor.u32 %v5356, %v5357
      %v5360 = vrot.slane %v5356, 4
      %v5362 = vshrl.u32 %v5202, 16
      %v5364 = vrot.slane %v5362, 7
      %v5365 = vshll.u32 %v5202, 16
      %v5367 = vor.u32 %v5364, %v5365
      %v5368 = vsel %vm341, %v5360, %v5367
      %v5369 = vrot.slane %v5364, 4
      %v5371 = vshrl.u32 %v5203, 16
      %v5373 = vrot.slane %v5371, 7
      %v5374 = vshll.u32 %v5203, 16
      %v5376 = vor.u32 %v5373, %v5374
      %v5377 = vrot.slane %v5373, 4
      %v5379 = vshrl.u32 %v5204, 16
      %v5381 = vrot.slane %v5379, 7
      %v5382 = vshll.u32 %v5204, 16
      %v5384 = vor.u32 %v5381, %v5382
      %v5385 = vsel %vm341, %v5377, %v5384
      %v5386 = vrot.slane %v5381, 4
      %v5388 = vshrl.u32 %v5205, 16
      %v5390 = vrot.slane %v5388, 7
      %v5391 = vshll.u32 %v5205, 16
      %v5393 = vor.u32 %v5390, %v5391
      %v5394 = vrot.slane %v5390, 4
      %v5396 = vshrl.u32 %v5206, 16
      %v5398 = vrot.slane %v5396, 7
      %v5399 = vshll.u32 %v5206, 16
      %v5401 = vor.u32 %v5398, %v5399
      %v5402 = vsel %vm341, %v5394, %v5401
      %v5403 = vrot.slane %v5398, 4
      %v5405 = vshrl.u32 %v5207, 16
      %v5407 = vrot.slane %v5405, 7
      %v5408 = vshll.u32 %v5207, 16
      %v5410 = vor.u32 %v5407, %v5408
      %v5411 = vrot.slane %v5407, 4
      %v5413 = vshrl.u32 %v5208, 16
      %v5415 = vrot.slane %v5413, 7
      %v5416 = vshll.u32 %v5208, 16
      %v5418 = vor.u32 %v5415, %v5416
      %v5419 = vsel %vm341, %v5411, %v5418
      %v5420 = vrot.slane %v5415, 4
      %v5422 = vshrl.u32 %v5209, 16
      %v5424 = vrot.slane %v5422, 7
      %v5425 = vshll.u32 %v5209, 16
      %v5427 = vor.u32 %v5424, %v5425
      %v5428 = vrot.slane %v5424, 4
      %v5430 = vshrl.u32 %v5210, 16
      %v5432 = vrot.slane %v5430, 7
      %v5433 = vshll.u32 %v5210, 16
      %v5435 = vor.u32 %v5432, %v5433
      %v5436 = vsel %vm341, %v5428, %v5435
      %v5437 = vrot.slane %v5432, 4
      %v5439 = vshrl.u32 %v5211, 16
      %v5441 = vrot.slane %v5439, 7
      %v5442 = vshll.u32 %v5211, 16
      %v5444 = vor.u32 %v5441, %v5442
      %v5445 = vrot.slane %v5441, 4
      %v5447 = vshrl.u32 %v5212, 16
      %v5449 = vrot.slane %v5447, 7
      %v5450 = vshll.u32 %v5212, 16
      %v5452 = vor.u32 %v5449, %v5450
      %v5453 = vsel %vm341, %v5445, %v5452
      %v5454 = vrot.slane %v5449, 4
      %v5456 = vshrl.u32 %v5213, 16
      %v5458 = vrot.slane %v5456, 7
      %v5459 = vshll.u32 %v5213, 16
      %v5461 = vor.u32 %v5458, %v5459
      %v5462 = vrot.slane %v5458, 4
      %v5464 = vshrl.u32 %v5214, 16
      %v5466 = vrot.slane %v5464, 7
      %v5467 = vshll.u32 %v5214, 16
      %v5469 = vor.u32 %v5466, %v5467
      %v5470 = vsel %vm341, %v5462, %v5469
      %v5471 = vrot.slane %v5466, 4
      %v5473 = vshrl.u32 %v5215, 16
      %v5475 = vrot.slane %v5473, 7
      %v5476 = vshll.u32 %v5215, 16
      %v5478 = vor.u32 %v5475, %v5476
      %v5479 = vrot.slane %v5475, 4
      %v5481 = vshrl.u32 %v5216, 16
      %v5483 = vrot.slane %v5481, 7
      %v5484 = vshll.u32 %v5216, 16
      %v5486 = vor.u32 %v5483, %v5484
      %v5487 = vsel %vm341, %v5479, %v5486
      %v5488 = vrot.slane %v5483, 4
      %s5537 = smul.addr %s1786, 4
      %s5538 = scalar_lea.vmem [#allocation3], %s5537
      %v5539 = vld [vmem:[%s5538] sm:$0xf]
      %v5540 = vsel %vm663, %v5223, %v5539
      %5541 = vst [vmem:[%s5538] sm:$0xf] %v5540
      %5542 = vst [vmem:[%s5538 + $0x4] sm:$0xf] %v5232
      %v5543 = vld [vmem:[%s5538 + $0x8] sm:$0x1]
      %v5544 = vsel %vm209, %v5233, %v5543
      %5545 = vst [vmem:[%s5538 + $0x8] sm:$0x1] %v5544
      %v5546 = vld [vmem:[%s5538 + $0xc] sm:$0xf]
      %v5547 = vsel %vm663, %v5240, %v5546
      %5548 = vst [vmem:[%s5538 + $0xc] sm:$0xf] %v5547
      %5549 = vst [vmem:[%s5538 + $0x10] sm:$0xf] %v5249
      %v5550 = vld [vmem:[%s5538 + $0x14] sm:$0x1]
      %v5551 = vsel %vm209, %v5250, %v5550
      %5552 = vst [vmem:[%s5538 + $0x14] sm:$0x1] %v5551
      %v5553 = vld [vmem:[%s5538 + $0x18] sm:$0xf]
      %v5554 = vsel %vm663, %v5257, %v5553
      %5555 = vst [vmem:[%s5538 + $0x18] sm:$0xf] %v5554
      %5556 = vst [vmem:[%s5538 + $0x1c] sm:$0xf] %v5266
      %v5557 = vld [vmem:[%s5538 + $0x20] sm:$0x1]
      %v5558 = vsel %vm209, %v5267, %v5557
      %5559 = vst [vmem:[%s5538 + $0x20] sm:$0x1] %v5558
      %v5560 = vld [vmem:[%s5538 + $0x24] sm:$0xf]
      %v5561 = vsel %vm663, %v5274, %v5560
      %5562 = vst [vmem:[%s5538 + $0x24] sm:$0xf] %v5561
      %5563 = vst [vmem:[%s5538 + $0x28] sm:$0xf] %v5283
      %v5564 = vld [vmem:[%s5538 + $0x2c] sm:$0x1]
      %v5565 = vsel %vm209, %v5284, %v5564
      %5566 = vst [vmem:[%s5538 + $0x2c] sm:$0x1] %v5565
      %v5567 = vld [vmem:[%s5538 + $0x30] sm:$0xf]
      %v5568 = vsel %vm663, %v5291, %v5567
      %5569 = vst [vmem:[%s5538 + $0x30] sm:$0xf] %v5568
      %5570 = vst [vmem:[%s5538 + $0x34] sm:$0xf] %v5300
      %v5571 = vld [vmem:[%s5538 + $0x38] sm:$0x1]
      %v5572 = vsel %vm209, %v5301, %v5571
      %5573 = vst [vmem:[%s5538 + $0x38] sm:$0x1] %v5572
      %v5574 = vld [vmem:[%s5538 + $0x3c] sm:$0xf]
      %v5575 = vsel %vm663, %v5308, %v5574
      %5576 = vst [vmem:[%s5538 + $0x3c] sm:$0xf] %v5575
      %5577 = vst [vmem:[%s5538 + $0x40] sm:$0xf] %v5317
      %v5578 = vld [vmem:[%s5538 + $0x44] sm:$0x1]
      %v5579 = vsel %vm209, %v5318, %v5578
      %5580 = vst [vmem:[%s5538 + $0x44] sm:$0x1] %v5579
      %v5581 = vld [vmem:[%s5538 + $0x48] sm:$0xf]
      %v5582 = vsel %vm663, %v5325, %v5581
      %5583 = vst [vmem:[%s5538 + $0x48] sm:$0xf] %v5582
      %5584 = vst [vmem:[%s5538 + $0x4c] sm:$0xf] %v5334
      %v5585 = vld [vmem:[%s5538 + $0x50] sm:$0x1]
      %v5586 = vsel %vm209, %v5335, %v5585
      %5587 = vst [vmem:[%s5538 + $0x50] sm:$0x1] %v5586
      %v5588 = vld [vmem:[%s5538 + $0x54] sm:$0xf]
      %v5589 = vsel %vm663, %v5342, %v5588
      %5590 = vst [vmem:[%s5538 + $0x54] sm:$0xf] %v5589
      %5591 = vst [vmem:[%s5538 + $0x58] sm:$0xf] %v5351
      %v5592 = vld [vmem:[%s5538 + $0x5c] sm:$0x1]
      %v5593 = vsel %vm209, %v5352, %v5592
      %5594 = vst [vmem:[%s5538 + $0x5c] sm:$0x1] %v5593
      %v5595 = vld [vmem:[%s5538 + $0x60] sm:$0xf]
      %v5596 = vsel %vm663, %v5359, %v5595
      %5597 = vst [vmem:[%s5538 + $0x60] sm:$0xf] %v5596
      %5598 = vst [vmem:[%s5538 + $0x64] sm:$0xf] %v5368
      %v5599 = vld [vmem:[%s5538 + $0x68] sm:$0x1]
      %v5600 = vsel %vm209, %v5369, %v5599
      %5601 = vst [vmem:[%s5538 + $0x68] sm:$0x1] %v5600
      %v5602 = vld [vmem:[%s5538 + $0x6c] sm:$0xf]
      %v5603 = vsel %vm663, %v5376, %v5602
      %5604 = vst [vmem:[%s5538 + $0x6c] sm:$0xf] %v5603
      %5605 = vst [vmem:[%s5538 + $0x70] sm:$0xf] %v5385
      %v5606 = vld [vmem:[%s5538 + $0x74] sm:$0x1]
      %v5607 = vsel %vm209, %v5386, %v5606
      %5608 = vst [vmem:[%s5538 + $0x74] sm:$0x1] %v5607
      %v5609 = vld [vmem:[%s5538 + $0x78] sm:$0xf]
      %v5610 = vsel %vm663, %v5393, %v5609
      %5611 = vst [vmem:[%s5538 + $0x78] sm:$0xf] %v5610
      %5612 = vst [vmem:[%s5538 + $0x7c] sm:$0xf] %v5402
      %v5613 = vld [vmem:[%s5538 + $0x80] sm:$0x1]
      %v5614 = vsel %vm209, %v5403, %v5613
      %5615 = vst [vmem:[%s5538 + $0x80] sm:$0x1] %v5614
      %v5616 = vld [vmem:[%s5538 + $0x84] sm:$0xf]
      %v5617 = vsel %vm663, %v5410, %v5616
      %5618 = vst [vmem:[%s5538 + $0x84] sm:$0xf] %v5617
      %5619 = vst [vmem:[%s5538 + $0x88] sm:$0xf] %v5419
      %v5620 = vld [vmem:[%s5538 + $0x8c] sm:$0x1]
      %v5621 = vsel %vm209, %v5420, %v5620
      %5622 = vst [vmem:[%s5538 + $0x8c] sm:$0x1] %v5621
      %v5623 = vld [vmem:[%s5538 + $0x90] sm:$0xf]
      %v5624 = vsel %vm663, %v5427, %v5623
      %5625 = vst [vmem:[%s5538 + $0x90] sm:$0xf] %v5624
      %5626 = vst [vmem:[%s5538 + $0x94] sm:$0xf] %v5436
      %v5627 = vld [vmem:[%s5538 + $0x98] sm:$0x1]
      %v5628 = vsel %vm209, %v5437, %v5627
      %5629 = vst [vmem:[%s5538 + $0x98] sm:$0x1] %v5628
      %v5630 = vld [vmem:[%s5538 + $0x9c] sm:$0xf]
      %v5631 = vsel %vm663, %v5444, %v5630
      %5632 = vst [vmem:[%s5538 + $0x9c] sm:$0xf] %v5631
      %5633 = vst [vmem:[%s5538 + $0xa0] sm:$0xf] %v5453
      %v5634 = vld [vmem:[%s5538 + $0xa4] sm:$0x1]
      %v5635 = vsel %vm209, %v5454, %v5634
      %5636 = vst [vmem:[%s5538 + $0xa4] sm:$0x1] %v5635
      %v5637 = vld [vmem:[%s5538 + $0xa8] sm:$0xf]
      %v5638 = vsel %vm663, %v5461, %v5637
      %5639 = vst [vmem:[%s5538 + $0xa8] sm:$0xf] %v5638
      %5640 = vst [vmem:[%s5538 + $0xac] sm:$0xf] %v5470
      %v5641 = vld [vmem:[%s5538 + $0xb0] sm:$0x1]
      %v5642 = vsel %vm209, %v5471, %v5641
      %5643 = vst [vmem:[%s5538 + $0xb0] sm:$0x1] %v5642
      %v5644 = vld [vmem:[%s5538 + $0xb4] sm:$0xf]
      %v5645 = vsel %vm663, %v5478, %v5644
      %5646 = vst [vmem:[%s5538 + $0xb4] sm:$0xf] %v5645
      %5647 = vst [vmem:[%s5538 + $0xb8] sm:$0xf] %v5487
      %v5648 = vld [vmem:[%s5538 + $0xbc] sm:$0x1]
      %v5649 = vsel %vm209, %v5488, %v5648
      %5650 = vst [vmem:[%s5538 + $0xbc] sm:$0x1] %v5649
      %s5651 = smul.addr %s884, 4
      %s5652 = scalar_lea.vmem [#allocation3], %s5651
      %v5653 = vld [vmem:[%s5652] sm:$0xf]
      %v5654 = vld [vmem:[%s5652 + $0x4] sm:$0xf]
      %v5655 = vld [vmem:[%s5652 + $0xc] sm:$0xf]
      %v5656 = vld [vmem:[%s5652 + $0x10] sm:$0xf]
      %v5657 = vld [vmem:[%s5652 + $0x18] sm:$0xf]
      %v5658 = vld [vmem:[%s5652 + $0x1c] sm:$0xf]
      %v5659 = vld [vmem:[%s5652 + $0x24] sm:$0xf]
      %v5660 = vld [vmem:[%s5652 + $0x28] sm:$0xf]
      %v5661 = vld [vmem:[%s5652 + $0x30] sm:$0xf]
      %v5662 = vld [vmem:[%s5652 + $0x34] sm:$0xf]
      %v5663 = vld [vmem:[%s5652 + $0x3c] sm:$0xf]
      %v5664 = vld [vmem:[%s5652 + $0x40] sm:$0xf]
      %v5665 = vld [vmem:[%s5652 + $0x48] sm:$0xf]
      %v5666 = vld [vmem:[%s5652 + $0x4c] sm:$0xf]
      %v5667 = vld [vmem:[%s5652 + $0x54] sm:$0xf]
      %v5668 = vld [vmem:[%s5652 + $0x58] sm:$0xf]
      %v5669 = vld [vmem:[%s5652 + $0x60] sm:$0xf]
      %v5670 = vld [vmem:[%s5652 + $0x64] sm:$0xf]
      %v5671 = vld [vmem:[%s5652 + $0x6c] sm:$0xf]
      %v5672 = vld [vmem:[%s5652 + $0x70] sm:$0xf]
      %v5673 = vld [vmem:[%s5652 + $0x78] sm:$0xf]
      %v5674 = vld [vmem:[%s5652 + $0x7c] sm:$0xf]
      %v5675 = vld [vmem:[%s5652 + $0x84] sm:$0xf]
      %v5676 = vld [vmem:[%s5652 + $0x88] sm:$0xf]
      %v5677 = vld [vmem:[%s5652 + $0x90] sm:$0xf]
      %v5678 = vld [vmem:[%s5652 + $0x94] sm:$0xf]
      %v5679 = vld [vmem:[%s5652 + $0x9c] sm:$0xf]
      %v5680 = vld [vmem:[%s5652 + $0xa0] sm:$0xf]
      %v5681 = vld [vmem:[%s5652 + $0xa8] sm:$0xf]
      %v5682 = vld [vmem:[%s5652 + $0xac] sm:$0xf]
      %v5683 = vld [vmem:[%s5652 + $0xb4] sm:$0xf]
      %v5684 = vld [vmem:[%s5652 + $0xb8] sm:$0xf]
      %v5717 = vunpack.c.l.b16 %v5653
      %v5718 = vunpack.c.l.b16 %v5654
      %v5719 = vunpack.c.l.b16 %v5655
      %v5720 = vunpack.c.l.b16 %v5656
      %v5721 = vunpack.c.l.b16 %v5657
      %v5722 = vunpack.c.l.b16 %v5658
      %v5723 = vunpack.c.l.b16 %v5659
      %v5724 = vunpack.c.l.b16 %v5660
      %v5725 = vunpack.c.l.b16 %v5661
      %v5726 = vunpack.c.l.b16 %v5662
      %v5727 = vunpack.c.l.b16 %v5663
      %v5728 = vunpack.c.l.b16 %v5664
      %v5729 = vunpack.c.l.b16 %v5665
      %v5730 = vunpack.c.l.b16 %v5666
      %v5731 = vunpack.c.l.b16 %v5667
      %v5732 = vunpack.c.l.b16 %v5668
      %v5733 = vunpack.c.l.b16 %v5669
      %v5734 = vunpack.c.l.b16 %v5670
      %v5735 = vunpack.c.l.b16 %v5671
      %v5736 = vunpack.c.l.b16 %v5672
      %v5737 = vunpack.c.l.b16 %v5673
      %v5738 = vunpack.c.l.b16 %v5674
      %v5739 = vunpack.c.l.b16 %v5675
      %v5740 = vunpack.c.l.b16 %v5676
      %v5741 = vunpack.c.l.b16 %v5677
      %v5742 = vunpack.c.l.b16 %v5678
      %v5743 = vunpack.c.l.b16 %v5679
      %v5744 = vunpack.c.l.b16 %v5680
      %v5745 = vunpack.c.l.b16 %v5681
      %v5746 = vunpack.c.l.b16 %v5682
      %v5747 = vunpack.c.l.b16 %v5683
      %v5748 = vunpack.c.l.b16 %v5684
      %v5749 = vpack.c.b16 %v5718, %v5717
      %v5750 = vpack.c.b16 %v5720, %v5719
      %v5751 = vpack.c.b16 %v5722, %v5721
      %v5752 = vpack.c.b16 %v5724, %v5723
      %v5753 = vpack.c.b16 %v5726, %v5725
      %v5754 = vpack.c.b16 %v5728, %v5727
      %v5755 = vpack.c.b16 %v5730, %v5729
      %v5756 = vpack.c.b16 %v5732, %v5731
      %v5757 = vpack.c.b16 %v5734, %v5733
      %v5758 = vpack.c.b16 %v5736, %v5735
      %v5759 = vpack.c.b16 %v5738, %v5737
      %v5760 = vpack.c.b16 %v5740, %v5739
      %v5761 = vpack.c.b16 %v5742, %v5741
      %v5762 = vpack.c.b16 %v5744, %v5743
      %v5763 = vpack.c.b16 %v5746, %v5745
      %v5764 = vpack.c.b16 %v5748, %v5747
      %5781 = vst [vmem:[#allocation4] sm:$0xff] %v5749
      %5782 = vst [vmem:[#allocation4 + $0x18] sm:$0xff] %v5750
      %5783 = vst [vmem:[#allocation4 + $0x30] sm:$0xff] %v5751
      %5784 = vst [vmem:[#allocation4 + $0x48] sm:$0xff] %v5752
      %5785 = vst [vmem:[#allocation4 + $0x60] sm:$0xff] %v5753
      %5786 = vst [vmem:[#allocation4 + $0x78] sm:$0xff] %v5754
      %5787 = vst [vmem:[#allocation4 + $0x90] sm:$0xff] %v5755
      %5788 = vst [vmem:[#allocation4 + $0xa8] sm:$0xff] %v5756
      %5789 = vst [vmem:[#allocation4 + $0xc0] sm:$0xff] %v5757
      %5790 = vst [vmem:[#allocation4 + $0xd8] sm:$0xff] %v5758
      %5791 = vst [vmem:[#allocation4 + $0xf0] sm:$0xff] %v5759
      %5792 = vst [vmem:[#allocation4 + $0x108] sm:$0xff] %v5760
      %5793 = vst [vmem:[#allocation4 + $0x120] sm:$0xff] %v5761
      %5794 = vst [vmem:[#allocation4 + $0x138] sm:$0xff] %v5762
      %5795 = vst [vmem:[#allocation4 + $0x150] sm:$0xff] %v5763
      %5796 = vst [vmem:[#allocation4 + $0x168] sm:$0xff] %v5764
      %v5797 = vld [vmem:[%s5652] sm:$0xf]
      %v5798 = vld [vmem:[%s5652 + $0x4] sm:$0xf]
      %v5799 = vld [vmem:[%s5652 + $0x8] sm:$0x1]
      %v5800 = vld [vmem:[%s5652 + $0xc] sm:$0xf]
      %v5801 = vld [vmem:[%s5652 + $0x10] sm:$0xf]
      %v5802 = vld [vmem:[%s5652 + $0x14] sm:$0x1]
      %v5803 = vld [vmem:[%s5652 + $0x18] sm:$0xf]
      %v5804 = vld [vmem:[%s5652 + $0x1c] sm:$0xf]
      %v5805 = vld [vmem:[%s5652 + $0x20] sm:$0x1]
      %v5806 = vld [vmem:[%s5652 + $0x24] sm:$0xf]
      %v5807 = vld [vmem:[%s5652 + $0x28] sm:$0xf]
      %v5808 = vld [vmem:[%s5652 + $0x2c] sm:$0x1]
      %v5809 = vld [vmem:[%s5652 + $0x30] sm:$0xf]
      %v5810 = vld [vmem:[%s5652 + $0x34] sm:$0xf]
      %v5811 = vld [vmem:[%s5652 + $0x38] sm:$0x1]
      %v5812 = vld [vmem:[%s5652 + $0x3c] sm:$0xf]
      %v5813 = vld [vmem:[%s5652 + $0x40] sm:$0xf]
      %v5814 = vld [vmem:[%s5652 + $0x44] sm:$0x1]
      %v5815 = vld [vmem:[%s5652 + $0x48] sm:$0xf]
      %v5816 = vld [vmem:[%s5652 + $0x4c] sm:$0xf]
      %v5817 = vld [vmem:[%s5652 + $0x50] sm:$0x1]
      %v5818 = vld [vmem:[%s5652 + $0x54] sm:$0xf]
      %v5819 = vld [vmem:[%s5652 + $0x58] sm:$0xf]
      %v5820 = vld [vmem:[%s5652 + $0x5c] sm:$0x1]
      %v5821 = vld [vmem:[%s5652 + $0x60] sm:$0xf]
      %v5822 = vld [vmem:[%s5652 + $0x64] sm:$0xf]
      %v5823 = vld [vmem:[%s5652 + $0x68] sm:$0x1]
      %v5824 = vld [vmem:[%s5652 + $0x6c] sm:$0xf]
      %v5825 = vld [vmem:[%s5652 + $0x70] sm:$0xf]
      %v5826 = vld [vmem:[%s5652 + $0x74] sm:$0x1]
      %v5827 = vld [vmem:[%s5652 + $0x78] sm:$0xf]
      %v5828 = vld [vmem:[%s5652 + $0x7c] sm:$0xf]
      %v5829 = vld [vmem:[%s5652 + $0x80] sm:$0x1]
      %v5830 = vld [vmem:[%s5652 + $0x84] sm:$0xf]
      %v5831 = vld [vmem:[%s5652 + $0x88] sm:$0xf]
      %v5832 = vld [vmem:[%s5652 + $0x8c] sm:$0x1]
      %v5833 = vld [vmem:[%s5652 + $0x90] sm:$0xf]
      %v5834 = vld [vmem:[%s5652 + $0x94] sm:$0xf]
      %v5835 = vld [vmem:[%s5652 + $0x98] sm:$0x1]
      %v5836 = vld [vmem:[%s5652 + $0x9c] sm:$0xf]
      %v5837 = vld [vmem:[%s5652 + $0xa0] sm:$0xf]
      %v5838 = vld [vmem:[%s5652 + $0xa4] sm:$0x1]
      %v5839 = vld [vmem:[%s5652 + $0xa8] sm:$0xf]
      %v5840 = vld [vmem:[%s5652 + $0xac] sm:$0xf]
      %v5841 = vld [vmem:[%s5652 + $0xb0] sm:$0x1]
      %v5842 = vld [vmem:[%s5652 + $0xb4] sm:$0xf]
      %v5843 = vld [vmem:[%s5652 + $0xb8] sm:$0xf]
      %v5844 = vld [vmem:[%s5652 + $0xbc] sm:$0x1]
      %v5893 = vunpack.c.l.b16 %v5797
      %v5894 = vunpack.c.l.b16 %v5798
      %v5895 = vunpack.c.l.b16 %v5799
      %v5896 = vunpack.c.l.b16 %v5800
      %v5897 = vunpack.c.l.b16 %v5801
      %v5898 = vunpack.c.l.b16 %v5802
      %v5899 = vunpack.c.l.b16 %v5803
      %v5900 = vunpack.c.l.b16 %v5804
      %v5901 = vunpack.c.l.b16 %v5805
      %v5902 = vunpack.c.l.b16 %v5806
      %v5903 = vunpack.c.l.b16 %v5807
      %v5904 = vunpack.c.l.b16 %v5808
      %v5905 = vunpack.c.l.b16 %v5809
      %v5906 = vunpack.c.l.b16 %v5810
      %v5907 = vunpack.c.l.b16 %v5811
      %v5908 = vunpack.c.l.b16 %v5812
      %v5909 = vunpack.c.l.b16 %v5813
      %v5910 = vunpack.c.l.b16 %v5814
      %v5911 = vunpack.c.l.b16 %v5815
      %v5912 = vunpack.c.l.b16 %v5816
      %v5913 = vunpack.c.l.b16 %v5817
      %v5914 = vunpack.c.l.b16 %v5818
      %v5915 = vunpack.c.l.b16 %v5819
      %v5916 = vunpack.c.l.b16 %v5820
      %v5917 = vunpack.c.l.b16 %v5821
      %v5918 = vunpack.c.l.b16 %v5822
      %v5919 = vunpack.c.l.b16 %v5823
      %v5920 = vunpack.c.l.b16 %v5824
      %v5921 = vunpack.c.l.b16 %v5825
      %v5922 = vunpack.c.l.b16 %v5826
      %v5923 = vunpack.c.l.b16 %v5827
      %v5924 = vunpack.c.l.b16 %v5828
      %v5925 = vunpack.c.l.b16 %v5829
      %v5926 = vunpack.c.l.b16 %v5830
      %v5927 = vunpack.c.l.b16 %v5831
      %v5928 = vunpack.c.l.b16 %v5832
      %v5929 = vunpack.c.l.b16 %v5833
      %v5930 = vunpack.c.l.b16 %v5834
      %v5931 = vunpack.c.l.b16 %v5835
      %v5932 = vunpack.c.l.b16 %v5836
      %v5933 = vunpack.c.l.b16 %v5837
      %v5934 = vunpack.c.l.b16 %v5838
      %v5935 = vunpack.c.l.b16 %v5839
      %v5936 = vunpack.c.l.b16 %v5840
      %v5937 = vunpack.c.l.b16 %v5841
      %v5938 = vunpack.c.l.b16 %v5842
      %v5939 = vunpack.c.l.b16 %v5843
      %v5940 = vunpack.c.l.b16 %v5844
      %v5941 = vpack.c.b16 %v5894, %v5893
      %v5942 = vpack.c.b16 %v5895, %v5895
      %v5943 = vpack.c.b16 %v5897, %v5896
      %v5944 = vpack.c.b16 %v5898, %v5898
      %v5945 = vpack.c.b16 %v5900, %v5899
      %v5946 = vpack.c.b16 %v5901, %v5901
      %v5947 = vpack.c.b16 %v5903, %v5902
      %v5948 = vpack.c.b16 %v5904, %v5904
      %v5949 = vpack.c.b16 %v5906, %v5905
      %v5950 = vpack.c.b16 %v5907, %v5907
      %v5951 = vpack.c.b16 %v5909, %v5908
      %v5952 = vpack.c.b16 %v5910, %v5910
      %v5953 = vpack.c.b16 %v5912, %v5911
      %v5954 = vpack.c.b16 %v5913, %v5913
      %v5955 = vpack.c.b16 %v5915, %v5914
      %v5956 = vpack.c.b16 %v5916, %v5916
      %v5957 = vpack.c.b16 %v5918, %v5917
      %v5958 = vpack.c.b16 %v5919, %v5919
      %v5959 = vpack.c.b16 %v5921, %v5920
      %v5960 = vpack.c.b16 %v5922, %v5922
      %v5961 = vpack.c.b16 %v5924, %v5923
      %v5962 = vpack.c.b16 %v5925, %v5925
      %v5963 = vpack.c.b16 %v5927, %v5926
      %v5964 = vpack.c.b16 %v5928, %v5928
      %v5965 = vpack.c.b16 %v5930, %v5929
      %v5966 = vpack.c.b16 %v5931, %v5931
      %v5967 = vpack.c.b16 %v5933, %v5932
      %v5968 = vpack.c.b16 %v5934, %v5934
      %v5969 = vpack.c.b16 %v5936, %v5935
      %v5970 = vpack.c.b16 %v5937, %v5937
      %v5971 = vpack.c.b16 %v5939, %v5938
      %v5972 = vpack.c.b16 %v5940, %v5940
      %v5974 = vshrl.u32 %v5941, 16
      %v5976 = vshll.u32 %v5941, 16
      %v5978 = vrot.slane %v5976, 1
      %v5979 = vor.u32 %v5974, %v5978
      %v5981 = vshll.u32 %v5942, 16
      %v5983 = vrot.slane %v5981, 1
      %v5984 = vsel %vm1207, %v5979, %v5983
      %v5986 = vshrl.u32 %v5943, 16
      %v5988 = vshll.u32 %v5943, 16
      %v5990 = vrot.slane %v5988, 1
      %v5991 = vor.u32 %v5986, %v5990
      %v5993 = vshll.u32 %v5944, 16
      %v5995 = vrot.slane %v5993, 1
      %v5996 = vsel %vm1207, %v5991, %v5995
      %v5998 = vshrl.u32 %v5945, 16
      %v6000 = vshll.u32 %v5945, 16
      %v6002 = vrot.slane %v6000, 1
      %v6003 = vor.u32 %v5998, %v6002
      %v6005 = vshll.u32 %v5946, 16
      %v6007 = vrot.slane %v6005, 1
      %v6008 = vsel %vm1207, %v6003, %v6007
      %v6010 = vshrl.u32 %v5947, 16
      %v6012 = vshll.u32 %v5947, 16
      %v6014 = vrot.slane %v6012, 1
      %v6015 = vor.u32 %v6010, %v6014
      %v6017 = vshll.u32 %v5948, 16
      %v6019 = vrot.slane %v6017, 1
      %v6020 = vsel %vm1207, %v6015, %v6019
      %v6022 = vshrl.u32 %v5949, 16
      %v6024 = vshll.u32 %v5949, 16
      %v6026 = vrot.slane %v6024, 1
      %v6027 = vor.u32 %v6022, %v6026
      %v6029 = vshll.u32 %v5950, 16
      %v6031 = vrot.slane %v6029, 1
      %v6032 = vsel %vm1207, %v6027, %v6031
      %v6034 = vshrl.u32 %v5951, 16
      %v6036 = vshll.u32 %v5951, 16
      %v6038 = vrot.slane %v6036, 1
      %v6039 = vor.u32 %v6034, %v6038
      %v6041 = vshll.u32 %v5952, 16
      %v6043 = vrot.slane %v6041, 1
      %v6044 = vsel %vm1207, %v6039, %v6043
      %v6046 = vshrl.u32 %v5953, 16
      %v6048 = vshll.u32 %v5953, 16
      %v6050 = vrot.slane %v6048, 1
      %v6051 = vor.u32 %v6046, %v6050
      %v6053 = vshll.u32 %v5954, 16
      %v6055 = vrot.slane %v6053, 1
      %v6056 = vsel %vm1207, %v6051, %v6055
      %v6058 = vshrl.u32 %v5955, 16
      %v6060 = vshll.u32 %v5955, 16
      %v6062 = vrot.slane %v6060, 1
      %v6063 = vor.u32 %v6058, %v6062
      %v6065 = vshll.u32 %v5956, 16
      %v6067 = vrot.slane %v6065, 1
      %v6068 = vsel %vm1207, %v6063, %v6067
      %v6070 = vshrl.u32 %v5957, 16
      %v6072 = vshll.u32 %v5957, 16
      %v6074 = vrot.slane %v6072, 1
      %v6075 = vor.u32 %v6070, %v6074
      %v6077 = vshll.u32 %v5958, 16
      %v6079 = vrot.slane %v6077, 1
      %v6080 = vsel %vm1207, %v6075, %v6079
      %v6082 = vshrl.u32 %v5959, 16
      %v6084 = vshll.u32 %v5959, 16
      %v6086 = vrot.slane %v6084, 1
      %v6087 = vor.u32 %v6082, %v6086
      %v6089 = vshll.u32 %v5960, 16
      %v6091 = vrot.slane %v6089, 1
      %v6092 = vsel %vm1207, %v6087, %v6091
      %v6094 = vshrl.u32 %v5961, 16
      %v6096 = vshll.u32 %v5961, 16
      %v6098 = vrot.slane %v6096, 1
      %v6099 = vor.u32 %v6094, %v6098
      %v6101 = vshll.u32 %v5962, 16
      %v6103 = vrot.slane %v6101, 1
      %v6104 = vsel %vm1207, %v6099, %v6103
      %v6106 = vshrl.u32 %v5963, 16
      %v6108 = vshll.u32 %v5963, 16
      %v6110 = vrot.slane %v6108, 1
      %v6111 = vor.u32 %v6106, %v6110
      %v6113 = vshll.u32 %v5964, 16
      %v6115 = vrot.slane %v6113, 1
      %v6116 = vsel %vm1207, %v6111, %v6115
      %v6118 = vshrl.u32 %v5965, 16
      %v6120 = vshll.u32 %v5965, 16
      %v6122 = vrot.slane %v6120, 1
      %v6123 = vor.u32 %v6118, %v6122
      %v6125 = vshll.u32 %v5966, 16
      %v6127 = vrot.slane %v6125, 1
      %v6128 = vsel %vm1207, %v6123, %v6127
      %v6130 = vshrl.u32 %v5967, 16
      %v6132 = vshll.u32 %v5967, 16
      %v6134 = vrot.slane %v6132, 1
      %v6135 = vor.u32 %v6130, %v6134
      %v6137 = vshll.u32 %v5968, 16
      %v6139 = vrot.slane %v6137, 1
      %v6140 = vsel %vm1207, %v6135, %v6139
      %v6142 = vshrl.u32 %v5969, 16
      %v6144 = vshll.u32 %v5969, 16
      %v6146 = vrot.slane %v6144, 1
      %v6147 = vor.u32 %v6142, %v6146
      %v6149 = vshll.u32 %v5970, 16
      %v6151 = vrot.slane %v6149, 1
      %v6152 = vsel %vm1207, %v6147, %v6151
      %v6154 = vshrl.u32 %v5971, 16
      %v6156 = vshll.u32 %v5971, 16
      %v6158 = vrot.slane %v6156, 1
      %v6159 = vor.u32 %v6154, %v6158
      %v6161 = vshll.u32 %v5972, 16
      %v6163 = vrot.slane %v6161, 1
      %v6164 = vsel %vm1207, %v6159, %v6163
      %6181 = vst [vmem:[#allocation4 + $0x8] sm:$0xff] %v5984
      %6182 = vst [vmem:[#allocation4 + $0x20] sm:$0xff] %v5996
      %6183 = vst [vmem:[#allocation4 + $0x38] sm:$0xff] %v6008
      %6184 = vst [vmem:[#allocation4 + $0x50] sm:$0xff] %v6020
      %6185 = vst [vmem:[#allocation4 + $0x68] sm:$0xff] %v6032
      %6186 = vst [vmem:[#allocation4 + $0x80] sm:$0xff] %v6044
      %6187 = vst [vmem:[#allocation4 + $0x98] sm:$0xff] %v6056
      %6188 = vst [vmem:[#allocation4 + $0xb0] sm:$0xff] %v6068
      %6189 = vst [vmem:[#allocation4 + $0xc8] sm:$0xff] %v6080
      %6190 = vst [vmem:[#allocation4 + $0xe0] sm:$0xff] %v6092
      %6191 = vst [vmem:[#allocation4 + $0xf8] sm:$0xff] %v6104
      %6192 = vst [vmem:[#allocation4 + $0x110] sm:$0xff] %v6116
      %6193 = vst [vmem:[#allocation4 + $0x128] sm:$0xff] %v6128
      %6194 = vst [vmem:[#allocation4 + $0x140] sm:$0xff] %v6140
      %6195 = vst [vmem:[#allocation4 + $0x158] sm:$0xff] %v6152
      %6196 = vst [vmem:[#allocation4 + $0x170] sm:$0xff] %v6164
      %v6197 = vld [vmem:[%s5652] sm:$0xe]
      %v6198 = vld [vmem:[%s5652 + $0x4] sm:$0xf]
      %v6199 = vld [vmem:[%s5652 + $0x8] sm:$0x1]
      %v6200 = vld [vmem:[%s5652 + $0xc] sm:$0xe]
      %v6201 = vld [vmem:[%s5652 + $0x10] sm:$0xf]
      %v6202 = vld [vmem:[%s5652 + $0x14] sm:$0x1]
      %v6203 = vld [vmem:[%s5652 + $0x18] sm:$0xe]
      %v6204 = vld [vmem:[%s5652 + $0x1c] sm:$0xf]
      %v6205 = vld [vmem:[%s5652 + $0x20] sm:$0x1]
      %v6206 = vld [vmem:[%s5652 + $0x24] sm:$0xe]
      %v6207 = vld [vmem:[%s5652 + $0x28] sm:$0xf]
      %v6208 = vld [vmem:[%s5652 + $0x2c] sm:$0x1]
      %v6209 = vld [vmem:[%s5652 + $0x30] sm:$0xe]
      %v6210 = vld [vmem:[%s5652 + $0x34] sm:$0xf]
      %v6211 = vld [vmem:[%s5652 + $0x38] sm:$0x1]
      %v6212 = vld [vmem:[%s5652 + $0x3c] sm:$0xe]
      %v6213 = vld [vmem:[%s5652 + $0x40] sm:$0xf]
      %v6214 = vld [vmem:[%s5652 + $0x44] sm:$0x1]
      %v6215 = vld [vmem:[%s5652 + $0x48] sm:$0xe]
      %v6216 = vld [vmem:[%s5652 + $0x4c] sm:$0xf]
      %v6217 = vld [vmem:[%s5652 + $0x50] sm:$0x1]
      %v6218 = vld [vmem:[%s5652 + $0x54] sm:$0xe]
      %v6219 = vld [vmem:[%s5652 + $0x58] sm:$0xf]
      %v6220 = vld [vmem:[%s5652 + $0x5c] sm:$0x1]
      %v6221 = vld [vmem:[%s5652 + $0x60] sm:$0xe]
      %v6222 = vld [vmem:[%s5652 + $0x64] sm:$0xf]
      %v6223 = vld [vmem:[%s5652 + $0x68] sm:$0x1]
      %v6224 = vld [vmem:[%s5652 + $0x6c] sm:$0xe]
      %v6225 = vld [vmem:[%s5652 + $0x70] sm:$0xf]
      %v6226 = vld [vmem:[%s5652 + $0x74] sm:$0x1]
      %v6227 = vld [vmem:[%s5652 + $0x78] sm:$0xe]
      %v6228 = vld [vmem:[%s5652 + $0x7c] sm:$0xf]
      %v6229 = vld [vmem:[%s5652 + $0x80] sm:$0x1]
      %v6230 = vld [vmem:[%s5652 + $0x84] sm:$0xe]
      %v6231 = vld [vmem:[%s5652 + $0x88] sm:$0xf]
      %v6232 = vld [vmem:[%s5652 + $0x8c] sm:$0x1]
      %v6233 = vld [vmem:[%s5652 + $0x90] sm:$0xe]
      %v6234 = vld [vmem:[%s5652 + $0x94] sm:$0xf]
      %v6235 = vld [vmem:[%s5652 + $0x98] sm:$0x1]
      %v6236 = vld [vmem:[%s5652 + $0x9c] sm:$0xe]
      %v6237 = vld [vmem:[%s5652 + $0xa0] sm:$0xf]
      %v6238 = vld [vmem:[%s5652 + $0xa4] sm:$0x1]
      %v6239 = vld [vmem:[%s5652 + $0xa8] sm:$0xe]
      %v6240 = vld [vmem:[%s5652 + $0xac] sm:$0xf]
      %v6241 = vld [vmem:[%s5652 + $0xb0] sm:$0x1]
      %v6242 = vld [vmem:[%s5652 + $0xb4] sm:$0xe]
      %v6243 = vld [vmem:[%s5652 + $0xb8] sm:$0xf]
      %v6244 = vld [vmem:[%s5652 + $0xbc] sm:$0x1]
      %v6293 = vunpack.c.l.b16 %v6197
      %v6294 = vunpack.c.l.b16 %v6198
      %v6295 = vunpack.c.l.b16 %v6199
      %v6296 = vunpack.c.l.b16 %v6200
      %v6297 = vunpack.c.l.b16 %v6201
      %v6298 = vunpack.c.l.b16 %v6202
      %v6299 = vunpack.c.l.b16 %v6203
      %v6300 = vunpack.c.l.b16 %v6204
      %v6301 = vunpack.c.l.b16 %v6205
      %v6302 = vunpack.c.l.b16 %v6206
      %v6303 = vunpack.c.l.b16 %v6207
      %v6304 = vunpack.c.l.b16 %v6208
      %v6305 = vunpack.c.l.b16 %v6209
      %v6306 = vunpack.c.l.b16 %v6210
      %v6307 = vunpack.c.l.b16 %v6211
      %v6308 = vunpack.c.l.b16 %v6212
      %v6309 = vunpack.c.l.b16 %v6213
      %v6310 = vunpack.c.l.b16 %v6214
      %v6311 = vunpack.c.l.b16 %v6215
      %v6312 = vunpack.c.l.b16 %v6216
      %v6313 = vunpack.c.l.b16 %v6217
      %v6314 = vunpack.c.l.b16 %v6218
      %v6315 = vunpack.c.l.b16 %v6219
      %v6316 = vunpack.c.l.b16 %v6220
      %v6317 = vunpack.c.l.b16 %v6221
      %v6318 = vunpack.c.l.b16 %v6222
      %v6319 = vunpack.c.l.b16 %v6223
      %v6320 = vunpack.c.l.b16 %v6224
      %v6321 = vunpack.c.l.b16 %v6225
      %v6322 = vunpack.c.l.b16 %v6226
      %v6323 = vunpack.c.l.b16 %v6227
      %v6324 = vunpack.c.l.b16 %v6228
      %v6325 = vunpack.c.l.b16 %v6229
      %v6326 = vunpack.c.l.b16 %v6230
      %v6327 = vunpack.c.l.b16 %v6231
      %v6328 = vunpack.c.l.b16 %v6232
      %v6329 = vunpack.c.l.b16 %v6233
      %v6330 = vunpack.c.l.b16 %v6234
      %v6331 = vunpack.c.l.b16 %v6235
      %v6332 = vunpack.c.l.b16 %v6236
      %v6333 = vunpack.c.l.b16 %v6237
      %v6334 = vunpack.c.l.b16 %v6238
      %v6335 = vunpack.c.l.b16 %v6239
      %v6336 = vunpack.c.l.b16 %v6240
      %v6337 = vunpack.c.l.b16 %v6241
      %v6338 = vunpack.c.l.b16 %v6242
      %v6339 = vunpack.c.l.b16 %v6243
      %v6340 = vunpack.c.l.b16 %v6244
      %v6341 = vpack.c.b16 %v6294, %v6293
      %v6342 = vpack.c.b16 %v6295, %v6295
      %v6343 = vpack.c.b16 %v6297, %v6296
      %v6344 = vpack.c.b16 %v6298, %v6298
      %v6345 = vpack.c.b16 %v6300, %v6299
      %v6346 = vpack.c.b16 %v6301, %v6301
      %v6347 = vpack.c.b16 %v6303, %v6302
      %v6348 = vpack.c.b16 %v6304, %v6304
      %v6349 = vpack.c.b16 %v6306, %v6305
      %v6350 = vpack.c.b16 %v6307, %v6307
      %v6351 = vpack.c.b16 %v6309, %v6308
      %v6352 = vpack.c.b16 %v6310, %v6310
      %v6353 = vpack.c.b16 %v6312, %v6311
      %v6354 = vpack.c.b16 %v6313, %v6313
      %v6355 = vpack.c.b16 %v6315, %v6314
      %v6356 = vpack.c.b16 %v6316, %v6316
      %v6357 = vpack.c.b16 %v6318, %v6317
      %v6358 = vpack.c.b16 %v6319, %v6319
      %v6359 = vpack.c.b16 %v6321, %v6320
      %v6360 = vpack.c.b16 %v6322, %v6322
      %v6361 = vpack.c.b16 %v6324, %v6323
      %v6362 = vpack.c.b16 %v6325, %v6325
      %v6363 = vpack.c.b16 %v6327, %v6326
      %v6364 = vpack.c.b16 %v6328, %v6328
      %v6365 = vpack.c.b16 %v6330, %v6329
      %v6366 = vpack.c.b16 %v6331, %v6331
      %v6367 = vpack.c.b16 %v6333, %v6332
      %v6368 = vpack.c.b16 %v6334, %v6334
      %v6369 = vpack.c.b16 %v6336, %v6335
      %v6370 = vpack.c.b16 %v6337, %v6337
      %v6371 = vpack.c.b16 %v6339, %v6338
      %v6372 = vpack.c.b16 %v6340, %v6340
      %v6373 = vrot.slane %v6341, 1
      %v6374 = vrot.slane %v6342, 1
      %v6375 = vsel %vm1608, %v6373, %v6374
      %v6376 = vrot.slane %v6343, 1
      %v6377 = vrot.slane %v6344, 1
      %v6378 = vsel %vm1608, %v6376, %v6377
      %v6379 = vrot.slane %v6345, 1
      %v6380 = vrot.slane %v6346, 1
      %v6381 = vsel %vm1608, %v6379, %v6380
      %v6382 = vrot.slane %v6347, 1
      %v6383 = vrot.slane %v6348, 1
      %v6384 = vsel %vm1608, %v6382, %v6383
      %v6385 = vrot.slane %v6349, 1
      %v6386 = vrot.slane %v6350, 1
      %v6387 = vsel %vm1608, %v6385, %v6386
      %v6388 = vrot.slane %v6351, 1
      %v6389 = vrot.slane %v6352, 1
      %v6390 = vsel %vm1608, %v6388, %v6389
      %v6391 = vrot.slane %v6353, 1
      %v6392 = vrot.slane %v6354, 1
      %v6393 = vsel %vm1608, %v6391, %v6392
      %v6394 = vrot.slane %v6355, 1
      %v6395 = vrot.slane %v6356, 1
      %v6396 = vsel %vm1608, %v6394, %v6395
      %v6397 = vrot.slane %v6357, 1
      %v6398 = vrot.slane %v6358, 1
      %v6399 = vsel %vm1608, %v6397, %v6398
      %v6400 = vrot.slane %v6359, 1
      %v6401 = vrot.slane %v6360, 1
      %v6402 = vsel %vm1608, %v6400, %v6401
      %v6403 = vrot.slane %v6361, 1
      %v6404 = vrot.slane %v6362, 1
      %v6405 = vsel %vm1608, %v6403, %v6404
      %v6406 = vrot.slane %v6363, 1
      %v6407 = vrot.slane %v6364, 1
      %v6408 = vsel %vm1608, %v6406, %v6407
      %v6409 = vrot.slane %v6365, 1
      %v6410 = vrot.slane %v6366, 1
      %v6411 = vsel %vm1608, %v6409, %v6410
      %v6412 = vrot.slane %v6367, 1
      %v6413 = vrot.slane %v6368, 1
      %v6414 = vsel %vm1608, %v6412, %v6413
      %v6415 = vrot.slane %v6369, 1
      %v6416 = vrot.slane %v6370, 1
      %v6417 = vsel %vm1608, %v6415, %v6416
      %v6418 = vrot.slane %v6371, 1
      %v6419 = vrot.slane %v6372, 1
      %v6420 = vsel %vm1608, %v6418, %v6419
      %6437 = vst [vmem:[#allocation4 + $0x10] sm:$0xff] %v6375
      %6438 = vst [vmem:[#allocation4 + $0x28] sm:$0xff] %v6378
      %6439 = vst [vmem:[#allocation4 + $0x40] sm:$0xff] %v6381
      %6440 = vst [vmem:[#allocation4 + $0x58] sm:$0xff] %v6384
      %6441 = vst [vmem:[#allocation4 + $0x70] sm:$0xff] %v6387
      %6442 = vst [vmem:[#allocation4 + $0x88] sm:$0xff] %v6390
      %6443 = vst [vmem:[#allocation4 + $0xa0] sm:$0xff] %v6393
      %6444 = vst [vmem:[#allocation4 + $0xb8] sm:$0xff] %v6396
      %6445 = vst [vmem:[#allocation4 + $0xd0] sm:$0xff] %v6399
      %6446 = vst [vmem:[#allocation4 + $0xe8] sm:$0xff] %v6402
      %6447 = vst [vmem:[#allocation4 + $0x100] sm:$0xff] %v6405
      %6448 = vst [vmem:[#allocation4 + $0x118] sm:$0xff] %v6408
      %6449 = vst [vmem:[#allocation4 + $0x130] sm:$0xff] %v6411
      %6450 = vst [vmem:[#allocation4 + $0x148] sm:$0xff] %v6414
      %6451 = vst [vmem:[#allocation4 + $0x160] sm:$0xff] %v6417
      %6452 = vst [vmem:[#allocation4 + $0x178] sm:$0xff] %v6420
      %v6453 = vld [vmem:[#allocation4] sm:$0xff]
      %v6454 = vld [vmem:[#allocation4 + $0x8] sm:$0xff]
      %v6455 = vld [vmem:[#allocation4 + $0x10] sm:$0xff]
      %v6456 = vld [vmem:[#allocation4 + $0x18] sm:$0xff]
      %v6457 = vld [vmem:[#allocation4 + $0x20] sm:$0xff]
      %v6458 = vld [vmem:[#allocation4 + $0x28] sm:$0xff]
      %v6459 = vld [vmem:[#allocation4 + $0x30] sm:$0xff]
      %v6460 = vld [vmem:[#allocation4 + $0x38] sm:$0xff]
      %v6461 = vld [vmem:[#allocation4 + $0x40] sm:$0xff]
      %v6462 = vld [vmem:[#allocation4 + $0x48] sm:$0xff]
      %v6463 = vld [vmem:[#allocation4 + $0x50] sm:$0xff]
      %v6464 = vld [vmem:[#allocation4 + $0x58] sm:$0xff]
      %v6465 = vld [vmem:[#allocation4 + $0x60] sm:$0xff]
      %v6466 = vld [vmem:[#allocation4 + $0x68] sm:$0xff]
      %v6467 = vld [vmem:[#allocation4 + $0x70] sm:$0xff]
      %v6468 = vld [vmem:[#allocation4 + $0x78] sm:$0xff]
      %v6469 = vld [vmem:[#allocation4 + $0x80] sm:$0xff]
      %v6470 = vld [vmem:[#allocation4 + $0x88] sm:$0xff]
      %v6471 = vld [vmem:[#allocation4 + $0x90] sm:$0xff]
      %v6472 = vld [vmem:[#allocation4 + $0x98] sm:$0xff]
      %v6473 = vld [vmem:[#allocation4 + $0xa0] sm:$0xff]
      %v6474 = vld [vmem:[#allocation4 + $0xa8] sm:$0xff]
      %v6475 = vld [vmem:[#allocation4 + $0xb0] sm:$0xff]
      %v6476 = vld [vmem:[#allocation4 + $0xb8] sm:$0xff]
      %v6477 = vld [vmem:[#allocation4 + $0xc0] sm:$0xff]
      %v6478 = vld [vmem:[#allocation4 + $0xc8] sm:$0xff]
      %v6479 = vld [vmem:[#allocation4 + $0xd0] sm:$0xff]
      %v6480 = vld [vmem:[#allocation4 + $0xd8] sm:$0xff]
      %v6481 = vld [vmem:[#allocation4 + $0xe0] sm:$0xff]
      %v6482 = vld [vmem:[#allocation4 + $0xe8] sm:$0xff]
      %v6483 = vld [vmem:[#allocation4 + $0xf0] sm:$0xff]
      %v6484 = vld [vmem:[#allocation4 + $0xf8] sm:$0xff]
      %v6485 = vld [vmem:[#allocation4 + $0x100] sm:$0xff]
      %v6486 = vld [vmem:[#allocation4 + $0x108] sm:$0xff]
      %v6487 = vld [vmem:[#allocation4 + $0x110] sm:$0xff]
      %v6488 = vld [vmem:[#allocation4 + $0x118] sm:$0xff]
      %v6489 = vld [vmem:[#allocation4 + $0x120] sm:$0xff]
      %v6490 = vld [vmem:[#allocation4 + $0x128] sm:$0xff]
      %v6491 = vld [vmem:[#allocation4 + $0x130] sm:$0xff]
      %v6492 = vld [vmem:[#allocation4 + $0x138] sm:$0xff]
      %v6493 = vld [vmem:[#allocation4 + $0x140] sm:$0xff]
      %v6494 = vld [vmem:[#allocation4 + $0x148] sm:$0xff]
      %v6495 = vld [vmem:[#allocation4 + $0x150] sm:$0xff]
      %v6496 = vld [vmem:[#allocation4 + $0x158] sm:$0xff]
      %v6497 = vld [vmem:[#allocation4 + $0x160] sm:$0xff]
      %v6498 = vld [vmem:[#allocation4 + $0x168] sm:$0xff]
      %v6499 = vld [vmem:[#allocation4 + $0x170] sm:$0xff]
      %v6500 = vld [vmem:[#allocation4 + $0x178] sm:$0xff]
      %v6501 = vld [vmem:[%s2] sm:$0xf]
      %v6502 = vld [vmem:[%s2 + $0x4] sm:$0xf]
      %v6503 = vld [vmem:[%s2 + $0x8] sm:$0xf]
      %v6504 = vld [vmem:[%s2 + $0xc] sm:$0xf]
      %v6505 = vld [vmem:[%s2 + $0x10] sm:$0xf]
      %v6506 = vld [vmem:[%s2 + $0x14] sm:$0xf]
      %v6507 = vld [vmem:[%s2 + $0x18] sm:$0xf]
      %v6508 = vld [vmem:[%s2 + $0x1c] sm:$0xf]
      %v6509 = vld [vmem:[%s2 + $0x20] sm:$0xf]
      %v6510 = vld [vmem:[%s2 + $0x24] sm:$0xf]
      %v6511 = vld [vmem:[%s2 + $0x28] sm:$0xf]
      %v6512 = vld [vmem:[%s2 + $0x2c] sm:$0xf]
      %v6513 = vld [vmem:[%s2 + $0x30] sm:$0xf]
      %v6514 = vld [vmem:[%s2 + $0x34] sm:$0xf]
      %v6515 = vld [vmem:[%s2 + $0x38] sm:$0xf]
      %v6516 = vld [vmem:[%s2 + $0x3c] sm:$0xf]
      %v6517 = vld [vmem:[%s2 + $0x40] sm:$0xf]
      %v6518 = vld [vmem:[%s2 + $0x44] sm:$0xf]
      %v6519 = vld [vmem:[%s2 + $0x48] sm:$0xf]
      %v6520 = vld [vmem:[%s2 + $0x4c] sm:$0xf]
      %v6521 = vld [vmem:[%s2 + $0x50] sm:$0xf]
      %v6522 = vld [vmem:[%s2 + $0x54] sm:$0xf]
      %v6523 = vld [vmem:[%s2 + $0x58] sm:$0xf]
      %v6524 = vld [vmem:[%s2 + $0x5c] sm:$0xf]
      %v6525 = vld [vmem:[%s2 + $0x60] sm:$0xf]
      %v6526 = vld [vmem:[%s2 + $0x64] sm:$0xf]
      %v6527 = vld [vmem:[%s2 + $0x68] sm:$0xf]
      %v6528 = vld [vmem:[%s2 + $0x6c] sm:$0xf]
      %v6529 = vld [vmem:[%s2 + $0x70] sm:$0xf]
      %v6530 = vld [vmem:[%s2 + $0x74] sm:$0xf]
      %v6531 = vld [vmem:[%s2 + $0x78] sm:$0xf]
      %v6532 = vld [vmem:[%s2 + $0x7c] sm:$0xf]
      %v6533 = vld [vmem:[%s2 + $0x80] sm:$0xf]
      %v6534 = vld [vmem:[%s2 + $0x84] sm:$0xf]
      %v6535 = vld [vmem:[%s2 + $0x88] sm:$0xf]
      %v6536 = vld [vmem:[%s2 + $0x8c] sm:$0xf]
      %v6537 = vld [vmem:[%s2 + $0x90] sm:$0xf]
      %v6538 = vld [vmem:[%s2 + $0x94] sm:$0xf]
      %v6539 = vld [vmem:[%s2 + $0x98] sm:$0xf]
      %v6540 = vld [vmem:[%s2 + $0x9c] sm:$0xf]
      %v6541 = vld [vmem:[%s2 + $0xa0] sm:$0xf]
      %v6542 = vld [vmem:[%s2 + $0xa4] sm:$0xf]
      %v6543 = vld [vmem:[%s2 + $0xa8] sm:$0xf]
      %v6544 = vld [vmem:[%s2 + $0xac] sm:$0xf]
      %v6545 = vld [vmem:[%s2 + $0xb0] sm:$0xf]
      %v6546 = vld [vmem:[%s2 + $0xb4] sm:$0xf]
      %v6547 = vld [vmem:[%s2 + $0xb8] sm:$0xf]
      %v6548 = vld [vmem:[%s2 + $0xbc] sm:$0xf]
      %v6549 = vld [vmem:[%s5538] sm:$0xf]
      %v6550 = vld [vmem:[%s5538 + $0x4] sm:$0xf]
      %v6551 = vld [vmem:[%s5538 + $0xc] sm:$0xf]
      %v6552 = vld [vmem:[%s5538 + $0x10] sm:$0xf]
      %v6553 = vld [vmem:[%s5538 + $0x18] sm:$0xf]
      %v6554 = vld [vmem:[%s5538 + $0x1c] sm:$0xf]
      %v6555 = vld [vmem:[%s5538 + $0x24] sm:$0xf]
      %v6556 = vld [vmem:[%s5538 + $0x28] sm:$0xf]
      %v6557 = vld [vmem:[%s5538 + $0x30] sm:$0xf]
      %v6558 = vld [vmem:[%s5538 + $0x34] sm:$0xf]
      %v6559 = vld [vmem:[%s5538 + $0x3c] sm:$0xf]
      %v6560 = vld [vmem:[%s5538 + $0x40] sm:$0xf]
      %v6561 = vld [vmem:[%s5538 + $0x48] sm:$0xf]
      %v6562 = vld [vmem:[%s5538 + $0x4c] sm:$0xf]
      %v6563 = vld [vmem:[%s5538 + $0x54] sm:$0xf]
      %v6564 = vld [vmem:[%s5538 + $0x58] sm:$0xf]
      %v6565 = vld [vmem:[%s5538 + $0x60] sm:$0xf]
      %v6566 = vld [vmem:[%s5538 + $0x64] sm:$0xf]
      %v6567 = vld [vmem:[%s5538 + $0x6c] sm:$0xf]
      %v6568 = vld [vmem:[%s5538 + $0x70] sm:$0xf]
      %v6569 = vld [vmem:[%s5538 + $0x78] sm:$0xf]
      %v6570 = vld [vmem:[%s5538 + $0x7c] sm:$0xf]
      %v6571 = vld [vmem:[%s5538 + $0x84] sm:$0xf]
      %v6572 = vld [vmem:[%s5538 + $0x88] sm:$0xf]
      %v6573 = vld [vmem:[%s5538 + $0x90] sm:$0xf]
      %v6574 = vld [vmem:[%s5538 + $0x94] sm:$0xf]
      %v6575 = vld [vmem:[%s5538 + $0x9c] sm:$0xf]
      %v6576 = vld [vmem:[%s5538 + $0xa0] sm:$0xf]
      %v6577 = vld [vmem:[%s5538 + $0xa8] sm:$0xf]
      %v6578 = vld [vmem:[%s5538 + $0xac] sm:$0xf]
      %v6579 = vld [vmem:[%s5538 + $0xb4] sm:$0xf]
      %v6580 = vld [vmem:[%s5538 + $0xb8] sm:$0xf]
      %v6613 = vunpack.c.l.b16 %v6549
      %v6614 = vunpack.c.l.b16 %v6550
      %v6615 = vunpack.c.l.b16 %v6551
      %v6616 = vunpack.c.l.b16 %v6552
      %v6617 = vunpack.c.l.b16 %v6553
      %v6618 = vunpack.c.l.b16 %v6554
      %v6619 = vunpack.c.l.b16 %v6555
      %v6620 = vunpack.c.l.b16 %v6556
      %v6621 = vunpack.c.l.b16 %v6557
      %v6622 = vunpack.c.l.b16 %v6558
      %v6623 = vunpack.c.l.b16 %v6559
      %v6624 = vunpack.c.l.b16 %v6560
      %v6625 = vunpack.c.l.b16 %v6561
      %v6626 = vunpack.c.l.b16 %v6562
      %v6627 = vunpack.c.l.b16 %v6563
      %v6628 = vunpack.c.l.b16 %v6564
      %v6629 = vunpack.c.l.b16 %v6565
      %v6630 = vunpack.c.l.b16 %v6566
      %v6631 = vunpack.c.l.b16 %v6567
      %v6632 = vunpack.c.l.b16 %v6568
      %v6633 = vunpack.c.l.b16 %v6569
      %v6634 = vunpack.c.l.b16 %v6570
      %v6635 = vunpack.c.l.b16 %v6571
      %v6636 = vunpack.c.l.b16 %v6572
      %v6637 = vunpack.c.l.b16 %v6573
      %v6638 = vunpack.c.l.b16 %v6574
      %v6639 = vunpack.c.l.b16 %v6575
      %v6640 = vunpack.c.l.b16 %v6576
      %v6641 = vunpack.c.l.b16 %v6577
      %v6642 = vunpack.c.l.b16 %v6578
      %v6643 = vunpack.c.l.b16 %v6579
      %v6644 = vunpack.c.l.b16 %v6580
      %v6645 = vpack.c.b16 %v6614, %v6613
      %v6646 = vpack.c.b16 %v6616, %v6615
      %v6647 = vpack.c.b16 %v6618, %v6617
      %v6648 = vpack.c.b16 %v6620, %v6619
      %v6649 = vpack.c.b16 %v6622, %v6621
      %v6650 = vpack.c.b16 %v6624, %v6623
      %v6651 = vpack.c.b16 %v6626, %v6625
      %v6652 = vpack.c.b16 %v6628, %v6627
      %v6653 = vpack.c.b16 %v6630, %v6629
      %v6654 = vpack.c.b16 %v6632, %v6631
      %v6655 = vpack.c.b16 %v6634, %v6633
      %v6656 = vpack.c.b16 %v6636, %v6635
      %v6657 = vpack.c.b16 %v6638, %v6637
      %v6658 = vpack.c.b16 %v6640, %v6639
      %v6659 = vpack.c.b16 %v6642, %v6641
      %v6660 = vpack.c.b16 %v6644, %v6643
      %6677 = vst [vmem:[#allocation4] sm:$0xff] %v6645
      %6678 = vst [vmem:[#allocation4 + $0x18] sm:$0xff] %v6646
      %6679 = vst [vmem:[#allocation4 + $0x30] sm:$0xff] %v6647
      %6680 = vst [vmem:[#allocation4 + $0x48] sm:$0xff] %v6648
      %6681 = vst [vmem:[#allocation4 + $0x60] sm:$0xff] %v6649
      %6682 = vst [vmem:[#allocation4 + $0x78] sm:$0xff] %v6650
      %6683 = vst [vmem:[#allocation4 + $0x90] sm:$0xff] %v6651
      %6684 = vst [vmem:[#allocation4 + $0xa8] sm:$0xff] %v6652
      %6685 = vst [vmem:[#allocation4 + $0xc0] sm:$0xff] %v6653
      %6686 = vst [vmem:[#allocation4 + $0xd8] sm:$0xff] %v6654
      %6687 = vst [vmem:[#allocation4 + $0xf0] sm:$0xff] %v6655
      %6688 = vst [vmem:[#allocation4 + $0x108] sm:$0xff] %v6656
      %6689 = vst [vmem:[#allocation4 + $0x120] sm:$0xff] %v6657
      %6690 = vst [vmem:[#allocation4 + $0x138] sm:$0xff] %v6658
      %6691 = vst [vmem:[#allocation4 + $0x150] sm:$0xff] %v6659
      %6692 = vst [vmem:[#allocation4 + $0x168] sm:$0xff] %v6660
      %v6693 = vld [vmem:[%s5538] sm:$0xf]
      %v6694 = vld [vmem:[%s5538 + $0x4] sm:$0xf]
      %v6695 = vld [vmem:[%s5538 + $0x8] sm:$0x1]
      %v6696 = vld [vmem:[%s5538 + $0xc] sm:$0xf]
      %v6697 = vld [vmem:[%s5538 + $0x10] sm:$0xf]
      %v6698 = vld [vmem:[%s5538 + $0x14] sm:$0x1]
      %v6699 = vld [vmem:[%s5538 + $0x18] sm:$0xf]
      %v6700 = vld [vmem:[%s5538 + $0x1c] sm:$0xf]
      %v6701 = vld [vmem:[%s5538 + $0x20] sm:$0x1]
      %v6702 = vld [vmem:[%s5538 + $0x24] sm:$0xf]
      %v6703 = vld [vmem:[%s5538 + $0x28] sm:$0xf]
      %v6704 = vld [vmem:[%s5538 + $0x2c] sm:$0x1]
      %v6705 = vld [vmem:[%s5538 + $0x30] sm:$0xf]
      %v6706 = vld [vmem:[%s5538 + $0x34] sm:$0xf]
      %v6707 = vld [vmem:[%s5538 + $0x38] sm:$0x1]
      %v6708 = vld [vmem:[%s5538 + $0x3c] sm:$0xf]
      %v6709 = vld [vmem:[%s5538 + $0x40] sm:$0xf]
      %v6710 = vld [vmem:[%s5538 + $0x44] sm:$0x1]
      %v6711 = vld [vmem:[%s5538 + $0x48] sm:$0xf]
      %v6712 = vld [vmem:[%s5538 + $0x4c] sm:$0xf]
      %v6713 = vld [vmem:[%s5538 + $0x50] sm:$0x1]
      %v6714 = vld [vmem:[%s5538 + $0x54] sm:$0xf]
      %v6715 = vld [vmem:[%s5538 + $0x58] sm:$0xf]
      %v6716 = vld [vmem:[%s5538 + $0x5c] sm:$0x1]
      %v6717 = vld [vmem:[%s5538 + $0x60] sm:$0xf]
      %v6718 = vld [vmem:[%s5538 + $0x64] sm:$0xf]
      %v6719 = vld [vmem:[%s5538 + $0x68] sm:$0x1]
      %v6720 = vld [vmem:[%s5538 + $0x6c] sm:$0xf]
      %v6721 = vld [vmem:[%s5538 + $0x70] sm:$0xf]
      %v6722 = vld [vmem:[%s5538 + $0x74] sm:$0x1]
      %v6723 = vld [vmem:[%s5538 + $0x78] sm:$0xf]
      %v6724 = vld [vmem:[%s5538 + $0x7c] sm:$0xf]
      %v6725 = vld [vmem:[%s5538 + $0x80] sm:$0x1]
      %v6726 = vld [vmem:[%s5538 + $0x84] sm:$0xf]
      %v6727 = vld [vmem:[%s5538 + $0x88] sm:$0xf]
      %v6728 = vld [vmem:[%s5538 + $0x8c] sm:$0x1]
      %v6729 = vld [vmem:[%s5538 + $0x90] sm:$0xf]
      %v6730 = vld [vmem:[%s5538 + $0x94] sm:$0xf]
      %v6731 = vld [vmem:[%s5538 + $0x98] sm:$0x1]
      %v6732 = vld [vmem:[%s5538 + $0x9c] sm:$0xf]
      %v6733 = vld [vmem:[%s5538 + $0xa0] sm:$0xf]
      %v6734 = vld [vmem:[%s5538 + $0xa4] sm:$0x1]
      %v6735 = vld [vmem:[%s5538 + $0xa8] sm:$0xf]
      %v6736 = vld [vmem:[%s5538 + $0xac] sm:$0xf]
      %v6737 = vld [vmem:[%s5538 + $0xb0] sm:$0x1]
      %v6738 = vld [vmem:[%s5538 + $0xb4] sm:$0xf]
      %v6739 = vld [vmem:[%s5538 + $0xb8] sm:$0xf]
      %v6740 = vld [vmem:[%s5538 + $0xbc] sm:$0x1]
      %v6789 = vunpack.c.l.b16 %v6693
      %v6790 = vunpack.c.l.b16 %v6694
      %v6791 = vunpack.c.l.b16 %v6695
      %v6792 = vunpack.c.l.b16 %v6696
      %v6793 = vunpack.c.l.b16 %v6697
      %v6794 = vunpack.c.l.b16 %v6698
      %v6795 = vunpack.c.l.b16 %v6699
      %v6796 = vunpack.c.l.b16 %v6700
      %v6797 = vunpack.c.l.b16 %v6701
      %v6798 = vunpack.c.l.b16 %v6702
      %v6799 = vunpack.c.l.b16 %v6703
      %v6800 = vunpack.c.l.b16 %v6704
      %v6801 = vunpack.c.l.b16 %v6705
      %v6802 = vunpack.c.l.b16 %v6706
      %v6803 = vunpack.c.l.b16 %v6707
      %v6804 = vunpack.c.l.b16 %v6708
      %v6805 = vunpack.c.l.b16 %v6709
      %v6806 = vunpack.c.l.b16 %v6710
      %v6807 = vunpack.c.l.b16 %v6711
      %v6808 = vunpack.c.l.b16 %v6712
      %v6809 = vunpack.c.l.b16 %v6713
      %v6810 = vunpack.c.l.b16 %v6714
      %v6811 = vunpack.c.l.b16 %v6715
      %v6812 = vunpack.c.l.b16 %v6716
      %v6813 = vunpack.c.l.b16 %v6717
      %v6814 = vunpack.c.l.b16 %v6718
      %v6815 = vunpack.c.l.b16 %v6719
      %v6816 = vunpack.c.l.b16 %v6720
      %v6817 = vunpack.c.l.b16 %v6721
      %v6818 = vunpack.c.l.b16 %v6722
      %v6819 = vunpack.c.l.b16 %v6723
      %v6820 = vunpack.c.l.b16 %v6724
      %v6821 = vunpack.c.l.b16 %v6725
      %v6822 = vunpack.c.l.b16 %v6726
      %v6823 = vunpack.c.l.b16 %v6727
      %v6824 = vunpack.c.l.b16 %v6728
      %v6825 = vunpack.c.l.b16 %v6729
      %v6826 = vunpack.c.l.b16 %v6730
      %v6827 = vunpack.c.l.b16 %v6731
      %v6828 = vunpack.c.l.b16 %v6732
      %v6829 = vunpack.c.l.b16 %v6733
      %v6830 = vunpack.c.l.b16 %v6734
      %v6831 = vunpack.c.l.b16 %v6735
      %v6832 = vunpack.c.l.b16 %v6736
      %v6833 = vunpack.c.l.b16 %v6737
      %v6834 = vunpack.c.l.b16 %v6738
      %v6835 = vunpack.c.l.b16 %v6739
      %v6836 = vunpack.c.l.b16 %v6740
      %v6837 = vpack.c.b16 %v6790, %v6789
      %v6838 = vpack.c.b16 %v6791, %v6791
      %v6839 = vpack.c.b16 %v6793, %v6792
      %v6840 = vpack.c.b16 %v6794, %v6794
      %v6841 = vpack.c.b16 %v6796, %v6795
      %v6842 = vpack.c.b16 %v6797, %v6797
      %v6843 = vpack.c.b16 %v6799, %v6798
      %v6844 = vpack.c.b16 %v6800, %v6800
      %v6845 = vpack.c.b16 %v6802, %v6801
      %v6846 = vpack.c.b16 %v6803, %v6803
      %v6847 = vpack.c.b16 %v6805, %v6804
      %v6848 = vpack.c.b16 %v6806, %v6806
      %v6849 = vpack.c.b16 %v6808, %v6807
      %v6850 = vpack.c.b16 %v6809, %v6809
      %v6851 = vpack.c.b16 %v6811, %v6810
      %v6852 = vpack.c.b16 %v6812, %v6812
      %v6853 = vpack.c.b16 %v6814, %v6813
      %v6854 = vpack.c.b16 %v6815, %v6815
      %v6855 = vpack.c.b16 %v6817, %v6816
      %v6856 = vpack.c.b16 %v6818, %v6818
      %v6857 = vpack.c.b16 %v6820, %v6819
      %v6858 = vpack.c.b16 %v6821, %v6821
      %v6859 = vpack.c.b16 %v6823, %v6822
      %v6860 = vpack.c.b16 %v6824, %v6824
      %v6861 = vpack.c.b16 %v6826, %v6825
      %v6862 = vpack.c.b16 %v6827, %v6827
      %v6863 = vpack.c.b16 %v6829, %v6828
      %v6864 = vpack.c.b16 %v6830, %v6830
      %v6865 = vpack.c.b16 %v6832, %v6831
      %v6866 = vpack.c.b16 %v6833, %v6833
      %v6867 = vpack.c.b16 %v6835, %v6834
      %v6868 = vpack.c.b16 %v6836, %v6836
      %v6870 = vshrl.u32 %v6837, 16
      %v6872 = vshll.u32 %v6837, 16
      %v6874 = vrot.slane %v6872, 1
      %v6875 = vor.u32 %v6870, %v6874
      %v6877 = vshll.u32 %v6838, 16
      %v6879 = vrot.slane %v6877, 1
      %v6880 = vsel %vm1207, %v6875, %v6879
      %v6882 = vshrl.u32 %v6839, 16
      %v6884 = vshll.u32 %v6839, 16
      %v6886 = vrot.slane %v6884, 1
      %v6887 = vor.u32 %v6882, %v6886
      %v6889 = vshll.u32 %v6840, 16
      %v6891 = vrot.slane %v6889, 1
      %v6892 = vsel %vm1207, %v6887, %v6891
      %v6894 = vshrl.u32 %v6841, 16
      %v6896 = vshll.u32 %v6841, 16
      %v6898 = vrot.slane %v6896, 1
      %v6899 = vor.u32 %v6894, %v6898
      %v6901 = vshll.u32 %v6842, 16
      %v6903 = vrot.slane %v6901, 1
      %v6904 = vsel %vm1207, %v6899, %v6903
      %v6906 = vshrl.u32 %v6843, 16
      %v6908 = vshll.u32 %v6843, 16
      %v6910 = vrot.slane %v6908, 1
      %v6911 = vor.u32 %v6906, %v6910
      %v6913 = vshll.u32 %v6844, 16
      %v6915 = vrot.slane %v6913, 1
      %v6916 = vsel %vm1207, %v6911, %v6915
      %v6918 = vshrl.u32 %v6845, 16
      %v6920 = vshll.u32 %v6845, 16
      %v6922 = vrot.slane %v6920, 1
      %v6923 = vor.u32 %v6918, %v6922
      %v6925 = vshll.u32 %v6846, 16
      %v6927 = vrot.slane %v6925, 1
      %v6928 = vsel %vm1207, %v6923, %v6927
      %v6930 = vshrl.u32 %v6847, 16
      %v6932 = vshll.u32 %v6847, 16
      %v6934 = vrot.slane %v6932, 1
      %v6935 = vor.u32 %v6930, %v6934
      %v6937 = vshll.u32 %v6848, 16
      %v6939 = vrot.slane %v6937, 1
      %v6940 = vsel %vm1207, %v6935, %v6939
      %v6942 = vshrl.u32 %v6849, 16
      %v6944 = vshll.u32 %v6849, 16
      %v6946 = vrot.slane %v6944, 1
      %v6947 = vor.u32 %v6942, %v6946
      %v6949 = vshll.u32 %v6850, 16
      %v6951 = vrot.slane %v6949, 1
      %v6952 = vsel %vm1207, %v6947, %v6951
      %v6954 = vshrl.u32 %v6851, 16
      %v6956 = vshll.u32 %v6851, 16
      %v6958 = vrot.slane %v6956, 1
      %v6959 = vor.u32 %v6954, %v6958
      %v6961 = vshll.u32 %v6852, 16
      %v6963 = vrot.slane %v6961, 1
      %v6964 = vsel %vm1207, %v6959, %v6963
      %v6966 = vshrl.u32 %v6853, 16
      %v6968 = vshll.u32 %v6853, 16
      %v6970 = vrot.slane %v6968, 1
      %v6971 = vor.u32 %v6966, %v6970
      %v6973 = vshll.u32 %v6854, 16
      %v6975 = vrot.slane %v6973, 1
      %v6976 = vsel %vm1207, %v6971, %v6975
      %v6978 = vshrl.u32 %v6855, 16
      %v6980 = vshll.u32 %v6855, 16
      %v6982 = vrot.slane %v6980, 1
      %v6983 = vor.u32 %v6978, %v6982
      %v6985 = vshll.u32 %v6856, 16
      %v6987 = vrot.slane %v6985, 1
      %v6988 = vsel %vm1207, %v6983, %v6987
      %v6990 = vshrl.u32 %v6857, 16
      %v6992 = vshll.u32 %v6857, 16
      %v6994 = vrot.slane %v6992, 1
      %v6995 = vor.u32 %v6990, %v6994
      %v6997 = vshll.u32 %v6858, 16
      %v6999 = vrot.slane %v6997, 1
      %v7000 = vsel %vm1207, %v6995, %v6999
      %v7002 = vshrl.u32 %v6859, 16
      %v7004 = vshll.u32 %v6859, 16
      %v7006 = vrot.slane %v7004, 1
      %v7007 = vor.u32 %v7002, %v7006
      %v7009 = vshll.u32 %v6860, 16
      %v7011 = vrot.slane %v7009, 1
      %v7012 = vsel %vm1207, %v7007, %v7011
      %v7014 = vshrl.u32 %v6861, 16
      %v7016 = vshll.u32 %v6861, 16
      %v7018 = vrot.slane %v7016, 1
      %v7019 = vor.u32 %v7014, %v7018
      %v7021 = vshll.u32 %v6862, 16
      %v7023 = vrot.slane %v7021, 1
      %v7024 = vsel %vm1207, %v7019, %v7023
      %v7026 = vshrl.u32 %v6863, 16
      %v7028 = vshll.u32 %v6863, 16
      %v7030 = vrot.slane %v7028, 1
      %v7031 = vor.u32 %v7026, %v7030
      %v7033 = vshll.u32 %v6864, 16
      %v7035 = vrot.slane %v7033, 1
      %v7036 = vsel %vm1207, %v7031, %v7035
      %v7038 = vshrl.u32 %v6865, 16
      %v7040 = vshll.u32 %v6865, 16
      %v7042 = vrot.slane %v7040, 1
      %v7043 = vor.u32 %v7038, %v7042
      %v7045 = vshll.u32 %v6866, 16
      %v7047 = vrot.slane %v7045, 1
      %v7048 = vsel %vm1207, %v7043, %v7047
      %v7050 = vshrl.u32 %v6867, 16
      %v7052 = vshll.u32 %v6867, 16
      %v7054 = vrot.slane %v7052, 1
      %v7055 = vor.u32 %v7050, %v7054
      %v7057 = vshll.u32 %v6868, 16
      %v7059 = vrot.slane %v7057, 1
      %v7060 = vsel %vm1207, %v7055, %v7059
      %7077 = vst [vmem:[#allocation4 + $0x8] sm:$0xff] %v6880
      %7078 = vst [vmem:[#allocation4 + $0x20] sm:$0xff] %v6892
      %7079 = vst [vmem:[#allocation4 + $0x38] sm:$0xff] %v6904
      %7080 = vst [vmem:[#allocation4 + $0x50] sm:$0xff] %v6916
      %7081 = vst [vmem:[#allocation4 + $0x68] sm:$0xff] %v6928
      %7082 = vst [vmem:[#allocation4 + $0x80] sm:$0xff] %v6940
      %7083 = vst [vmem:[#allocation4 + $0x98] sm:$0xff] %v6952
      %7084 = vst [vmem:[#allocation4 + $0xb0] sm:$0xff] %v6964
      %7085 = vst [vmem:[#allocation4 + $0xc8] sm:$0xff] %v6976
      %7086 = vst [vmem:[#allocation4 + $0xe0] sm:$0xff] %v6988
      %7087 = vst [vmem:[#allocation4 + $0xf8] sm:$0xff] %v7000
      %7088 = vst [vmem:[#allocation4 + $0x110] sm:$0xff] %v7012
      %7089 = vst [vmem:[#allocation4 + $0x128] sm:$0xff] %v7024
      %7090 = vst [vmem:[#allocation4 + $0x140] sm:$0xff] %v7036
      %7091 = vst [vmem:[#allocation4 + $0x158] sm:$0xff] %v7048
      %7092 = vst [vmem:[#allocation4 + $0x170] sm:$0xff] %v7060
      %v7093 = vld [vmem:[%s5538] sm:$0xe]
      %v7094 = vld [vmem:[%s5538 + $0x4] sm:$0xf]
      %v7095 = vld [vmem:[%s5538 + $0x8] sm:$0x1]
      %v7096 = vld [vmem:[%s5538 + $0xc] sm:$0xe]
      %v7097 = vld [vmem:[%s5538 + $0x10] sm:$0xf]
      %v7098 = vld [vmem:[%s5538 + $0x14] sm:$0x1]
      %v7099 = vld [vmem:[%s5538 + $0x18] sm:$0xe]
      %v7100 = vld [vmem:[%s5538 + $0x1c] sm:$0xf]
      %v7101 = vld [vmem:[%s5538 + $0x20] sm:$0x1]
      %v7102 = vld [vmem:[%s5538 + $0x24] sm:$0xe]
      %v7103 = vld [vmem:[%s5538 + $0x28] sm:$0xf]
      %v7104 = vld [vmem:[%s5538 + $0x2c] sm:$0x1]
      %v7105 = vld [vmem:[%s5538 + $0x30] sm:$0xe]
      %v7106 = vld [vmem:[%s5538 + $0x34] sm:$0xf]
      %v7107 = vld [vmem:[%s5538 + $0x38] sm:$0x1]
      %v7108 = vld [vmem:[%s5538 + $0x3c] sm:$0xe]
      %v7109 = vld [vmem:[%s5538 + $0x40] sm:$0xf]
      %v7110 = vld [vmem:[%s5538 + $0x44] sm:$0x1]
      %v7111 = vld [vmem:[%s5538 + $0x48] sm:$0xe]
      %v7112 = vld [vmem:[%s5538 + $0x4c] sm:$0xf]
      %v7113 = vld [vmem:[%s5538 + $0x50] sm:$0x1]
      %v7114 = vld [vmem:[%s5538 + $0x54] sm:$0xe]
      %v7115 = vld [vmem:[%s5538 + $0x58] sm:$0xf]
      %v7116 = vld [vmem:[%s5538 + $0x5c] sm:$0x1]
      %v7117 = vld [vmem:[%s5538 + $0x60] sm:$0xe]
      %v7118 = vld [vmem:[%s5538 + $0x64] sm:$0xf]
      %v7119 = vld [vmem:[%s5538 + $0x68] sm:$0x1]
      %v7120 = vld [vmem:[%s5538 + $0x6c] sm:$0xe]
      %v7121 = vld [vmem:[%s5538 + $0x70] sm:$0xf]
      %v7122 = vld [vmem:[%s5538 + $0x74] sm:$0x1]
      %v7123 = vld [vmem:[%s5538 + $0x78] sm:$0xe]
      %v7124 = vld [vmem:[%s5538 + $0x7c] sm:$0xf]
      %v7125 = vld [vmem:[%s5538 + $0x80] sm:$0x1]
      %v7126 = vld [vmem:[%s5538 + $0x84] sm:$0xe]
      %v7127 = vld [vmem:[%s5538 + $0x88] sm:$0xf]
      %v7128 = vld [vmem:[%s5538 + $0x8c] sm:$0x1]
      %v7129 = vld [vmem:[%s5538 + $0x90] sm:$0xe]
      %v7130 = vld [vmem:[%s5538 + $0x94] sm:$0xf]
      %v7131 = vld [vmem:[%s5538 + $0x98] sm:$0x1]
      %v7132 = vld [vmem:[%s5538 + $0x9c] sm:$0xe]
      %v7133 = vld [vmem:[%s5538 + $0xa0] sm:$0xf]
      %v7134 = vld [vmem:[%s5538 + $0xa4] sm:$0x1]
      %v7135 = vld [vmem:[%s5538 + $0xa8] sm:$0xe]
      %v7136 = vld [vmem:[%s5538 + $0xac] sm:$0xf]
      %v7137 = vld [vmem:[%s5538 + $0xb0] sm:$0x1]
      %v7138 = vld [vmem:[%s5538 + $0xb4] sm:$0xe]
      %v7139 = vld [vmem:[%s5538 + $0xb8] sm:$0xf]
      %v7140 = vld [vmem:[%s5538 + $0xbc] sm:$0x1]
      %v7189 = vunpack.c.l.b16 %v7093
      %v7190 = vunpack.c.l.b16 %v7094
      %v7191 = vunpack.c.l.b16 %v7095
      %v7192 = vunpack.c.l.b16 %v7096
      %v7193 = vunpack.c.l.b16 %v7097
      %v7194 = vunpack.c.l.b16 %v7098
      %v7195 = vunpack.c.l.b16 %v7099
      %v7196 = vunpack.c.l.b16 %v7100
      %v7197 = vunpack.c.l.b16 %v7101
      %v7198 = vunpack.c.l.b16 %v7102
      %v7199 = vunpack.c.l.b16 %v7103
      %v7200 = vunpack.c.l.b16 %v7104
      %v7201 = vunpack.c.l.b16 %v7105
      %v7202 = vunpack.c.l.b16 %v7106
      %v7203 = vunpack.c.l.b16 %v7107
      %v7204 = vunpack.c.l.b16 %v7108
      %v7205 = vunpack.c.l.b16 %v7109
      %v7206 = vunpack.c.l.b16 %v7110
      %v7207 = vunpack.c.l.b16 %v7111
      %v7208 = vunpack.c.l.b16 %v7112
      %v7209 = vunpack.c.l.b16 %v7113
      %v7210 = vunpack.c.l.b16 %v7114
      %v7211 = vunpack.c.l.b16 %v7115
      %v7212 = vunpack.c.l.b16 %v7116
      %v7213 = vunpack.c.l.b16 %v7117
      %v7214 = vunpack.c.l.b16 %v7118
      %v7215 = vunpack.c.l.b16 %v7119
      %v7216 = vunpack.c.l.b16 %v7120
      %v7217 = vunpack.c.l.b16 %v7121
      %v7218 = vunpack.c.l.b16 %v7122
      %v7219 = vunpack.c.l.b16 %v7123
      %v7220 = vunpack.c.l.b16 %v7124
      %v7221 = vunpack.c.l.b16 %v7125
      %v7222 = vunpack.c.l.b16 %v7126
      %v7223 = vunpack.c.l.b16 %v7127
      %v7224 = vunpack.c.l.b16 %v7128
      %v7225 = vunpack.c.l.b16 %v7129
      %v7226 = vunpack.c.l.b16 %v7130
      %v7227 = vunpack.c.l.b16 %v7131
      %v7228 = vunpack.c.l.b16 %v7132
      %v7229 = vunpack.c.l.b16 %v7133
      %v7230 = vunpack.c.l.b16 %v7134
      %v7231 = vunpack.c.l.b16 %v7135
      %v7232 = vunpack.c.l.b16 %v7136
      %v7233 = vunpack.c.l.b16 %v7137
      %v7234 = vunpack.c.l.b16 %v7138
      %v7235 = vunpack.c.l.b16 %v7139
      %v7236 = vunpack.c.l.b16 %v7140
      %v7237 = vpack.c.b16 %v7190, %v7189
      %v7238 = vpack.c.b16 %v7191, %v7191
      %v7239 = vpack.c.b16 %v7193, %v7192
      %v7240 = vpack.c.b16 %v7194, %v7194
      %v7241 = vpack.c.b16 %v7196, %v7195
      %v7242 = vpack.c.b16 %v7197, %v7197
      %v7243 = vpack.c.b16 %v7199, %v7198
      %v7244 = vpack.c.b16 %v7200, %v7200
      %v7245 = vpack.c.b16 %v7202, %v7201
      %v7246 = vpack.c.b16 %v7203, %v7203
      %v7247 = vpack.c.b16 %v7205, %v7204
      %v7248 = vpack.c.b16 %v7206, %v7206
      %v7249 = vpack.c.b16 %v7208, %v7207
      %v7250 = vpack.c.b16 %v7209, %v7209
      %v7251 = vpack.c.b16 %v7211, %v7210
      %v7252 = vpack.c.b16 %v7212, %v7212
      %v7253 = vpack.c.b16 %v7214, %v7213
      %v7254 = vpack.c.b16 %v7215, %v7215
      %v7255 = vpack.c.b16 %v7217, %v7216
      %v7256 = vpack.c.b16 %v7218, %v7218
      %v7257 = vpack.c.b16 %v7220, %v7219
      %v7258 = vpack.c.b16 %v7221, %v7221
      %v7259 = vpack.c.b16 %v7223, %v7222
      %v7260 = vpack.c.b16 %v7224, %v7224
      %v7261 = vpack.c.b16 %v7226, %v7225
      %v7262 = vpack.c.b16 %v7227, %v7227
      %v7263 = vpack.c.b16 %v7229, %v7228
      %v7264 = vpack.c.b16 %v7230, %v7230
      %v7265 = vpack.c.b16 %v7232, %v7231
      %v7266 = vpack.c.b16 %v7233, %v7233
      %v7267 = vpack.c.b16 %v7235, %v7234
      %v7268 = vpack.c.b16 %v7236, %v7236
      %v7269 = vrot.slane %v7237, 1
      %v7270 = vrot.slane %v7238, 1
      %v7271 = vsel %vm1608, %v7269, %v7270
      %v7272 = vrot.slane %v7239, 1
      %v7273 = vrot.slane %v7240, 1
      %v7274 = vsel %vm1608, %v7272, %v7273
      %v7275 = vrot.slane %v7241, 1
      %v7276 = vrot.slane %v7242, 1
      %v7277 = vsel %vm1608, %v7275, %v7276
      %v7278 = vrot.slane %v7243, 1
      %v7279 = vrot.slane %v7244, 1
      %v7280 = vsel %vm1608, %v7278, %v7279
      %v7281 = vrot.slane %v7245, 1
      %v7282 = vrot.slane %v7246, 1
      %v7283 = vsel %vm1608, %v7281, %v7282
      %v7284 = vrot.slane %v7247, 1
      %v7285 = vrot.slane %v7248, 1
      %v7286 = vsel %vm1608, %v7284, %v7285
      %v7287 = vrot.slane %v7249, 1
      %v7288 = vrot.slane %v7250, 1
      %v7289 = vsel %vm1608, %v7287, %v7288
      %v7290 = vrot.slane %v7251, 1
      %v7291 = vrot.slane %v7252, 1
      %v7292 = vsel %vm1608, %v7290, %v7291
      %v7293 = vrot.slane %v7253, 1
      %v7294 = vrot.slane %v7254, 1
      %v7295 = vsel %vm1608, %v7293, %v7294
      %v7296 = vrot.slane %v7255, 1
      %v7297 = vrot.slane %v7256, 1
      %v7298 = vsel %vm1608, %v7296, %v7297
      %v7299 = vrot.slane %v7257, 1
      %v7300 = vrot.slane %v7258, 1
      %v7301 = vsel %vm1608, %v7299, %v7300
      %v7302 = vrot.slane %v7259, 1
      %v7303 = vrot.slane %v7260, 1
      %v7304 = vsel %vm1608, %v7302, %v7303
      %v7305 = vrot.slane %v7261, 1
      %v7306 = vrot.slane %v7262, 1
      %v7307 = vsel %vm1608, %v7305, %v7306
      %v7308 = vrot.slane %v7263, 1
      %v7309 = vrot.slane %v7264, 1
      %v7310 = vsel %vm1608, %v7308, %v7309
      %v7311 = vrot.slane %v7265, 1
      %v7312 = vrot.slane %v7266, 1
      %v7313 = vsel %vm1608, %v7311, %v7312
      %v7314 = vrot.slane %v7267, 1
      %v7315 = vrot.slane %v7268, 1
      %v7316 = vsel %vm1608, %v7314, %v7315
      %7333 = vst [vmem:[#allocation4 + $0x10] sm:$0xff] %v7271
      %7334 = vst [vmem:[#allocation4 + $0x28] sm:$0xff] %v7274
      %7335 = vst [vmem:[#allocation4 + $0x40] sm:$0xff] %v7277
      %7336 = vst [vmem:[#allocation4 + $0x58] sm:$0xff] %v7280
      %7337 = vst [vmem:[#allocation4 + $0x70] sm:$0xff] %v7283
      %7338 = vst [vmem:[#allocation4 + $0x88] sm:$0xff] %v7286
      %7339 = vst [vmem:[#allocation4 + $0xa0] sm:$0xff] %v7289
      %7340 = vst [vmem:[#allocation4 + $0xb8] sm:$0xff] %v7292
      %7341 = vst [vmem:[#allocation4 + $0xd0] sm:$0xff] %v7295
      %7342 = vst [vmem:[#allocation4 + $0xe8] sm:$0xff] %v7298
      %7343 = vst [vmem:[#allocation4 + $0x100] sm:$0xff] %v7301
      %7344 = vst [vmem:[#allocation4 + $0x118] sm:$0xff] %v7304
      %7345 = vst [vmem:[#allocation4 + $0x130] sm:$0xff] %v7307
      %7346 = vst [vmem:[#allocation4 + $0x148] sm:$0xff] %v7310
      %7347 = vst [vmem:[#allocation4 + $0x160] sm:$0xff] %v7313
      %7348 = vst [vmem:[#allocation4 + $0x178] sm:$0xff] %v7316
      %v7349 = vld [vmem:[#allocation4] sm:$0xff]
      %v7350 = vld [vmem:[#allocation4 + $0x8] sm:$0xff]
      %v7351 = vld [vmem:[#allocation4 + $0x10] sm:$0xff]
      %v7352 = vld [vmem:[#allocation4 + $0x18] sm:$0xff]
      %v7353 = vld [vmem:[#allocation4 + $0x20] sm:$0xff]
      %v7354 = vld [vmem:[#allocation4 + $0x28] sm:$0xff]
      %v7355 = vld [vmem:[#allocation4 + $0x30] sm:$0xff]
      %v7356 = vld [vmem:[#allocation4 + $0x38] sm:$0xff]
      %v7357 = vld [vmem:[#allocation4 + $0x40] sm:$0xff]
      %v7358 = vld [vmem:[#allocation4 + $0x48] sm:$0xff]
      %v7359 = vld [vmem:[#allocation4 + $0x50] sm:$0xff]
      %v7360 = vld [vmem:[#allocation4 + $0x58] sm:$0xff]
      %v7361 = vld [vmem:[#allocation4 + $0x60] sm:$0xff]
      %v7362 = vld [vmem:[#allocation4 + $0x68] sm:$0xff]
      %v7363 = vld [vmem:[#allocation4 + $0x70] sm:$0xff]
      %v7364 = vld [vmem:[#allocation4 + $0x78] sm:$0xff]
      %v7365 = vld [vmem:[#allocation4 + $0x80] sm:$0xff]
      %v7366 = vld [vmem:[#allocation4 + $0x88] sm:$0xff]
      %v7367 = vld [vmem:[#allocation4 + $0x90] sm:$0xff]
      %v7368 = vld [vmem:[#allocation4 + $0x98] sm:$0xff]
      %v7369 = vld [vmem:[#allocation4 + $0xa0] sm:$0xff]
      %v7370 = vld [vmem:[#allocation4 + $0xa8] sm:$0xff]
      %v7371 = vld [vmem:[#allocation4 + $0xb0] sm:$0xff]
      %v7372 = vld [vmem:[#allocation4 + $0xb8] sm:$0xff]
      %v7373 = vld [vmem:[#allocation4 + $0xc0] sm:$0xff]
      %v7374 = vld [vmem:[#allocation4 + $0xc8] sm:$0xff]
      %v7375 = vld [vmem:[#allocation4 + $0xd0] sm:$0xff]
      %v7376 = vld [vmem:[#allocation4 + $0xd8] sm:$0xff]
      %v7377 = vld [vmem:[#allocation4 + $0xe0] sm:$0xff]
      %v7378 = vld [vmem:[#allocation4 + $0xe8] sm:$0xff]
      %v7379 = vld [vmem:[#allocation4 + $0xf0] sm:$0xff]
      %v7380 = vld [vmem:[#allocation4 + $0xf8] sm:$0xff]
      %v7381 = vld [vmem:[#allocation4 + $0x100] sm:$0xff]
      %v7382 = vld [vmem:[#allocation4 + $0x108] sm:$0xff]
      %v7383 = vld [vmem:[#allocation4 + $0x110] sm:$0xff]
      %v7384 = vld [vmem:[#allocation4 + $0x118] sm:$0xff]
      %v7385 = vld [vmem:[#allocation4 + $0x120] sm:$0xff]
      %v7386 = vld [vmem:[#allocation4 + $0x128] sm:$0xff]
      %v7387 = vld [vmem:[#allocation4 + $0x130] sm:$0xff]
      %v7388 = vld [vmem:[#allocation4 + $0x138] sm:$0xff]
      %v7389 = vld [vmem:[#allocation4 + $0x140] sm:$0xff]
      %v7390 = vld [vmem:[#allocation4 + $0x148] sm:$0xff]
      %v7391 = vld [vmem:[#allocation4 + $0x150] sm:$0xff]
      %v7392 = vld [vmem:[#allocation4 + $0x158] sm:$0xff]
      %v7393 = vld [vmem:[#allocation4 + $0x160] sm:$0xff]
      %v7394 = vld [vmem:[#allocation4 + $0x168] sm:$0xff]
      %v7395 = vld [vmem:[#allocation4 + $0x170] sm:$0xff]
      %v7396 = vld [vmem:[#allocation4 + $0x178] sm:$0xff]
      %s7397 = scalar_lea.vmem %s2, 192
      %v7398 = vld [vmem:[%s7397] sm:$0xf]
      %v7399 = vld [vmem:[%s7397 + $0x4] sm:$0xf]
      %v7400 = vld [vmem:[%s7397 + $0x8] sm:$0xf]
      %v7401 = vld [vmem:[%s7397 + $0xc] sm:$0xf]
      %v7402 = vld [vmem:[%s7397 + $0x10] sm:$0xf]
      %v7403 = vld [vmem:[%s7397 + $0x14] sm:$0xf]
      %v7404 = vld [vmem:[%s7397 + $0x18] sm:$0xf]
      %v7405 = vld [vmem:[%s7397 + $0x1c] sm:$0xf]
      %v7406 = vld [vmem:[%s7397 + $0x20] sm:$0xf]
      %v7407 = vld [vmem:[%s7397 + $0x24] sm:$0xf]
      %v7408 = vld [vmem:[%s7397 + $0x28] sm:$0xf]
      %v7409 = vld [vmem:[%s7397 + $0x2c] sm:$0xf]
      %v7410 = vld [vmem:[%s7397 + $0x30] sm:$0xf]
      %v7411 = vld [vmem:[%s7397 + $0x34] sm:$0xf]
      %v7412 = vld [vmem:[%s7397 + $0x38] sm:$0xf]
      %v7413 = vld [vmem:[%s7397 + $0x3c] sm:$0xf]
      %v7414 = vld [vmem:[%s7397 + $0x40] sm:$0xf]
      %v7415 = vld [vmem:[%s7397 + $0x44] sm:$0xf]
      %v7416 = vld [vmem:[%s7397 + $0x48] sm:$0xf]
      %v7417 = vld [vmem:[%s7397 + $0x4c] sm:$0xf]
      %v7418 = vld [vmem:[%s7397 + $0x50] sm:$0xf]
      %v7419 = vld [vmem:[%s7397 + $0x54] sm:$0xf]
      %v7420 = vld [vmem:[%s7397 + $0x58] sm:$0xf]
      %v7421 = vld [vmem:[%s7397 + $0x5c] sm:$0xf]
      %v7422 = vld [vmem:[%s7397 + $0x60] sm:$0xf]
      %v7423 = vld [vmem:[%s7397 + $0x64] sm:$0xf]
      %v7424 = vld [vmem:[%s7397 + $0x68] sm:$0xf]
      %v7425 = vld [vmem:[%s7397 + $0x6c] sm:$0xf]
      %v7426 = vld [vmem:[%s7397 + $0x70] sm:$0xf]
      %v7427 = vld [vmem:[%s7397 + $0x74] sm:$0xf]
      %v7428 = vld [vmem:[%s7397 + $0x78] sm:$0xf]
      %v7429 = vld [vmem:[%s7397 + $0x7c] sm:$0xf]
      %v7430 = vld [vmem:[%s7397 + $0x80] sm:$0xf]
      %v7431 = vld [vmem:[%s7397 + $0x84] sm:$0xf]
      %v7432 = vld [vmem:[%s7397 + $0x88] sm:$0xf]
      %v7433 = vld [vmem:[%s7397 + $0x8c] sm:$0xf]
      %v7434 = vld [vmem:[%s7397 + $0x90] sm:$0xf]
      %v7435 = vld [vmem:[%s7397 + $0x94] sm:$0xf]
      %v7436 = vld [vmem:[%s7397 + $0x98] sm:$0xf]
      %v7437 = vld [vmem:[%s7397 + $0x9c] sm:$0xf]
      %v7438 = vld [vmem:[%s7397 + $0xa0] sm:$0xf]
      %v7439 = vld [vmem:[%s7397 + $0xa4] sm:$0xf]
      %v7440 = vld [vmem:[%s7397 + $0xa8] sm:$0xf]
      %v7441 = vld [vmem:[%s7397 + $0xac] sm:$0xf]
      %v7442 = vld [vmem:[%s7397 + $0xb0] sm:$0xf]
      %v7443 = vld [vmem:[%s7397 + $0xb4] sm:$0xf]
      %v7444 = vld [vmem:[%s7397 + $0xb8] sm:$0xf]
      %v7445 = vld [vmem:[%s7397 + $0xbc] sm:$0xf]
      %v7494 = vunpack.c.l.b16 %v7398
      %v7495 = vunpack.c.l.b16 %v7399
      %v7496 = vunpack.c.l.b16 %v7400
      %v7497 = vunpack.c.l.b16 %v7401
      %v7498 = vunpack.c.l.b16 %v7402
      %v7499 = vunpack.c.l.b16 %v7403
      %v7500 = vunpack.c.l.b16 %v7404
      %v7501 = vunpack.c.l.b16 %v7405
      %v7502 = vunpack.c.l.b16 %v7406
      %v7503 = vunpack.c.l.b16 %v7407
      %v7504 = vunpack.c.l.b16 %v7408
      %v7505 = vunpack.c.l.b16 %v7409
      %v7506 = vunpack.c.l.b16 %v7410
      %v7507 = vunpack.c.l.b16 %v7411
      %v7508 = vunpack.c.l.b16 %v7412
      %v7509 = vunpack.c.l.b16 %v7413
      %v7510 = vunpack.c.l.b16 %v7414
      %v7511 = vunpack.c.l.b16 %v7415
      %v7512 = vunpack.c.l.b16 %v7416
      %v7513 = vunpack.c.l.b16 %v7417
      %v7514 = vunpack.c.l.b16 %v7418
      %v7515 = vunpack.c.l.b16 %v7419
      %v7516 = vunpack.c.l.b16 %v7420
      %v7517 = vunpack.c.l.b16 %v7421
      %v7518 = vunpack.c.l.b16 %v7422
      %v7519 = vunpack.c.l.b16 %v7423
      %v7520 = vunpack.c.l.b16 %v7424
      %v7521 = vunpack.c.l.b16 %v7425
      %v7522 = vunpack.c.l.b16 %v7426
      %v7523 = vunpack.c.l.b16 %v7427
      %v7524 = vunpack.c.l.b16 %v7428
      %v7525 = vunpack.c.l.b16 %v7429
      %v7526 = vunpack.c.l.b16 %v7430
      %v7527 = vunpack.c.l.b16 %v7431
      %v7528 = vunpack.c.l.b16 %v7432
      %v7529 = vunpack.c.l.b16 %v7433
      %v7530 = vunpack.c.l.b16 %v7434
      %v7531 = vunpack.c.l.b16 %v7435
      %v7532 = vunpack.c.l.b16 %v7436
      %v7533 = vunpack.c.l.b16 %v7437
      %v7534 = vunpack.c.l.b16 %v7438
      %v7535 = vunpack.c.l.b16 %v7439
      %v7536 = vunpack.c.l.b16 %v7440
      %v7537 = vunpack.c.l.b16 %v7441
      %v7538 = vunpack.c.l.b16 %v7442
      %v7539 = vunpack.c.l.b16 %v7443
      %v7540 = vunpack.c.l.b16 %v7444
      %v7541 = vunpack.c.l.b16 %v7445
      %v7542 = vpack.c.b16 %v7495, %v7494
      %v7543 = vpack.c.b16 %v7497, %v7496
      %v7544 = vpack.c.b16 %v7499, %v7498
      %v7545 = vpack.c.b16 %v7501, %v7500
      %v7546 = vpack.c.b16 %v7503, %v7502
      %v7547 = vpack.c.b16 %v7505, %v7504
      %v7548 = vpack.c.b16 %v7507, %v7506
      %v7549 = vpack.c.b16 %v7509, %v7508
      %v7550 = vpack.c.b16 %v7511, %v7510
      %v7551 = vpack.c.b16 %v7513, %v7512
      %v7552 = vpack.c.b16 %v7515, %v7514
      %v7553 = vpack.c.b16 %v7517, %v7516
      %v7554 = vpack.c.b16 %v7519, %v7518
      %v7555 = vpack.c.b16 %v7521, %v7520
      %v7556 = vpack.c.b16 %v7523, %v7522
      %v7557 = vpack.c.b16 %v7525, %v7524
      %v7558 = vpack.c.b16 %v7527, %v7526
      %v7559 = vpack.c.b16 %v7529, %v7528
      %v7560 = vpack.c.b16 %v7531, %v7530
      %v7561 = vpack.c.b16 %v7533, %v7532
      %v7562 = vpack.c.b16 %v7535, %v7534
      %v7563 = vpack.c.b16 %v7537, %v7536
      %v7564 = vpack.c.b16 %v7539, %v7538
      %v7565 = vpack.c.b16 %v7541, %v7540
      %7590 = vmatprep.subr.bf16.mxu0 0
      %7591 = vmatpush1.bf16.msra.mxu0 %v7542
      %7592 = vmatprep.subr.bf16.mxu0 0
      %7593 = vmatpush1.bf16.msra.mxu0 %v7543
      %7594 = vmatprep.subr.bf16.mxu0 0
      %7595 = vmatpush1.bf16.msra.mxu0 %v7544
      %7596 = vmatprep.subr.bf16.mxu0 0
      %7597 = vmatpush1.bf16.msra.mxu0 %v7545
      %7598 = vmatprep.subr.bf16.mxu0 0
      %7599 = vmatpush1.bf16.msra.mxu0 %v7546
      %7600 = vmatprep.subr.bf16.mxu0 0
      %7601 = vmatpush1.bf16.msra.mxu0 %v7547
      %7602 = vmatprep.subr.bf16.mxu0 0
      %7603 = vmatpush1.bf16.msra.mxu0 %v7548
      %7604 = vmatprep.subr.bf16.mxu0 0
      %7605 = vmatpush1.bf16.msra.mxu0 %v7549
      %7606 = vmatprep.subr.bf16.mxu0 0
      %7607 = vmatpush1.bf16.msra.mxu0 %v7550
      %7608 = vmatprep.subr.bf16.mxu0 0
      %7609 = vmatpush1.bf16.msra.mxu0 %v7551
      %7610 = vmatprep.subr.bf16.mxu0 0
      %7611 = vmatpush1.bf16.msra.mxu0 %v7552
      %7612 = vmatprep.subr.bf16.mxu0 0
      %7613 = vmatpush1.bf16.msra.mxu0 %v7553
      %7614 = vmatprep.subr.bf16.mxu0 0
      %7615 = vmatpush1.bf16.msra.mxu0 %v7554
      %7616 = vmatprep.subr.bf16.mxu0 0
      %7617 = vmatpush1.bf16.msra.mxu0 %v7555
      %7618 = vmatprep.subr.bf16.mxu0 0
      %7619 = vmatpush1.bf16.msra.mxu0 %v7556
      %7620 = vmatprep.subr.bf16.mxu0 0
      %7621 = vmatpush1.bf16.msra.mxu0 %v7557
      %7622 = vmatprep.mubr.bf16.mxu0 %v7350
      %7623 = vmatmul.mubr.bf16.gmra.mrb[0].mxu0 %v7349
      %v7624 = vpop.f32.mrb[0].mxu0
      %v7625 = vadd.f32 0.0, %v7624
      %v7626 = vpop.f32.mrb[0].mxu0
      %v7627 = vpop.f32.mrb[0].mxu0
      %v7628 = vadd.f32 0.0, %v7627
      %v7629 = vpop.f32.mrb[0].mxu0
      %7630 = vmatprep.mubr.bf16.mxu0 %v7353
      %7631 = vmatmul.mubr.bf16.gmra.mrb[0].mxu0 %v7352
      %v7632 = vpop.f32.mrb[0].mxu0
      %v7633 = vadd.f32 0.0, %v7632
      %v7634 = vpop.f32.mrb[0].mxu0
      %v7635 = vpop.f32.mrb[0].mxu0
      %v7636 = vadd.f32 0.0, %v7635
      %v7637 = vpop.f32.mrb[0].mxu0
      %7638 = vmatprep.mubr.bf16.mxu0 %v7356
      %7639 = vmatmul.mubr.bf16.gmra.mrb[0].mxu0 %v7355
      %v7640 = vpop.f32.mrb[0].mxu0
      %v7641 = vadd.f32 0.0, %v7640
      %v7642 = vpop.f32.mrb[0].mxu0
      %v7643 = vpop.f32.mrb[0].mxu0
      %v7644 = vadd.f32 0.0, %v7643
      %v7645 = vpop.f32.mrb[0].mxu0
      %7646 = vmatprep.mubr.bf16.mxu0 %v7359
      %7647 = vmatmul.mubr.bf16.gmra.mrb[0].mxu0 %v7358
      %v7648 = vpop.f32.mrb[0].mxu0
      %v7649 = vadd.f32 0.0, %v7648
      %v7650 = vpop.f32.mrb[0].mxu0
      %v7651 = vpop.f32.mrb[0].mxu0
      %v7652 = vadd.f32 0.0, %v7651
      %v7653 = vpop.f32.mrb[0].mxu0
      %7654 = vmatprep.mubr.bf16.mxu0 %v7362
      %7655 = vmatmul.mubr.bf16.gmra.mrb[0].mxu0 %v7361
      %v7656 = vpop.f32.mrb[0].mxu0
      %v7657 = vadd.f32 0.0, %v7656
      %v7658 = vpop.f32.mrb[0].mxu0
      %v7659 = vpop.f32.mrb[0].mxu0
      %v7660 = vadd.f32 0.0, %v7659
      %v7661 = vpop.f32.mrb[0].mxu0
      %7662 = vmatprep.mubr.bf16.mxu0 %v7365
      %7663 = vmatmul.mubr.bf16.gmra.mrb[0].mxu0 %v7364
      %v7664 = vpop.f32.mrb[0].mxu0
      %v7665 = vadd.f32 0.0, %v7664
      %v7666 = vpop.f32.mrb[0].mxu0
      %v7667 = vpop.f32.mrb[0].mxu0
      %v7668 = vadd.f32 0.0, %v7667
      %v7669 = vpop.f32.mrb[0].mxu0
      %7670 = vmatprep.mubr.bf16.mxu0 %v7368
      %7671 = vmatmul.mubr.bf16.gmra.mrb[0].mxu0 %v7367
      %v7672 = vpop.f32.mrb[0].mxu0
      %v7673 = vadd.f32 0.0, %v7672
      %v7674 = vpop.f32.mrb[0].mxu0
      %v7675 = vpop.f32.mrb[0].mxu0
      %v7676 = vadd.f32 0.0, %v7675
      %v7677 = vpop.f32.mrb[0].mxu0
      %7678 = vmatprep.mubr.bf16.mxu0 %v7371
      %7679 = vmatmul.mubr.bf16.gmra.mrb[0].mxu0 %v7370
      %v7680 = vpop.f32.mrb[0].mxu0
      %v7681 = vadd.f32 0.0, %v7680
      %v7682 = vpop.f32.mrb[0].mxu0
      %v7683 = vpop.f32.mrb[0].mxu0
      %v7684 = vadd.f32 0.0, %v7683
      %v7685 = vpop.f32.mrb[0].mxu0
      %7686 = vmatprep.mubr.bf16.mxu0 %v7374
      %7687 = vmatmul.mubr.bf16.gmra.mrb[0].mxu0 %v7373
      %v7688 = vpop.f32.mrb[0].mxu0
      %v7689 = vadd.f32 0.0, %v7688
      %v7690 = vpop.f32.mrb[0].mxu0
      %v7691 = vpop.f32.mrb[0].mxu0
      %v7692 = vadd.f32 0.0, %v7691
      %v7693 = vpop.f32.mrb[0].mxu0
      %7694 = vmatprep.mubr.bf16.mxu0 %v7377
      %7695 = vmatmul.mubr.bf16.gmra.mrb[0].mxu0 %v7376
      %v7696 = vpop.f32.mrb[0].mxu0
      %v7697 = vadd.f32 0.0, %v7696
      %v7698 = vpop.f32.mrb[0].mxu0
      %v7699 = vpop.f32.mrb[0].mxu0
      %v7700 = vadd.f32 0.0, %v7699
      %v7701 = vpop.f32.mrb[0].mxu0
      %7702 = vmatprep.mubr.bf16.mxu0 %v7380
      %7703 = vmatmul.mubr.bf16.gmra.mrb[0].mxu0 %v7379
      %v7704 = vpop.f32.mrb[0].mxu0
      %v7705 = vadd.f32 0.0, %v7704
      %v7706 = vpop.f32.mrb[0].mxu0
      %v7707 = vpop.f32.mrb[0].mxu0
      %v7708 = vadd.f32 0.0, %v7707
      %v7709 = vpop.f32.mrb[0].mxu0
      %7710 = vmatprep.mubr.bf16.mxu0 %v7383
      %7711 = vmatmul.mubr.bf16.gmra.mrb[0].mxu0 %v7382
      %v7712 = vpop.f32.mrb[0].mxu0
      %v7713 = vadd.f32 0.0, %v7712
      %v7714 = vpop.f32.mrb[0].mxu0
      %v7715 = vpop.f32.mrb[0].mxu0
      %v7716 = vadd.f32 0.0, %v7715
      %v7717 = vpop.f32.mrb[0].mxu0
      %7718 = vmatprep.mubr.bf16.mxu0 %v7386
      %7719 = vmatmul.mubr.bf16.gmra.mrb[0].mxu0 %v7385
      %v7720 = vpop.f32.mrb[0].mxu0
      %v7721 = vadd.f32 0.0, %v7720
      %v7722 = vpop.f32.mrb[0].mxu0
      %v7723 = vpop.f32.mrb[0].mxu0
      %v7724 = vadd.f32 0.0, %v7723
      %v7725 = vpop.f32.mrb[0].mxu0
      %7726 = vmatprep.mubr.bf16.mxu0 %v7389
      %7727 = vmatmul.mubr.bf16.gmra.mrb[0].mxu0 %v7388
      %v7728 = vpop.f32.mrb[0].mxu0
      %v7729 = vadd.f32 0.0, %v7728
      %v7730 = vpop.f32.mrb[0].mxu0
      %v7731 = vpop.f32.mrb[0].mxu0
      %v7732 = vadd.f32 0.0, %v7731
      %v7733 = vpop.f32.mrb[0].mxu0
      %7734 = vmatprep.mubr.bf16.mxu0 %v7392
      %7735 = vmatmul.mubr.bf16.gmra.mrb[0].mxu0 %v7391
      %v7736 = vpop.f32.mrb[0].mxu0
      %v7737 = vadd.f32 0.0, %v7736
      %v7738 = vpop.f32.mrb[0].mxu0
      %v7739 = vpop.f32.mrb[0].mxu0
      %v7740 = vadd.f32 0.0, %v7739
      %v7741 = vpop.f32.mrb[0].mxu0
      %7742 = vmatprep.mubr.bf16.mxu0 %v7395
      %7743 = vmatmul.mubr.bf16.gmra.mrb[0].mxu0 %v7394
      %v7744 = vpop.f32.mrb[0].mxu0
      %v7745 = vadd.f32 0.0, %v7744
      %v7746 = vpop.f32.mrb[0].mxu0
      %v7747 = vpop.f32.mrb[0].mxu0
      %v7748 = vadd.f32 0.0, %v7747
      %v7749 = vpop.f32.mrb[0].mxu0
      %7750 = vdwg.mxu0
      %7751 = vmatprep.subr.bf16.mxu0 0
      %7752 = vmatpush1.bf16.msra.mxu0 %v7558
      %7753 = vmatprep.subr.bf16.mxu0 0
      %7754 = vmatpush1.bf16.msra.mxu0 %v7559
      %7755 = vmatprep.subr.bf16.mxu0 0
      %7756 = vmatpush1.bf16.msra.mxu0 %v7560
      %7757 = vmatprep.subr.bf16.mxu0 0
      %7758 = vmatpush1.bf16.msra.mxu0 %v7561
      %7759 = vmatprep.subr.bf16.mxu0 0
      %7760 = vmatpush1.bf16.msra.mxu0 %v7562
      %7761 = vmatprep.subr.bf16.mxu0 0
      %7762 = vmatpush1.bf16.msra.mxu0 %v7563
      %7763 = vmatprep.subr.bf16.mxu0 0
      %7764 = vmatpush1.bf16.msra.mxu0 %v7564
      %7765 = vmatprep.subr.bf16.mxu0 0
      %7766 = vmatpush1.bf16.msra.mxu0 %v7565
      %7767 = vmatprep.subr.bf16.mxu0 0
      %7768 = vmatpush1.bf16.msra.mxu0 0
      %7769 = vmatprep.subr.bf16.mxu0 0
      %7770 = vmatpush1.bf16.msra.mxu0 0
      %7771 = vmatprep.subr.bf16.mxu0 0
      %7772 = vmatpush1.bf16.msra.mxu0 0
      %7773 = vmatprep.subr.bf16.mxu0 0
      %7774 = vmatpush1.bf16.msra.mxu0 0
      %7775 = vmatprep.subr.bf16.mxu0 0
      %7776 = vmatpush1.bf16.msra.mxu0 0
      %7777 = vmatprep.subr.bf16.mxu0 0
      %7778 = vmatpush1.bf16.msra.mxu0 0
      %7779 = vmatprep.subr.bf16.mxu0 0
      %7780 = vmatpush1.bf16.msra.mxu0 0
      %7781 = vmatprep.subr.bf16.mxu0 0
      %7782 = vmatpush1.bf16.msra.mxu0 0
      %7783 = vmatprep.mubr.bf16.mxu0 0
      %7784 = vmatmul.mubr.bf16.gmra.mrb[0].mxu0 %v7351
      %v7785 = vpop.f32.mrb[0].mxu0
      %v7786 = vadd.f32 %v7625, %v7785
      %v7787 = vpop.f32.mrb[0].mxu0
      %v7788 = vpop.f32.mrb[0].mxu0
      %v7789 = vadd.f32 %v7628, %v7788
      %v7790 = vpop.f32.mrb[0].mxu0
      %7791 = vmatprep.mubr.bf16.mxu0 0
      %7792 = vmatmul.mubr.bf16.gmra.mrb[0].mxu0 %v7354
      %v7793 = vpop.f32.mrb[0].mxu0
      %v7794 = vadd.f32 %v7633, %v7793
      %v7795 = vpop.f32.mrb[0].mxu0
      %v7796 = vpop.f32.mrb[0].mxu0
      %v7797 = vadd.f32 %v7636, %v7796
      %v7798 = vpop.f32.mrb[0].mxu0
      %7799 = vmatprep.mubr.bf16.mxu0 0
      %7800 = vmatmul.mubr.bf16.gmra.mrb[0].mxu0 %v7357
      %v7801 = vpop.f32.mrb[0].mxu0
      %v7802 = vadd.f32 %v7641, %v7801
      %v7803 = vpop.f32.mrb[0].mxu0
      %v7804 = vpop.f32.mrb[0].mxu0
      %v7805 = vadd.f32 %v7644, %v7804
      %v7806 = vpop.f32.mrb[0].mxu0
      %7807 = vmatprep.mubr.bf16.mxu0 0
      %7808 = vmatmul.mubr.bf16.gmra.mrb[0].mxu0 %v7360
      %v7809 = vpop.f32.mrb[0].mxu0
      %v7810 = vadd.f32 %v7649, %v7809
      %v7811 = vpop.f32.mrb[0].mxu0
      %v7812 = vpop.f32.mrb[0].mxu0
      %v7813 = vadd.f32 %v7652, %v7812
      %v7814 = vpop.f32.mrb[0].mxu0
      %7815 = vmatprep.mubr.bf16.mxu0 0
      %7816 = vmatmul.mubr.bf16.gmra.mrb[0].mxu0 %v7363
      %v7817 = vpop.f32.mrb[0].mxu0
      %v7818 = vadd.f32 %v7657, %v7817
      %v7819 = vpop.f32.mrb[0].mxu0
      %v7820 = vpop.f32.mrb[0].mxu0
      %v7821 = vadd.f32 %v7660, %v7820
      %v7822 = vpop.f32.mrb[0].mxu0
      %7823 = vmatprep.mubr.bf16.mxu0 0
      %7824 = vmatmul.mubr.bf16.gmra.mrb[0].mxu0 %v7366
      %v7825 = vpop.f32.mrb[0].mxu0
      %v7826 = vadd.f32 %v7665, %v7825
      %v7827 = vpop.f32.mrb[0].mxu0
      %v7828 = vpop.f32.mrb[0].mxu0
      %v7829 = vadd.f32 %v7668, %v7828
      %v7830 = vpop.f32.mrb[0].mxu0
      %7831 = vmatprep.mubr.bf16.mxu0 0
      %7832 = vmatmul.mubr.bf16.gmra.mrb[0].mxu0 %v7369
      %v7833 = vpop.f32.mrb[0].mxu0
      %v7834 = vadd.f32 %v7673, %v7833
      %v7835 = vpop.f32.mrb[0].mxu0
      %v7836 = vpop.f32.mrb[0].mxu0
      %v7837 = vadd.f32 %v7676, %v7836
      %v7838 = vpop.f32.mrb[0].mxu0
      %7839 = vmatprep.mubr.bf16.mxu0 0
      %7840 = vmatmul.mubr.bf16.gmra.mrb[0].mxu0 %v7372
      %v7841 = vpop.f32.mrb[0].mxu0
      %v7842 = vadd.f32 %v7681, %v7841
      %v7843 = vpop.f32.mrb[0].mxu0
      %v7844 = vpop.f32.mrb[0].mxu0
      %v7845 = vadd.f32 %v7684, %v7844
      %v7846 = vpop.f32.mrb[0].mxu0
      %7847 = vmatprep.mubr.bf16.mxu0 0
      %7848 = vmatmul.mubr.bf16.gmra.mrb[0].mxu0 %v7375
      %v7849 = vpop.f32.mrb[0].mxu0
      %v7850 = vadd.f32 %v7689, %v7849
      %v7851 = vpop.f32.mrb[0].mxu0
      %v7852 = vpop.f32.mrb[0].mxu0
      %v7853 = vadd.f32 %v7692, %v7852
      %v7854 = vpop.f32.mrb[0].mxu0
      %7855 = vmatprep.mubr.bf16.mxu0 0
      %7856 = vmatmul.mubr.bf16.gmra.mrb[0].mxu0 %v7378
      %v7857 = vpop.f32.mrb[0].mxu0
      %v7858 = vadd.f32 %v7697, %v7857
      %v7859 = vpop.f32.mrb[0].mxu0
      %v7860 = vpop.f32.mrb[0].mxu0
      %v7861 = vadd.f32 %v7700, %v7860
      %v7862 = vpop.f32.mrb[0].mxu0
      %7863 = vmatprep.mubr.bf16.mxu0 0
      %7864 = vmatmul.mubr.bf16.gmra.mrb[0].mxu0 %v7381
      %v7865 = vpop.f32.mrb[0].mxu0
      %v7866 = vadd.f32 %v7705, %v7865
      %v7867 = vpop.f32.mrb[0].mxu0
      %v7868 = vpop.f32.mrb[0].mxu0
      %v7869 = vadd.f32 %v7708, %v7868
      %v7870 = vpop.f32.mrb[0].mxu0
      %7871 = vmatprep.mubr.bf16.mxu0 0
      %7872 = vmatmul.mubr.bf16.gmra.mrb[0].mxu0 %v7384
      %v7873 = vpop.f32.mrb[0].mxu0
      %v7874 = vadd.f32 %v7713, %v7873
      %v7875 = vpop.f32.mrb[0].mxu0
      %v7876 = vpop.f32.mrb[0].mxu0
      %v7877 = vadd.f32 %v7716, %v7876
      %v7878 = vpop.f32.mrb[0].mxu0
      %7879 = vmatprep.mubr.bf16.mxu0 0
      %7880 = vmatmul.mubr.bf16.gmra.mrb[0].mxu0 %v7387
      %v7881 = vpop.f32.mrb[0].mxu0
      %v7882 = vadd.f32 %v7721, %v7881
      %v7883 = vpop.f32.mrb[0].mxu0
      %v7884 = vpop.f32.mrb[0].mxu0
      %v7885 = vadd.f32 %v7724, %v7884
      %v7886 = vpop.f32.mrb[0].mxu0
      %7887 = vmatprep.mubr.bf16.mxu0 0
      %7888 = vmatmul.mubr.bf16.gmra.mrb[0].mxu0 %v7390
      %v7889 = vpop.f32.mrb[0].mxu0
      %v7890 = vadd.f32 %v7729, %v7889
      %v7891 = vpop.f32.mrb[0].mxu0
      %v7892 = vpop.f32.mrb[0].mxu0
      %v7893 = vadd.f32 %v7732, %v7892
      %v7894 = vpop.f32.mrb[0].mxu0
      %7895 = vmatprep.mubr.bf16.mxu0 0
      %7896 = vmatmul.mubr.bf16.gmra.mrb[0].mxu0 %v7393
      %v7897 = vpop.f32.mrb[0].mxu0
      %v7898 = vadd.f32 %v7737, %v7897
      %v7899 = vpop.f32.mrb[0].mxu0
      %v7900 = vpop.f32.mrb[0].mxu0
      %v7901 = vadd.f32 %v7740, %v7900
      %v7902 = vpop.f32.mrb[0].mxu0
      %7903 = vmatprep.mubr.bf16.mxu0 0
      %7904 = vmatmul.mubr.bf16.gmra.mrb[0].mxu0 %v7396
      %v7905 = vpop.f32.mrb[0].mxu0
      %v7906 = vadd.f32 %v7745, %v7905
      %v7907 = vpop.f32.mrb[0].mxu0
      %v7908 = vpop.f32.mrb[0].mxu0
      %v7909 = vadd.f32 %v7748, %v7908
      %v7910 = vpop.f32.mrb[0].mxu0
      %7911 = vdwg.mxu0
      %v7960 = vunpack.c.l.b16 %v6501
      %v7961 = vunpack.c.l.b16 %v6502
      %v7962 = vunpack.c.l.b16 %v6503
      %v7963 = vunpack.c.l.b16 %v6504
      %v7964 = vunpack.c.l.b16 %v6505
      %v7965 = vunpack.c.l.b16 %v6506
      %v7966 = vunpack.c.l.b16 %v6507
      %v7967 = vunpack.c.l.b16 %v6508
      %v7968 = vunpack.c.l.b16 %v6509
      %v7969 = vunpack.c.l.b16 %v6510
      %v7970 = vunpack.c.l.b16 %v6511
      %v7971 = vunpack.c.l.b16 %v6512
      %v7972 = vunpack.c.l.b16 %v6513
      %v7973 = vunpack.c.l.b16 %v6514
      %v7974 = vunpack.c.l.b16 %v6515
      %v7975 = vunpack.c.l.b16 %v6516
      %v7976 = vunpack.c.l.b16 %v6517
      %v7977 = vunpack.c.l.b16 %v6518
      %v7978 = vunpack.c.l.b16 %v6519
      %v7979 = vunpack.c.l.b16 %v6520
      %v7980 = vunpack.c.l.b16 %v6521
      %v7981 = vunpack.c.l.b16 %v6522
      %v7982 = vunpack.c.l.b16 %v6523
      %v7983 = vunpack.c.l.b16 %v6524
      %v7984 = vunpack.c.l.b16 %v6525
      %v7985 = vunpack.c.l.b16 %v6526
      %v7986 = vunpack.c.l.b16 %v6527
      %v7987 = vunpack.c.l.b16 %v6528
      %v7988 = vunpack.c.l.b16 %v6529
      %v7989 = vunpack.c.l.b16 %v6530
      %v7990 = vunpack.c.l.b16 %v6531
      %v7991 = vunpack.c.l.b16 %v6532
      %v7992 = vunpack.c.l.b16 %v6533
      %v7993 = vunpack.c.l.b16 %v6534
      %v7994 = vunpack.c.l.b16 %v6535
      %v7995 = vunpack.c.l.b16 %v6536
      %v7996 = vunpack.c.l.b16 %v6537
      %v7997 = vunpack.c.l.b16 %v6538
      %v7998 = vunpack.c.l.b16 %v6539
      %v7999 = vunpack.c.l.b16 %v6540
      %v8000 = vunpack.c.l.b16 %v6541
      %v8001 = vunpack.c.l.b16 %v6542
      %v8002 = vunpack.c.l.b16 %v6543
      %v8003 = vunpack.c.l.b16 %v6544
      %v8004 = vunpack.c.l.b16 %v6545
      %v8005 = vunpack.c.l.b16 %v6546
      %v8006 = vunpack.c.l.b16 %v6547
      %v8007 = vunpack.c.l.b16 %v6548
      %v8008 = vpack.c.b16 %v7961, %v7960
      %v8009 = vpack.c.b16 %v7963, %v7962
      %v8010 = vpack.c.b16 %v7965, %v7964
      %v8011 = vpack.c.b16 %v7967, %v7966
      %v8012 = vpack.c.b16 %v7969, %v7968
      %v8013 = vpack.c.b16 %v7971, %v7970
      %v8014 = vpack.c.b16 %v7973, %v7972
      %v8015 = vpack.c.b16 %v7975, %v7974
      %v8016 = vpack.c.b16 %v7977, %v7976
      %v8017 = vpack.c.b16 %v7979, %v7978
      %v8018 = vpack.c.b16 %v7981, %v7980
      %v8019 = vpack.c.b16 %v7983, %v7982
      %v8020 = vpack.c.b16 %v7985, %v7984
      %v8021 = vpack.c.b16 %v7987, %v7986
      %v8022 = vpack.c.b16 %v7989, %v7988
      %v8023 = vpack.c.b16 %v7991, %v7990
      %v8024 = vpack.c.b16 %v7993, %v7992
      %v8025 = vpack.c.b16 %v7995, %v7994
      %v8026 = vpack.c.b16 %v7997, %v7996
      %v8027 = vpack.c.b16 %v7999, %v7998
      %v8028 = vpack.c.b16 %v8001, %v8000
      %v8029 = vpack.c.b16 %v8003, %v8002
      %v8030 = vpack.c.b16 %v8005, %v8004
      %v8031 = vpack.c.b16 %v8007, %v8006
      %8056 = vmatprep.subr.bf16.mxu0 0
      %8057 = vmatpush1.bf16.msra.mxu0 %v8008
      %8058 = vmatprep.subr.bf16.mxu0 0
      %8059 = vmatpush1.bf16.msra.mxu0 %v8009
      %8060 = vmatprep.subr.bf16.mxu0 0
      %8061 = vmatpush1.bf16.msra.mxu0 %v8010
      %8062 = vmatprep.subr.bf16.mxu0 0
      %8063 = vmatpush1.bf16.msra.mxu0 %v8011
      %8064 = vmatprep.subr.bf16.mxu0 0
      %8065 = vmatpush1.bf16.msra.mxu0 %v8012
      %8066 = vmatprep.subr.bf16.mxu0 0
      %8067 = vmatpush1.bf16.msra.mxu0 %v8013
      %8068 = vmatprep.subr.bf16.mxu0 0
      %8069 = vmatpush1.bf16.msra.mxu0 %v8014
      %8070 = vmatprep.subr.bf16.mxu0 0
      %8071 = vmatpush1.bf16.msra.mxu0 %v8015
      %8072 = vmatprep.subr.bf16.mxu0 0
      %8073 = vmatpush1.bf16.msra.mxu0 %v8016
      %8074 = vmatprep.subr.bf16.mxu0 0
      %8075 = vmatpush1.bf16.msra.mxu0 %v8017
      %8076 = vmatprep.subr.bf16.mxu0 0
      %8077 = vmatpush1.bf16.msra.mxu0 %v8018
      %8078 = vmatprep.subr.bf16.mxu0 0
      %8079 = vmatpush1.bf16.msra.mxu0 %v8019
      %8080 = vmatprep.subr.bf16.mxu0 0
      %8081 = vmatpush1.bf16.msra.mxu0 %v8020
      %8082 = vmatprep.subr.bf16.mxu0 0
      %8083 = vmatpush1.bf16.msra.mxu0 %v8021
      %8084 = vmatprep.subr.bf16.mxu0 0
      %8085 = vmatpush1.bf16.msra.mxu0 %v8022
      %8086 = vmatprep.subr.bf16.mxu0 0
      %8087 = vmatpush1.bf16.msra.mxu0 %v8023
      %8088 = vmatprep.mubr.bf16.mxu0 %v6454
      %8089 = vmatmul.mubr.bf16.gmra.mrb[0].mxu0 %v6453
      %v8090 = vpop.f32.mrb[0].mxu0
      %v8091 = vadd.f32 %v7786, %v8090
      %v8092 = vpop.f32.mrb[0].mxu0
      %v8093 = vpop.f32.mrb[0].mxu0
      %v8094 = vadd.f32 %v7789, %v8093
      %v8095 = vpop.f32.mrb[0].mxu0
      %8096 = vmatprep.mubr.bf16.mxu0 %v6457
      %8097 = vmatmul.mubr.bf16.gmra.mrb[0].mxu0 %v6456
      %v8098 = vpop.f32.mrb[0].mxu0
      %v8099 = vadd.f32 %v7794, %v8098
      %v8100 = vpop.f32.mrb[0].mxu0
      %v8101 = vpop.f32.mrb[0].mxu0
      %v8102 = vadd.f32 %v7797, %v8101
      %v8103 = vpop.f32.mrb[0].mxu0
      %8104 = vmatprep.mubr.bf16.mxu0 %v6460
      %8105 = vmatmul.mubr.bf16.gmra.mrb[0].mxu0 %v6459
      %v8106 = vpop.f32.mrb[0].mxu0
      %v8107 = vadd.f32 %v7802, %v8106
      %v8108 = vpop.f32.mrb[0].mxu0
      %v8109 = vpop.f32.mrb[0].mxu0
      %v8110 = vadd.f32 %v7805, %v8109
      %v8111 = vpop.f32.mrb[0].mxu0
      %8112 = vmatprep.mubr.bf16.mxu0 %v6463
      %8113 = vmatmul.mubr.bf16.gmra.mrb[0].mxu0 %v6462
      %v8114 = vpop.f32.mrb[0].mxu0
      %v8115 = vadd.f32 %v7810, %v8114
      %v8116 = vpop.f32.mrb[0].mxu0
      %v8117 = vpop.f32.mrb[0].mxu0
      %v8118 = vadd.f32 %v7813, %v8117
      %v8119 = vpop.f32.mrb[0].mxu0
      %8120 = vmatprep.mubr.bf16.mxu0 %v6466
      %8121 = vmatmul.mubr.bf16.gmra.mrb[0].mxu0 %v6465
      %v8122 = vpop.f32.mrb[0].mxu0
      %v8123 = vadd.f32 %v7818, %v8122
      %v8124 = vpop.f32.mrb[0].mxu0
      %v8125 = vpop.f32.mrb[0].mxu0
      %v8126 = vadd.f32 %v7821, %v8125
      %v8127 = vpop.f32.mrb[0].mxu0
      %8128 = vmatprep.mubr.bf16.mxu0 %v6469
      %8129 = vmatmul.mubr.bf16.gmra.mrb[0].mxu0 %v6468
      %v8130 = vpop.f32.mrb[0].mxu0
      %v8131 = vadd.f32 %v7826, %v8130
      %v8132 = vpop.f32.mrb[0].mxu0
      %v8133 = vpop.f32.mrb[0].mxu0
      %v8134 = vadd.f32 %v7829, %v8133
      %v8135 = vpop.f32.mrb[0].mxu0
      %8136 = vmatprep.mubr.bf16.mxu0 %v6472
      %8137 = vmatmul.mubr.bf16.gmra.mrb[0].mxu0 %v6471
      %v8138 = vpop.f32.mrb[0].mxu0
      %v8139 = vadd.f32 %v7834, %v8138
      %v8140 = vpop.f32.mrb[0].mxu0
      %v8141 = vpop.f32.mrb[0].mxu0
      %v8142 = vadd.f32 %v7837, %v8141
      %v8143 = vpop.f32.mrb[0].mxu0
      %8144 = vmatprep.mubr.bf16.mxu0 %v6475
      %8145 = vmatmul.mubr.bf16.gmra.mrb[0].mxu0 %v6474
      %v8146 = vpop.f32.mrb[0].mxu0
      %v8147 = vadd.f32 %v7842, %v8146
      %v8148 = vpop.f32.mrb[0].mxu0
      %v8149 = vpop.f32.mrb[0].mxu0
      %v8150 = vadd.f32 %v7845, %v8149
      %v8151 = vpop.f32.mrb[0].mxu0
      %8152 = vmatprep.mubr.bf16.mxu0 %v6478
      %8153 = vmatmul.mubr.bf16.gmra.mrb[0].mxu0 %v6477
      %v8154 = vpop.f32.mrb[0].mxu0
      %v8155 = vadd.f32 %v7850, %v8154
      %v8156 = vpop.f32.mrb[0].mxu0
      %v8157 = vpop.f32.mrb[0].mxu0
      %v8158 = vadd.f32 %v7853, %v8157
      %v8159 = vpop.f32.mrb[0].mxu0
      %8160 = vmatprep.mubr.bf16.mxu0 %v6481
      %8161 = vmatmul.mubr.bf16.gmra.mrb[0].mxu0 %v6480
      %v8162 = vpop.f32.mrb[0].mxu0
      %v8163 = vadd.f32 %v7858, %v8162
      %v8164 = vpop.f32.mrb[0].mxu0
      %v8165 = vpop.f32.mrb[0].mxu0
      %v8166 = vadd.f32 %v7861, %v8165
      %v8167 = vpop.f32.mrb[0].mxu0
      %8168 = vmatprep.mubr.bf16.mxu0 %v6484
      %8169 = vmatmul.mubr.bf16.gmra.mrb[0].mxu0 %v6483
      %v8170 = vpop.f32.mrb[0].mxu0
      %v8171 = vadd.f32 %v7866, %v8170
      %v8172 = vpop.f32.mrb[0].mxu0
      %v8173 = vpop.f32.mrb[0].mxu0
      %v8174 = vadd.f32 %v7869, %v8173
      %v8175 = vpop.f32.mrb[0].mxu0
      %8176 = vmatprep.mubr.bf16.mxu0 %v6487
      %8177 = vmatmul.mubr.bf16.gmra.mrb[0].mxu0 %v6486
      %v8178 = vpop.f32.mrb[0].mxu0
      %v8179 = vadd.f32 %v7874, %v8178
      %v8180 = vpop.f32.mrb[0].mxu0
      %v8181 = vpop.f32.mrb[0].mxu0
      %v8182 = vadd.f32 %v7877, %v8181
      %v8183 = vpop.f32.mrb[0].mxu0
      %8184 = vmatprep.mubr.bf16.mxu0 %v6490
      %8185 = vmatmul.mubr.bf16.gmra.mrb[0].mxu0 %v6489
      %v8186 = vpop.f32.mrb[0].mxu0
      %v8187 = vadd.f32 %v7882, %v8186
      %v8188 = vpop.f32.mrb[0].mxu0
      %v8189 = vpop.f32.mrb[0].mxu0
      %v8190 = vadd.f32 %v7885, %v8189
      %v8191 = vpop.f32.mrb[0].mxu0
      %8192 = vmatprep.mubr.bf16.mxu0 %v6493
      %8193 = vmatmul.mubr.bf16.gmra.mrb[0].mxu0 %v6492
      %v8194 = vpop.f32.mrb[0].mxu0
      %v8195 = vadd.f32 %v7890, %v8194
      %v8196 = vpop.f32.mrb[0].mxu0
      %v8197 = vpop.f32.mrb[0].mxu0
      %v8198 = vadd.f32 %v7893, %v8197
      %v8199 = vpop.f32.mrb[0].mxu0
      %8200 = vmatprep.mubr.bf16.mxu0 %v6496
      %8201 = vmatmul.mubr.bf16.gmra.mrb[0].mxu0 %v6495
      %v8202 = vpop.f32.mrb[0].mxu0
      %v8203 = vadd.f32 %v7898, %v8202
      %v8204 = vpop.f32.mrb[0].mxu0
      %v8205 = vpop.f32.mrb[0].mxu0
      %v8206 = vadd.f32 %v7901, %v8205
      %v8207 = vpop.f32.mrb[0].mxu0
      %8208 = vmatprep.mubr.bf16.mxu0 %v6499
      %8209 = vmatmul.mubr.bf16.gmra.mrb[0].mxu0 %v6498
      %v8210 = vpop.f32.mrb[0].mxu0
      %v8211 = vadd.f32 %v7906, %v8210
      %v8212 = vpop.f32.mrb[0].mxu0
      %v8213 = vpop.f32.mrb[0].mxu0
      %v8214 = vadd.f32 %v7909, %v8213
      %v8215 = vpop.f32.mrb[0].mxu0
      %8216 = vdwg.mxu0
      %8217 = vmatprep.subr.bf16.mxu0 0
      %8218 = vmatpush1.bf16.msra.mxu0 %v8024
      %8219 = vmatprep.subr.bf16.mxu0 0
      %8220 = vmatpush1.bf16.msra.mxu0 %v8025
      %8221 = vmatprep.subr.bf16.mxu0 0
      %8222 = vmatpush1.bf16.msra.mxu0 %v8026
      %8223 = vmatprep.subr.bf16.mxu0 0
      %8224 = vmatpush1.bf16.msra.mxu0 %v8027
      %8225 = vmatprep.subr.bf16.mxu0 0
      %8226 = vmatpush1.bf16.msra.mxu0 %v8028
      %8227 = vmatprep.subr.bf16.mxu0 0
      %8228 = vmatpush1.bf16.msra.mxu0 %v8029
      %8229 = vmatprep.subr.bf16.mxu0 0
      %8230 = vmatpush1.bf16.msra.mxu0 %v8030
      %8231 = vmatprep.subr.bf16.mxu0 0
      %8232 = vmatpush1.bf16.msra.mxu0 %v8031
      %8233 = vmatprep.subr.bf16.mxu0 0
      %8234 = vmatpush1.bf16.msra.mxu0 0
      %8235 = vmatprep.subr.bf16.mxu0 0
      %8236 = vmatpush1.bf16.msra.mxu0 0
      %8237 = vmatprep.subr.bf16.mxu0 0
      %8238 = vmatpush1.bf16.msra.mxu0 0
      %8239 = vmatprep.subr.bf16.mxu0 0
      %8240 = vmatpush1.bf16.msra.mxu0 0
      %8241 = vmatprep.subr.bf16.mxu0 0
      %8242 = vmatpush1.bf16.msra.mxu0 0
      %8243 = vmatprep.subr.bf16.mxu0 0
      %8244 = vmatpush1.bf16.msra.mxu0 0
      %8245 = vmatprep.subr.bf16.mxu0 0
      %8246 = vmatpush1.bf16.msra.mxu0 0
      %8247 = vmatprep.subr.bf16.mxu0 0
      %8248 = vmatpush1.bf16.msra.mxu0 0
      %8249 = vmatprep.mubr.bf16.mxu0 0
      %8250 = vmatmul.mubr.bf16.gmra.mrb[0].mxu0 %v6455
      %v8251 = vpop.f32.mrb[0].mxu0
      %v8252 = vadd.f32 %v8091, %v8251
      %v8253 = vpop.f32.mrb[0].mxu0
      %v8254 = vpop.f32.mrb[0].mxu0
      %v8255 = vadd.f32 %v8094, %v8254
      %v8256 = vpop.f32.mrb[0].mxu0
      %8257 = vmatprep.mubr.bf16.mxu0 0
      %8258 = vmatmul.mubr.bf16.gmra.mrb[0].mxu0 %v6458
      %v8259 = vpop.f32.mrb[0].mxu0
      %v8260 = vadd.f32 %v8099, %v8259
      %v8261 = vpop.f32.mrb[0].mxu0
      %v8262 = vpop.f32.mrb[0].mxu0
      %v8263 = vadd.f32 %v8102, %v8262
      %v8264 = vpop.f32.mrb[0].mxu0
      %8265 = vmatprep.mubr.bf16.mxu0 0
      %8266 = vmatmul.mubr.bf16.gmra.mrb[0].mxu0 %v6461
      %v8267 = vpop.f32.mrb[0].mxu0
      %v8268 = vadd.f32 %v8107, %v8267
      %v8269 = vpop.f32.mrb[0].mxu0
      %v8270 = vpop.f32.mrb[0].mxu0
      %v8271 = vadd.f32 %v8110, %v8270
      %v8272 = vpop.f32.mrb[0].mxu0
      %8273 = vmatprep.mubr.bf16.mxu0 0
      %8274 = vmatmul.mubr.bf16.gmra.mrb[0].mxu0 %v6464
      %v8275 = vpop.f32.mrb[0].mxu0
      %v8276 = vadd.f32 %v8115, %v8275
      %v8277 = vpop.f32.mrb[0].mxu0
      %v8278 = vpop.f32.mrb[0].mxu0
      %v8279 = vadd.f32 %v8118, %v8278
      %v8280 = vpop.f32.mrb[0].mxu0
      %8281 = vmatprep.mubr.bf16.mxu0 0
      %8282 = vmatmul.mubr.bf16.gmra.mrb[0].mxu0 %v6467
      %v8283 = vpop.f32.mrb[0].mxu0
      %v8284 = vadd.f32 %v8123, %v8283
      %v8285 = vpop.f32.mrb[0].mxu0
      %v8286 = vpop.f32.mrb[0].mxu0
      %v8287 = vadd.f32 %v8126, %v8286
      %v8288 = vpop.f32.mrb[0].mxu0
      %8289 = vmatprep.mubr.bf16.mxu0 0
      %8290 = vmatmul.mubr.bf16.gmra.mrb[0].mxu0 %v6470
      %v8291 = vpop.f32.mrb[0].mxu0
      %v8292 = vadd.f32 %v8131, %v8291
      %v8293 = vpop.f32.mrb[0].mxu0
      %v8294 = vpop.f32.mrb[0].mxu0
      %v8295 = vadd.f32 %v8134, %v8294
      %v8296 = vpop.f32.mrb[0].mxu0
      %8297 = vmatprep.mubr.bf16.mxu0 0
      %8298 = vmatmul.mubr.bf16.gmra.mrb[0].mxu0 %v6473
      %v8299 = vpop.f32.mrb[0].mxu0
      %v8300 = vadd.f32 %v8139, %v8299
      %v8301 = vpop.f32.mrb[0].mxu0
      %v8302 = vpop.f32.mrb[0].mxu0
      %v8303 = vadd.f32 %v8142, %v8302
      %v8304 = vpop.f32.mrb[0].mxu0
      %8305 = vmatprep.mubr.bf16.mxu0 0
      %8306 = vmatmul.mubr.bf16.gmra.mrb[0].mxu0 %v6476
      %v8307 = vpop.f32.mrb[0].mxu0
      %v8308 = vadd.f32 %v8147, %v8307
      %v8309 = vpop.f32.mrb[0].mxu0
      %v8310 = vpop.f32.mrb[0].mxu0
      %v8311 = vadd.f32 %v8150, %v8310
      %v8312 = vpop.f32.mrb[0].mxu0
      %8313 = vmatprep.mubr.bf16.mxu0 0
      %8314 = vmatmul.mubr.bf16.gmra.mrb[0].mxu0 %v6479
      %v8315 = vpop.f32.mrb[0].mxu0
      %v8316 = vadd.f32 %v8155, %v8315
      %v8317 = vpop.f32.mrb[0].mxu0
      %v8318 = vpop.f32.mrb[0].mxu0
      %v8319 = vadd.f32 %v8158, %v8318
      %v8320 = vpop.f32.mrb[0].mxu0
      %8321 = vmatprep.mubr.bf16.mxu0 0
      %8322 = vmatmul.mubr.bf16.gmra.mrb[0].mxu0 %v6482
      %v8323 = vpop.f32.mrb[0].mxu0
      %v8324 = vadd.f32 %v8163, %v8323
      %v8325 = vpop.f32.mrb[0].mxu0
      %v8326 = vpop.f32.mrb[0].mxu0
      %v8327 = vadd.f32 %v8166, %v8326
      %v8328 = vpop.f32.mrb[0].mxu0
      %8329 = vmatprep.mubr.bf16.mxu0 0
      %8330 = vmatmul.mubr.bf16.gmra.mrb[0].mxu0 %v6485
      %v8331 = vpop.f32.mrb[0].mxu0
      %v8332 = vadd.f32 %v8171, %v8331
      %v8333 = vpop.f32.mrb[0].mxu0
      %v8334 = vpop.f32.mrb[0].mxu0
      %v8335 = vadd.f32 %v8174, %v8334
      %v8336 = vpop.f32.mrb[0].mxu0
      %8337 = vmatprep.mubr.bf16.mxu0 0
      %8338 = vmatmul.mubr.bf16.gmra.mrb[0].mxu0 %v6488
      %v8339 = vpop.f32.mrb[0].mxu0
      %v8340 = vadd.f32 %v8179, %v8339
      %v8341 = vpop.f32.mrb[0].mxu0
      %v8342 = vpop.f32.mrb[0].mxu0
      %v8343 = vadd.f32 %v8182, %v8342
      %v8344 = vpop.f32.mrb[0].mxu0
      %8345 = vmatprep.mubr.bf16.mxu0 0
      %8346 = vmatmul.mubr.bf16.gmra.mrb[0].mxu0 %v6491
      %v8347 = vpop.f32.mrb[0].mxu0
      %v8348 = vadd.f32 %v8187, %v8347
      %v8349 = vpop.f32.mrb[0].mxu0
      %v8350 = vpop.f32.mrb[0].mxu0
      %v8351 = vadd.f32 %v8190, %v8350
      %v8352 = vpop.f32.mrb[0].mxu0
      %8353 = vmatprep.mubr.bf16.mxu0 0
      %8354 = vmatmul.mubr.bf16.gmra.mrb[0].mxu0 %v6494
      %v8355 = vpop.f32.mrb[0].mxu0
      %v8356 = vadd.f32 %v8195, %v8355
      %v8357 = vpop.f32.mrb[0].mxu0
      %v8358 = vpop.f32.mrb[0].mxu0
      %v8359 = vadd.f32 %v8198, %v8358
      %v8360 = vpop.f32.mrb[0].mxu0
      %8361 = vmatprep.mubr.bf16.mxu0 0
      %8362 = vmatmul.mubr.bf16.gmra.mrb[0].mxu0 %v6497
      %v8363 = vpop.f32.mrb[0].mxu0
      %v8364 = vadd.f32 %v8203, %v8363
      %v8365 = vpop.f32.mrb[0].mxu0
      %v8366 = vpop.f32.mrb[0].mxu0
      %v8367 = vadd.f32 %v8206, %v8366
      %v8368 = vpop.f32.mrb[0].mxu0
      %8369 = vmatprep.mubr.bf16.mxu0 0
      %8370 = vmatmul.mubr.bf16.gmra.mrb[0].mxu0 %v6500
      %v8371 = vpop.f32.mrb[0].mxu0
      %v8372 = vadd.f32 %v8211, %v8371
      %v8373 = vpop.f32.mrb[0].mxu0
      %v8374 = vpop.f32.mrb[0].mxu0
      %v8375 = vadd.f32 %v8214, %v8374
      %v8376 = vpop.f32.mrb[0].mxu0
      %8377 = vdwg.mxu0
      %s8378 = smul.addr %s3619, 4
      %s8379 = scalar_lea.vmem [#allocation3], %s8378
      %v8380 = vld [vmem:[%s8379] sm:$0xf]
      %v8381 = vld [vmem:[%s8379 + $0x4] sm:$0xf]
      %v8382 = vld [vmem:[%s8379 + $0xc] sm:$0xf]
      %v8383 = vld [vmem:[%s8379 + $0x10] sm:$0xf]
      %v8384 = vld [vmem:[%s8379 + $0x18] sm:$0xf]
      %v8385 = vld [vmem:[%s8379 + $0x1c] sm:$0xf]
      %v8386 = vld [vmem:[%s8379 + $0x24] sm:$0xf]
      %v8387 = vld [vmem:[%s8379 + $0x28] sm:$0xf]
      %v8388 = vld [vmem:[%s8379 + $0x30] sm:$0xf]
      %v8389 = vld [vmem:[%s8379 + $0x34] sm:$0xf]
      %v8390 = vld [vmem:[%s8379 + $0x3c] sm:$0xf]
      %v8391 = vld [vmem:[%s8379 + $0x40] sm:$0xf]
      %v8392 = vld [vmem:[%s8379 + $0x48] sm:$0xf]
      %v8393 = vld [vmem:[%s8379 + $0x4c] sm:$0xf]
      %v8394 = vld [vmem:[%s8379 + $0x54] sm:$0xf]
      %v8395 = vld [vmem:[%s8379 + $0x58] sm:$0xf]
      %v8396 = vld [vmem:[%s8379 + $0x60] sm:$0xf]
      %v8397 = vld [vmem:[%s8379 + $0x64] sm:$0xf]
      %v8398 = vld [vmem:[%s8379 + $0x6c] sm:$0xf]
      %v8399 = vld [vmem:[%s8379 + $0x70] sm:$0xf]
      %v8400 = vld [vmem:[%s8379 + $0x78] sm:$0xf]
      %v8401 = vld [vmem:[%s8379 + $0x7c] sm:$0xf]
      %v8402 = vld [vmem:[%s8379 + $0x84] sm:$0xf]
      %v8403 = vld [vmem:[%s8379 + $0x88] sm:$0xf]
      %v8404 = vld [vmem:[%s8379 + $0x90] sm:$0xf]
      %v8405 = vld [vmem:[%s8379 + $0x94] sm:$0xf]
      %v8406 = vld [vmem:[%s8379 + $0x9c] sm:$0xf]
      %v8407 = vld [vmem:[%s8379 + $0xa0] sm:$0xf]
      %v8408 = vld [vmem:[%s8379 + $0xa8] sm:$0xf]
      %v8409 = vld [vmem:[%s8379 + $0xac] sm:$0xf]
      %v8410 = vld [vmem:[%s8379 + $0xb4] sm:$0xf]
      %v8411 = vld [vmem:[%s8379 + $0xb8] sm:$0xf]
      %v8444 = vunpack.c.l.b16 %v8380
      %v8445 = vunpack.c.l.b16 %v8381
      %v8446 = vunpack.c.l.b16 %v8382
      %v8447 = vunpack.c.l.b16 %v8383
      %v8448 = vunpack.c.l.b16 %v8384
      %v8449 = vunpack.c.l.b16 %v8385
      %v8450 = vunpack.c.l.b16 %v8386
      %v8451 = vunpack.c.l.b16 %v8387
      %v8452 = vunpack.c.l.b16 %v8388
      %v8453 = vunpack.c.l.b16 %v8389
      %v8454 = vunpack.c.l.b16 %v8390
      %v8455 = vunpack.c.l.b16 %v8391
      %v8456 = vunpack.c.l.b16 %v8392
      %v8457 = vunpack.c.l.b16 %v8393
      %v8458 = vunpack.c.l.b16 %v8394
      %v8459 = vunpack.c.l.b16 %v8395
      %v8460 = vunpack.c.l.b16 %v8396
      %v8461 = vunpack.c.l.b16 %v8397
      %v8462 = vunpack.c.l.b16 %v8398
      %v8463 = vunpack.c.l.b16 %v8399
      %v8464 = vunpack.c.l.b16 %v8400
      %v8465 = vunpack.c.l.b16 %v8401
      %v8466 = vunpack.c.l.b16 %v8402
      %v8467 = vunpack.c.l.b16 %v8403
      %v8468 = vunpack.c.l.b16 %v8404
      %v8469 = vunpack.c.l.b16 %v8405
      %v8470 = vunpack.c.l.b16 %v8406
      %v8471 = vunpack.c.l.b16 %v8407
      %v8472 = vunpack.c.l.b16 %v8408
      %v8473 = vunpack.c.l.b16 %v8409
      %v8474 = vunpack.c.l.b16 %v8410
      %v8475 = vunpack.c.l.b16 %v8411
      %v8476 = vpack.c.b16 %v8445, %v8444
      %v8477 = vpack.c.b16 %v8447, %v8446
      %v8478 = vpack.c.b16 %v8449, %v8448
      %v8479 = vpack.c.b16 %v8451, %v8450
      %v8480 = vpack.c.b16 %v8453, %v8452
      %v8481 = vpack.c.b16 %v8455, %v8454
      %v8482 = vpack.c.b16 %v8457, %v8456
      %v8483 = vpack.c.b16 %v8459, %v8458
      %v8484 = vpack.c.b16 %v8461, %v8460
      %v8485 = vpack.c.b16 %v8463, %v8462
      %v8486 = vpack.c.b16 %v8465, %v8464
      %v8487 = vpack.c.b16 %v8467, %v8466
      %v8488 = vpack.c.b16 %v8469, %v8468
      %v8489 = vpack.c.b16 %v8471, %v8470
      %v8490 = vpack.c.b16 %v8473, %v8472
      %v8491 = vpack.c.b16 %v8475, %v8474
      %8508 = vst [vmem:[#allocation4] sm:$0xff] %v8476
      %8509 = vst [vmem:[#allocation4 + $0x18] sm:$0xff] %v8477
      %8510 = vst [vmem:[#allocation4 + $0x30] sm:$0xff] %v8478
      %8511 = vst [vmem:[#allocation4 + $0x48] sm:$0xff] %v8479
      %8512 = vst [vmem:[#allocation4 + $0x60] sm:$0xff] %v8480
      %8513 = vst [vmem:[#allocation4 + $0x78] sm:$0xff] %v8481
      %8514 = vst [vmem:[#allocation4 + $0x90] sm:$0xff] %v8482
      %8515 = vst [vmem:[#allocation4 + $0xa8] sm:$0xff] %v8483
      %8516 = vst [vmem:[#allocation4 + $0xc0] sm:$0xff] %v8484
      %8517 = vst [vmem:[#allocation4 + $0xd8] sm:$0xff] %v8485
      %8518 = vst [vmem:[#allocation4 + $0xf0] sm:$0xff] %v8486
      %8519 = vst [vmem:[#allocation4 + $0x108] sm:$0xff] %v8487
      %8520 = vst [vmem:[#allocation4 + $0x120] sm:$0xff] %v8488
      %8521 = vst [vmem:[#allocation4 + $0x138] sm:$0xff] %v8489
      %8522 = vst [vmem:[#allocation4 + $0x150] sm:$0xff] %v8490
      %8523 = vst [vmem:[#allocation4 + $0x168] sm:$0xff] %v8491
      %v8524 = vld [vmem:[%s8379] sm:$0xf]
      %v8525 = vld [vmem:[%s8379 + $0x4] sm:$0xf]
      %v8526 = vld [vmem:[%s8379 + $0x8] sm:$0x1]
      %v8527 = vld [vmem:[%s8379 + $0xc] sm:$0xf]
      %v8528 = vld [vmem:[%s8379 + $0x10] sm:$0xf]
      %v8529 = vld [vmem:[%s8379 + $0x14] sm:$0x1]
      %v8530 = vld [vmem:[%s8379 + $0x18] sm:$0xf]
      %v8531 = vld [vmem:[%s8379 + $0x1c] sm:$0xf]
      %v8532 = vld [vmem:[%s8379 + $0x20] sm:$0x1]
      %v8533 = vld [vmem:[%s8379 + $0x24] sm:$0xf]
      %v8534 = vld [vmem:[%s8379 + $0x28] sm:$0xf]
      %v8535 = vld [vmem:[%s8379 + $0x2c] sm:$0x1]
      %v8536 = vld [vmem:[%s8379 + $0x30] sm:$0xf]
      %v8537 = vld [vmem:[%s8379 + $0x34] sm:$0xf]
      %v8538 = vld [vmem:[%s8379 + $0x38] sm:$0x1]
      %v8539 = vld [vmem:[%s8379 + $0x3c] sm:$0xf]
      %v8540 = vld [vmem:[%s8379 + $0x40] sm:$0xf]
      %v8541 = vld [vmem:[%s8379 + $0x44] sm:$0x1]
      %v8542 = vld [vmem:[%s8379 + $0x48] sm:$0xf]
      %v8543 = vld [vmem:[%s8379 + $0x4c] sm:$0xf]
      %v8544 = vld [vmem:[%s8379 + $0x50] sm:$0x1]
      %v8545 = vld [vmem:[%s8379 + $0x54] sm:$0xf]
      %v8546 = vld [vmem:[%s8379 + $0x58] sm:$0xf]
      %v8547 = vld [vmem:[%s8379 + $0x5c] sm:$0x1]
      %v8548 = vld [vmem:[%s8379 + $0x60] sm:$0xf]
      %v8549 = vld [vmem:[%s8379 + $0x64] sm:$0xf]
      %v8550 = vld [vmem:[%s8379 + $0x68] sm:$0x1]
      %v8551 = vld [vmem:[%s8379 + $0x6c] sm:$0xf]
      %v8552 = vld [vmem:[%s8379 + $0x70] sm:$0xf]
      %v8553 = vld [vmem:[%s8379 + $0x74] sm:$0x1]
      %v8554 = vld [vmem:[%s8379 + $0x78] sm:$0xf]
      %v8555 = vld [vmem:[%s8379 + $0x7c] sm:$0xf]
      %v8556 = vld [vmem:[%s8379 + $0x80] sm:$0x1]
      %v8557 = vld [vmem:[%s8379 + $0x84] sm:$0xf]
      %v8558 = vld [vmem:[%s8379 + $0x88] sm:$0xf]
      %v8559 = vld [vmem:[%s8379 + $0x8c] sm:$0x1]
      %v8560 = vld [vmem:[%s8379 + $0x90] sm:$0xf]
      %v8561 = vld [vmem:[%s8379 + $0x94] sm:$0xf]
      %v8562 = vld [vmem:[%s8379 + $0x98] sm:$0x1]
      %v8563 = vld [vmem:[%s8379 + $0x9c] sm:$0xf]
      %v8564 = vld [vmem:[%s8379 + $0xa0] sm:$0xf]
      %v8565 = vld [vmem:[%s8379 + $0xa4] sm:$0x1]
      %v8566 = vld [vmem:[%s8379 + $0xa8] sm:$0xf]
      %v8567 = vld [vmem:[%s8379 + $0xac] sm:$0xf]
      %v8568 = vld [vmem:[%s8379 + $0xb0] sm:$0x1]
      %v8569 = vld [vmem:[%s8379 + $0xb4] sm:$0xf]
      %v8570 = vld [vmem:[%s8379 + $0xb8] sm:$0xf]
      %v8571 = vld [vmem:[%s8379 + $0xbc] sm:$0x1]
      %v8620 = vunpack.c.l.b16 %v8524
      %v8621 = vunpack.c.l.b16 %v8525
      %v8622 = vunpack.c.l.b16 %v8526
      %v8623 = vunpack.c.l.b16 %v8527
      %v8624 = vunpack.c.l.b16 %v8528
      %v8625 = vunpack.c.l.b16 %v8529
      %v8626 = vunpack.c.l.b16 %v8530
      %v8627 = vunpack.c.l.b16 %v8531
      %v8628 = vunpack.c.l.b16 %v8532
      %v8629 = vunpack.c.l.b16 %v8533
      %v8630 = vunpack.c.l.b16 %v8534
      %v8631 = vunpack.c.l.b16 %v8535
      %v8632 = vunpack.c.l.b16 %v8536
      %v8633 = vunpack.c.l.b16 %v8537
      %v8634 = vunpack.c.l.b16 %v8538
      %v8635 = vunpack.c.l.b16 %v8539
      %v8636 = vunpack.c.l.b16 %v8540
      %v8637 = vunpack.c.l.b16 %v8541
      %v8638 = vunpack.c.l.b16 %v8542
      %v8639 = vunpack.c.l.b16 %v8543
      %v8640 = vunpack.c.l.b16 %v8544
      %v8641 = vunpack.c.l.b16 %v8545
      %v8642 = vunpack.c.l.b16 %v8546
      %v8643 = vunpack.c.l.b16 %v8547
      %v8644 = vunpack.c.l.b16 %v8548
      %v8645 = vunpack.c.l.b16 %v8549
      %v8646 = vunpack.c.l.b16 %v8550
      %v8647 = vunpack.c.l.b16 %v8551
      %v8648 = vunpack.c.l.b16 %v8552
      %v8649 = vunpack.c.l.b16 %v8553
      %v8650 = vunpack.c.l.b16 %v8554
      %v8651 = vunpack.c.l.b16 %v8555
      %v8652 = vunpack.c.l.b16 %v8556
      %v8653 = vunpack.c.l.b16 %v8557
      %v8654 = vunpack.c.l.b16 %v8558
      %v8655 = vunpack.c.l.b16 %v8559
      %v8656 = vunpack.c.l.b16 %v8560
      %v8657 = vunpack.c.l.b16 %v8561
      %v8658 = vunpack.c.l.b16 %v8562
      %v8659 = vunpack.c.l.b16 %v8563
      %v8660 = vunpack.c.l.b16 %v8564
      %v8661 = vunpack.c.l.b16 %v8565
      %v8662 = vunpack.c.l.b16 %v8566
      %v8663 = vunpack.c.l.b16 %v8567
      %v8664 = vunpack.c.l.b16 %v8568
      %v8665 = vunpack.c.l.b16 %v8569
      %v8666 = vunpack.c.l.b16 %v8570
      %v8667 = vunpack.c.l.b16 %v8571
      %v8668 = vpack.c.b16 %v8621, %v8620
      %v8669 = vpack.c.b16 %v8622, %v8622
      %v8670 = vpack.c.b16 %v8624, %v8623
      %v8671 = vpack.c.b16 %v8625, %v8625
      %v8672 = vpack.c.b16 %v8627, %v8626
      %v8673 = vpack.c.b16 %v8628, %v8628
      %v8674 = vpack.c.b16 %v8630, %v8629
      %v8675 = vpack.c.b16 %v8631, %v8631
      %v8676 = vpack.c.b16 %v8633, %v8632
      %v8677 = vpack.c.b16 %v8634, %v8634
      %v8678 = vpack.c.b16 %v8636, %v8635
      %v8679 = vpack.c.b16 %v8637, %v8637
      %v8680 = vpack.c.b16 %v8639, %v8638
      %v8681 = vpack.c.b16 %v8640, %v8640
      %v8682 = vpack.c.b16 %v8642, %v8641
      %v8683 = vpack.c.b16 %v8643, %v8643
      %v8684 = vpack.c.b16 %v8645, %v8644
      %v8685 = vpack.c.b16 %v8646, %v8646
      %v8686 = vpack.c.b16 %v8648, %v8647
      %v8687 = vpack.c.b16 %v8649, %v8649
      %v8688 = vpack.c.b16 %v8651, %v8650
      %v8689 = vpack.c.b16 %v8652, %v8652
      %v8690 = vpack.c.b16 %v8654, %v8653
      %v8691 = vpack.c.b16 %v8655, %v8655
      %v8692 = vpack.c.b16 %v8657, %v8656
      %v8693 = vpack.c.b16 %v8658, %v8658
      %v8694 = vpack.c.b16 %v8660, %v8659
      %v8695 = vpack.c.b16 %v8661, %v8661
      %v8696 = vpack.c.b16 %v8663, %v8662
      %v8697 = vpack.c.b16 %v8664, %v8664
      %v8698 = vpack.c.b16 %v8666, %v8665
      %v8699 = vpack.c.b16 %v8667, %v8667
      %v8701 = vshrl.u32 %v8668, 16
      %v8703 = vshll.u32 %v8668, 16
      %v8705 = vrot.slane %v8703, 1
      %v8706 = vor.u32 %v8701, %v8705
      %v8708 = vshll.u32 %v8669, 16
      %v8710 = vrot.slane %v8708, 1
      %v8711 = vsel %vm1207, %v8706, %v8710
      %v8713 = vshrl.u32 %v8670, 16
      %v8715 = vshll.u32 %v8670, 16
      %v8717 = vrot.slane %v8715, 1
      %v8718 = vor.u32 %v8713, %v8717
      %v8720 = vshll.u32 %v8671, 16
      %v8722 = vrot.slane %v8720, 1
      %v8723 = vsel %vm1207, %v8718, %v8722
      %v8725 = vshrl.u32 %v8672, 16
      %v8727 = vshll.u32 %v8672, 16
      %v8729 = vrot.slane %v8727, 1
      %v8730 = vor.u32 %v8725, %v8729
      %v8732 = vshll.u32 %v8673, 16
      %v8734 = vrot.slane %v8732, 1
      %v8735 = vsel %vm1207, %v8730, %v8734
      %v8737 = vshrl.u32 %v8674, 16
      %v8739 = vshll.u32 %v8674, 16
      %v8741 = vrot.slane %v8739, 1
      %v8742 = vor.u32 %v8737, %v8741
      %v8744 = vshll.u32 %v8675, 16
      %v8746 = vrot.slane %v8744, 1
      %v8747 = vsel %vm1207, %v8742, %v8746
      %v8749 = vshrl.u32 %v8676, 16
      %v8751 = vshll.u32 %v8676, 16
      %v8753 = vrot.slane %v8751, 1
      %v8754 = vor.u32 %v8749, %v8753
      %v8756 = vshll.u32 %v8677, 16
      %v8758 = vrot.slane %v8756, 1
      %v8759 = vsel %vm1207, %v8754, %v8758
      %v8761 = vshrl.u32 %v8678, 16
      %v8763 = vshll.u32 %v8678, 16
      %v8765 = vrot.slane %v8763, 1
      %v8766 = vor.u32 %v8761, %v8765
      %v8768 = vshll.u32 %v8679, 16
      %v8770 = vrot.slane %v8768, 1
      %v8771 = vsel %vm1207, %v8766, %v8770
      %v8773 = vshrl.u32 %v8680, 16
      %v8775 = vshll.u32 %v8680, 16
      %v8777 = vrot.slane %v8775, 1
      %v8778 = vor.u32 %v8773, %v8777
      %v8780 = vshll.u32 %v8681, 16
      %v8782 = vrot.slane %v8780, 1
      %v8783 = vsel %vm1207, %v8778, %v8782
      %v8785 = vshrl.u32 %v8682, 16
      %v8787 = vshll.u32 %v8682, 16
      %v8789 = vrot.slane %v8787, 1
      %v8790 = vor.u32 %v8785, %v8789
      %v8792 = vshll.u32 %v8683, 16
      %v8794 = vrot.slane %v8792, 1
      %v8795 = vsel %vm1207, %v8790, %v8794
      %v8797 = vshrl.u32 %v8684, 16
      %v8799 = vshll.u32 %v8684, 16
      %v8801 = vrot.slane %v8799, 1
      %v8802 = vor.u32 %v8797, %v8801
      %v8804 = vshll.u32 %v8685, 16
      %v8806 = vrot.slane %v8804, 1
      %v8807 = vsel %vm1207, %v8802, %v8806
      %v8809 = vshrl.u32 %v8686, 16
      %v8811 = vshll.u32 %v8686, 16
      %v8813 = vrot.slane %v8811, 1
      %v8814 = vor.u32 %v8809, %v8813
      %v8816 = vshll.u32 %v8687, 16
      %v8818 = vrot.slane %v8816, 1
      %v8819 = vsel %vm1207, %v8814, %v8818
      %v8821 = vshrl.u32 %v8688, 16
      %v8823 = vshll.u32 %v8688, 16
      %v8825 = vrot.slane %v8823, 1
      %v8826 = vor.u32 %v8821, %v8825
      %v8828 = vshll.u32 %v8689, 16
      %v8830 = vrot.slane %v8828, 1
      %v8831 = vsel %vm1207, %v8826, %v8830
      %v8833 = vshrl.u32 %v8690, 16
      %v8835 = vshll.u32 %v8690, 16
      %v8837 = vrot.slane %v8835, 1
      %v8838 = vor.u32 %v8833, %v8837
      %v8840 = vshll.u32 %v8691, 16
      %v8842 = vrot.slane %v8840, 1
      %v8843 = vsel %vm1207, %v8838, %v8842
      %v8845 = vshrl.u32 %v8692, 16
      %v8847 = vshll.u32 %v8692, 16
      %v8849 = vrot.slane %v8847, 1
      %v8850 = vor.u32 %v8845, %v8849
      %v8852 = vshll.u32 %v8693, 16
      %v8854 = vrot.slane %v8852, 1
      %v8855 = vsel %vm1207, %v8850, %v8854
      %v8857 = vshrl.u32 %v8694, 16
      %v8859 = vshll.u32 %v8694, 16
      %v8861 = vrot.slane %v8859, 1
      %v8862 = vor.u32 %v8857, %v8861
      %v8864 = vshll.u32 %v8695, 16
      %v8866 = vrot.slane %v8864, 1
      %v8867 = vsel %vm1207, %v8862, %v8866
      %v8869 = vshrl.u32 %v8696, 16
      %v8871 = vshll.u32 %v8696, 16
      %v8873 = vrot.slane %v8871, 1
      %v8874 = vor.u32 %v8869, %v8873
      %v8876 = vshll.u32 %v8697, 16
      %v8878 = vrot.slane %v8876, 1
      %v8879 = vsel %vm1207, %v8874, %v8878
      %v8881 = vshrl.u32 %v8698, 16
      %v8883 = vshll.u32 %v8698, 16
      %v8885 = vrot.slane %v8883, 1
      %v8886 = vor.u32 %v8881, %v8885
      %v8888 = vshll.u32 %v8699, 16
      %v8890 = vrot.slane %v8888, 1
      %v8891 = vsel %vm1207, %v8886, %v8890
      %8908 = vst [vmem:[#allocation4 + $0x8] sm:$0xff] %v8711
      %8909 = vst [vmem:[#allocation4 + $0x20] sm:$0xff] %v8723
      %8910 = vst [vmem:[#allocation4 + $0x38] sm:$0xff] %v8735
      %8911 = vst [vmem:[#allocation4 + $0x50] sm:$0xff] %v8747
      %8912 = vst [vmem:[#allocation4 + $0x68] sm:$0xff] %v8759
      %8913 = vst [vmem:[#allocation4 + $0x80] sm:$0xff] %v8771
      %8914 = vst [vmem:[#allocation4 + $0x98] sm:$0xff] %v8783
      %8915 = vst [vmem:[#allocation4 + $0xb0] sm:$0xff] %v8795
      %8916 = vst [vmem:[#allocation4 + $0xc8] sm:$0xff] %v8807
      %8917 = vst [vmem:[#allocation4 + $0xe0] sm:$0xff] %v8819
      %8918 = vst [vmem:[#allocation4 + $0xf8] sm:$0xff] %v8831
      %8919 = vst [vmem:[#allocation4 + $0x110] sm:$0xff] %v8843
      %8920 = vst [vmem:[#allocation4 + $0x128] sm:$0xff] %v8855
      %8921 = vst [vmem:[#allocation4 + $0x140] sm:$0xff] %v8867
      %8922 = vst [vmem:[#allocation4 + $0x158] sm:$0xff] %v8879
      %8923 = vst [vmem:[#allocation4 + $0x170] sm:$0xff] %v8891
      %v8924 = vld [vmem:[%s8379] sm:$0xe]
      %v8925 = vld [vmem:[%s8379 + $0x4] sm:$0xf]
      %v8926 = vld [vmem:[%s8379 + $0x8] sm:$0x1]
      %v8927 = vld [vmem:[%s8379 + $0xc] sm:$0xe]
      %v8928 = vld [vmem:[%s8379 + $0x10] sm:$0xf]
      %v8929 = vld [vmem:[%s8379 + $0x14] sm:$0x1]
      %v8930 = vld [vmem:[%s8379 + $0x18] sm:$0xe]
      %v8931 = vld [vmem:[%s8379 + $0x1c] sm:$0xf]
      %v8932 = vld [vmem:[%s8379 + $0x20] sm:$0x1]
      %v8933 = vld [vmem:[%s8379 + $0x24] sm:$0xe]
      %v8934 = vld [vmem:[%s8379 + $0x28] sm:$0xf]
      %v8935 = vld [vmem:[%s8379 + $0x2c] sm:$0x1]
      %v8936 = vld [vmem:[%s8379 + $0x30] sm:$0xe]
      %v8937 = vld [vmem:[%s8379 + $0x34] sm:$0xf]
      %v8938 = vld [vmem:[%s8379 + $0x38] sm:$0x1]
      %v8939 = vld [vmem:[%s8379 + $0x3c] sm:$0xe]
      %v8940 = vld [vmem:[%s8379 + $0x40] sm:$0xf]
      %v8941 = vld [vmem:[%s8379 + $0x44] sm:$0x1]
      %v8942 = vld [vmem:[%s8379 + $0x48] sm:$0xe]
      %v8943 = vld [vmem:[%s8379 + $0x4c] sm:$0xf]
      %v8944 = vld [vmem:[%s8379 + $0x50] sm:$0x1]
      %v8945 = vld [vmem:[%s8379 + $0x54] sm:$0xe]
      %v8946 = vld [vmem:[%s8379 + $0x58] sm:$0xf]
      %v8947 = vld [vmem:[%s8379 + $0x5c] sm:$0x1]
      %v8948 = vld [vmem:[%s8379 + $0x60] sm:$0xe]
      %v8949 = vld [vmem:[%s8379 + $0x64] sm:$0xf]
      %v8950 = vld [vmem:[%s8379 + $0x68] sm:$0x1]
      %v8951 = vld [vmem:[%s8379 + $0x6c] sm:$0xe]
      %v8952 = vld [vmem:[%s8379 + $0x70] sm:$0xf]
      %v8953 = vld [vmem:[%s8379 + $0x74] sm:$0x1]
      %v8954 = vld [vmem:[%s8379 + $0x78] sm:$0xe]
      %v8955 = vld [vmem:[%s8379 + $0x7c] sm:$0xf]
      %v8956 = vld [vmem:[%s8379 + $0x80] sm:$0x1]
      %v8957 = vld [vmem:[%s8379 + $0x84] sm:$0xe]
      %v8958 = vld [vmem:[%s8379 + $0x88] sm:$0xf]
      %v8959 = vld [vmem:[%s8379 + $0x8c] sm:$0x1]
      %v8960 = vld [vmem:[%s8379 + $0x90] sm:$0xe]
      %v8961 = vld [vmem:[%s8379 + $0x94] sm:$0xf]
      %v8962 = vld [vmem:[%s8379 + $0x98] sm:$0x1]
      %v8963 = vld [vmem:[%s8379 + $0x9c] sm:$0xe]
      %v8964 = vld [vmem:[%s8379 + $0xa0] sm:$0xf]
      %v8965 = vld [vmem:[%s8379 + $0xa4] sm:$0x1]
      %v8966 = vld [vmem:[%s8379 + $0xa8] sm:$0xe]
      %v8967 = vld [vmem:[%s8379 + $0xac] sm:$0xf]
      %v8968 = vld [vmem:[%s8379 + $0xb0] sm:$0x1]
      %v8969 = vld [vmem:[%s8379 + $0xb4] sm:$0xe]
      %v8970 = vld [vmem:[%s8379 + $0xb8] sm:$0xf]
      %v8971 = vld [vmem:[%s8379 + $0xbc] sm:$0x1]
      %v9020 = vunpack.c.l.b16 %v8924
      %v9021 = vunpack.c.l.b16 %v8925
      %v9022 = vunpack.c.l.b16 %v8926
      %v9023 = vunpack.c.l.b16 %v8927
      %v9024 = vunpack.c.l.b16 %v8928
      %v9025 = vunpack.c.l.b16 %v8929
      %v9026 = vunpack.c.l.b16 %v8930
      %v9027 = vunpack.c.l.b16 %v8931
      %v9028 = vunpack.c.l.b16 %v8932
      %v9029 = vunpack.c.l.b16 %v8933
      %v9030 = vunpack.c.l.b16 %v8934
      %v9031 = vunpack.c.l.b16 %v8935
      %v9032 = vunpack.c.l.b16 %v8936
      %v9033 = vunpack.c.l.b16 %v8937
      %v9034 = vunpack.c.l.b16 %v8938
      %v9035 = vunpack.c.l.b16 %v8939
      %v9036 = vunpack.c.l.b16 %v8940
      %v9037 = vunpack.c.l.b16 %v8941
      %v9038 = vunpack.c.l.b16 %v8942
      %v9039 = vunpack.c.l.b16 %v8943
      %v9040 = vunpack.c.l.b16 %v8944
      %v9041 = vunpack.c.l.b16 %v8945
      %v9042 = vunpack.c.l.b16 %v8946
      %v9043 = vunpack.c.l.b16 %v8947
      %v9044 = vunpack.c.l.b16 %v8948
      %v9045 = vunpack.c.l.b16 %v8949
      %v9046 = vunpack.c.l.b16 %v8950
      %v9047 = vunpack.c.l.b16 %v8951
      %v9048 = vunpack.c.l.b16 %v8952
      %v9049 = vunpack.c.l.b16 %v8953
      %v9050 = vunpack.c.l.b16 %v8954
      %v9051 = vunpack.c.l.b16 %v8955
      %v9052 = vunpack.c.l.b16 %v8956
      %v9053 = vunpack.c.l.b16 %v8957
      %v9054 = vunpack.c.l.b16 %v8958
      %v9055 = vunpack.c.l.b16 %v8959
      %v9056 = vunpack.c.l.b16 %v8960
      %v9057 = vunpack.c.l.b16 %v8961
      %v9058 = vunpack.c.l.b16 %v8962
      %v9059 = vunpack.c.l.b16 %v8963
      %v9060 = vunpack.c.l.b16 %v8964
      %v9061 = vunpack.c.l.b16 %v8965
      %v9062 = vunpack.c.l.b16 %v8966
      %v9063 = vunpack.c.l.b16 %v8967
      %v9064 = vunpack.c.l.b16 %v8968
      %v9065 = vunpack.c.l.b16 %v8969
      %v9066 = vunpack.c.l.b16 %v8970
      %v9067 = vunpack.c.l.b16 %v8971
      %v9068 = vpack.c.b16 %v9021, %v9020
      %v9069 = vpack.c.b16 %v9022, %v9022
      %v9070 = vpack.c.b16 %v9024, %v9023
      %v9071 = vpack.c.b16 %v9025, %v9025
      %v9072 = vpack.c.b16 %v9027, %v9026
      %v9073 = vpack.c.b16 %v9028, %v9028
      %v9074 = vpack.c.b16 %v9030, %v9029
      %v9075 = vpack.c.b16 %v9031, %v9031
      %v9076 = vpack.c.b16 %v9033, %v9032
      %v9077 = vpack.c.b16 %v9034, %v9034
      %v9078 = vpack.c.b16 %v9036, %v9035
      %v9079 = vpack.c.b16 %v9037, %v9037
      %v9080 = vpack.c.b16 %v9039, %v9038
      %v9081 = vpack.c.b16 %v9040, %v9040
      %v9082 = vpack.c.b16 %v9042, %v9041
      %v9083 = vpack.c.b16 %v9043, %v9043
      %v9084 = vpack.c.b16 %v9045, %v9044
      %v9085 = vpack.c.b16 %v9046, %v9046
      %v9086 = vpack.c.b16 %v9048, %v9047
      %v9087 = vpack.c.b16 %v9049, %v9049
      %v9088 = vpack.c.b16 %v9051, %v9050
      %v9089 = vpack.c.b16 %v9052, %v9052
      %v9090 = vpack.c.b16 %v9054, %v9053
      %v9091 = vpack.c.b16 %v9055, %v9055
      %v9092 = vpack.c.b16 %v9057, %v9056
      %v9093 = vpack.c.b16 %v9058, %v9058
      %v9094 = vpack.c.b16 %v9060, %v9059
      %v9095 = vpack.c.b16 %v9061, %v9061
      %v9096 = vpack.c.b16 %v9063, %v9062
      %v9097 = vpack.c.b16 %v9064, %v9064
      %v9098 = vpack.c.b16 %v9066, %v9065
      %v9099 = vpack.c.b16 %v9067, %v9067
      %v9100 = vrot.slane %v9068, 1
      %v9101 = vrot.slane %v9069, 1
      %v9102 = vsel %vm1608, %v9100, %v9101
      %v9103 = vrot.slane %v9070, 1
      %v9104 = vrot.slane %v9071, 1
      %v9105 = vsel %vm1608, %v9103, %v9104
      %v9106 = vrot.slane %v9072, 1
      %v9107 = vrot.slane %v9073, 1
      %v9108 = vsel %vm1608, %v9106, %v9107
      %v9109 = vrot.slane %v9074, 1
      %v9110 = vrot.slane %v9075, 1
      %v9111 = vsel %vm1608, %v9109, %v9110
      %v9112 = vrot.slane %v9076, 1
      %v9113 = vrot.slane %v9077, 1
      %v9114 = vsel %vm1608, %v9112, %v9113
      %v9115 = vrot.slane %v9078, 1
      %v9116 = vrot.slane %v9079, 1
      %v9117 = vsel %vm1608, %v9115, %v9116
      %v9118 = vrot.slane %v9080, 1
      %v9119 = vrot.slane %v9081, 1
      %v9120 = vsel %vm1608, %v9118, %v9119
      %v9121 = vrot.slane %v9082, 1
      %v9122 = vrot.slane %v9083, 1
      %v9123 = vsel %vm1608, %v9121, %v9122
      %v9124 = vrot.slane %v9084, 1
      %v9125 = vrot.slane %v9085, 1
      %v9126 = vsel %vm1608, %v9124, %v9125
      %v9127 = vrot.slane %v9086, 1
      %v9128 = vrot.slane %v9087, 1
      %v9129 = vsel %vm1608, %v9127, %v9128
      %v9130 = vrot.slane %v9088, 1
      %v9131 = vrot.slane %v9089, 1
      %v9132 = vsel %vm1608, %v9130, %v9131
      %v9133 = vrot.slane %v9090, 1
      %v9134 = vrot.slane %v9091, 1
      %v9135 = vsel %vm1608, %v9133, %v9134
      %v9136 = vrot.slane %v9092, 1
      %v9137 = vrot.slane %v9093, 1
      %v9138 = vsel %vm1608, %v9136, %v9137
      %v9139 = vrot.slane %v9094, 1
      %v9140 = vrot.slane %v9095, 1
      %v9141 = vsel %vm1608, %v9139, %v9140
      %v9142 = vrot.slane %v9096, 1
      %v9143 = vrot.slane %v9097, 1
      %v9144 = vsel %vm1608, %v9142, %v9143
      %v9145 = vrot.slane %v9098, 1
      %v9146 = vrot.slane %v9099, 1
      %v9147 = vsel %vm1608, %v9145, %v9146
      %9164 = vst [vmem:[#allocation4 + $0x10] sm:$0xff] %v9102
      %9165 = vst [vmem:[#allocation4 + $0x28] sm:$0xff] %v9105
      %9166 = vst [vmem:[#allocation4 + $0x40] sm:$0xff] %v9108
      %9167 = vst [vmem:[#allocation4 + $0x58] sm:$0xff] %v9111
      %9168 = vst [vmem:[#allocation4 + $0x70] sm:$0xff] %v9114
      %9169 = vst [vmem:[#allocation4 + $0x88] sm:$0xff] %v9117
      %9170 = vst [vmem:[#allocation4 + $0xa0] sm:$0xff] %v9120
      %9171 = vst [vmem:[#allocation4 + $0xb8] sm:$0xff] %v9123
      %9172 = vst [vmem:[#allocation4 + $0xd0] sm:$0xff] %v9126
      %9173 = vst [vmem:[#allocation4 + $0xe8] sm:$0xff] %v9129
      %9174 = vst [vmem:[#allocation4 + $0x100] sm:$0xff] %v9132
      %9175 = vst [vmem:[#allocation4 + $0x118] sm:$0xff] %v9135
      %9176 = vst [vmem:[#allocation4 + $0x130] sm:$0xff] %v9138
      %9177 = vst [vmem:[#allocation4 + $0x148] sm:$0xff] %v9141
      %9178 = vst [vmem:[#allocation4 + $0x160] sm:$0xff] %v9144
      %9179 = vst [vmem:[#allocation4 + $0x178] sm:$0xff] %v9147
      %v9180 = vld [vmem:[#allocation4] sm:$0xff]
      %v9181 = vld [vmem:[#allocation4 + $0x8] sm:$0xff]
      %v9182 = vld [vmem:[#allocation4 + $0x10] sm:$0xff]
      %v9183 = vld [vmem:[#allocation4 + $0x18] sm:$0xff]
      %v9184 = vld [vmem:[#allocation4 + $0x20] sm:$0xff]
      %v9185 = vld [vmem:[#allocation4 + $0x28] sm:$0xff]
      %v9186 = vld [vmem:[#allocation4 + $0x30] sm:$0xff]
      %v9187 = vld [vmem:[#allocation4 + $0x38] sm:$0xff]
      %v9188 = vld [vmem:[#allocation4 + $0x40] sm:$0xff]
      %v9189 = vld [vmem:[#allocation4 + $0x48] sm:$0xff]
      %v9190 = vld [vmem:[#allocation4 + $0x50] sm:$0xff]
      %v9191 = vld [vmem:[#allocation4 + $0x58] sm:$0xff]
      %v9192 = vld [vmem:[#allocation4 + $0x60] sm:$0xff]
      %v9193 = vld [vmem:[#allocation4 + $0x68] sm:$0xff]
      %v9194 = vld [vmem:[#allocation4 + $0x70] sm:$0xff]
      %v9195 = vld [vmem:[#allocation4 + $0x78] sm:$0xff]
      %v9196 = vld [vmem:[#allocation4 + $0x80] sm:$0xff]
      %v9197 = vld [vmem:[#allocation4 + $0x88] sm:$0xff]
      %v9198 = vld [vmem:[#allocation4 + $0x90] sm:$0xff]
      %v9199 = vld [vmem:[#allocation4 + $0x98] sm:$0xff]
      %v9200 = vld [vmem:[#allocation4 + $0xa0] sm:$0xff]
      %v9201 = vld [vmem:[#allocation4 + $0xa8] sm:$0xff]
      %v9202 = vld [vmem:[#allocation4 + $0xb0] sm:$0xff]
      %v9203 = vld [vmem:[#allocation4 + $0xb8] sm:$0xff]
      %v9204 = vld [vmem:[#allocation4 + $0xc0] sm:$0xff]
      %v9205 = vld [vmem:[#allocation4 + $0xc8] sm:$0xff]
      %v9206 = vld [vmem:[#allocation4 + $0xd0] sm:$0xff]
      %v9207 = vld [vmem:[#allocation4 + $0xd8] sm:$0xff]
      %v9208 = vld [vmem:[#allocation4 + $0xe0] sm:$0xff]
      %v9209 = vld [vmem:[#allocation4 + $0xe8] sm:$0xff]
      %v9210 = vld [vmem:[#allocation4 + $0xf0] sm:$0xff]
      %v9211 = vld [vmem:[#allocation4 + $0xf8] sm:$0xff]
      %v9212 = vld [vmem:[#allocation4 + $0x100] sm:$0xff]
      %v9213 = vld [vmem:[#allocation4 + $0x108] sm:$0xff]
      %v9214 = vld [vmem:[#allocation4 + $0x110] sm:$0xff]
      %v9215 = vld [vmem:[#allocation4 + $0x118] sm:$0xff]
      %v9216 = vld [vmem:[#allocation4 + $0x120] sm:$0xff]
      %v9217 = vld [vmem:[#allocation4 + $0x128] sm:$0xff]
      %v9218 = vld [vmem:[#allocation4 + $0x130] sm:$0xff]
      %v9219 = vld [vmem:[#allocation4 + $0x138] sm:$0xff]
      %v9220 = vld [vmem:[#allocation4 + $0x140] sm:$0xff]
      %v9221 = vld [vmem:[#allocation4 + $0x148] sm:$0xff]
      %v9222 = vld [vmem:[#allocation4 + $0x150] sm:$0xff]
      %v9223 = vld [vmem:[#allocation4 + $0x158] sm:$0xff]
      %v9224 = vld [vmem:[#allocation4 + $0x160] sm:$0xff]
      %v9225 = vld [vmem:[#allocation4 + $0x168] sm:$0xff]
      %v9226 = vld [vmem:[#allocation4 + $0x170] sm:$0xff]
      %v9227 = vld [vmem:[#allocation4 + $0x178] sm:$0xff]
      %s9228 = scalar_lea.vmem %s2, 384
      %v9229 = vld [vmem:[%s9228] sm:$0xf]
      %v9230 = vld [vmem:[%s9228 + $0x4] sm:$0xf]
      %v9231 = vld [vmem:[%s9228 + $0x8] sm:$0xf]
      %v9232 = vld [vmem:[%s9228 + $0xc] sm:$0xf]
      %v9233 = vld [vmem:[%s9228 + $0x10] sm:$0xf]
      %v9234 = vld [vmem:[%s9228 + $0x14] sm:$0xf]
      %v9235 = vld [vmem:[%s9228 + $0x18] sm:$0xf]
      %v9236 = vld [vmem:[%s9228 + $0x1c] sm:$0xf]
      %v9237 = vld [vmem:[%s9228 + $0x20] sm:$0xf]
      %v9238 = vld [vmem:[%s9228 + $0x24] sm:$0xf]
      %v9239 = vld [vmem:[%s9228 + $0x28] sm:$0xf]
      %v9240 = vld [vmem:[%s9228 + $0x2c] sm:$0xf]
      %v9241 = vld [vmem:[%s9228 + $0x30] sm:$0xf]
      %v9242 = vld [vmem:[%s9228 + $0x34] sm:$0xf]
      %v9243 = vld [vmem:[%s9228 + $0x38] sm:$0xf]
      %v9244 = vld [vmem:[%s9228 + $0x3c] sm:$0xf]
      %v9245 = vld [vmem:[%s9228 + $0x40] sm:$0xf]
      %v9246 = vld [vmem:[%s9228 + $0x44] sm:$0xf]
      %v9247 = vld [vmem:[%s9228 + $0x48] sm:$0xf]
      %v9248 = vld [vmem:[%s9228 + $0x4c] sm:$0xf]
      %v9249 = vld [vmem:[%s9228 + $0x50] sm:$0xf]
      %v9250 = vld [vmem:[%s9228 + $0x54] sm:$0xf]
      %v9251 = vld [vmem:[%s9228 + $0x58] sm:$0xf]
      %v9252 = vld [vmem:[%s9228 + $0x5c] sm:$0xf]
      %v9253 = vld [vmem:[%s9228 + $0x60] sm:$0xf]
      %v9254 = vld [vmem:[%s9228 + $0x64] sm:$0xf]
      %v9255 = vld [vmem:[%s9228 + $0x68] sm:$0xf]
      %v9256 = vld [vmem:[%s9228 + $0x6c] sm:$0xf]
      %v9257 = vld [vmem:[%s9228 + $0x70] sm:$0xf]
      %v9258 = vld [vmem:[%s9228 + $0x74] sm:$0xf]
      %v9259 = vld [vmem:[%s9228 + $0x78] sm:$0xf]
      %v9260 = vld [vmem:[%s9228 + $0x7c] sm:$0xf]
      %v9261 = vld [vmem:[%s9228 + $0x80] sm:$0xf]
      %v9262 = vld [vmem:[%s9228 + $0x84] sm:$0xf]
      %v9263 = vld [vmem:[%s9228 + $0x88] sm:$0xf]
      %v9264 = vld [vmem:[%s9228 + $0x8c] sm:$0xf]
      %v9265 = vld [vmem:[%s9228 + $0x90] sm:$0xf]
      %v9266 = vld [vmem:[%s9228 + $0x94] sm:$0xf]
      %v9267 = vld [vmem:[%s9228 + $0x98] sm:$0xf]
      %v9268 = vld [vmem:[%s9228 + $0x9c] sm:$0xf]
      %v9269 = vld [vmem:[%s9228 + $0xa0] sm:$0xf]
      %v9270 = vld [vmem:[%s9228 + $0xa4] sm:$0xf]
      %v9271 = vld [vmem:[%s9228 + $0xa8] sm:$0xf]
      %v9272 = vld [vmem:[%s9228 + $0xac] sm:$0xf]
      %v9273 = vld [vmem:[%s9228 + $0xb0] sm:$0xf]
      %v9274 = vld [vmem:[%s9228 + $0xb4] sm:$0xf]
      %v9275 = vld [vmem:[%s9228 + $0xb8] sm:$0xf]
      %v9276 = vld [vmem:[%s9228 + $0xbc] sm:$0xf]
      %v9325 = vunpack.c.l.b16 %v9229
      %v9326 = vunpack.c.l.b16 %v9230
      %v9327 = vunpack.c.l.b16 %v9231
      %v9328 = vunpack.c.l.b16 %v9232
      %v9329 = vunpack.c.l.b16 %v9233
      %v9330 = vunpack.c.l.b16 %v9234
      %v9331 = vunpack.c.l.b16 %v9235
      %v9332 = vunpack.c.l.b16 %v9236
      %v9333 = vunpack.c.l.b16 %v9237
      %v9334 = vunpack.c.l.b16 %v9238
      %v9335 = vunpack.c.l.b16 %v9239
      %v9336 = vunpack.c.l.b16 %v9240
      %v9337 = vunpack.c.l.b16 %v9241
      %v9338 = vunpack.c.l.b16 %v9242
      %v9339 = vunpack.c.l.b16 %v9243
      %v9340 = vunpack.c.l.b16 %v9244
      %v9341 = vunpack.c.l.b16 %v9245
      %v9342 = vunpack.c.l.b16 %v9246
      %v9343 = vunpack.c.l.b16 %v9247
      %v9344 = vunpack.c.l.b16 %v9248
      %v9345 = vunpack.c.l.b16 %v9249
      %v9346 = vunpack.c.l.b16 %v9250
      %v9347 = vunpack.c.l.b16 %v9251
      %v9348 = vunpack.c.l.b16 %v9252
      %v9349 = vunpack.c.l.b16 %v9253
      %v9350 = vunpack.c.l.b16 %v9254
      %v9351 = vunpack.c.l.b16 %v9255
      %v9352 = vunpack.c.l.b16 %v9256
      %v9353 = vunpack.c.l.b16 %v9257
      %v9354 = vunpack.c.l.b16 %v9258
      %v9355 = vunpack.c.l.b16 %v9259
      %v9356 = vunpack.c.l.b16 %v9260
      %v9357 = vunpack.c.l.b16 %v9261
      %v9358 = vunpack.c.l.b16 %v9262
      %v9359 = vunpack.c.l.b16 %v9263
      %v9360 = vunpack.c.l.b16 %v9264
      %v9361 = vunpack.c.l.b16 %v9265
      %v9362 = vunpack.c.l.b16 %v9266
      %v9363 = vunpack.c.l.b16 %v9267
      %v9364 = vunpack.c.l.b16 %v9268
      %v9365 = vunpack.c.l.b16 %v9269
      %v9366 = vunpack.c.l.b16 %v9270
      %v9367 = vunpack.c.l.b16 %v9271
      %v9368 = vunpack.c.l.b16 %v9272
      %v9369 = vunpack.c.l.b16 %v9273
      %v9370 = vunpack.c.l.b16 %v9274
      %v9371 = vunpack.c.l.b16 %v9275
      %v9372 = vunpack.c.l.b16 %v9276
      %v9373 = vpack.c.b16 %v9326, %v9325
      %v9374 = vpack.c.b16 %v9328, %v9327
      %v9375 = vpack.c.b16 %v9330, %v9329
      %v9376 = vpack.c.b16 %v9332, %v9331
      %v9377 = vpack.c.b16 %v9334, %v9333
      %v9378 = vpack.c.b16 %v9336, %v9335
      %v9379 = vpack.c.b16 %v9338, %v9337
      %v9380 = vpack.c.b16 %v9340, %v9339
      %v9381 = vpack.c.b16 %v9342, %v9341
      %v9382 = vpack.c.b16 %v9344, %v9343
      %v9383 = vpack.c.b16 %v9346, %v9345
      %v9384 = vpack.c.b16 %v9348, %v9347
      %v9385 = vpack.c.b16 %v9350, %v9349
      %v9386 = vpack.c.b16 %v9352, %v9351
      %v9387 = vpack.c.b16 %v9354, %v9353
      %v9388 = vpack.c.b16 %v9356, %v9355
      %v9389 = vpack.c.b16 %v9358, %v9357
      %v9390 = vpack.c.b16 %v9360, %v9359
      %v9391 = vpack.c.b16 %v9362, %v9361
      %v9392 = vpack.c.b16 %v9364, %v9363
      %v9393 = vpack.c.b16 %v9366, %v9365
      %v9394 = vpack.c.b16 %v9368, %v9367
      %v9395 = vpack.c.b16 %v9370, %v9369
      %v9396 = vpack.c.b16 %v9372, %v9371
      %9421 = vmatprep.subr.bf16.mxu0 0
      %9422 = vmatpush1.bf16.msra.mxu0 %v9373
      %9423 = vmatprep.subr.bf16.mxu0 0
      %9424 = vmatpush1.bf16.msra.mxu0 %v9374
      %9425 = vmatprep.subr.bf16.mxu0 0
      %9426 = vmatpush1.bf16.msra.mxu0 %v9375
      %9427 = vmatprep.subr.bf16.mxu0 0
      %9428 = vmatpush1.bf16.msra.mxu0 %v9376
      %9429 = vmatprep.subr.bf16.mxu0 0
      %9430 = vmatpush1.bf16.msra.mxu0 %v9377
      %9431 = vmatprep.subr.bf16.mxu0 0
      %9432 = vmatpush1.bf16.msra.mxu0 %v9378
      %9433 = vmatprep.subr.bf16.mxu0 0
      %9434 = vmatpush1.bf16.msra.mxu0 %v9379
      %9435 = vmatprep.subr.bf16.mxu0 0
      %9436 = vmatpush1.bf16.msra.mxu0 %v9380
      %9437 = vmatprep.subr.bf16.mxu0 0
      %9438 = vmatpush1.bf16.msra.mxu0 %v9381
      %9439 = vmatprep.subr.bf16.mxu0 0
      %9440 = vmatpush1.bf16.msra.mxu0 %v9382
      %9441 = vmatprep.subr.bf16.mxu0 0
      %9442 = vmatpush1.bf16.msra.mxu0 %v9383
      %9443 = vmatprep.subr.bf16.mxu0 0
      %9444 = vmatpush1.bf16.msra.mxu0 %v9384
      %9445 = vmatprep.subr.bf16.mxu0 0
      %9446 = vmatpush1.bf16.msra.mxu0 %v9385
      %9447 = vmatprep.subr.bf16.mxu0 0
      %9448 = vmatpush1.bf16.msra.mxu0 %v9386
      %9449 = vmatprep.subr.bf16.mxu0 0
      %9450 = vmatpush1.bf16.msra.mxu0 %v9387
      %9451 = vmatprep.subr.bf16.mxu0 0
      %9452 = vmatpush1.bf16.msra.mxu0 %v9388
      %9453 = vmatprep.mubr.bf16.mxu0 %v9181
      %9454 = vmatmul.mubr.bf16.gmra.mrb[0].mxu0 %v9180
      %v9455 = vpop.f32.mrb[0].mxu0
      %v9456 = vadd.f32 0.0, %v9455
      %v9457 = vpop.f32.mrb[0].mxu0
      %v9458 = vpop.f32.mrb[0].mxu0
      %v9459 = vadd.f32 0.0, %v9458
      %v9460 = vpop.f32.mrb[0].mxu0
      %9461 = vmatprep.mubr.bf16.mxu0 %v9184
      %9462 = vmatmul.mubr.bf16.gmra.mrb[0].mxu0 %v9183
      %v9463 = vpop.f32.mrb[0].mxu0
      %v9464 = vadd.f32 0.0, %v9463
      %v9465 = vpop.f32.mrb[0].mxu0
      %v9466 = vpop.f32.mrb[0].mxu0
      %v9467 = vadd.f32 0.0, %v9466
      %v9468 = vpop.f32.mrb[0].mxu0
      %9469 = vmatprep.mubr.bf16.mxu0 %v9187
      %9470 = vmatmul.mubr.bf16.gmra.mrb[0].mxu0 %v9186
      %v9471 = vpop.f32.mrb[0].mxu0
      %v9472 = vadd.f32 0.0, %v9471
      %v9473 = vpop.f32.mrb[0].mxu0
      %v9474 = vpop.f32.mrb[0].mxu0
      %v9475 = vadd.f32 0.0, %v9474
      %v9476 = vpop.f32.mrb[0].mxu0
      %9477 = vmatprep.mubr.bf16.mxu0 %v9190
      %9478 = vmatmul.mubr.bf16.gmra.mrb[0].mxu0 %v9189
      %v9479 = vpop.f32.mrb[0].mxu0
      %v9480 = vadd.f32 0.0, %v9479
      %v9481 = vpop.f32.mrb[0].mxu0
      %v9482 = vpop.f32.mrb[0].mxu0
      %v9483 = vadd.f32 0.0, %v9482
      %v9484 = vpop.f32.mrb[0].mxu0
      %9485 = vmatprep.mubr.bf16.mxu0 %v9193
      %9486 = vmatmul.mubr.bf16.gmra.mrb[0].mxu0 %v9192
      %v9487 = vpop.f32.mrb[0].mxu0
      %v9488 = vadd.f32 0.0, %v9487
      %v9489 = vpop.f32.mrb[0].mxu0
      %v9490 = vpop.f32.mrb[0].mxu0
      %v9491 = vadd.f32 0.0, %v9490
      %v9492 = vpop.f32.mrb[0].mxu0
      %9493 = vmatprep.mubr.bf16.mxu0 %v9196
      %9494 = vmatmul.mubr.bf16.gmra.mrb[0].mxu0 %v9195
      %v9495 = vpop.f32.mrb[0].mxu0
      %v9496 = vadd.f32 0.0, %v9495
      %v9497 = vpop.f32.mrb[0].mxu0
      %v9498 = vpop.f32.mrb[0].mxu0
      %v9499 = vadd.f32 0.0, %v9498
      %v9500 = vpop.f32.mrb[0].mxu0
      %9501 = vmatprep.mubr.bf16.mxu0 %v9199
      %9502 = vmatmul.mubr.bf16.gmra.mrb[0].mxu0 %v9198
      %v9503 = vpop.f32.mrb[0].mxu0
      %v9504 = vadd.f32 0.0, %v9503
      %v9505 = vpop.f32.mrb[0].mxu0
      %v9506 = vpop.f32.mrb[0].mxu0
      %v9507 = vadd.f32 0.0, %v9506
      %v9508 = vpop.f32.mrb[0].mxu0
      %9509 = vmatprep.mubr.bf16.mxu0 %v9202
      %9510 = vmatmul.mubr.bf16.gmra.mrb[0].mxu0 %v9201
      %v9511 = vpop.f32.mrb[0].mxu0
      %v9512 = vadd.f32 0.0, %v9511
      %v9513 = vpop.f32.mrb[0].mxu0
      %v9514 = vpop.f32.mrb[0].mxu0
      %v9515 = vadd.f32 0.0, %v9514
      %v9516 = vpop.f32.mrb[0].mxu0
      %9517 = vmatprep.mubr.bf16.mxu0 %v9205
      %9518 = vmatmul.mubr.bf16.gmra.mrb[0].mxu0 %v9204
      %v9519 = vpop.f32.mrb[0].mxu0
      %v9520 = vadd.f32 0.0, %v9519
      %v9521 = vpop.f32.mrb[0].mxu0
      %v9522 = vpop.f32.mrb[0].mxu0
      %v9523 = vadd.f32 0.0, %v9522
      %v9524 = vpop.f32.mrb[0].mxu0
      %9525 = vmatprep.mubr.bf16.mxu0 %v9208
      %9526 = vmatmul.mubr.bf16.gmra.mrb[0].mxu0 %v9207
      %v9527 = vpop.f32.mrb[0].mxu0
      %v9528 = vadd.f32 0.0, %v9527
      %v9529 = vpop.f32.mrb[0].mxu0
      %v9530 = vpop.f32.mrb[0].mxu0
      %v9531 = vadd.f32 0.0, %v9530
      %v9532 = vpop.f32.mrb[0].mxu0
      %9533 = vmatprep.mubr.bf16.mxu0 %v9211
      %9534 = vmatmul.mubr.bf16.gmra.mrb[0].mxu0 %v9210
      %v9535 = vpop.f32.mrb[0].mxu0
      %v9536 = vadd.f32 0.0, %v9535
      %v9537 = vpop.f32.mrb[0].mxu0
      %v9538 = vpop.f32.mrb[0].mxu0
      %v9539 = vadd.f32 0.0, %v9538
      %v9540 = vpop.f32.mrb[0].mxu0
      %9541 = vmatprep.mubr.bf16.mxu0 %v9214
      %9542 = vmatmul.mubr.bf16.gmra.mrb[0].mxu0 %v9213
      %v9543 = vpop.f32.mrb[0].mxu0
      %v9544 = vadd.f32 0.0, %v9543
      %v9545 = vpop.f32.mrb[0].mxu0
      %v9546 = vpop.f32.mrb[0].mxu0
      %v9547 = vadd.f32 0.0, %v9546
      %v9548 = vpop.f32.mrb[0].mxu0
      %9549 = vmatprep.mubr.bf16.mxu0 %v9217
      %9550 = vmatmul.mubr.bf16.gmra.mrb[0].mxu0 %v9216
      %v9551 = vpop.f32.mrb[0].mxu0
      %v9552 = vadd.f32 0.0, %v9551
      %v9553 = vpop.f32.mrb[0].mxu0
      %v9554 = vpop.f32.mrb[0].mxu0
      %v9555 = vadd.f32 0.0, %v9554
      %v9556 = vpop.f32.mrb[0].mxu0
      %9557 = vmatprep.mubr.bf16.mxu0 %v9220
      %9558 = vmatmul.mubr.bf16.gmra.mrb[0].mxu0 %v9219
      %v9559 = vpop.f32.mrb[0].mxu0
      %v9560 = vadd.f32 0.0, %v9559
      %v9561 = vpop.f32.mrb[0].mxu0
      %v9562 = vpop.f32.mrb[0].mxu0
      %v9563 = vadd.f32 0.0, %v9562
      %v9564 = vpop.f32.mrb[0].mxu0
      %9565 = vmatprep.mubr.bf16.mxu0 %v9223
      %9566 = vmatmul.mubr.bf16.gmra.mrb[0].mxu0 %v9222
      %v9567 = vpop.f32.mrb[0].mxu0
      %v9568 = vadd.f32 0.0, %v9567
      %v9569 = vpop.f32.mrb[0].mxu0
      %v9570 = vpop.f32.mrb[0].mxu0
      %v9571 = vadd.f32 0.0, %v9570
      %v9572 = vpop.f32.mrb[0].mxu0
      %9573 = vmatprep.mubr.bf16.mxu0 %v9226
      %9574 = vmatmul.mubr.bf16.gmra.mrb[0].mxu0 %v9225
      %v9575 = vpop.f32.mrb[0].mxu0
      %v9576 = vadd.f32 0.0, %v9575
      %v9577 = vpop.f32.mrb[0].mxu0
      %v9578 = vpop.f32.mrb[0].mxu0
      %v9579 = vadd.f32 0.0, %v9578
      %v9580 = vpop.f32.mrb[0].mxu0
      %9581 = vdwg.mxu0
      %9582 = vmatprep.subr.bf16.mxu0 0
      %9583 = vmatpush1.bf16.msra.mxu0 %v9389
      %9584 = vmatprep.subr.bf16.mxu0 0
      %9585 = vmatpush1.bf16.msra.mxu0 %v9390
      %9586 = vmatprep.subr.bf16.mxu0 0
      %9587 = vmatpush1.bf16.msra.mxu0 %v9391
      %9588 = vmatprep.subr.bf16.mxu0 0
      %9589 = vmatpush1.bf16.msra.mxu0 %v9392
      %9590 = vmatprep.subr.bf16.mxu0 0
      %9591 = vmatpush1.bf16.msra.mxu0 %v9393
      %9592 = vmatprep.subr.bf16.mxu0 0
      %9593 = vmatpush1.bf16.msra.mxu0 %v9394
      %9594 = vmatprep.subr.bf16.mxu0 0
      %9595 = vmatpush1.bf16.msra.mxu0 %v9395
      %9596 = vmatprep.subr.bf16.mxu0 0
      %9597 = vmatpush1.bf16.msra.mxu0 %v9396
      %9598 = vmatprep.subr.bf16.mxu0 0
      %9599 = vmatpush1.bf16.msra.mxu0 0
      %9600 = vmatprep.subr.bf16.mxu0 0
      %9601 = vmatpush1.bf16.msra.mxu0 0
      %9602 = vmatprep.subr.bf16.mxu0 0
      %9603 = vmatpush1.bf16.msra.mxu0 0
      %9604 = vmatprep.subr.bf16.mxu0 0
      %9605 = vmatpush1.bf16.msra.mxu0 0
      %9606 = vmatprep.subr.bf16.mxu0 0
      %9607 = vmatpush1.bf16.msra.mxu0 0
      %9608 = vmatprep.subr.bf16.mxu0 0
      %9609 = vmatpush1.bf16.msra.mxu0 0
      %9610 = vmatprep.subr.bf16.mxu0 0
      %9611 = vmatpush1.bf16.msra.mxu0 0
      %9612 = vmatprep.subr.bf16.mxu0 0
      %9613 = vmatpush1.bf16.msra.mxu0 0
      %9614 = vmatprep.mubr.bf16.mxu0 0
      %9615 = vmatmul.mubr.bf16.gmra.mrb[0].mxu0 %v9182
      %v9616 = vpop.f32.mrb[0].mxu0
      %v9617 = vadd.f32 %v9456, %v9616
      %v9618 = vpop.f32.mrb[0].mxu0
      %v9619 = vpop.f32.mrb[0].mxu0
      %v9620 = vadd.f32 %v9459, %v9619
      %v9621 = vpop.f32.mrb[0].mxu0
      %9622 = vmatprep.mubr.bf16.mxu0 0
      %9623 = vmatmul.mubr.bf16.gmra.mrb[0].mxu0 %v9185
      %v9624 = vpop.f32.mrb[0].mxu0
      %v9625 = vadd.f32 %v9464, %v9624
      %v9626 = vpop.f32.mrb[0].mxu0
      %v9627 = vpop.f32.mrb[0].mxu0
      %v9628 = vadd.f32 %v9467, %v9627
      %v9629 = vpop.f32.mrb[0].mxu0
      %9630 = vmatprep.mubr.bf16.mxu0 0
      %9631 = vmatmul.mubr.bf16.gmra.mrb[0].mxu0 %v9188
      %v9632 = vpop.f32.mrb[0].mxu0
      %v9633 = vadd.f32 %v9472, %v9632
      %v9634 = vpop.f32.mrb[0].mxu0
      %v9635 = vpop.f32.mrb[0].mxu0
      %v9636 = vadd.f32 %v9475, %v9635
      %v9637 = vpop.f32.mrb[0].mxu0
      %9638 = vmatprep.mubr.bf16.mxu0 0
      %9639 = vmatmul.mubr.bf16.gmra.mrb[0].mxu0 %v9191
      %v9640 = vpop.f32.mrb[0].mxu0
      %v9641 = vadd.f32 %v9480, %v9640
      %v9642 = vpop.f32.mrb[0].mxu0
      %v9643 = vpop.f32.mrb[0].mxu0
      %v9644 = vadd.f32 %v9483, %v9643
      %v9645 = vpop.f32.mrb[0].mxu0
      %9646 = vmatprep.mubr.bf16.mxu0 0
      %9647 = vmatmul.mubr.bf16.gmra.mrb[0].mxu0 %v9194
      %v9648 = vpop.f32.mrb[0].mxu0
      %v9649 = vadd.f32 %v9488, %v9648
      %v9650 = vpop.f32.mrb[0].mxu0
      %v9651 = vpop.f32.mrb[0].mxu0
      %v9652 = vadd.f32 %v9491, %v9651
      %v9653 = vpop.f32.mrb[0].mxu0
      %9654 = vmatprep.mubr.bf16.mxu0 0
      %9655 = vmatmul.mubr.bf16.gmra.mrb[0].mxu0 %v9197
      %v9656 = vpop.f32.mrb[0].mxu0
      %v9657 = vadd.f32 %v9496, %v9656
      %v9658 = vpop.f32.mrb[0].mxu0
      %v9659 = vpop.f32.mrb[0].mxu0
      %v9660 = vadd.f32 %v9499, %v9659
      %v9661 = vpop.f32.mrb[0].mxu0
      %9662 = vmatprep.mubr.bf16.mxu0 0
      %9663 = vmatmul.mubr.bf16.gmra.mrb[0].mxu0 %v9200
      %v9664 = vpop.f32.mrb[0].mxu0
      %v9665 = vadd.f32 %v9504, %v9664
      %v9666 = vpop.f32.mrb[0].mxu0
      %v9667 = vpop.f32.mrb[0].mxu0
      %v9668 = vadd.f32 %v9507, %v9667
      %v9669 = vpop.f32.mrb[0].mxu0
      %9670 = vmatprep.mubr.bf16.mxu0 0
      %9671 = vmatmul.mubr.bf16.gmra.mrb[0].mxu0 %v9203
      %v9672 = vpop.f32.mrb[0].mxu0
      %v9673 = vadd.f32 %v9512, %v9672
      %v9674 = vpop.f32.mrb[0].mxu0
      %v9675 = vpop.f32.mrb[0].mxu0
      %v9676 = vadd.f32 %v9515, %v9675
      %v9677 = vpop.f32.mrb[0].mxu0
      %9678 = vmatprep.mubr.bf16.mxu0 0
      %9679 = vmatmul.mubr.bf16.gmra.mrb[0].mxu0 %v9206
      %v9680 = vpop.f32.mrb[0].mxu0
      %v9681 = vadd.f32 %v9520, %v9680
      %v9682 = vpop.f32.mrb[0].mxu0
      %v9683 = vpop.f32.mrb[0].mxu0
      %v9684 = vadd.f32 %v9523, %v9683
      %v9685 = vpop.f32.mrb[0].mxu0
      %9686 = vmatprep.mubr.bf16.mxu0 0
      %9687 = vmatmul.mubr.bf16.gmra.mrb[0].mxu0 %v9209
      %v9688 = vpop.f32.mrb[0].mxu0
      %v9689 = vadd.f32 %v9528, %v9688
      %v9690 = vpop.f32.mrb[0].mxu0
      %v9691 = vpop.f32.mrb[0].mxu0
      %v9692 = vadd.f32 %v9531, %v9691
      %v9693 = vpop.f32.mrb[0].mxu0
      %9694 = vmatprep.mubr.bf16.mxu0 0
      %9695 = vmatmul.mubr.bf16.gmra.mrb[0].mxu0 %v9212
      %v9696 = vpop.f32.mrb[0].mxu0
      %v9697 = vadd.f32 %v9536, %v9696
      %v9698 = vpop.f32.mrb[0].mxu0
      %v9699 = vpop.f32.mrb[0].mxu0
      %v9700 = vadd.f32 %v9539, %v9699
      %v9701 = vpop.f32.mrb[0].mxu0
      %9702 = vmatprep.mubr.bf16.mxu0 0
      %9703 = vmatmul.mubr.bf16.gmra.mrb[0].mxu0 %v9215
      %v9704 = vpop.f32.mrb[0].mxu0
      %v9705 = vadd.f32 %v9544, %v9704
      %v9706 = vpop.f32.mrb[0].mxu0
      %v9707 = vpop.f32.mrb[0].mxu0
      %v9708 = vadd.f32 %v9547, %v9707
      %v9709 = vpop.f32.mrb[0].mxu0
      %9710 = vmatprep.mubr.bf16.mxu0 0
      %9711 = vmatmul.mubr.bf16.gmra.mrb[0].mxu0 %v9218
      %v9712 = vpop.f32.mrb[0].mxu0
      %v9713 = vadd.f32 %v9552, %v9712
      %v9714 = vpop.f32.mrb[0].mxu0
      %v9715 = vpop.f32.mrb[0].mxu0
      %v9716 = vadd.f32 %v9555, %v9715
      %v9717 = vpop.f32.mrb[0].mxu0
      %9718 = vmatprep.mubr.bf16.mxu0 0
      %9719 = vmatmul.mubr.bf16.gmra.mrb[0].mxu0 %v9221
      %v9720 = vpop.f32.mrb[0].mxu0
      %v9721 = vadd.f32 %v9560, %v9720
      %v9722 = vpop.f32.mrb[0].mxu0
      %v9723 = vpop.f32.mrb[0].mxu0
      %v9724 = vadd.f32 %v9563, %v9723
      %v9725 = vpop.f32.mrb[0].mxu0
      %9726 = vmatprep.mubr.bf16.mxu0 0
      %9727 = vmatmul.mubr.bf16.gmra.mrb[0].mxu0 %v9224
      %v9728 = vpop.f32.mrb[0].mxu0
      %v9729 = vadd.f32 %v9568, %v9728
      %v9730 = vpop.f32.mrb[0].mxu0
      %v9731 = vpop.f32.mrb[0].mxu0
      %v9732 = vadd.f32 %v9571, %v9731
      %v9733 = vpop.f32.mrb[0].mxu0
      %9734 = vmatprep.mubr.bf16.mxu0 0
      %9735 = vmatmul.mubr.bf16.gmra.mrb[0].mxu0 %v9227
      %v9736 = vpop.f32.mrb[0].mxu0
      %v9737 = vadd.f32 %v9576, %v9736
      %v9738 = vpop.f32.mrb[0].mxu0
      %v9739 = vpop.f32.mrb[0].mxu0
      %v9740 = vadd.f32 %v9579, %v9739
      %v9741 = vpop.f32.mrb[0].mxu0
      %9742 = vdwg.mxu0
      %v9743 = vadd.f32 %v8252, %v9617
      %v9744 = vadd.f32 %v8255, %v9620
      %v9745 = vadd.f32 %v8260, %v9625
      %v9746 = vadd.f32 %v8263, %v9628
      %v9747 = vadd.f32 %v8268, %v9633
      %v9748 = vadd.f32 %v8271, %v9636
      %v9749 = vadd.f32 %v8276, %v9641
      %v9750 = vadd.f32 %v8279, %v9644
      %v9751 = vadd.f32 %v8284, %v9649
      %v9752 = vadd.f32 %v8287, %v9652
      %v9753 = vadd.f32 %v8292, %v9657
      %v9754 = vadd.f32 %v8295, %v9660
      %v9755 = vadd.f32 %v8300, %v9665
      %v9756 = vadd.f32 %v8303, %v9668
      %v9757 = vadd.f32 %v8308, %v9673
      %v9758 = vadd.f32 %v8311, %v9676
      %v9759 = vadd.f32 %v8316, %v9681
      %v9760 = vadd.f32 %v8319, %v9684
      %v9761 = vadd.f32 %v8324, %v9689
      %v9762 = vadd.f32 %v8327, %v9692
      %v9763 = vadd.f32 %v8332, %v9697
      %v9764 = vadd.f32 %v8335, %v9700
      %v9765 = vadd.f32 %v8340, %v9705
      %v9766 = vadd.f32 %v8343, %v9708
      %v9767 = vadd.f32 %v8348, %v9713
      %v9768 = vadd.f32 %v8351, %v9716
      %v9769 = vadd.f32 %v8356, %v9721
      %v9770 = vadd.f32 %v8359, %v9724
      %v9771 = vadd.f32 %v8364, %v9729
      %v9772 = vadd.f32 %v8367, %v9732
      %v9773 = vadd.f32 %v8372, %v9737
      %v9774 = vadd.f32 %v8375, %v9740
      %v9775 = vlaneseq
      %v9776 = vshrl.u32 %v9775, 7
      %v9777 = vsub.s32 0, %v9776
      %v9778 = vrot.slane %v882, %v9777
      %v9779 = vmul.f32 %v9743, %v9778
      %v9780 = vmul.f32 %v9744, %v9778
      %v9781 = vmul.f32 %v9745, %v9778
      %v9782 = vmul.f32 %v9746, %v9778
      %v9783 = vmul.f32 %v9747, %v9778
      %v9784 = vmul.f32 %v9748, %v9778
      %v9785 = vmul.f32 %v9749, %v9778
      %v9786 = vmul.f32 %v9750, %v9778
      %v9787 = vmul.f32 %v9751, %v9778
      %v9788 = vmul.f32 %v9752, %v9778
      %v9789 = vmul.f32 %v9753, %v9778
      %v9790 = vmul.f32 %v9754, %v9778
      %v9791 = vmul.f32 %v9755, %v9778
      %v9792 = vmul.f32 %v9756, %v9778
      %v9793 = vmul.f32 %v9757, %v9778
      %v9794 = vmul.f32 %v9758, %v9778
      %v9795 = vmul.f32 %v9759, %v9778
      %v9796 = vmul.f32 %v9760, %v9778
      %v9797 = vmul.f32 %v9761, %v9778
      %v9798 = vmul.f32 %v9762, %v9778
      %v9799 = vmul.f32 %v9763, %v9778
      %v9800 = vmul.f32 %v9764, %v9778
      %v9801 = vmul.f32 %v9765, %v9778
      %v9802 = vmul.f32 %v9766, %v9778
      %v9803 = vmul.f32 %v9767, %v9778
      %v9804 = vmul.f32 %v9768, %v9778
      %v9805 = vmul.f32 %v9769, %v9778
      %v9806 = vmul.f32 %v9770, %v9778
      %v9807 = vmul.f32 %v9771, %v9778
      %v9808 = vmul.f32 %v9772, %v9778
      %v9809 = vmul.f32 %v9773, %v9778
      %v9810 = vmul.f32 %v9774, %v9778
      %v9811 = vlaneseq
      %v9812 = vshrl.u32 %v9811, 7
      %v9813 = vsub.s32 0, %v9812
      %v9814 = vrot.slane %v883, %v9813
      %v9815 = vadd.f32 %v9779, %v9814
      %v9816 = vadd.f32 %v9780, %v9814
      %v9817 = vadd.f32 %v9781, %v9814
      %v9818 = vadd.f32 %v9782, %v9814
      %v9819 = vadd.f32 %v9783, %v9814
      %v9820 = vadd.f32 %v9784, %v9814
      %v9821 = vadd.f32 %v9785, %v9814
      %v9822 = vadd.f32 %v9786, %v9814
      %v9823 = vadd.f32 %v9787, %v9814
      %v9824 = vadd.f32 %v9788, %v9814
      %v9825 = vadd.f32 %v9789, %v9814
      %v9826 = vadd.f32 %v9790, %v9814
      %v9827 = vadd.f32 %v9791, %v9814
      %v9828 = vadd.f32 %v9792, %v9814
      %v9829 = vadd.f32 %v9793, %v9814
      %v9830 = vadd.f32 %v9794, %v9814
      %v9831 = vadd.f32 %v9795, %v9814
      %v9832 = vadd.f32 %v9796, %v9814
      %v9833 = vadd.f32 %v9797, %v9814
      %v9834 = vadd.f32 %v9798, %v9814
      %v9835 = vadd.f32 %v9799, %v9814
      %v9836 = vadd.f32 %v9800, %v9814
      %v9837 = vadd.f32 %v9801, %v9814
      %v9838 = vadd.f32 %v9802, %v9814
      %v9839 = vadd.f32 %v9803, %v9814
      %v9840 = vadd.f32 %v9804, %v9814
      %v9841 = vadd.f32 %v9805, %v9814
      %v9842 = vadd.f32 %v9806, %v9814
      %v9843 = vadd.f32 %v9807, %v9814
      %v9844 = vadd.f32 %v9808, %v9814
      %v9845 = vadd.f32 %v9809, %v9814
      %v9846 = vadd.f32 %v9810, %v9814
      %s9847 = smul.u32 0, 2
      %s9848 = smul.addr %s9847, 4
      %s9849 = scalar_lea.vmem %s192, %s9848
      %v9850 = vld [vmem:[%s9849] sm:$0xf]
      %v9851 = vld [vmem:[%s9849 + $0x4] sm:$0xf]
      %v9852 = vld [vmem:[%s9849 + $0x8] sm:$0xf]
      %v9853 = vld [vmem:[%s9849 + $0xc] sm:$0xf]
      %v9854 = vld [vmem:[%s9849 + $0x10] sm:$0xf]
      %v9855 = vld [vmem:[%s9849 + $0x14] sm:$0xf]
      %v9856 = vld [vmem:[%s9849 + $0x18] sm:$0xf]
      %v9857 = vld [vmem:[%s9849 + $0x1c] sm:$0xf]
      %v9858 = vld [vmem:[%s9849 + $0x20] sm:$0xf]
      %v9859 = vld [vmem:[%s9849 + $0x24] sm:$0xf]
      %v9860 = vld [vmem:[%s9849 + $0x28] sm:$0xf]
      %v9861 = vld [vmem:[%s9849 + $0x2c] sm:$0xf]
      %v9862 = vld [vmem:[%s9849 + $0x30] sm:$0xf]
      %v9863 = vld [vmem:[%s9849 + $0x34] sm:$0xf]
      %v9864 = vld [vmem:[%s9849 + $0x38] sm:$0xf]
      %v9865 = vld [vmem:[%s9849 + $0x3c] sm:$0xf]
      %v9866 = vld [vmem:[%s9849 + $0x40] sm:$0xf]
      %v9867 = vld [vmem:[%s9849 + $0x44] sm:$0xf]
      %v9868 = vld [vmem:[%s9849 + $0x48] sm:$0xf]
      %v9869 = vld [vmem:[%s9849 + $0x4c] sm:$0xf]
      %v9870 = vld [vmem:[%s9849 + $0x50] sm:$0xf]
      %v9871 = vld [vmem:[%s9849 + $0x54] sm:$0xf]
      %v9872 = vld [vmem:[%s9849 + $0x58] sm:$0xf]
      %v9873 = vld [vmem:[%s9849 + $0x5c] sm:$0xf]
      %v9874 = vld [vmem:[%s9849 + $0x60] sm:$0xf]
      %v9875 = vld [vmem:[%s9849 + $0x64] sm:$0xf]
      %v9876 = vld [vmem:[%s9849 + $0x68] sm:$0xf]
      %v9877 = vld [vmem:[%s9849 + $0x6c] sm:$0xf]
      %v9878 = vld [vmem:[%s9849 + $0x70] sm:$0xf]
      %v9879 = vld [vmem:[%s9849 + $0x74] sm:$0xf]
      %v9880 = vld [vmem:[%s9849 + $0x78] sm:$0xf]
      %v9881 = vld [vmem:[%s9849 + $0x7c] sm:$0xf]
      %v9882 = vunpack.c.l.bf16 %v9850
      %v9883 = vunpack.c.l.bf16 %v9851
      %v9884 = vunpack.c.l.bf16 %v9852
      %v9885 = vunpack.c.l.bf16 %v9853
      %v9886 = vunpack.c.l.bf16 %v9854
      %v9887 = vunpack.c.l.bf16 %v9855
      %v9888 = vunpack.c.l.bf16 %v9856
      %v9889 = vunpack.c.l.bf16 %v9857
      %v9890 = vunpack.c.l.bf16 %v9858
      %v9891 = vunpack.c.l.bf16 %v9859
      %v9892 = vunpack.c.l.bf16 %v9860
      %v9893 = vunpack.c.l.bf16 %v9861
      %v9894 = vunpack.c.l.bf16 %v9862
      %v9895 = vunpack.c.l.bf16 %v9863
      %v9896 = vunpack.c.l.bf16 %v9864
      %v9897 = vunpack.c.l.bf16 %v9865
      %v9898 = vunpack.c.l.bf16 %v9866
      %v9899 = vunpack.c.l.bf16 %v9867
      %v9900 = vunpack.c.l.bf16 %v9868
      %v9901 = vunpack.c.l.bf16 %v9869
      %v9902 = vunpack.c.l.bf16 %v9870
      %v9903 = vunpack.c.l.bf16 %v9871
      %v9904 = vunpack.c.l.bf16 %v9872
      %v9905 = vunpack.c.l.bf16 %v9873
      %v9906 = vunpack.c.l.bf16 %v9874
      %v9907 = vunpack.c.l.bf16 %v9875
      %v9908 = vunpack.c.l.bf16 %v9876
      %v9909 = vunpack.c.l.bf16 %v9877
      %v9910 = vunpack.c.l.bf16 %v9878
      %v9911 = vunpack.c.l.bf16 %v9879
      %v9912 = vunpack.c.l.bf16 %v9880
      %v9913 = vunpack.c.l.bf16 %v9881
      %v9914 = vadd.f32 %v9815, %v9882
      %v9915 = vadd.f32 %v9816, %v9883
      %v9916 = vadd.f32 %v9817, %v9884
      %v9917 = vadd.f32 %v9818, %v9885
      %v9918 = vadd.f32 %v9819, %v9886
      %v9919 = vadd.f32 %v9820, %v9887
      %v9920 = vadd.f32 %v9821, %v9888
      %v9921 = vadd.f32 %v9822, %v9889
      %v9922 = vadd.f32 %v9823, %v9890
      %v9923 = vadd.f32 %v9824, %v9891
      %v9924 = vadd.f32 %v9825, %v9892
      %v9925 = vadd.f32 %v9826, %v9893
      %v9926 = vadd.f32 %v9827, %v9894
      %v9927 = vadd.f32 %v9828, %v9895
      %v9928 = vadd.f32 %v9829, %v9896
      %v9929 = vadd.f32 %v9830, %v9897
      %v9930 = vadd.f32 %v9831, %v9898
      %v9931 = vadd.f32 %v9832, %v9899
      %v9932 = vadd.f32 %v9833, %v9900
      %v9933 = vadd.f32 %v9834, %v9901
      %v9934 = vadd.f32 %v9835, %v9902
      %v9935 = vadd.f32 %v9836, %v9903
      %v9936 = vadd.f32 %v9837, %v9904
      %v9937 = vadd.f32 %v9838, %v9905
      %v9938 = vadd.f32 %v9839, %v9906
      %v9939 = vadd.f32 %v9840, %v9907
      %v9940 = vadd.f32 %v9841, %v9908
      %v9941 = vadd.f32 %v9842, %v9909
      %v9942 = vadd.f32 %v9843, %v9910
      %v9943 = vadd.f32 %v9844, %v9911
      %v9944 = vadd.f32 %v9845, %v9912
      %v9945 = vadd.f32 %v9846, %v9913
      %v9946 = vmax.f32 %v9914, 0.0
      %v9947 = vmax.f32 %v9915, 0.0
      %v9948 = vmax.f32 %v9916, 0.0
      %v9949 = vmax.f32 %v9917, 0.0
      %v9950 = vmax.f32 %v9918, 0.0
      %v9951 = vmax.f32 %v9919, 0.0
      %v9952 = vmax.f32 %v9920, 0.0
      %v9953 = vmax.f32 %v9921, 0.0
      %v9954 = vmax.f32 %v9922, 0.0
      %v9955 = vmax.f32 %v9923, 0.0
      %v9956 = vmax.f32 %v9924, 0.0
      %v9957 = vmax.f32 %v9925, 0.0
      %v9958 = vmax.f32 %v9926, 0.0
      %v9959 = vmax.f32 %v9927, 0.0
      %v9960 = vmax.f32 %v9928, 0.0
      %v9961 = vmax.f32 %v9929, 0.0
      %v9962 = vmax.f32 %v9930, 0.0
      %v9963 = vmax.f32 %v9931, 0.0
      %v9964 = vmax.f32 %v9932, 0.0
      %v9965 = vmax.f32 %v9933, 0.0
      %v9966 = vmax.f32 %v9934, 0.0
      %v9967 = vmax.f32 %v9935, 0.0
      %v9968 = vmax.f32 %v9936, 0.0
      %v9969 = vmax.f32 %v9937, 0.0
      %v9970 = vmax.f32 %v9938, 0.0
      %v9971 = vmax.f32 %v9939, 0.0
      %v9972 = vmax.f32 %v9940, 0.0
      %v9973 = vmax.f32 %v9941, 0.0
      %v9974 = vmax.f32 %v9942, 0.0
      %v9975 = vmax.f32 %v9943, 0.0
      %v9976 = vmax.f32 %v9944, 0.0
      %v9977 = vmax.f32 %v9945, 0.0
      %s9978 = smul.u32 0, 16
      %s9979 = scalar_lea.vmem %s197, %s9978
      %9980 = vst [vmem:[%s9979] sm:$0xff] %v9946
      %9981 = vst [vmem:[%s9979 + $0x8] sm:$0xff] %v9947
      %9982 = vst [vmem:[%s9979 + $0x10] sm:$0xff] %v9948
      %9983 = vst [vmem:[%s9979 + $0x18] sm:$0xff] %v9949
      %9984 = vst [vmem:[%s9979 + $0x20] sm:$0xff] %v9950
      %9985 = vst [vmem:[%s9979 + $0x28] sm:$0xff] %v9951
      %9986 = vst [vmem:[%s9979 + $0x30] sm:$0xff] %v9952
      %9987 = vst [vmem:[%s9979 + $0x38] sm:$0xff] %v9953
      %9988 = vst [vmem:[%s9979 + $0x40] sm:$0xff] %v9954
      %9989 = vst [vmem:[%s9979 + $0x48] sm:$0xff] %v9955
      %9990 = vst [vmem:[%s9979 + $0x50] sm:$0xff] %v9956
      %9991 = vst [vmem:[%s9979 + $0x58] sm:$0xff] %v9957
      %9992 = vst [vmem:[%s9979 + $0x60] sm:$0xff] %v9958
      %9993 = vst [vmem:[%s9979 + $0x68] sm:$0xff] %v9959
      %9994 = vst [vmem:[%s9979 + $0x70] sm:$0xff] %v9960
      %9995 = vst [vmem:[%s9979 + $0x78] sm:$0xff] %v9961
      %9996 = vst [vmem:[%s9979 + $0x80] sm:$0xff] %v9962
      %9997 = vst [vmem:[%s9979 + $0x88] sm:$0xff] %v9963
      %9998 = vst [vmem:[%s9979 + $0x90] sm:$0xff] %v9964
      %9999 = vst [vmem:[%s9979 + $0x98] sm:$0xff] %v9965
      %10000 = vst [vmem:[%s9979 + $0xa0] sm:$0xff] %v9966
      %10001 = vst [vmem:[%s9979 + $0xa8] sm:$0xff] %v9967
      %10002 = vst [vmem:[%s9979 + $0xb0] sm:$0xff] %v9968
      %10003 = vst [vmem:[%s9979 + $0xb8] sm:$0xff] %v9969
      %10004 = vst [vmem:[%s9979 + $0xc0] sm:$0xff] %v9970
      %10005 = vst [vmem:[%s9979 + $0xc8] sm:$0xff] %v9971
      %10006 = vst [vmem:[%s9979 + $0xd0] sm:$0xff] %v9972
      %10007 = vst [vmem:[%s9979 + $0xd8] sm:$0xff] %v9973
      %10008 = vst [vmem:[%s9979 + $0xe0] sm:$0xff] %v9974
      %10009 = vst [vmem:[%s9979 + $0xe8] sm:$0xff] %v9975
      %10010 = vst [vmem:[%s9979 + $0xf0] sm:$0xff] %v9976
      %10011 = vst [vmem:[%s9979 + $0xf8] sm:$0xff] %v9977
      %p10012 = scmp.lt.s32.totalorder %s15, 1
      %s10013 = scalar_select %p10012, %s15, 1
      %s10014 = smul.addr %s10013, 32
      %s10015 = smul.addr %s10014, 8
      %s10016 = scalar_lea.vmem %s4, %s10015
      // Predicated region
      $region37: #{basic_block.1} parent=35 // pred_check
        %p10017 = pneg %p122
      $region38: #{basic_block.1} parent=35 // pred_check_branch
        %10019 = sbr.rel (%p10017) target = $region40
      $region39: #{basic_block.1} parent=35 // pred_region
        _
      $region40: #{basic_block.1} parent=35 // pred_fallthru
        _
    $region36: #{basic_block.1} parent=5 // pred_fallthru
      _
    %p10020 = scmp.le.s32.totalorder 2, %s10
    // Predicated region
    $region41: #{basic_block.1} parent=5 // pred_check
      %p10021 = pneg %p10020
    $region42: #{basic_block.1} parent=5 // pred_check_branch
      %10023 = sbr.rel (%p10021) target = $region44
    $region43: #{basic_block.1} parent=5 // pred_region
      %s10024 = ssub.s32 %s10, 2
      // Predicated region
      $region45: #{basic_block.1} parent=43 // pred_check
        %p10025 = pneg %p128
      $region46: #{basic_block.1} parent=43 // pred_check_branch
        %10027 = sbr.rel (%p10025) target = $region48
      $region47: #{basic_block.1} parent=43 // pred_region
        %p10028 = scmp.lt.s32.totalorder %s16, 1
        %s10029 = scalar_select %p10028, %s16, 1
        %s10030 = smul.addr %s10029, 32
        %s10031 = smul.addr %s10030, 8
        %s10032 = scalar_lea.vmem %s4, %s10031
      $region48: #{basic_block.1} parent=43 // pred_fallthru
        _
    $region44: #{basic_block.1} parent=5 // pred_fallthru
      _
  $region6: #{basic_block.1} parent=0 // loop_footer
    %s14 = sadd.s32 1, %s10
  $region7: #{basic_block.1} parent=0 // loop_footer_branch
    %9 = sbr.rel target = $region3
  $region8: #{basic_block.1} parent=0 // loop_exit
    _

</llo_original>
